<compile_context>
chip_gen: v5e
topology: v5e:2x2
jax: 0.10.0
libtpu: 0.0.40
codegen_flags: <defaults>
</compile_context>

<pallas_src>
import functools

import jax
import jax.numpy as jnp
import numpy as np
from jax.experimental import pallas as pl
from jax.experimental.pallas import tpu as pltpu


# ----------------------------------------------------------------------------
# Network definition (what parse_model_config would return for a small cfg)
# ----------------------------------------------------------------------------
_MODULE_DEFS_RAW = [
    {'type': 'net', 'batch': '1', 'subdivisions': '1', 'width': '16',
     'height': '16', 'channels': '4', 'momentum': '0.9', 'decay': '0.0005',
     'learning_rate': '0.001', 'burn_in': '10', 'max_batches': '100',
     'policy': 'steps', 'steps': '50,80', 'scales': '0.1,0.1'},
    {'type': 'convolutional', 'batch_normalize': '1', 'filters': '8',
     'size': '3', 'stride': '1', 'pad': '1', 'activation': 'leaky'},
    {'type': 'convolutional', 'batch_normalize': '1', 'filters': '16',
     'size': '3', 'stride': '2', 'pad': '1', 'activation': 'leaky'},
    {'type': 'convolutional', 'batch_normalize': '1', 'filters': '8',
     'size': '1', 'stride': '1', 'pad': '1', 'activation': 'leaky'},
    {'type': 'convolutional', 'batch_normalize': '1', 'filters': '16',
     'size': '3', 'stride': '1', 'pad': '1', 'activation': 'leaky'},
    {'type': 'shortcut', 'from': '-3', 'activation': 'linear'},
    {'type': 'convolutional', 'batch_normalize': '1', 'filters': '16',
     'size': '3', 'stride': '2', 'pad': '1', 'activation': 'leaky'},
    {'type': 'convolutional', 'batch_normalize': '0', 'filters': '21',
     'size': '1', 'stride': '1', 'pad': '1', 'activation': 'linear'},
    {'type': 'yolo', 'mask': '3,4,5',
     'anchors': '10,14, 23,27, 37,58, 81,82, 135,169, 344,319',
     'classes': '2'},
    {'type': 'route', 'layers': '-3'},
    {'type': 'upsample', 'stride': '2'},
    {'type': 'route', 'layers': '-1,-6'},
    {'type': 'convolutional', 'batch_normalize': '1', 'filters': '16',
     'size': '3', 'stride': '1', 'pad': '1', 'activation': 'leaky'},
    {'type': 'convolutional', 'batch_normalize': '0', 'filters': '21',
     'size': '1', 'stride': '1', 'pad': '1', 'activation': 'linear'},
    {'type': 'yolo', 'mask': '0,1,2',
     'anchors': '10,14, 23,27, 37,58, 81,82, 135,169, 344,319',
     'classes': '2'},
]
HYPERPARAMS = _MODULE_DEFS_RAW[0]
MODULE_DEFS = _MODULE_DEFS_RAW[1:]

_LANE = 128
_SUBLANE = 8
_VMEM_SPEC = pl.BlockSpec(memory_space=pltpu.MemorySpace.VMEM)


def _round_up(x, m):
    return -(-x // m) * m


# ----------------------------------------------------------------------------
# Pallas kernels
# ----------------------------------------------------------------------------
def _conv_core(par_refs, w_ref, shift_ref, *, K, stride, N, Hout, Woutp, Cin,
               act):
    """Fused im2col + MXU matmul + folded-BN bias + activation.

    par_refs : stride*stride refs of (N, Hpar, Wpar, Cin) f32 parity grids
    w_ref    : (K*K*Cin, Cpad) bf16 weights (BN scale folded, Cout padded->128)
    shift_ref: (1, Cpad) f32 bias / folded BN shift
    returns  : (N*Hout*Woutp, Cpad) f32
    """
    s = stride
    xs = [r[...] for r in par_refs]
    cols = []
    for kh in range(K):
        for kw in range(K):
            x = xs[(kh % s) * s + (kw % s)]
            dh, dw = kh // s, kw // s
            cols.append(x[:, dh:dh + Hout, dw:dw + Woutp, :])
    patches = cols[0] if len(cols) == 1 else jnp.concatenate(cols, axis=-1)
    # Woutp is a multiple of 8 -> this collapse is sublane-tile aligned.
    patches = patches.reshape(N * Hout * Woutp, K * K * Cin)
    acc = jnp.dot(patches.astype(jnp.bfloat16), w_ref[...],
                  preferred_element_type=jnp.float32)
    y = acc + shift_ref[...]
    if act == 'leaky':
        y = jnp.where(y > 0.0, y, 0.1 * y)
    return y


def _conv_kernel(*refs, K, stride, N, Hout, Woutp, Cin, act):
    P = stride * stride
    par_refs, (w_ref, shift_ref, o_ref) = refs[:P], refs[P:]
    o_ref[...] = _conv_core(par_refs, w_ref, shift_ref, K=K, stride=stride,
                            N=N, Hout=Hout, Woutp=Woutp, Cin=Cin, act=act)


def _conv_yolo_kernel(*refs, K, stride, N, Hout, Woutp, Cin, act, ystride):
    """Conv + fused YOLO eval decode epilogue (role 0: xy, 1: wh, 2: sigmoid)."""
    P = stride * stride
    par_refs = refs[:P]
    w_ref, shift_ref, grid_ref, anch_ref, role_ref, o_ref = refs[P:]
    y = _conv_core(par_refs, w_ref, shift_ref, K=K, stride=stride,
                   N=N, Hout=Hout, Woutp=Woutp, Cin=Cin, act=act)
    role = role_ref[...]
    sig = jax.nn.sigmoid(y)
    xy = (sig + grid_ref[...]) * ystride
    wh = jnp.exp(y) * anch_ref[...]
    o_ref[...] = jnp.where(role == 0, xy, jnp.where(role == 1, wh, sig))


def _add_kernel(a_ref, b_ref, o_ref):
    o_ref[...] = a_ref[...] + b_ref[...]


# ----------------------------------------------------------------------------
# Wrappers
# ----------------------------------------------------------------------------
def _parity_grids(x_nhwc, K, stride, pad, Hout, Woutp):
    """Space-to-depth split of the zero-padded input into stride^2 parity grids.

    Total bytes == padded input (no K^2 im2col expansion); every in-kernel tap
    becomes a static unit-stride slice of one parity grid.
    """
    s = stride
    N, H, W, C = x_nhwc.shape
    Hpar = (K - 1) // s + Hout
    Wpar = (K - 1) // s + Woutp
    need_h = (s - 1) + s * (Hpar - 1) + 1
    need_w = (s - 1) + s * (Wpar - 1) + 1
    Hp, Wp = H + 2 * pad, W + 2 * pad
    xp = jnp.pad(x_nhwc, ((0, 0),
                          (pad, pad + max(0, need_h - Hp)),
                          (pad, pad + max(0, need_w - Wp)),
                          (0, 0)))
    grids = []
    for ph in range(s):
        for pw in range(s):
            grids.append(xp[:, ph::s, pw::s, :][:, :Hpar, :Wpar, :])
    return grids


def _yolo_meta(mdef):
    mask = [int(v) for v in mdef['mask'].split(',')]
    anc = [float(v) for v in mdef['anchors'].split(',')]
    anchors = [(anc[2 * i], anc[2 * i + 1]) for i in mask]
    no = int(mdef['classes']) + 5
    return len(mask), no, anchors


def _yolo_maps(N, ny, nxp, na, no, anchors, Cpad):
    """Static numpy decode maps in the conv's (rows, Cpad) NHWC layout."""
    rows = N * ny * nxp
    gy, gx = np.meshgrid(np.arange(ny), np.arange(nxp), indexing='ij')
    grid = np.zeros((ny, nxp, Cpad), np.float32)
    anch = np.ones((Cpad,), np.float32)
    role = np.full((Cpad,), 2, np.int32)        # 2 -> plain sigmoid (+ padding)
    for a, (aw, ah) in enumerate(anchors):
        c = a * no
        grid[..., c + 0] = gx
        grid[..., c + 1] = gy
        anch[c + 2] = aw
        anch[c + 3] = ah
        role[c + 0] = role[c + 1] = 0           # 0 -> (sigmoid + grid) * stride
        role[c + 2] = role[c + 3] = 1           # 1 -> exp * anchor
    grid_map = np.broadcast_to(grid[None], (N, ny, nxp, Cpad)).reshape(rows, Cpad)
    anch_map = np.broadcast_to(anch, (rows, Cpad))
    role_map = np.broadcast_to(role, (rows, Cpad))
    return (jnp.asarray(np.ascontiguousarray(grid_map)),
            jnp.asarray(np.ascontiguousarray(anch_map)),
            jnp.asarray(np.ascontiguousarray(role_map)))


def conv_layer(x_nhwc, p, mdef, yolo_def=None, img_size=None):
    """conv (+ folded BN) (+ leaky) (+ optional fused YOLO decode)."""
    K = int(mdef['size'])
    stride = int(mdef['stride'])
    act = mdef['activation']
    if act not in ('leaky', 'linear'):
        # TODO(synk): mish/swish/logistic activations from create_modules are
        # not needed by this cfg.
        raise NotImplementedError(act)
    w, scale, shift = p['w'], p['scale'], p['shift']
    Cout, Cin = int(w.shape[0]), int(w.shape[1])
    # create_modules() always uses pad=(K-1)//2 and ignores the cfg 'pad' flag;
    # we match that behaviour exactly.
    pad = (K - 1) // 2
    N, H, W, _ = x_nhwc.shape
    Hout = (H + 2 * pad - K) // stride + 1
    Wout = (W + 2 * pad - K) // stride + 1
    Woutp = _round_up(Wout, _SUBLANE)       # sublane-aligned row collapse
    Cpad = _round_up(Cout, _LANE)           # lane-dense (unmasked) stores
    rows = N * Hout * Woutp

    grids = _parity_grids(x_nhwc, K, stride, pad, Hout, Woutp)
    # weight (Cout,Cin,K,K) -> (K*K*Cin, Cout) im2col matrix, BN scale folded,
    # zero-padded to 128 output lanes, bf16 MXU operand.
    w2 = jnp.transpose(w, (2, 3, 1, 0)).reshape(K * K * Cin, Cout)
    w2 = w2 * scale.astype(jnp.float32)[None, :]
    w2 = jnp.pad(w2, ((0, 0), (0, Cpad - Cout))).astype(jnp.bfloat16)
    shift2 = jnp.pad(shift.astype(jnp.float32).reshape(1, Cout),
                     ((0, 0), (0, Cpad - Cout)))

    common = dict(K=K, stride=stride, N=N, Hout=Hout, Woutp=Woutp, Cin=Cin,
                  act=act)
    P = stride * stride

    if yolo_def is None:
        out = pl.pallas_call(
            functools.partial(_conv_kernel, **common),
            out_shape=jax.ShapeDtypeStruct((rows, Cpad), jnp.float32),
            in_specs=[_VMEM_SPEC] * (P + 2),
            out_specs=_VMEM_SPEC,
        )(*grids, w2, shift2)
        return out.reshape(N, Hout, Woutp, Cpad)[:, :, :Wout, :Cout]

    # Fused conv + YOLO eval decode.
    na, no, anchors = _yolo_meta(yolo_def)
    assert Cout == na * no
    ystride = float(img_size // Hout)
    grid_map, anch_map, role_map = _yolo_maps(N, Hout, Woutp, na, no, anchors,
                                              Cpad)
    out = pl.pallas_call(
        functools.partial(_conv_yolo_kernel, ystride=ystride, **common),
        out_shape=jax.ShapeDtypeStruct((rows, Cpad), jnp.float32),
        in_specs=[_VMEM_SPEC] * (P + 5),
        out_specs=_VMEM_SPEC,
    )(*grids, w2, shift2, grid_map, anch_map, role_map)
    dec = out.reshape(N, Hout, Woutp, Cpad)[:, :, :Wout, :Cout]
    dec = dec.reshape(N, Hout, Wout, na, no).transpose(0, 3, 1, 2, 4)
    return dec.reshape(N, na * Hout * Wout, no)


def shortcut_add(a, b):
    """Residual add as one lane-dense (rows, 128) VMEM block."""
    shape, total = a.shape, a.size
    padn = (-total) % _LANE
    af, bf = a.reshape(-1), b.reshape(-1)
    if padn:
        af = jnp.pad(af, (0, padn))
        bf = jnp.pad(bf, (0, padn))
    rows = (total + padn) // _LANE
    out = pl.pallas_call(
        _add_kernel,
        out_shape=jax.ShapeDtypeStruct((rows, _LANE), a.dtype),
        in_specs=[_VMEM_SPEC, _VMEM_SPEC],
        out_specs=_VMEM_SPEC,
    )(af.reshape(rows, _LANE), bf.reshape(rows, _LANE))
    return out.reshape(-1)[:total].reshape(shape)


# ----------------------------------------------------------------------------
# Darknet forward (eval / inference path)
# ----------------------------------------------------------------------------
def darknet_forward(x_nchw, params):
    img_size = x_nchw.shape[2]
    x = jnp.transpose(x_nchw, (0, 2, 3, 1)).astype(jnp.float32)   # NCHW -> NHWC
    layer_outputs, yolo_outputs = [], []
    for i, mdef in enumerate(MODULE_DEFS):
        t = mdef['type']
        if t == 'convolutional':
            nxt = MODULE_DEFS[i + 1] if i + 1 < len(MODULE_DEFS) else None
            yolo_def = nxt if (nxt is not None and nxt['type'] == 'yolo') else None
            x = conv_layer(x, params[i], mdef, yolo_def, img_size)
        elif t == 'upsample':
            s = int(mdef['stride'])
            x = jnp.repeat(jnp.repeat(x, s, axis=1), s, axis=2)    # nearest
        elif t == 'route':
            layers = [int(l) for l in mdef['layers'].split(',')]
            combined = jnp.concatenate([layer_outputs[l] for l in layers],
                                       axis=-1)                    # channel axis
            groups = int(mdef.get('groups', 1))
            gid = int(mdef.get('group_id', 0))
            gsz = combined.shape[-1] // groups
            x = combined[..., gsz * gid:gsz * (gid + 1)]
        elif t == 'shortcut':
            x = shortcut_add(layer_outputs[-1],
                             layer_outputs[int(mdef['from'])])
        elif t == 'yolo':
            # decode already fused into the preceding conv; x is (N, boxes, no)
            yolo_outputs.append(x)
        # TODO(synk): maxpool layers are supported by create_modules but not
        # present in this cfg.
        layer_outputs.append(x)
    return jnp.concatenate(yolo_outputs, axis=1)


# ----------------------------------------------------------------------------
# Deterministic parameter init (BN folded into scale/shift for eval)
# ----------------------------------------------------------------------------
def init_params(module_defs, in_channels, key):
    params = {}
    out_filters = [in_channels]
    for i, mdef in enumerate(module_defs):
        t = mdef['type']
        filters = out_filters[-1]
        if t == 'convolutional':
            bn = int(mdef['batch_normalize'])
            cout = int(mdef['filters'])
            K = int(mdef['size'])
            cin = out_filters[-1]
            key, k1, k2, k3, k4, k5 = jax.random.split(key, 6)
            w = jax.random.normal(k1, (cout, cin, K, K), jnp.float32) * 0.1
            if bn:
                gamma = jax.random.uniform(k2, (cout,), jnp.float32, 0.5, 1.5)
                beta = jax.random.normal(k3, (cout,), jnp.float32) * 0.1
                rm = jax.random.normal(k4, (cout,), jnp.float32) * 0.1
                rv = jax.random.uniform(k5, (cout,), jnp.float32, 0.5, 1.5)
                scale = gamma / jnp.sqrt(rv + 1e-5)
                shift = beta - rm * scale
            else:
                bias = jax.random.normal(k2, (cout,), jnp.float32) * 0.1
                scale = jnp.ones((cout,), jnp.float32)
                shift = bias
            params[i] = {'w': w, 'scale': scale, 'shift': shift}
            filters = cout
        elif t == 'route':
            layers = [int(x) for x in mdef['layers'].split(',')]
            filters = (sum(out_filters[1:][l] for l in layers)
                       // int(mdef.get('groups', 1)))
        elif t == 'shortcut':
            filters = out_filters[1:][int(mdef['from'])]
        out_filters.append(filters)
    return params


# ----------------------------------------------------------------------------
# Pure-JAX reference (same bf16 operand quantisation, XLA conv path)
# ----------------------------------------------------------------------------
def _ref_conv(x, w_oihw, scale, shift, stride, act):
    K = int(w_oihw.shape[2])
    pad = (K - 1) // 2
    wf = (w_oihw * scale.astype(jnp.float32)[:, None, None, None]
          ).astype(jnp.bfloat16)
    wf = jnp.transpose(wf, (2, 3, 1, 0))          # OIHW -> HWIO
    y = jax.lax.conv_general_dilated(
        x.astype(jnp.bfloat16), wf, (stride, stride), [(pad, pad), (pad, pad)],
        dimension_numbers=('NHWC', 'HWIO', 'NHWC'),
        preferred_element_type=jnp.float32)
    y = y + shift.astype(jnp.float32)
    if act == 'leaky':
        y = jnp.where(y > 0.0, y, 0.1 * y)
    return y


def _ref_yolo(x_nhwc, mdef, img_size):
    N, ny, nx, C = x_nhwc.shape
    na, no, anchors = _yolo_meta(mdef)
    anchors = jnp.asarray(np.array(anchors, np.float32))          # (na, 2)
    stride = img_size // ny
    x5 = x_nhwc.reshape(N, ny, nx, na, no).transpose(0, 3, 1, 2, 4)
    yv, xv = jnp.meshgrid(jnp.arange(ny), jnp.arange(nx), indexing='ij')
    grid = jnp.stack([xv, yv], axis=-1).astype(jnp.float32)       # (ny,nx,2)
    xy = (jax.nn.sigmoid(x5[..., 0:2]) + grid[None, None]) * stride
    wh = jnp.exp(x5[..., 2:4]) * anchors[None, :, None, None, :]
    rest = jax.nn.sigmoid(x5[..., 4:])
    out = jnp.concatenate([xy, wh, rest], axis=-1)
    return out.reshape(N, na * ny * nx, no)


def ref_forward(x_nchw, params):
    img_size = x_nchw.shape[2]
    x = jnp.transpose(x_nchw, (0, 2, 3, 1)).astype(jnp.float32)
    layer_outputs, yolo_outputs = [], []
    for i, mdef in enumerate(MODULE_DEFS):
        t = mdef['type']
        if t == 'convolutional':
            p = params[i]
            x = _ref_conv(x, p['w'], p['scale'], p['shift'],
                          int(mdef['stride']), mdef['activation'])
        elif t == 'upsample':
            s = int(mdef['stride'])
            x = jnp.repeat(jnp.repeat(x, s, axis=1), s, axis=2)
        elif t == 'route':
            layers = [int(l) for l in mdef['layers'].split(',')]
            combined = jnp.concatenate([layer_outputs[l] for l in layers],
                                       axis=-1)
            groups = int(mdef.get('groups', 1))
            gid = int(mdef.get('group_id', 0))
            gsz = combined.shape[-1] // groups
            x = combined[..., gsz * gid:gsz * (gid + 1)]
        elif t == 'shortcut':
            x = layer_outputs[-1] + layer_outputs[int(mdef['from'])]
        elif t == 'yolo':
            x = _ref_yolo(x, mdef, img_size)
            yolo_outputs.append(x)
        layer_outputs.append(x)
    return jnp.concatenate(yolo_outputs, axis=1)


# ----------------------------------------------------------------------------
if __name__ == "__main__":
    key = jax.random.PRNGKey(0)
    kx, kp = jax.random.split(key)
    # matches hyperparams: channels=4, width=height=16
    x = jax.random.normal(kx, (2, 4, 16, 16), jnp.float32)
    params = init_params(MODULE_DEFS, in_channels=4, key=kp)

    out = jax.block_until_ready(jax.jit(darknet_forward)(x, params))
    # yolo head 1: 3 anchors * 4*4 = 48 boxes; head 2: 3 * 8*8 = 192 boxes
    assert out.shape == (2, 240, 7), out.shape

    ref = jax.block_until_ready(jax.jit(ref_forward)(x, params))
    # Both paths quantise MXU operands to bf16 (f32 accumulation), so they
    # agree to ~1e-3 (the old test used 2e-2).
    np.testing.assert_allclose(np.asarray(out), np.asarray(ref),
                               rtol=2e-3, atol=2e-3)
    print("KERNEL_OK")
</pallas_src>

<mosaic_0001>
module attributes {stable_mosaic.version = 11 : i64} {
  func.func @_conv_kernel(%arg0: memref<2x18x18x4xf32, #tpu.memory_space<vmem>>, %arg1: memref<36x128xbf16, #tpu.memory_space<vmem>>, %arg2: memref<1x128xf32, #tpu.memory_space<vmem>>, %arg3: memref<512x128xf32, #tpu.memory_space<vmem>>) attributes {dimension_semantics = [], scalar_prefetch = 0 : i64, scratch_operands = 0 : i64, tpu.core_type = #tpu.core_type<tc>} {
    %c0 = arith.constant 0 : index
    %c0_0 = arith.constant 0 : index
    %c0_1 = arith.constant 0 : index
    %c0_2 = arith.constant 0 : index
    %0 = vector.load %arg0[%c0, %c0_0, %c0_1, %c0_2] : memref<2x18x18x4xf32, #tpu.memory_space<vmem>>, vector<2x18x18x4xf32>
    %1 = vector.extract_strided_slice %0 {offsets = [0, 0, 0, 0], sizes = [2, 16, 16, 4], strides = [1, 1, 1, 1]} : vector<2x18x18x4xf32> to vector<2x16x16x4xf32>
    %2 = vector.extract_strided_slice %0 {offsets = [0, 0, 1, 0], sizes = [2, 16, 16, 4], strides = [1, 1, 1, 1]} : vector<2x18x18x4xf32> to vector<2x16x16x4xf32>
    %3 = vector.extract_strided_slice %0 {offsets = [0, 0, 2, 0], sizes = [2, 16, 16, 4], strides = [1, 1, 1, 1]} : vector<2x18x18x4xf32> to vector<2x16x16x4xf32>
    %4 = vector.extract_strided_slice %0 {offsets = [0, 1, 0, 0], sizes = [2, 16, 16, 4], strides = [1, 1, 1, 1]} : vector<2x18x18x4xf32> to vector<2x16x16x4xf32>
    %5 = vector.extract_strided_slice %0 {offsets = [0, 1, 1, 0], sizes = [2, 16, 16, 4], strides = [1, 1, 1, 1]} : vector<2x18x18x4xf32> to vector<2x16x16x4xf32>
    %6 = vector.extract_strided_slice %0 {offsets = [0, 1, 2, 0], sizes = [2, 16, 16, 4], strides = [1, 1, 1, 1]} : vector<2x18x18x4xf32> to vector<2x16x16x4xf32>
    %7 = vector.extract_strided_slice %0 {offsets = [0, 2, 0, 0], sizes = [2, 16, 16, 4], strides = [1, 1, 1, 1]} : vector<2x18x18x4xf32> to vector<2x16x16x4xf32>
    %8 = vector.extract_strided_slice %0 {offsets = [0, 2, 1, 0], sizes = [2, 16, 16, 4], strides = [1, 1, 1, 1]} : vector<2x18x18x4xf32> to vector<2x16x16x4xf32>
    %9 = vector.extract_strided_slice %0 {offsets = [0, 2, 2, 0], sizes = [2, 16, 16, 4], strides = [1, 1, 1, 1]} : vector<2x18x18x4xf32> to vector<2x16x16x4xf32>
    %10 = tpu.concatenate %1, %2, %3, %4, %5, %6, %7, %8, %9 in 3 : vector<2x16x16x4xf32>, vector<2x16x16x4xf32>, vector<2x16x16x4xf32>, vector<2x16x16x4xf32>, vector<2x16x16x4xf32>, vector<2x16x16x4xf32>, vector<2x16x16x4xf32>, vector<2x16x16x4xf32>, vector<2x16x16x4xf32> -> vector<2x16x16x36xf32>
    %11 = vector.shape_cast %10 : vector<2x16x16x36xf32> to vector<512x36xf32>
    %12 = arith.truncf %11 : vector<512x36xf32> to vector<512x36xbf16>
    %c0_3 = arith.constant 0 : index
    %c0_4 = arith.constant 0 : index
    %13 = vector.load %arg1[%c0_3, %c0_4] : memref<36x128xbf16, #tpu.memory_space<vmem>>, vector<36x128xbf16>
    %cst = arith.constant dense<0.000000e+00> : vector<512x128xf32>
    %14 = tpu.matmul %12, %13, %cst {dimension_numbers = #tpu.dot_dimension_numbers<[1], [0], [0], [1], [0, 0, 1, 1], [], []>} : vector<512x36xbf16>, vector<36x128xbf16>, vector<512x128xf32> -> vector<512x128xf32>
    %c0_5 = arith.constant 0 : index
    %c0_6 = arith.constant 0 : index
    %15 = vector.load %arg2[%c0_5, %c0_6] : memref<1x128xf32, #tpu.memory_space<vmem>>, vector<1x128xf32>
    %16 = vector.broadcast %15 : vector<1x128xf32> to vector<512x128xf32>
    %17 = arith.addf %14, %16 : vector<512x128xf32>
    %cst_7 = arith.constant 0.000000e+00 : f32
    %18 = vector.broadcast %cst_7 : f32 to vector<512x128xf32>
    %19 = arith.cmpf ogt, %17, %18 : vector<512x128xf32>
    %cst_8 = arith.constant 1.000000e-01 : f32
    %20 = vector.broadcast %cst_8 : f32 to vector<512x128xf32>
    %21 = arith.mulf %20, %17 : vector<512x128xf32>
    %22 = arith.select %19, %17, %21 : vector<512x128xi1>, vector<512x128xf32>
    %c0_9 = arith.constant 0 : index
    %c0_10 = arith.constant 0 : index
    %23 = vector.load %arg3[%c0_9, %c0_10] : memref<512x128xf32, #tpu.memory_space<vmem>>, vector<512x128xf32>
    tpu.vector_store %arg3[%c0_9, %c0_10], %22 {strides = array<i32>} : memref<512x128xf32, #tpu.memory_space<vmem>>, vector<512x128xf32>,
    return
  }
}

module attributes {stable_mosaic.version = 11 : i64} {
  func.func @_conv_kernel(%arg0: memref<2x9x9x8xf32, #tpu.memory_space<vmem>>, %arg1: memref<2x9x9x8xf32, #tpu.memory_space<vmem>>, %arg2: memref<2x9x9x8xf32, #tpu.memory_space<vmem>>, %arg3: memref<2x9x9x8xf32, #tpu.memory_space<vmem>>, %arg4: memref<72x128xbf16, #tpu.memory_space<vmem>>, %arg5: memref<1x128xf32, #tpu.memory_space<vmem>>, %arg6: memref<128x128xf32, #tpu.memory_space<vmem>>) attributes {dimension_semantics = [], scalar_prefetch = 0 : i64, scratch_operands = 0 : i64, tpu.core_type = #tpu.core_type<tc>} {
    %c0 = arith.constant 0 : index
    %c0_0 = arith.constant 0 : index
    %c0_1 = arith.constant 0 : index
    %c0_2 = arith.constant 0 : index
    %0 = vector.load %arg0[%c0, %c0_0, %c0_1, %c0_2] : memref<2x9x9x8xf32, #tpu.memory_space<vmem>>, vector<2x9x9x8xf32>
    %c0_3 = arith.constant 0 : index
    %c0_4 = arith.constant 0 : index
    %c0_5 = arith.constant 0 : index
    %c0_6 = arith.constant 0 : index
    %1 = vector.load %arg1[%c0_3, %c0_4, %c0_5, %c0_6] : memref<2x9x9x8xf32, #tpu.memory_space<vmem>>, vector<2x9x9x8xf32>
    %c0_7 = arith.constant 0 : index
    %c0_8 = arith.constant 0 : index
    %c0_9 = arith.constant 0 : index
    %c0_10 = arith.constant 0 : index
    %2 = vector.load %arg2[%c0_7, %c0_8, %c0_9, %c0_10] : memref<2x9x9x8xf32, #tpu.memory_space<vmem>>, vector<2x9x9x8xf32>
    %c0_11 = arith.constant 0 : index
    %c0_12 = arith.constant 0 : index
    %c0_13 = arith.constant 0 : index
    %c0_14 = arith.constant 0 : index
    %3 = vector.load %arg3[%c0_11, %c0_12, %c0_13, %c0_14] : memref<2x9x9x8xf32, #tpu.memory_space<vmem>>, vector<2x9x9x8xf32>
    %4 = vector.extract_strided_slice %0 {offsets = [0, 0, 0, 0], sizes = [2, 8, 8, 8], strides = [1, 1, 1, 1]} : vector<2x9x9x8xf32> to vector<2x8x8x8xf32>
    %5 = vector.extract_strided_slice %1 {offsets = [0, 0, 0, 0], sizes = [2, 8, 8, 8], strides = [1, 1, 1, 1]} : vector<2x9x9x8xf32> to vector<2x8x8x8xf32>
    %6 = vector.extract_strided_slice %0 {offsets = [0, 0, 1, 0], sizes = [2, 8, 8, 8], strides = [1, 1, 1, 1]} : vector<2x9x9x8xf32> to vector<2x8x8x8xf32>
    %7 = vector.extract_strided_slice %2 {offsets = [0, 0, 0, 0], sizes = [2, 8, 8, 8], strides = [1, 1, 1, 1]} : vector<2x9x9x8xf32> to vector<2x8x8x8xf32>
    %8 = vector.extract_strided_slice %3 {offsets = [0, 0, 0, 0], sizes = [2, 8, 8, 8], strides = [1, 1, 1, 1]} : vector<2x9x9x8xf32> to vector<2x8x8x8xf32>
    %9 = vector.extract_strided_slice %2 {offsets = [0, 0, 1, 0], sizes = [2, 8, 8, 8], strides = [1, 1, 1, 1]} : vector<2x9x9x8xf32> to vector<2x8x8x8xf32>
    %10 = vector.extract_strided_slice %0 {offsets = [0, 1, 0, 0], sizes = [2, 8, 8, 8], strides = [1, 1, 1, 1]} : vector<2x9x9x8xf32> to vector<2x8x8x8xf32>
    %11 = vector.extract_strided_slice %1 {offsets = [0, 1, 0, 0], sizes = [2, 8, 8, 8], strides = [1, 1, 1, 1]} : vector<2x9x9x8xf32> to vector<2x8x8x8xf32>
    %12 = vector.extract_strided_slice %0 {offsets = [0, 1, 1, 0], sizes = [2, 8, 8, 8], strides = [1, 1, 1, 1]} : vector<2x9x9x8xf32> to vector<2x8x8x8xf32>
    %13 = tpu.concatenate %4, %5, %6, %7, %8, %9, %10, %11, %12 in 3 : vector<2x8x8x8xf32>, vector<2x8x8x8xf32>, vector<2x8x8x8xf32>, vector<2x8x8x8xf32>, vector<2x8x8x8xf32>, vector<2x8x8x8xf32>, vector<2x8x8x8xf32>, vector<2x8x8x8xf32>, vector<2x8x8x8xf32> -> vector<2x8x8x72xf32>
    %14 = vector.shape_cast %13 : vector<2x8x8x72xf32> to vector<128x72xf32>
    %15 = arith.truncf %14 : vector<128x72xf32> to vector<128x72xbf16>
    %c0_15 = arith.constant 0 : index
    %c0_16 = arith.constant 0 : index
    %16 = vector.load %arg4[%c0_15, %c0_16] : memref<72x128xbf16, #tpu.memory_space<vmem>>, vector<72x128xbf16>
    %cst = arith.constant dense<0.000000e+00> : vector<128x128xf32>
    %17 = tpu.matmul %15, %16, %cst {dimension_numbers = #tpu.dot_dimension_numbers<[1], [0], [0], [1], [0, 0, 1, 1], [], []>} : vector<128x72xbf16>, vector<72x128xbf16>, vector<128x128xf32> -> vector<128x128xf32>
    %c0_17 = arith.constant 0 : index
    %c0_18 = arith.constant 0 : index
    %18 = vector.load %arg5[%c0_17, %c0_18] : memref<1x128xf32, #tpu.memory_space<vmem>>, vector<1x128xf32>
    %19 = vector.broadcast %18 : vector<1x128xf32> to vector<128x128xf32>
    %20 = arith.addf %17, %19 : vector<128x128xf32>
    %cst_19 = arith.constant 0.000000e+00 : f32
    %21 = vector.broadcast %cst_19 : f32 to vector<128x128xf32>
    %22 = arith.cmpf ogt, %20, %21 : vector<128x128xf32>
    %cst_20 = arith.constant 1.000000e-01 : f32
    %23 = vector.broadcast %cst_20 : f32 to vector<128x128xf32>
    %24 = arith.mulf %23, %20 : vector<128x128xf32>
    %25 = arith.select %22, %20, %24 : vector<128x128xi1>, vector<128x128xf32>
    %c0_21 = arith.constant 0 : index
    %c0_22 = arith.constant 0 : index
    %26 = vector.load %arg6[%c0_21, %c0_22] : memref<128x128xf32, #tpu.memory_space<vmem>>, vector<128x128xf32>
    tpu.vector_store %arg6[%c0_21, %c0_22], %25 {strides = array<i32>} : memref<128x128xf32, #tpu.memory_space<vmem>>, vector<128x128xf32>,
    return
  }
}

module attributes {stable_mosaic.version = 11 : i64} {
  func.func @_conv_kernel(%arg0: memref<2x8x8x16xf32, #tpu.memory_space<vmem>>, %arg1: memref<16x128xbf16, #tpu.memory_space<vmem>>, %arg2: memref<1x128xf32, #tpu.memory_space<vmem>>, %arg3: memref<128x128xf32, #tpu.memory_space<vmem>>) attributes {dimension_semantics = [], scalar_prefetch = 0 : i64, scratch_operands = 0 : i64, tpu.core_type = #tpu.core_type<tc>} {
    %c0 = arith.constant 0 : index
    %c0_0 = arith.constant 0 : index
    %c0_1 = arith.constant 0 : index
    %c0_2 = arith.constant 0 : index
    %0 = vector.load %arg0[%c0, %c0_0, %c0_1, %c0_2] : memref<2x8x8x16xf32, #tpu.memory_space<vmem>>, vector<2x8x8x16xf32>
    %1 = vector.shape_cast %0 : vector<2x8x8x16xf32> to vector<128x16xf32>
    %2 = arith.truncf %1 : vector<128x16xf32> to vector<128x16xbf16>
    %c0_3 = arith.constant 0 : index
    %c0_4 = arith.constant 0 : index
    %3 = vector.load %arg1[%c0_3, %c0_4] : memref<16x128xbf16, #tpu.memory_space<vmem>>, vector<16x128xbf16>
    %cst = arith.constant dense<0.000000e+00> : vector<128x128xf32>
    %4 = tpu.matmul %2, %3, %cst {dimension_numbers = #tpu.dot_dimension_numbers<[1], [0], [0], [1], [0, 0, 1, 1], [], []>} : vector<128x16xbf16>, vector<16x128xbf16>, vector<128x128xf32> -> vector<128x128xf32>
    %c0_5 = arith.constant 0 : index
    %c0_6 = arith.constant 0 : index
    %5 = vector.load %arg2[%c0_5, %c0_6] : memref<1x128xf32, #tpu.memory_space<vmem>>, vector<1x128xf32>
    %6 = vector.broadcast %5 : vector<1x128xf32> to vector<128x128xf32>
    %7 = arith.addf %4, %6 : vector<128x128xf32>
    %cst_7 = arith.constant 0.000000e+00 : f32
    %8 = vector.broadcast %cst_7 : f32 to vector<128x128xf32>
    %9 = arith.cmpf ogt, %7, %8 : vector<128x128xf32>
    %cst_8 = arith.constant 1.000000e-01 : f32
    %10 = vector.broadcast %cst_8 : f32 to vector<128x128xf32>
    %11 = arith.mulf %10, %7 : vector<128x128xf32>
    %12 = arith.select %9, %7, %11 : vector<128x128xi1>, vector<128x128xf32>
    %c0_9 = arith.constant 0 : index
    %c0_10 = arith.constant 0 : index
    %13 = vector.load %arg3[%c0_9, %c0_10] : memref<128x128xf32, #tpu.memory_space<vmem>>, vector<128x128xf32>
    tpu.vector_store %arg3[%c0_9, %c0_10], %12 {strides = array<i32>} : memref<128x128xf32, #tpu.memory_space<vmem>>, vector<128x128xf32>,
    return
  }
}

module attributes {stable_mosaic.version = 11 : i64} {
  func.func @_conv_kernel(%arg0: memref<2x10x10x8xf32, #tpu.memory_space<vmem>>, %arg1: memref<72x128xbf16, #tpu.memory_space<vmem>>, %arg2: memref<1x128xf32, #tpu.memory_space<vmem>>, %arg3: memref<128x128xf32, #tpu.memory_space<vmem>>) attributes {dimension_semantics = [], scalar_prefetch = 0 : i64, scratch_operands = 0 : i64, tpu.core_type = #tpu.core_type<tc>} {
    %c0 = arith.constant 0 : index
    %c0_0 = arith.constant 0 : index
    %c0_1 = arith.constant 0 : index
    %c0_2 = arith.constant 0 : index
    %0 = vector.load %arg0[%c0, %c0_0, %c0_1, %c0_2] : memref<2x10x10x8xf32, #tpu.memory_space<vmem>>, vector<2x10x10x8xf32>
    %1 = vector.extract_strided_slice %0 {offsets = [0, 0, 0, 0], sizes = [2, 8, 8, 8], strides = [1, 1, 1, 1]} : vector<2x10x10x8xf32> to vector<2x8x8x8xf32>
    %2 = vector.extract_strided_slice %0 {offsets = [0, 0, 1, 0], sizes = [2, 8, 8, 8], strides = [1, 1, 1, 1]} : vector<2x10x10x8xf32> to vector<2x8x8x8xf32>
    %3 = vector.extract_strided_slice %0 {offsets = [0, 0, 2, 0], sizes = [2, 8, 8, 8], strides = [1, 1, 1, 1]} : vector<2x10x10x8xf32> to vector<2x8x8x8xf32>
    %4 = vector.extract_strided_slice %0 {offsets = [0, 1, 0, 0], sizes = [2, 8, 8, 8], strides = [1, 1, 1, 1]} : vector<2x10x10x8xf32> to vector<2x8x8x8xf32>
    %5 = vector.extract_strided_slice %0 {offsets = [0, 1, 1, 0], sizes = [2, 8, 8, 8], strides = [1, 1, 1, 1]} : vector<2x10x10x8xf32> to vector<2x8x8x8xf32>
    %6 = vector.extract_strided_slice %0 {offsets = [0, 1, 2, 0], sizes = [2, 8, 8, 8], strides = [1, 1, 1, 1]} : vector<2x10x10x8xf32> to vector<2x8x8x8xf32>
    %7 = vector.extract_strided_slice %0 {offsets = [0, 2, 0, 0], sizes = [2, 8, 8, 8], strides = [1, 1, 1, 1]} : vector<2x10x10x8xf32> to vector<2x8x8x8xf32>
    %8 = vector.extract_strided_slice %0 {offsets = [0, 2, 1, 0], sizes = [2, 8, 8, 8], strides = [1, 1, 1, 1]} : vector<2x10x10x8xf32> to vector<2x8x8x8xf32>
    %9 = vector.extract_strided_slice %0 {offsets = [0, 2, 2, 0], sizes = [2, 8, 8, 8], strides = [1, 1, 1, 1]} : vector<2x10x10x8xf32> to vector<2x8x8x8xf32>
    %10 = tpu.concatenate %1, %2, %3, %4, %5, %6, %7, %8, %9 in 3 : vector<2x8x8x8xf32>, vector<2x8x8x8xf32>, vector<2x8x8x8xf32>, vector<2x8x8x8xf32>, vector<2x8x8x8xf32>, vector<2x8x8x8xf32>, vector<2x8x8x8xf32>, vector<2x8x8x8xf32>, vector<2x8x8x8xf32> -> vector<2x8x8x72xf32>
    %11 = vector.shape_cast %10 : vector<2x8x8x72xf32> to vector<128x72xf32>
    %12 = arith.truncf %11 : vector<128x72xf32> to vector<128x72xbf16>
    %c0_3 = arith.constant 0 : index
    %c0_4 = arith.constant 0 : index
    %13 = vector.load %arg1[%c0_3, %c0_4] : memref<72x128xbf16, #tpu.memory_space<vmem>>, vector<72x128xbf16>
    %cst = arith.constant dense<0.000000e+00> : vector<128x128xf32>
    %14 = tpu.matmul %12, %13, %cst {dimension_numbers = #tpu.dot_dimension_numbers<[1], [0], [0], [1], [0, 0, 1, 1], [], []>} : vector<128x72xbf16>, vector<72x128xbf16>, vector<128x128xf32> -> vector<128x128xf32>
    %c0_5 = arith.constant 0 : index
    %c0_6 = arith.constant 0 : index
    %15 = vector.load %arg2[%c0_5, %c0_6] : memref<1x128xf32, #tpu.memory_space<vmem>>, vector<1x128xf32>
    %16 = vector.broadcast %15 : vector<1x128xf32> to vector<128x128xf32>
    %17 = arith.addf %14, %16 : vector<128x128xf32>
    %cst_7 = arith.constant 0.000000e+00 : f32
    %18 = vector.broadcast %cst_7 : f32 to vector<128x128xf32>
    %19 = arith.cmpf ogt, %17, %18 : vector<128x128xf32>
    %cst_8 = arith.constant 1.000000e-01 : f32
    %20 = vector.broadcast %cst_8 : f32 to vector<128x128xf32>
    %21 = arith.mulf %20, %17 : vector<128x128xf32>
    %22 = arith.select %19, %17, %21 : vector<128x128xi1>, vector<128x128xf32>
    %c0_9 = arith.constant 0 : index
    %c0_10 = arith.constant 0 : index
    %23 = vector.load %arg3[%c0_9, %c0_10] : memref<128x128xf32, #tpu.memory_space<vmem>>, vector<128x128xf32>
    tpu.vector_store %arg3[%c0_9, %c0_10], %22 {strides = array<i32>} : memref<128x128xf32, #tpu.memory_space<vmem>>, vector<128x128xf32>,
    return
  }
}

module attributes {stable_mosaic.version = 11 : i64} {
  func.func @_add_kernel(%arg0: memref<16x128xf32, #tpu.memory_space<vmem>>, %arg1: memref<16x128xf32, #tpu.memory_space<vmem>>, %arg2: memref<16x128xf32, #tpu.memory_space<vmem>>) attributes {dimension_semantics = [], scalar_prefetch = 0 : i64, scratch_operands = 0 : i64, tpu.core_type = #tpu.core_type<tc>} {
    %c0 = arith.constant 0 : index
    %c0_0 = arith.constant 0 : index
    %0 = vector.load %arg0[%c0, %c0_0] : memref<16x128xf32, #tpu.memory_space<vmem>>, vector<16x128xf32>
    %c0_1 = arith.constant 0 : index
    %c0_2 = arith.constant 0 : index
    %1 = vector.load %arg1[%c0_1, %c0_2] : memref<16x128xf32, #tpu.memory_space<vmem>>, vector<16x128xf32>
    %2 = arith.addf %0, %1 : vector<16x128xf32>
    %c0_3 = arith.constant 0 : index
    %c0_4 = arith.constant 0 : index
    %3 = vector.load %arg2[%c0_3, %c0_4] : memref<16x128xf32, #tpu.memory_space<vmem>>, vector<16x128xf32>
    tpu.vector_store %arg2[%c0_3, %c0_4], %2 {strides = array<i32>} : memref<16x128xf32, #tpu.memory_space<vmem>>, vector<16x128xf32>,
    return
  }
}

module attributes {stable_mosaic.version = 11 : i64} {
  func.func @_conv_kernel(%arg0: memref<2x5x9x16xf32, #tpu.memory_space<vmem>>, %arg1: memref<2x5x9x16xf32, #tpu.memory_space<vmem>>, %arg2: memref<2x5x9x16xf32, #tpu.memory_space<vmem>>, %arg3: memref<2x5x9x16xf32, #tpu.memory_space<vmem>>, %arg4: memref<144x128xbf16, #tpu.memory_space<vmem>>, %arg5: memref<1x128xf32, #tpu.memory_space<vmem>>, %arg6: memref<64x128xf32, #tpu.memory_space<vmem>>) attributes {dimension_semantics = [], scalar_prefetch = 0 : i64, scratch_operands = 0 : i64, tpu.core_type = #tpu.core_type<tc>} {
    %c0 = arith.constant 0 : index
    %c0_0 = arith.constant 0 : index
    %c0_1 = arith.constant 0 : index
    %c0_2 = arith.constant 0 : index
    %0 = vector.load %arg0[%c0, %c0_0, %c0_1, %c0_2] : memref<2x5x9x16xf32, #tpu.memory_space<vmem>>, vector<2x5x9x16xf32>
    %c0_3 = arith.constant 0 : index
    %c0_4 = arith.constant 0 : index
    %c0_5 = arith.constant 0 : index
    %c0_6 = arith.constant 0 : index
    %1 = vector.load %arg1[%c0_3, %c0_4, %c0_5, %c0_6] : memref<2x5x9x16xf32, #tpu.memory_space<vmem>>, vector<2x5x9x16xf32>
    %c0_7 = arith.constant 0 : index
    %c0_8 = arith.constant 0 : index
    %c0_9 = arith.constant 0 : index
    %c0_10 = arith.constant 0 : index
    %2 = vector.load %arg2[%c0_7, %c0_8, %c0_9, %c0_10] : memref<2x5x9x16xf32, #tpu.memory_space<vmem>>, vector<2x5x9x16xf32>
    %c0_11 = arith.constant 0 : index
    %c0_12 = arith.constant 0 : index
    %c0_13 = arith.constant 0 : index
    %c0_14 = arith.constant 0 : index
    %3 = vector.load %arg3[%c0_11, %c0_12, %c0_13, %c0_14] : memref<2x5x9x16xf32, #tpu.memory_space<vmem>>, vector<2x5x9x16xf32>
    %4 = vector.extract_strided_slice %0 {offsets = [0, 0, 0, 0], sizes = [2, 4, 8, 16], strides = [1, 1, 1, 1]} : vector<2x5x9x16xf32> to vector<2x4x8x16xf32>
    %5 = vector.extract_strided_slice %1 {offsets = [0, 0, 0, 0], sizes = [2, 4, 8, 16], strides = [1, 1, 1, 1]} : vector<2x5x9x16xf32> to vector<2x4x8x16xf32>
    %6 = vector.extract_strided_slice %0 {offsets = [0, 0, 1, 0], sizes = [2, 4, 8, 16], strides = [1, 1, 1, 1]} : vector<2x5x9x16xf32> to vector<2x4x8x16xf32>
    %7 = vector.extract_strided_slice %2 {offsets = [0, 0, 0, 0], sizes = [2, 4, 8, 16], strides = [1, 1, 1, 1]} : vector<2x5x9x16xf32> to vector<2x4x8x16xf32>
    %8 = vector.extract_strided_slice %3 {offsets = [0, 0, 0, 0], sizes = [2, 4, 8, 16], strides = [1, 1, 1, 1]} : vector<2x5x9x16xf32> to vector<2x4x8x16xf32>
    %9 = vector.extract_strided_slice %2 {offsets = [0, 0, 1, 0], sizes = [2, 4, 8, 16], strides = [1, 1, 1, 1]} : vector<2x5x9x16xf32> to vector<2x4x8x16xf32>
    %10 = vector.extract_strided_slice %0 {offsets = [0, 1, 0, 0], sizes = [2, 4, 8, 16], strides = [1, 1, 1, 1]} : vector<2x5x9x16xf32> to vector<2x4x8x16xf32>
    %11 = vector.extract_strided_slice %1 {offsets = [0, 1, 0, 0], sizes = [2, 4, 8, 16], strides = [1, 1, 1, 1]} : vector<2x5x9x16xf32> to vector<2x4x8x16xf32>
    %12 = vector.extract_strided_slice %0 {offsets = [0, 1, 1, 0], sizes = [2, 4, 8, 16], strides = [1, 1, 1, 1]} : vector<2x5x9x16xf32> to vector<2x4x8x16xf32>
    %13 = tpu.concatenate %4, %5, %6, %7, %8, %9, %10, %11, %12 in 3 : vector<2x4x8x16xf32>, vector<2x4x8x16xf32>, vector<2x4x8x16xf32>, vector<2x4x8x16xf32>, vector<2x4x8x16xf32>, vector<2x4x8x16xf32>, vector<2x4x8x16xf32>, vector<2x4x8x16xf32>, vector<2x4x8x16xf32> -> vector<2x4x8x144xf32>
    %14 = vector.shape_cast %13 : vector<2x4x8x144xf32> to vector<64x144xf32>
    %15 = arith.truncf %14 : vector<64x144xf32> to vector<64x144xbf16>
    %c0_15 = arith.constant 0 : index
    %c0_16 = arith.constant 0 : index
    %16 = vector.load %arg4[%c0_15, %c0_16] : memref<144x128xbf16, #tpu.memory_space<vmem>>, vector<144x128xbf16>
    %cst = arith.constant dense<0.000000e+00> : vector<64x128xf32>
    %17 = tpu.matmul %15, %16, %cst {dimension_numbers = #tpu.dot_dimension_numbers<[1], [0], [0], [1], [0, 0, 1, 1], [], []>} : vector<64x144xbf16>, vector<144x128xbf16>, vector<64x128xf32> -> vector<64x128xf32>
    %c0_17 = arith.constant 0 : index
    %c0_18 = arith.constant 0 : index
    %18 = vector.load %arg5[%c0_17, %c0_18] : memref<1x128xf32, #tpu.memory_space<vmem>>, vector<1x128xf32>
    %19 = vector.broadcast %18 : vector<1x128xf32> to vector<64x128xf32>
    %20 = arith.addf %17, %19 : vector<64x128xf32>
    %cst_19 = arith.constant 0.000000e+00 : f32
    %21 = vector.broadcast %cst_19 : f32 to vector<64x128xf32>
    %22 = arith.cmpf ogt, %20, %21 : vector<64x128xf32>
    %cst_20 = arith.constant 1.000000e-01 : f32
    %23 = vector.broadcast %cst_20 : f32 to vector<64x128xf32>
    %24 = arith.mulf %23, %20 : vector<64x128xf32>
    %25 = arith.select %22, %20, %24 : vector<64x128xi1>, vector<64x128xf32>
    %c0_21 = arith.constant 0 : index
    %c0_22 = arith.constant 0 : index
    %26 = vector.load %arg6[%c0_21, %c0_22] : memref<64x128xf32, #tpu.memory_space<vmem>>, vector<64x128xf32>
    tpu.vector_store %arg6[%c0_21, %c0_22], %25 {strides = array<i32>} : memref<64x128xf32, #tpu.memory_space<vmem>>, vector<64x128xf32>,
    return
  }
}

module attributes {stable_mosaic.version = 11 : i64} {
  func.func @_conv_yolo_kernel(%arg0: memref<2x8x8x16xf32, #tpu.memory_space<vmem>>, %arg1: memref<16x128xbf16, #tpu.memory_space<vmem>>, %arg2: memref<1x128xf32, #tpu.memory_space<vmem>>, %arg3: memref<128x128xf32, #tpu.memory_space<vmem>>, %arg4: memref<128x128xf32, #tpu.memory_space<vmem>>, %arg5: memref<128x128xi32, #tpu.memory_space<vmem>>, %arg6: memref<128x128xf32, #tpu.memory_space<vmem>>) attributes {dimension_semantics = [], scalar_prefetch = 0 : i64, scratch_operands = 0 : i64, tpu.core_type = #tpu.core_type<tc>} {
    %c0 = arith.constant 0 : index
    %c0_0 = arith.constant 0 : index
    %c0_1 = arith.constant 0 : index
    %c0_2 = arith.constant 0 : index
    %0 = vector.load %arg0[%c0, %c0_0, %c0_1, %c0_2] : memref<2x8x8x16xf32, #tpu.memory_space<vmem>>, vector<2x8x8x16xf32>
    %1 = vector.shape_cast %0 : vector<2x8x8x16xf32> to vector<128x16xf32>
    %2 = arith.truncf %1 : vector<128x16xf32> to vector<128x16xbf16>
    %c0_3 = arith.constant 0 : index
    %c0_4 = arith.constant 0 : index
    %3 = vector.load %arg1[%c0_3, %c0_4] : memref<16x128xbf16, #tpu.memory_space<vmem>>, vector<16x128xbf16>
    %cst = arith.constant dense<0.000000e+00> : vector<128x128xf32>
    %4 = tpu.matmul %2, %3, %cst {dimension_numbers = #tpu.dot_dimension_numbers<[1], [0], [0], [1], [0, 0, 1, 1], [], []>} : vector<128x16xbf16>, vector<16x128xbf16>, vector<128x128xf32> -> vector<128x128xf32>
    %c0_5 = arith.constant 0 : index
    %c0_6 = arith.constant 0 : index
    %5 = vector.load %arg2[%c0_5, %c0_6] : memref<1x128xf32, #tpu.memory_space<vmem>>, vector<1x128xf32>
    %6 = vector.broadcast %5 : vector<1x128xf32> to vector<128x128xf32>
    %7 = arith.addf %4, %6 : vector<128x128xf32>
    %c0_7 = arith.constant 0 : index
    %c0_8 = arith.constant 0 : index
    %8 = vector.load %arg5[%c0_7, %c0_8] : memref<128x128xi32, #tpu.memory_space<vmem>>, vector<128x128xi32>
    %9 = arith.negf %7 : vector<128x128xf32>
    %10 = math.exp %9 : vector<128x128xf32>
    %cst_9 = arith.constant 1.000000e+00 : f32
    %11 = vector.broadcast %cst_9 : f32 to vector<128x128xf32>
    %12 = arith.addf %11, %10 : vector<128x128xf32>
    %13 = arith.divf %11, %12 : vector<128x128xf32>
    %c0_10 = arith.constant 0 : index
    %c0_11 = arith.constant 0 : index
    %14 = vector.load %arg3[%c0_10, %c0_11] : memref<128x128xf32, #tpu.memory_space<vmem>>, vector<128x128xf32>
    %15 = arith.addf %13, %14 : vector<128x128xf32>
    %cst_12 = arith.constant 2.000000e+00 : f32
    %16 = vector.broadcast %cst_12 : f32 to vector<128x128xf32>
    %17 = arith.mulf %15, %16 : vector<128x128xf32>
    %18 = math.exp %7 : vector<128x128xf32>
    %c0_13 = arith.constant 0 : index
    %c0_14 = arith.constant 0 : index
    %19 = vector.load %arg4[%c0_13, %c0_14] : memref<128x128xf32, #tpu.memory_space<vmem>>, vector<128x128xf32>
    %20 = arith.mulf %18, %19 : vector<128x128xf32>
    %c0_i32 = arith.constant 0 : i32
    %21 = vector.broadcast %c0_i32 : i32 to vector<128x128xi32>
    %22 = arith.cmpi eq, %8, %21 : vector<128x128xi32>
    %c1_i32 = arith.constant 1 : i32
    %23 = vector.broadcast %c1_i32 : i32 to vector<128x128xi32>
    %24 = arith.cmpi eq, %8, %23 : vector<128x128xi32>
    %25 = arith.select %24, %20, %13 : vector<128x128xi1>, vector<128x128xf32>
    %26 = arith.select %22, %17, %25 : vector<128x128xi1>, vector<128x128xf32>
    %c0_15 = arith.constant 0 : index
    %c0_16 = arith.constant 0 : index
    %27 = vector.load %arg6[%c0_15, %c0_16] : memref<128x128xf32, #tpu.memory_space<vmem>>, vector<128x128xf32>
    tpu.vector_store %arg6[%c0_15, %c0_16], %26 {strides = array<i32>} : memref<128x128xf32, #tpu.memory_space<vmem>>, vector<128x128xf32>,
    return
  }
}

module attributes {stable_mosaic.version = 11 : i64} {
  func.func @_conv_kernel(%arg0: memref<2x10x10x32xf32, #tpu.memory_space<vmem>>, %arg1: memref<288x128xbf16, #tpu.memory_space<vmem>>, %arg2: memref<1x128xf32, #tpu.memory_space<vmem>>, %arg3: memref<128x128xf32, #tpu.memory_space<vmem>>) attributes {dimension_semantics = [], scalar_prefetch = 0 : i64, scratch_operands = 0 : i64, tpu.core_type = #tpu.core_type<tc>} {
    %c0 = arith.constant 0 : index
    %c0_0 = arith.constant 0 : index
    %c0_1 = arith.constant 0 : index
    %c0_2 = arith.constant 0 : index
    %0 = vector.load %arg0[%c0, %c0_0, %c0_1, %c0_2] : memref<2x10x10x32xf32, #tpu.memory_space<vmem>>, vector<2x10x10x32xf32>
    %1 = vector.extract_strided_slice %0 {offsets = [0, 0, 0, 0], sizes = [2, 8, 8, 32], strides = [1, 1, 1, 1]} : vector<2x10x10x32xf32> to vector<2x8x8x32xf32>
    %2 = vector.extract_strided_slice %0 {offsets = [0, 0, 1, 0], sizes = [2, 8, 8, 32], strides = [1, 1, 1, 1]} : vector<2x10x10x32xf32> to vector<2x8x8x32xf32>
    %3 = vector.extract_strided_slice %0 {offsets = [0, 0, 2, 0], sizes = [2, 8, 8, 32], strides = [1, 1, 1, 1]} : vector<2x10x10x32xf32> to vector<2x8x8x32xf32>
    %4 = vector.extract_strided_slice %0 {offsets = [0, 1, 0, 0], sizes = [2, 8, 8, 32], strides = [1, 1, 1, 1]} : vector<2x10x10x32xf32> to vector<2x8x8x32xf32>
    %5 = vector.extract_strided_slice %0 {offsets = [0, 1, 1, 0], sizes = [2, 8, 8, 32], strides = [1, 1, 1, 1]} : vector<2x10x10x32xf32> to vector<2x8x8x32xf32>
    %6 = vector.extract_strided_slice %0 {offsets = [0, 1, 2, 0], sizes = [2, 8, 8, 32], strides = [1, 1, 1, 1]} : vector<2x10x10x32xf32> to vector<2x8x8x32xf32>
    %7 = vector.extract_strided_slice %0 {offsets = [0, 2, 0, 0], sizes = [2, 8, 8, 32], strides = [1, 1, 1, 1]} : vector<2x10x10x32xf32> to vector<2x8x8x32xf32>
    %8 = vector.extract_strided_slice %0 {offsets = [0, 2, 1, 0], sizes = [2, 8, 8, 32], strides = [1, 1, 1, 1]} : vector<2x10x10x32xf32> to vector<2x8x8x32xf32>
    %9 = vector.extract_strided_slice %0 {offsets = [0, 2, 2, 0], sizes = [2, 8, 8, 32], strides = [1, 1, 1, 1]} : vector<2x10x10x32xf32> to vector<2x8x8x32xf32>
    %10 = tpu.concatenate %1, %2, %3, %4, %5, %6, %7, %8, %9 in 3 : vector<2x8x8x32xf32>, vector<2x8x8x32xf32>, vector<2x8x8x32xf32>, vector<2x8x8x32xf32>, vector<2x8x8x32xf32>, vector<2x8x8x32xf32>, vector<2x8x8x32xf32>, vector<2x8x8x32xf32>, vector<2x8x8x32xf32> -> vector<2x8x8x288xf32>
    %11 = vector.shape_cast %10 : vector<2x8x8x288xf32> to vector<128x288xf32>
    %12 = arith.truncf %11 : vector<128x288xf32> to vector<128x288xbf16>
    %c0_3 = arith.constant 0 : index
    %c0_4 = arith.constant 0 : index
    %13 = vector.load %arg1[%c0_3, %c0_4] : memref<288x128xbf16, #tpu.memory_space<vmem>>, vector<288x128xbf16>
    %cst = arith.constant dense<0.000000e+00> : vector<128x128xf32>
    %14 = tpu.matmul %12, %13, %cst {dimension_numbers = #tpu.dot_dimension_numbers<[1], [0], [0], [1], [0, 0, 1, 1], [], []>} : vector<128x288xbf16>, vector<288x128xbf16>, vector<128x128xf32> -> vector<128x128xf32>
    %c0_5 = arith.constant 0 : index
    %c0_6 = arith.constant 0 : index
    %15 = vector.load %arg2[%c0_5, %c0_6] : memref<1x128xf32, #tpu.memory_space<vmem>>, vector<1x128xf32>
    %16 = vector.broadcast %15 : vector<1x128xf32> to vector<128x128xf32>
    %17 = arith.addf %14, %16 : vector<128x128xf32>
    %cst_7 = arith.constant 0.000000e+00 : f32
    %18 = vector.broadcast %cst_7 : f32 to vector<128x128xf32>
    %19 = arith.cmpf ogt, %17, %18 : vector<128x128xf32>
    %cst_8 = arith.constant 1.000000e-01 : f32
    %20 = vector.broadcast %cst_8 : f32 to vector<128x128xf32>
    %21 = arith.mulf %20, %17 : vector<128x128xf32>
    %22 = arith.select %19, %17, %21 : vector<128x128xi1>, vector<128x128xf32>
    %c0_9 = arith.constant 0 : index
    %c0_10 = arith.constant 0 : index
    %23 = vector.load %arg3[%c0_9, %c0_10] : memref<128x128xf32, #tpu.memory_space<vmem>>, vector<128x128xf32>
    tpu.vector_store %arg3[%c0_9, %c0_10], %22 {strides = array<i32>} : memref<128x128xf32, #tpu.memory_space<vmem>>, vector<128x128xf32>,
    return
  }
}

module attributes {stable_mosaic.version = 11 : i64} {
  func.func @_conv_yolo_kernel(%arg0: memref<2x4x8x16xf32, #tpu.memory_space<vmem>>, %arg1: memref<16x128xbf16, #tpu.memory_space<vmem>>, %arg2: memref<1x128xf32, #tpu.memory_space<vmem>>, %arg3: memref<64x128xf32, #tpu.memory_space<vmem>>, %arg4: memref<64x128xf32, #tpu.memory_space<vmem>>, %arg5: memref<64x128xi32, #tpu.memory_space<vmem>>, %arg6: memref<64x128xf32, #tpu.memory_space<vmem>>) attributes {dimension_semantics = [], scalar_prefetch = 0 : i64, scratch_operands = 0 : i64, tpu.core_type = #tpu.core_type<tc>} {
    %c0 = arith.constant 0 : index
    %c0_0 = arith.constant 0 : index
    %c0_1 = arith.constant 0 : index
    %c0_2 = arith.constant 0 : index
    %0 = vector.load %arg0[%c0, %c0_0, %c0_1, %c0_2] : memref<2x4x8x16xf32, #tpu.memory_space<vmem>>, vector<2x4x8x16xf32>
    %1 = vector.shape_cast %0 : vector<2x4x8x16xf32> to vector<64x16xf32>
    %2 = arith.truncf %1 : vector<64x16xf32> to vector<64x16xbf16>
    %c0_3 = arith.constant 0 : index
    %c0_4 = arith.constant 0 : index
    %3 = vector.load %arg1[%c0_3, %c0_4] : memref<16x128xbf16, #tpu.memory_space<vmem>>, vector<16x128xbf16>
    %cst = arith.constant dense<0.000000e+00> : vector<64x128xf32>
    %4 = tpu.matmul %2, %3, %cst {dimension_numbers = #tpu.dot_dimension_numbers<[1], [0], [0], [1], [0, 0, 1, 1], [], []>} : vector<64x16xbf16>, vector<16x128xbf16>, vector<64x128xf32> -> vector<64x128xf32>
    %c0_5 = arith.constant 0 : index
    %c0_6 = arith.constant 0 : index
    %5 = vector.load %arg2[%c0_5, %c0_6] : memref<1x128xf32, #tpu.memory_space<vmem>>, vector<1x128xf32>
    %6 = vector.broadcast %5 : vector<1x128xf32> to vector<64x128xf32>
    %7 = arith.addf %4, %6 : vector<64x128xf32>
    %c0_7 = arith.constant 0 : index
    %c0_8 = arith.constant 0 : index
    %8 = vector.load %arg5[%c0_7, %c0_8] : memref<64x128xi32, #tpu.memory_space<vmem>>, vector<64x128xi32>
    %9 = arith.negf %7 : vector<64x128xf32>
    %10 = math.exp %9 : vector<64x128xf32>
    %cst_9 = arith.constant 1.000000e+00 : f32
    %11 = vector.broadcast %cst_9 : f32 to vector<64x128xf32>
    %12 = arith.addf %11, %10 : vector<64x128xf32>
    %13 = arith.divf %11, %12 : vector<64x128xf32>
    %c0_10 = arith.constant 0 : index
    %c0_11 = arith.constant 0 : index
    %14 = vector.load %arg3[%c0_10, %c0_11] : memref<64x128xf32, #tpu.memory_space<vmem>>, vector<64x128xf32>
    %15 = arith.addf %13, %14 : vector<64x128xf32>
    %cst_12 = arith.constant 4.000000e+00 : f32
    %16 = vector.broadcast %cst_12 : f32 to vector<64x128xf32>
    %17 = arith.mulf %15, %16 : vector<64x128xf32>
    %18 = math.exp %7 : vector<64x128xf32>
    %c0_13 = arith.constant 0 : index
    %c0_14 = arith.constant 0 : index
    %19 = vector.load %arg4[%c0_13, %c0_14] : memref<64x128xf32, #tpu.memory_space<vmem>>, vector<64x128xf32>
    %20 = arith.mulf %18, %19 : vector<64x128xf32>
    %c0_i32 = arith.constant 0 : i32
    %21 = vector.broadcast %c0_i32 : i32 to vector<64x128xi32>
    %22 = arith.cmpi eq, %8, %21 : vector<64x128xi32>
    %c1_i32 = arith.constant 1 : i32
    %23 = vector.broadcast %c1_i32 : i32 to vector<64x128xi32>
    %24 = arith.cmpi eq, %8, %23 : vector<64x128xi32>
    %25 = arith.select %24, %20, %13 : vector<64x128xi1>, vector<64x128xf32>
    %26 = arith.select %22, %17, %25 : vector<64x128xi1>, vector<64x128xf32>
    %c0_15 = arith.constant 0 : index
    %c0_16 = arith.constant 0 : index
    %27 = vector.load %arg6[%c0_15, %c0_16] : memref<64x128xf32, #tpu.memory_space<vmem>>, vector<64x128xf32>
    tpu.vector_store %arg6[%c0_15, %c0_16], %26 {strides = array<i32>} : memref<64x128xf32, #tpu.memory_space<vmem>>, vector<64x128xf32>,
    return
  }
}

</mosaic_0001>

<llo_original>
// kernel: darknet_forward.11
$region0: #{darknet_forward.11}
  #allocation0 [shape = 'u32[]', space=smem, size = 0x4, offset = 0x4, fixed_abs, tag = 'smem constant byte address 0x4 - core index']
  #allocation1 [shape = 'u32[72,128]{1,0:T(1,128)}', space=vmem, size = 0x9000, scoped, tag = 'internal scratch']
  %s0 = inlined_call_operand.vmem [shape: f32[2,8,8,16], index: 0, kind: input, shape index: {}]
  %s1 = inlined_call_operand.vmem [shape: bf16[16,128], index: 1, kind: input, shape index: {}]
  %s2 = inlined_call_operand.vmem [shape: f32[1,128], index: 2, kind: input, shape index: {}]
  %s3 = inlined_call_operand.vmem [shape: f32[128,128], index: 3, kind: output, shape index: {}]
  %s4 = sld [smem:[#allocation0]]
  $region22: #{darknet_forward.11} parent=0
    _
  %s6 = ssub.s32 1, %s4
  %s7 = scalar_select 0, %s6, %s4
  // Predicated region
  $region2: #{darknet_forward.11} parent=0 // pred_check
    _
  $region3: #{darknet_forward.11} parent=0 // pred_check_branch
    %9 = sbr.rel (0) target = $region5
  $region4: #{darknet_forward.11} parent=0 // pred_region
    _
  $region5: #{darknet_forward.11} parent=0 // pred_fallthru
    _
  // Predicated region
  $region6: #{darknet_forward.11} parent=0 // pred_check
    _
  $region7: #{darknet_forward.11} parent=0 // pred_check_branch
    %11 = sbr.rel (0) target = $region9
  $region8: #{darknet_forward.11} parent=0 // pred_region
    _
  $region9: #{darknet_forward.11} parent=0 // pred_fallthru
    _
  // Predicated region
  $region10: #{darknet_forward.11} parent=0 // pred_check
    _
  $region11: #{darknet_forward.11} parent=0 // pred_check_branch
    %13 = sbr.rel (0) target = $region13
  $region12: #{darknet_forward.11} parent=0 // pred_region
    _
  $region13: #{darknet_forward.11} parent=0 // pred_fallthru
    _
  %v15 = vld [vmem:[%s0] sm:$0xff]
  %v16 = vld [vmem:[%s0 + $0x8] sm:$0xff]
  %v17 = vld [vmem:[%s0 + $0x10] sm:$0xff]
  %v18 = vld [vmem:[%s0 + $0x18] sm:$0xff]
  %v19 = vld [vmem:[%s0 + $0x20] sm:$0xff]
  %v20 = vld [vmem:[%s0 + $0x28] sm:$0xff]
  %v21 = vld [vmem:[%s0 + $0x30] sm:$0xff]
  %v22 = vld [vmem:[%s0 + $0x38] sm:$0xff]
  %v23 = vld [vmem:[%s0 + $0x40] sm:$0xff]
  %v24 = vld [vmem:[%s0 + $0x48] sm:$0xff]
  %v25 = vld [vmem:[%s0 + $0x50] sm:$0xff]
  %v26 = vld [vmem:[%s0 + $0x58] sm:$0xff]
  %v27 = vld [vmem:[%s0 + $0x60] sm:$0xff]
  %v28 = vld [vmem:[%s0 + $0x68] sm:$0xff]
  %v29 = vld [vmem:[%s0 + $0x70] sm:$0xff]
  %v30 = vld [vmem:[%s0 + $0x78] sm:$0xff]
  %v31 = vpack.c.bf16 %v16, %v15
  %v32 = vpack.c.bf16 %v18, %v17
  %v33 = vpack.c.bf16 %v20, %v19
  %v34 = vpack.c.bf16 %v22, %v21
  %v35 = vpack.c.bf16 %v24, %v23
  %v36 = vpack.c.bf16 %v26, %v25
  %v37 = vpack.c.bf16 %v28, %v27
  %v38 = vpack.c.bf16 %v30, %v29
  %v39 = vld [vmem:[%s1] sm:$0xf]
  %v40 = vld [vmem:[%s1 + $0x4] sm:$0xf]
  %v41 = vld [vmem:[%s2] sm:$0x1]
  %v43 = vperm.slane %v41, 0
  %v47 = vunpack.c.l.b16 %v39
  %v48 = vunpack.c.l.b16 %v40
  %v49 = vpack.c.b16 %v48, %v47
  %vm51 = vcmask 130048
  %v53 = vsel %vm51, %v31, 0
  %v56 = vsel %vm51, %v32, 0
  %v59 = vsel %vm51, %v33, 0
  %v62 = vsel %vm51, %v34, 0
  %v65 = vsel %vm51, %v35, 0
  %v68 = vsel %vm51, %v36, 0
  %v71 = vsel %vm51, %v37, 0
  %v74 = vsel %vm51, %v38, 0
  %76 = vmatpush.bf16.msra.mxu0 0
  %77 = vmatpush.bf16.msra.mxu0 0
  %78 = vmatpush.bf16.msra.mxu0 0
  %79 = vmatpush.bf16.msra.mxu0 0
  %80 = vmatpush.bf16.msra.mxu0 0
  %81 = vmatpush.bf16.msra.mxu0 0
  %82 = vmatpush.bf16.msra.mxu0 0
  %83 = vmatpush.bf16.msra.mxu0 %v49
  %84 = vmatmul.bf16.gmra.mxu0 %v53
  %v85 = vpop.f32.mrf.mxu0
  %v86 = vadd.f32 %v43, %v85
  %v87 = vpop.f32.mrf.mxu0
  %v88 = vadd.f32 %v43, %v87
  %89 = vmatmul.bf16.gmra.mxu0 %v56
  %v90 = vpop.f32.mrf.mxu0
  %v91 = vadd.f32 %v43, %v90
  %v92 = vpop.f32.mrf.mxu0
  %v93 = vadd.f32 %v43, %v92
  %94 = vmatmul.bf16.gmra.mxu0 %v59
  %v95 = vpop.f32.mrf.mxu0
  %v96 = vadd.f32 %v43, %v95
  %v97 = vpop.f32.mrf.mxu0
  %v98 = vadd.f32 %v43, %v97
  %99 = vmatmul.bf16.gmra.mxu0 %v62
  %v100 = vpop.f32.mrf.mxu0
  %v101 = vadd.f32 %v43, %v100
  %v102 = vpop.f32.mrf.mxu0
  %v103 = vadd.f32 %v43, %v102
  %104 = vmatmul.bf16.gmra.mxu0 %v65
  %v105 = vpop.f32.mrf.mxu0
  %v106 = vadd.f32 %v43, %v105
  %v107 = vpop.f32.mrf.mxu0
  %v108 = vadd.f32 %v43, %v107
  %109 = vmatmul.bf16.gmra.mxu0 %v68
  %v110 = vpop.f32.mrf.mxu0
  %v111 = vadd.f32 %v43, %v110
  %v112 = vpop.f32.mrf.mxu0
  %v113 = vadd.f32 %v43, %v112
  %114 = vmatmul.bf16.gmra.mxu0 %v71
  %v115 = vpop.f32.mrf.mxu0
  %v116 = vadd.f32 %v43, %v115
  %v117 = vpop.f32.mrf.mxu0
  %v118 = vadd.f32 %v43, %v117
  %119 = vmatmul.bf16.gmra.mxu0 %v74
  %v120 = vpop.f32.mrf.mxu0
  %v121 = vadd.f32 %v43, %v120
  %v122 = vpop.f32.mrf.mxu0
  %v123 = vadd.f32 %v43, %v122
  %124 = vdwg.mxu0
  %vm125 = vcmp.gt.f32.partialorder %v86, 0.0
  %vm126 = vcmp.gt.f32.partialorder %v88, 0.0
  %vm127 = vcmp.gt.f32.partialorder %v91, 0.0
  %vm128 = vcmp.gt.f32.partialorder %v93, 0.0
  %vm129 = vcmp.gt.f32.partialorder %v96, 0.0
  %vm130 = vcmp.gt.f32.partialorder %v98, 0.0
  %vm131 = vcmp.gt.f32.partialorder %v101, 0.0
  %vm132 = vcmp.gt.f32.partialorder %v103, 0.0
  %vm133 = vcmp.gt.f32.partialorder %v106, 0.0
  %vm134 = vcmp.gt.f32.partialorder %v108, 0.0
  %vm135 = vcmp.gt.f32.partialorder %v111, 0.0
  %vm136 = vcmp.gt.f32.partialorder %v113, 0.0
  %vm137 = vcmp.gt.f32.partialorder %v116, 0.0
  %vm138 = vcmp.gt.f32.partialorder %v118, 0.0
  %vm139 = vcmp.gt.f32.partialorder %v121, 0.0
  %vm140 = vcmp.gt.f32.partialorder %v123, 0.0
  %v141 = vmul.f32 %v86, 0.1
  %v142 = vmul.f32 %v88, 0.1
  %v143 = vmul.f32 %v91, 0.1
  %v144 = vmul.f32 %v93, 0.1
  %v145 = vmul.f32 %v96, 0.1
  %v146 = vmul.f32 %v98, 0.1
  %v147 = vmul.f32 %v101, 0.1
  %v148 = vmul.f32 %v103, 0.1
  %v149 = vmul.f32 %v106, 0.1
  %v150 = vmul.f32 %v108, 0.1
  %v151 = vmul.f32 %v111, 0.1
  %v152 = vmul.f32 %v113, 0.1
  %v153 = vmul.f32 %v116, 0.1
  %v154 = vmul.f32 %v118, 0.1
  %v155 = vmul.f32 %v121, 0.1
  %v156 = vmul.f32 %v123, 0.1
  %v157 = vsel %vm125, %v86, %v141
  %v158 = vsel %vm126, %v88, %v142
  %v159 = vsel %vm127, %v91, %v143
  %v160 = vsel %vm128, %v93, %v144
  %v161 = vsel %vm129, %v96, %v145
  %v162 = vsel %vm130, %v98, %v146
  %v163 = vsel %vm131, %v101, %v147
  %v164 = vsel %vm132, %v103, %v148
  %v165 = vsel %vm133, %v106, %v149
  %v166 = vsel %vm134, %v108, %v150
  %v167 = vsel %vm135, %v111, %v151
  %v168 = vsel %vm136, %v113, %v152
  %v169 = vsel %vm137, %v116, %v153
  %v170 = vsel %vm138, %v118, %v154
  %v171 = vsel %vm139, %v121, %v155
  %v172 = vsel %vm140, %v123, %v156
  %173 = vst [vmem:[%s3] sm:$0xff] %v157
  %174 = vst [vmem:[%s3 + $0x8] sm:$0xff] %v158
  %175 = vst [vmem:[%s3 + $0x10] sm:$0xff] %v159
  %176 = vst [vmem:[%s3 + $0x18] sm:$0xff] %v160
  %177 = vst [vmem:[%s3 + $0x20] sm:$0xff] %v161
  %178 = vst [vmem:[%s3 + $0x28] sm:$0xff] %v162
  %179 = vst [vmem:[%s3 + $0x30] sm:$0xff] %v163
  %180 = vst [vmem:[%s3 + $0x38] sm:$0xff] %v164
  %181 = vst [vmem:[%s3 + $0x40] sm:$0xff] %v165
  %182 = vst [vmem:[%s3 + $0x48] sm:$0xff] %v166
  %183 = vst [vmem:[%s3 + $0x50] sm:$0xff] %v167
  %184 = vst [vmem:[%s3 + $0x58] sm:$0xff] %v168
  %185 = vst [vmem:[%s3 + $0x60] sm:$0xff] %v169
  %186 = vst [vmem:[%s3 + $0x68] sm:$0xff] %v170
  %187 = vst [vmem:[%s3 + $0x70] sm:$0xff] %v171
  %188 = vst [vmem:[%s3 + $0x78] sm:$0xff] %v172
  // Predicated region
  $region14: #{darknet_forward.11} parent=0 // pred_check
    _
  $region15: #{darknet_forward.11} parent=0 // pred_check_branch
    %190 = sbr.rel (0) target = $region17
  $region16: #{darknet_forward.11} parent=0 // pred_region
    _
  $region17: #{darknet_forward.11} parent=0 // pred_fallthru
    _
  // Predicated region
  $region18: #{darknet_forward.11} parent=0 // pred_check
    _
  $region19: #{darknet_forward.11} parent=0 // pred_check_branch
    %192 = sbr.rel (0) target = $region21
  $region20: #{darknet_forward.11} parent=0 // pred_region
    _
  $region21: #{darknet_forward.11} parent=0 // pred_fallthru
    _

// kernel: darknet_forward.10
$region0: #{darknet_forward.10}
  #allocation0 [shape = 'u32[]', space=smem, size = 0x4, offset = 0x4, fixed_abs, tag = 'smem constant byte address 0x4 - core index']
  #allocation1 [shape = 'u32[72,128]{1,0:T(1,128)}', space=vmem, size = 0x9000, scoped, tag = 'internal scratch']
  %s0 = inlined_call_operand.vmem [shape: f32[2,9,9,8], index: 0, kind: input, shape index: {}]
  %s1 = inlined_call_operand.vmem [shape: f32[2,9,9,8], index: 1, kind: input, shape index: {}]
  %s2 = inlined_call_operand.vmem [shape: f32[2,9,9,8], index: 2, kind: input, shape index: {}]
  %s3 = inlined_call_operand.vmem [shape: f32[2,9,9,8], index: 3, kind: input, shape index: {}]
  %s4 = inlined_call_operand.vmem [shape: bf16[72,128], index: 4, kind: input, shape index: {}]
  %s5 = inlined_call_operand.vmem [shape: f32[1,128], index: 5, kind: input, shape index: {}]
  %s6 = inlined_call_operand.vmem [shape: f32[128,128], index: 6, kind: output, shape index: {}]
  %s7 = sld [smem:[#allocation0]]
  $region34: #{darknet_forward.10} parent=0
    _
  %s9 = ssub.s32 1, %s7
  %s10 = scalar_select 0, %s9, %s7
  // Predicated region
  $region2: #{darknet_forward.10} parent=0 // pred_check
    _
  $region3: #{darknet_forward.10} parent=0 // pred_check_branch
    %12 = sbr.rel (0) target = $region5
  $region4: #{darknet_forward.10} parent=0 // pred_region
    _
  $region5: #{darknet_forward.10} parent=0 // pred_fallthru
    _
  // Predicated region
  $region6: #{darknet_forward.10} parent=0 // pred_check
    _
  $region7: #{darknet_forward.10} parent=0 // pred_check_branch
    %14 = sbr.rel (0) target = $region9
  $region8: #{darknet_forward.10} parent=0 // pred_region
    _
  $region9: #{darknet_forward.10} parent=0 // pred_fallthru
    _
  // Predicated region
  $region10: #{darknet_forward.10} parent=0 // pred_check
    _
  $region11: #{darknet_forward.10} parent=0 // pred_check_branch
    %16 = sbr.rel (0) target = $region13
  $region12: #{darknet_forward.10} parent=0 // pred_region
    _
  $region13: #{darknet_forward.10} parent=0 // pred_fallthru
    _
  // Predicated region
  $region14: #{darknet_forward.10} parent=0 // pred_check
    _
  $region15: #{darknet_forward.10} parent=0 // pred_check_branch
    %18 = sbr.rel (0) target = $region17
  $region16: #{darknet_forward.10} parent=0 // pred_region
    _
  $region17: #{darknet_forward.10} parent=0 // pred_fallthru
    _
  // Predicated region
  $region18: #{darknet_forward.10} parent=0 // pred_check
    _
  $region19: #{darknet_forward.10} parent=0 // pred_check_branch
    %20 = sbr.rel (0) target = $region21
  $region20: #{darknet_forward.10} parent=0 // pred_region
    _
  $region21: #{darknet_forward.10} parent=0 // pred_fallthru
    _
  // Predicated region
  $region22: #{darknet_forward.10} parent=0 // pred_check
    _
  $region23: #{darknet_forward.10} parent=0 // pred_check_branch
    %22 = sbr.rel (0) target = $region25
  $region24: #{darknet_forward.10} parent=0 // pred_region
    _
  $region25: #{darknet_forward.10} parent=0 // pred_fallthru
    _
  %v24 = vld [vmem:[%s0] sm:$0xff]
  %v25 = vld [vmem:[%s0 + $0x8] sm:$0x1]
  %v26 = vld [vmem:[%s0 + $0x10] sm:$0xff]
  %v27 = vld [vmem:[%s0 + $0x18] sm:$0x1]
  %v28 = vld [vmem:[%s0 + $0x20] sm:$0xff]
  %v29 = vld [vmem:[%s0 + $0x28] sm:$0x1]
  %v30 = vld [vmem:[%s0 + $0x30] sm:$0xff]
  %v31 = vld [vmem:[%s0 + $0x38] sm:$0x1]
  %v32 = vld [vmem:[%s0 + $0x40] sm:$0xff]
  %v33 = vld [vmem:[%s0 + $0x48] sm:$0x1]
  %v34 = vld [vmem:[%s0 + $0x50] sm:$0xff]
  %v35 = vld [vmem:[%s0 + $0x58] sm:$0x1]
  %v36 = vld [vmem:[%s0 + $0x60] sm:$0xff]
  %v37 = vld [vmem:[%s0 + $0x68] sm:$0x1]
  %v38 = vld [vmem:[%s0 + $0x70] sm:$0xff]
  %v39 = vld [vmem:[%s0 + $0x78] sm:$0x1]
  %v40 = vld [vmem:[%s0 + $0x80] sm:$0xff]
  %v41 = vld [vmem:[%s0 + $0x88] sm:$0x1]
  %v42 = vld [vmem:[%s0 + $0x90] sm:$0xff]
  %v43 = vld [vmem:[%s0 + $0x98] sm:$0x1]
  %v44 = vld [vmem:[%s0 + $0xa0] sm:$0xff]
  %v45 = vld [vmem:[%s0 + $0xa8] sm:$0x1]
  %v46 = vld [vmem:[%s0 + $0xb0] sm:$0xff]
  %v47 = vld [vmem:[%s0 + $0xb8] sm:$0x1]
  %v48 = vld [vmem:[%s0 + $0xc0] sm:$0xff]
  %v49 = vld [vmem:[%s0 + $0xc8] sm:$0x1]
  %v50 = vld [vmem:[%s0 + $0xd0] sm:$0xff]
  %v51 = vld [vmem:[%s0 + $0xd8] sm:$0x1]
  %v52 = vld [vmem:[%s0 + $0xe0] sm:$0xff]
  %v53 = vld [vmem:[%s0 + $0xe8] sm:$0x1]
  %v54 = vld [vmem:[%s0 + $0xf0] sm:$0xff]
  %v55 = vld [vmem:[%s0 + $0xf8] sm:$0x1]
  %v56 = vld [vmem:[%s0 + $0x100] sm:$0xff]
  %v57 = vld [vmem:[%s0 + $0x108] sm:$0x1]
  %v58 = vld [vmem:[%s0 + $0x110] sm:$0xff]
  %v59 = vld [vmem:[%s0 + $0x118] sm:$0x1]
  %v60 = vld [vmem:[%s1] sm:$0xff]
  %v61 = vld [vmem:[%s1 + $0x10] sm:$0xff]
  %v62 = vld [vmem:[%s1 + $0x20] sm:$0xff]
  %v63 = vld [vmem:[%s1 + $0x30] sm:$0xff]
  %v64 = vld [vmem:[%s1 + $0x40] sm:$0xff]
  %v65 = vld [vmem:[%s1 + $0x50] sm:$0xff]
  %v66 = vld [vmem:[%s1 + $0x60] sm:$0xff]
  %v67 = vld [vmem:[%s1 + $0x70] sm:$0xff]
  %v68 = vld [vmem:[%s1 + $0x80] sm:$0xff]
  %v69 = vld [vmem:[%s1 + $0x90] sm:$0xff]
  %v70 = vld [vmem:[%s1 + $0xa0] sm:$0xff]
  %v71 = vld [vmem:[%s1 + $0xb0] sm:$0xff]
  %v72 = vld [vmem:[%s1 + $0xc0] sm:$0xff]
  %v73 = vld [vmem:[%s1 + $0xd0] sm:$0xff]
  %v74 = vld [vmem:[%s1 + $0xe0] sm:$0xff]
  %v75 = vld [vmem:[%s1 + $0xf0] sm:$0xff]
  %v76 = vld [vmem:[%s1 + $0x100] sm:$0xff]
  %v77 = vld [vmem:[%s1 + $0x110] sm:$0xff]
  %v78 = vld [vmem:[%s2] sm:$0xff]
  %v79 = vld [vmem:[%s2 + $0x8] sm:$0x1]
  %v80 = vld [vmem:[%s2 + $0x10] sm:$0xff]
  %v81 = vld [vmem:[%s2 + $0x18] sm:$0x1]
  %v82 = vld [vmem:[%s2 + $0x20] sm:$0xff]
  %v83 = vld [vmem:[%s2 + $0x28] sm:$0x1]
  %v84 = vld [vmem:[%s2 + $0x30] sm:$0xff]
  %v85 = vld [vmem:[%s2 + $0x38] sm:$0x1]
  %v86 = vld [vmem:[%s2 + $0x40] sm:$0xff]
  %v87 = vld [vmem:[%s2 + $0x48] sm:$0x1]
  %v88 = vld [vmem:[%s2 + $0x50] sm:$0xff]
  %v89 = vld [vmem:[%s2 + $0x58] sm:$0x1]
  %v90 = vld [vmem:[%s2 + $0x60] sm:$0xff]
  %v91 = vld [vmem:[%s2 + $0x68] sm:$0x1]
  %v92 = vld [vmem:[%s2 + $0x70] sm:$0xff]
  %v93 = vld [vmem:[%s2 + $0x78] sm:$0x1]
  %v94 = vld [vmem:[%s2 + $0x90] sm:$0xff]
  %v95 = vld [vmem:[%s2 + $0x98] sm:$0x1]
  %v96 = vld [vmem:[%s2 + $0xa0] sm:$0xff]
  %v97 = vld [vmem:[%s2 + $0xa8] sm:$0x1]
  %v98 = vld [vmem:[%s2 + $0xb0] sm:$0xff]
  %v99 = vld [vmem:[%s2 + $0xb8] sm:$0x1]
  %v100 = vld [vmem:[%s2 + $0xc0] sm:$0xff]
  %v101 = vld [vmem:[%s2 + $0xc8] sm:$0x1]
  %v102 = vld [vmem:[%s2 + $0xd0] sm:$0xff]
  %v103 = vld [vmem:[%s2 + $0xd8] sm:$0x1]
  %v104 = vld [vmem:[%s2 + $0xe0] sm:$0xff]
  %v105 = vld [vmem:[%s2 + $0xe8] sm:$0x1]
  %v106 = vld [vmem:[%s2 + $0xf0] sm:$0xff]
  %v107 = vld [vmem:[%s2 + $0xf8] sm:$0x1]
  %v108 = vld [vmem:[%s2 + $0x100] sm:$0xff]
  %v109 = vld [vmem:[%s2 + $0x108] sm:$0x1]
  %v110 = vld [vmem:[%s3] sm:$0xff]
  %v111 = vld [vmem:[%s3 + $0x10] sm:$0xff]
  %v112 = vld [vmem:[%s3 + $0x20] sm:$0xff]
  %v113 = vld [vmem:[%s3 + $0x30] sm:$0xff]
  %v114 = vld [vmem:[%s3 + $0x40] sm:$0xff]
  %v115 = vld [vmem:[%s3 + $0x50] sm:$0xff]
  %v116 = vld [vmem:[%s3 + $0x60] sm:$0xff]
  %v117 = vld [vmem:[%s3 + $0x70] sm:$0xff]
  %v118 = vld [vmem:[%s3 + $0x90] sm:$0xff]
  %v119 = vld [vmem:[%s3 + $0xa0] sm:$0xff]
  %v120 = vld [vmem:[%s3 + $0xb0] sm:$0xff]
  %v121 = vld [vmem:[%s3 + $0xc0] sm:$0xff]
  %v122 = vld [vmem:[%s3 + $0xd0] sm:$0xff]
  %v123 = vld [vmem:[%s3 + $0xe0] sm:$0xff]
  %v124 = vld [vmem:[%s3 + $0xf0] sm:$0xff]
  %v125 = vld [vmem:[%s3 + $0x100] sm:$0xff]
  %142 = vrot.lane.b32.xlu0 %v60, 8
  %v143 = vpop.permute.xlu0 %142
  %144 = vrot.lane.b32.xlu0 %v61, 8
  %v145 = vpop.permute.xlu0 %144
  %146 = vrot.lane.b32.xlu0 %v62, 8
  %v147 = vpop.permute.xlu0 %146
  %148 = vrot.lane.b32.xlu0 %v63, 8
  %v149 = vpop.permute.xlu0 %148
  %150 = vrot.lane.b32.xlu0 %v64, 8
  %v151 = vpop.permute.xlu0 %150
  %152 = vrot.lane.b32.xlu0 %v65, 8
  %v153 = vpop.permute.xlu0 %152
  %154 = vrot.lane.b32.xlu0 %v66, 8
  %v155 = vpop.permute.xlu0 %154
  %156 = vrot.lane.b32.xlu0 %v67, 8
  %v157 = vpop.permute.xlu0 %156
  %158 = vrot.lane.b32.xlu0 %v69, 8
  %v159 = vpop.permute.xlu0 %158
  %160 = vrot.lane.b32.xlu0 %v70, 8
  %v161 = vpop.permute.xlu0 %160
  %162 = vrot.lane.b32.xlu0 %v71, 8
  %v163 = vpop.permute.xlu0 %162
  %164 = vrot.lane.b32.xlu0 %v72, 8
  %v165 = vpop.permute.xlu0 %164
  %166 = vrot.lane.b32.xlu0 %v73, 8
  %v167 = vpop.permute.xlu0 %166
  %168 = vrot.lane.b32.xlu0 %v74, 8
  %v169 = vpop.permute.xlu0 %168
  %170 = vrot.lane.b32.xlu0 %v75, 8
  %v171 = vpop.permute.xlu0 %170
  %172 = vrot.lane.b32.xlu0 %v76, 8
  %v173 = vpop.permute.xlu0 %172
  %vm222 = vcmask 1046528
  %v223 = vrot.slane %v24, 1
  %v224 = vrot.slane %v25, 1
  %v225 = vsel %vm222, %v223, %v224
  %v226 = vrot.slane %v26, 1
  %v227 = vrot.slane %v27, 1
  %v228 = vsel %vm222, %v226, %v227
  %v229 = vrot.slane %v28, 1
  %v230 = vrot.slane %v29, 1
  %v231 = vsel %vm222, %v229, %v230
  %v232 = vrot.slane %v30, 1
  %v233 = vrot.slane %v31, 1
  %v234 = vsel %vm222, %v232, %v233
  %v235 = vrot.slane %v32, 1
  %v236 = vrot.slane %v33, 1
  %v237 = vsel %vm222, %v235, %v236
  %v238 = vrot.slane %v34, 1
  %v239 = vrot.slane %v35, 1
  %v240 = vsel %vm222, %v238, %v239
  %v241 = vrot.slane %v36, 1
  %v242 = vrot.slane %v37, 1
  %v243 = vsel %vm222, %v241, %v242
  %v244 = vrot.slane %v38, 1
  %v245 = vrot.slane %v39, 1
  %v246 = vsel %vm222, %v244, %v245
  %v247 = vrot.slane %v42, 1
  %v248 = vrot.slane %v43, 1
  %v249 = vsel %vm222, %v247, %v248
  %v250 = vrot.slane %v44, 1
  %v251 = vrot.slane %v45, 1
  %v252 = vsel %vm222, %v250, %v251
  %v253 = vrot.slane %v46, 1
  %v254 = vrot.slane %v47, 1
  %v255 = vsel %vm222, %v253, %v254
  %v256 = vrot.slane %v48, 1
  %v257 = vrot.slane %v49, 1
  %v258 = vsel %vm222, %v256, %v257
  %v259 = vrot.slane %v50, 1
  %v260 = vrot.slane %v51, 1
  %v261 = vsel %vm222, %v259, %v260
  %v262 = vrot.slane %v52, 1
  %v263 = vrot.slane %v53, 1
  %v264 = vsel %vm222, %v262, %v263
  %v265 = vrot.slane %v54, 1
  %v266 = vrot.slane %v55, 1
  %v267 = vsel %vm222, %v265, %v266
  %v268 = vrot.slane %v56, 1
  %v269 = vrot.slane %v57, 1
  %v270 = vsel %vm222, %v268, %v269
  %271 = vrot.lane.b32.xlu0 %v225, 16
  %v272 = vpop.permute.xlu0 %271
  %273 = vrot.lane.b32.xlu0 %v228, 16
  %v274 = vpop.permute.xlu0 %273
  %275 = vrot.lane.b32.xlu0 %v231, 16
  %v276 = vpop.permute.xlu0 %275
  %277 = vrot.lane.b32.xlu0 %v234, 16
  %v278 = vpop.permute.xlu0 %277
  %279 = vrot.lane.b32.xlu0 %v237, 16
  %v280 = vpop.permute.xlu0 %279
  %281 = vrot.lane.b32.xlu0 %v240, 16
  %v282 = vpop.permute.xlu0 %281
  %283 = vrot.lane.b32.xlu0 %v243, 16
  %v284 = vpop.permute.xlu0 %283
  %285 = vrot.lane.b32.xlu0 %v246, 16
  %v286 = vpop.permute.xlu0 %285
  %287 = vrot.lane.b32.xlu0 %v249, 16
  %v288 = vpop.permute.xlu0 %287
  %289 = vrot.lane.b32.xlu0 %v252, 16
  %v290 = vpop.permute.xlu0 %289
  %291 = vrot.lane.b32.xlu0 %v255, 16
  %v292 = vpop.permute.xlu0 %291
  %293 = vrot.lane.b32.xlu0 %v258, 16
  %v294 = vpop.permute.xlu0 %293
  %295 = vrot.lane.b32.xlu0 %v261, 16
  %v296 = vpop.permute.xlu0 %295
  %297 = vrot.lane.b32.xlu0 %v264, 16
  %v298 = vpop.permute.xlu0 %297
  %299 = vrot.lane.b32.xlu0 %v267, 16
  %v300 = vpop.permute.xlu0 %299
  %301 = vrot.lane.b32.xlu0 %v270, 16
  %v302 = vpop.permute.xlu0 %301
  %335 = vrot.lane.b32.xlu0 %v78, 24
  %v336 = vpop.permute.xlu0 %335
  %337 = vrot.lane.b32.xlu0 %v80, 24
  %v338 = vpop.permute.xlu0 %337
  %339 = vrot.lane.b32.xlu0 %v82, 24
  %v340 = vpop.permute.xlu0 %339
  %341 = vrot.lane.b32.xlu0 %v84, 24
  %v342 = vpop.permute.xlu0 %341
  %343 = vrot.lane.b32.xlu0 %v86, 24
  %v344 = vpop.permute.xlu0 %343
  %345 = vrot.lane.b32.xlu0 %v88, 24
  %v346 = vpop.permute.xlu0 %345
  %347 = vrot.lane.b32.xlu0 %v90, 24
  %v348 = vpop.permute.xlu0 %347
  %349 = vrot.lane.b32.xlu0 %v92, 24
  %v350 = vpop.permute.xlu0 %349
  %351 = vrot.lane.b32.xlu0 %v94, 24
  %v352 = vpop.permute.xlu0 %351
  %353 = vrot.lane.b32.xlu0 %v96, 24
  %v354 = vpop.permute.xlu0 %353
  %355 = vrot.lane.b32.xlu0 %v98, 24
  %v356 = vpop.permute.xlu0 %355
  %357 = vrot.lane.b32.xlu0 %v100, 24
  %v358 = vpop.permute.xlu0 %357
  %359 = vrot.lane.b32.xlu0 %v102, 24
  %v360 = vpop.permute.xlu0 %359
  %361 = vrot.lane.b32.xlu0 %v104, 24
  %v362 = vpop.permute.xlu0 %361
  %363 = vrot.lane.b32.xlu0 %v106, 24
  %v364 = vpop.permute.xlu0 %363
  %365 = vrot.lane.b32.xlu0 %v108, 24
  %v366 = vpop.permute.xlu0 %365
  %399 = vrot.lane.b32.xlu0 %v110, 32
  %v400 = vpop.permute.xlu0 %399
  %401 = vrot.lane.b32.xlu0 %v111, 32
  %v402 = vpop.permute.xlu0 %401
  %403 = vrot.lane.b32.xlu0 %v112, 32
  %v404 = vpop.permute.xlu0 %403
  %405 = vrot.lane.b32.xlu0 %v113, 32
  %v406 = vpop.permute.xlu0 %405
  %407 = vrot.lane.b32.xlu0 %v114, 32
  %v408 = vpop.permute.xlu0 %407
  %409 = vrot.lane.b32.xlu0 %v115, 32
  %v410 = vpop.permute.xlu0 %409
  %411 = vrot.lane.b32.xlu0 %v116, 32
  %v412 = vpop.permute.xlu0 %411
  %413 = vrot.lane.b32.xlu0 %v117, 32
  %v414 = vpop.permute.xlu0 %413
  %415 = vrot.lane.b32.xlu0 %v118, 32
  %v416 = vpop.permute.xlu0 %415
  %417 = vrot.lane.b32.xlu0 %v119, 32
  %v418 = vpop.permute.xlu0 %417
  %419 = vrot.lane.b32.xlu0 %v120, 32
  %v420 = vpop.permute.xlu0 %419
  %421 = vrot.lane.b32.xlu0 %v121, 32
  %v422 = vpop.permute.xlu0 %421
  %423 = vrot.lane.b32.xlu0 %v122, 32
  %v424 = vpop.permute.xlu0 %423
  %425 = vrot.lane.b32.xlu0 %v123, 32
  %v426 = vpop.permute.xlu0 %425
  %427 = vrot.lane.b32.xlu0 %v124, 32
  %v428 = vpop.permute.xlu0 %427
  %429 = vrot.lane.b32.xlu0 %v125, 32
  %v430 = vpop.permute.xlu0 %429
  %v463 = vrot.slane %v78, 1
  %v464 = vrot.slane %v79, 1
  %v465 = vsel %vm222, %v463, %v464
  %v466 = vrot.slane %v80, 1
  %v467 = vrot.slane %v81, 1
  %v468 = vsel %vm222, %v466, %v467
  %v469 = vrot.slane %v82, 1
  %v470 = vrot.slane %v83, 1
  %v471 = vsel %vm222, %v469, %v470
  %v472 = vrot.slane %v84, 1
  %v473 = vrot.slane %v85, 1
  %v474 = vsel %vm222, %v472, %v473
  %v475 = vrot.slane %v86, 1
  %v476 = vrot.slane %v87, 1
  %v477 = vsel %vm222, %v475, %v476
  %v478 = vrot.slane %v88, 1
  %v479 = vrot.slane %v89, 1
  %v480 = vsel %vm222, %v478, %v479
  %v481 = vrot.slane %v90, 1
  %v482 = vrot.slane %v91, 1
  %v483 = vsel %vm222, %v481, %v482
  %v484 = vrot.slane %v92, 1
  %v485 = vrot.slane %v93, 1
  %v486 = vsel %vm222, %v484, %v485
  %v487 = vrot.slane %v94, 1
  %v488 = vrot.slane %v95, 1
  %v489 = vsel %vm222, %v487, %v488
  %v490 = vrot.slane %v96, 1
  %v491 = vrot.slane %v97, 1
  %v492 = vsel %vm222, %v490, %v491
  %v493 = vrot.slane %v98, 1
  %v494 = vrot.slane %v99, 1
  %v495 = vsel %vm222, %v493, %v494
  %v496 = vrot.slane %v100, 1
  %v497 = vrot.slane %v101, 1
  %v498 = vsel %vm222, %v496, %v497
  %v499 = vrot.slane %v102, 1
  %v500 = vrot.slane %v103, 1
  %v501 = vsel %vm222, %v499, %v500
  %v502 = vrot.slane %v104, 1
  %v503 = vrot.slane %v105, 1
  %v504 = vsel %vm222, %v502, %v503
  %v505 = vrot.slane %v106, 1
  %v506 = vrot.slane %v107, 1
  %v507 = vsel %vm222, %v505, %v506
  %v508 = vrot.slane %v108, 1
  %v509 = vrot.slane %v109, 1
  %v510 = vsel %vm222, %v508, %v509
  %511 = vrot.lane.b32.xlu0 %v465, 40
  %v512 = vpop.permute.xlu0 %511
  %513 = vrot.lane.b32.xlu0 %v468, 40
  %v514 = vpop.permute.xlu0 %513
  %515 = vrot.lane.b32.xlu0 %v471, 40
  %v516 = vpop.permute.xlu0 %515
  %517 = vrot.lane.b32.xlu0 %v474, 40
  %v518 = vpop.permute.xlu0 %517
  %519 = vrot.lane.b32.xlu0 %v477, 40
  %v520 = vpop.permute.xlu0 %519
  %521 = vrot.lane.b32.xlu0 %v480, 40
  %v522 = vpop.permute.xlu0 %521
  %523 = vrot.lane.b32.xlu0 %v483, 40
  %v524 = vpop.permute.xlu0 %523
  %525 = vrot.lane.b32.xlu0 %v486, 40
  %v526 = vpop.permute.xlu0 %525
  %527 = vrot.lane.b32.xlu0 %v489, 40
  %v528 = vpop.permute.xlu0 %527
  %529 = vrot.lane.b32.xlu0 %v492, 40
  %v530 = vpop.permute.xlu0 %529
  %531 = vrot.lane.b32.xlu0 %v495, 40
  %v532 = vpop.permute.xlu0 %531
  %533 = vrot.lane.b32.xlu0 %v498, 40
  %v534 = vpop.permute.xlu0 %533
  %535 = vrot.lane.b32.xlu0 %v501, 40
  %v536 = vpop.permute.xlu0 %535
  %537 = vrot.lane.b32.xlu0 %v504, 40
  %v538 = vpop.permute.xlu0 %537
  %539 = vrot.lane.b32.xlu0 %v507, 40
  %v540 = vpop.permute.xlu0 %539
  %541 = vrot.lane.b32.xlu0 %v510, 40
  %v542 = vpop.permute.xlu0 %541
  %561 = vrot.lane.b32.xlu0 %v26, 48
  %v562 = vpop.permute.xlu0 %561
  %563 = vrot.lane.b32.xlu0 %v28, 48
  %v564 = vpop.permute.xlu0 %563
  %565 = vrot.lane.b32.xlu0 %v30, 48
  %v566 = vpop.permute.xlu0 %565
  %567 = vrot.lane.b32.xlu0 %v32, 48
  %v568 = vpop.permute.xlu0 %567
  %569 = vrot.lane.b32.xlu0 %v34, 48
  %v570 = vpop.permute.xlu0 %569
  %571 = vrot.lane.b32.xlu0 %v36, 48
  %v572 = vpop.permute.xlu0 %571
  %573 = vrot.lane.b32.xlu0 %v38, 48
  %v574 = vpop.permute.xlu0 %573
  %575 = vrot.lane.b32.xlu0 %v40, 48
  %v576 = vpop.permute.xlu0 %575
  %577 = vrot.lane.b32.xlu0 %v44, 48
  %v578 = vpop.permute.xlu0 %577
  %579 = vrot.lane.b32.xlu0 %v46, 48
  %v580 = vpop.permute.xlu0 %579
  %581 = vrot.lane.b32.xlu0 %v48, 48
  %v582 = vpop.permute.xlu0 %581
  %583 = vrot.lane.b32.xlu0 %v50, 48
  %v584 = vpop.permute.xlu0 %583
  %585 = vrot.lane.b32.xlu0 %v52, 48
  %v586 = vpop.permute.xlu0 %585
  %587 = vrot.lane.b32.xlu0 %v54, 48
  %v588 = vpop.permute.xlu0 %587
  %589 = vrot.lane.b32.xlu0 %v56, 48
  %v590 = vpop.permute.xlu0 %589
  %591 = vrot.lane.b32.xlu0 %v58, 48
  %v592 = vpop.permute.xlu0 %591
  %611 = vrot.lane.b32.xlu0 %v61, 56
  %v612 = vpop.permute.xlu0 %611
  %613 = vrot.lane.b32.xlu0 %v62, 56
  %v614 = vpop.permute.xlu0 %613
  %615 = vrot.lane.b32.xlu0 %v63, 56
  %v616 = vpop.permute.xlu0 %615
  %617 = vrot.lane.b32.xlu0 %v64, 56
  %v618 = vpop.permute.xlu0 %617
  %619 = vrot.lane.b32.xlu0 %v65, 56
  %v620 = vpop.permute.xlu0 %619
  %621 = vrot.lane.b32.xlu0 %v66, 56
  %v622 = vpop.permute.xlu0 %621
  %623 = vrot.lane.b32.xlu0 %v67, 56
  %v624 = vpop.permute.xlu0 %623
  %625 = vrot.lane.b32.xlu0 %v68, 56
  %v626 = vpop.permute.xlu0 %625
  %627 = vrot.lane.b32.xlu0 %v70, 56
  %v628 = vpop.permute.xlu0 %627
  %629 = vrot.lane.b32.xlu0 %v71, 56
  %v630 = vpop.permute.xlu0 %629
  %631 = vrot.lane.b32.xlu0 %v72, 56
  %v632 = vpop.permute.xlu0 %631
  %633 = vrot.lane.b32.xlu0 %v73, 56
  %v634 = vpop.permute.xlu0 %633
  %635 = vrot.lane.b32.xlu0 %v74, 56
  %v636 = vpop.permute.xlu0 %635
  %637 = vrot.lane.b32.xlu0 %v75, 56
  %v638 = vpop.permute.xlu0 %637
  %639 = vrot.lane.b32.xlu0 %v76, 56
  %v640 = vpop.permute.xlu0 %639
  %641 = vrot.lane.b32.xlu0 %v77, 56
  %v642 = vpop.permute.xlu0 %641
  %v661 = vrot.slane %v40, 1
  %v662 = vrot.slane %v41, 1
  %v663 = vsel %vm222, %v661, %v662
  %v664 = vrot.slane %v58, 1
  %v665 = vrot.slane %v59, 1
  %v666 = vsel %vm222, %v664, %v665
  %667 = vrot.lane.b32.xlu0 %v228, 64
  %v668 = vpop.permute.xlu0 %667
  %669 = vrot.lane.b32.xlu0 %v231, 64
  %v670 = vpop.permute.xlu0 %669
  %671 = vrot.lane.b32.xlu0 %v234, 64
  %v672 = vpop.permute.xlu0 %671
  %673 = vrot.lane.b32.xlu0 %v237, 64
  %v674 = vpop.permute.xlu0 %673
  %675 = vrot.lane.b32.xlu0 %v240, 64
  %v676 = vpop.permute.xlu0 %675
  %677 = vrot.lane.b32.xlu0 %v243, 64
  %v678 = vpop.permute.xlu0 %677
  %679 = vrot.lane.b32.xlu0 %v246, 64
  %v680 = vpop.permute.xlu0 %679
  %681 = vrot.lane.b32.xlu0 %v663, 64
  %v682 = vpop.permute.xlu0 %681
  %683 = vrot.lane.b32.xlu0 %v252, 64
  %v684 = vpop.permute.xlu0 %683
  %685 = vrot.lane.b32.xlu0 %v255, 64
  %v686 = vpop.permute.xlu0 %685
  %687 = vrot.lane.b32.xlu0 %v258, 64
  %v688 = vpop.permute.xlu0 %687
  %689 = vrot.lane.b32.xlu0 %v261, 64
  %v690 = vpop.permute.xlu0 %689
  %691 = vrot.lane.b32.xlu0 %v264, 64
  %v692 = vpop.permute.xlu0 %691
  %693 = vrot.lane.b32.xlu0 %v267, 64
  %v694 = vpop.permute.xlu0 %693
  %695 = vrot.lane.b32.xlu0 %v270, 64
  %v696 = vpop.permute.xlu0 %695
  %697 = vrot.lane.b32.xlu0 %v666, 64
  %v698 = vpop.permute.xlu0 %697
  %vm715 = vcmask 64512
  %v716 = vsel %vm715, %v24, %v143
  %v717 = vsel %vm715, %v26, %v145
  %v718 = vsel %vm715, %v28, %v147
  %v719 = vsel %vm715, %v30, %v149
  %v720 = vsel %vm715, %v32, %v151
  %v721 = vsel %vm715, %v34, %v153
  %v722 = vsel %vm715, %v36, %v155
  %v723 = vsel %vm715, %v38, %v157
  %v724 = vsel %vm715, %v42, %v159
  %v725 = vsel %vm715, %v44, %v161
  %v726 = vsel %vm715, %v46, %v163
  %v727 = vsel %vm715, %v48, %v165
  %v728 = vsel %vm715, %v50, %v167
  %v729 = vsel %vm715, %v52, %v169
  %v730 = vsel %vm715, %v54, %v171
  %v731 = vsel %vm715, %v56, %v173
  %vm732 = vcmask 130048
  %v733 = vsel %vm732, %v716, %v272
  %v734 = vsel %vm732, %v717, %v274
  %v735 = vsel %vm732, %v718, %v276
  %v736 = vsel %vm732, %v719, %v278
  %v737 = vsel %vm732, %v720, %v280
  %v738 = vsel %vm732, %v721, %v282
  %v739 = vsel %vm732, %v722, %v284
  %v740 = vsel %vm732, %v723, %v286
  %v741 = vsel %vm732, %v724, %v288
  %v742 = vsel %vm732, %v725, %v290
  %v743 = vsel %vm732, %v726, %v292
  %v744 = vsel %vm732, %v727, %v294
  %v745 = vsel %vm732, %v728, %v296
  %v746 = vsel %vm732, %v729, %v298
  %v747 = vsel %vm732, %v730, %v300
  %v748 = vsel %vm732, %v731, %v302
  %vm749 = vcmask 195584
  %v750 = vsel %vm749, %v733, %v336
  %v751 = vsel %vm749, %v734, %v338
  %v752 = vsel %vm749, %v735, %v340
  %v753 = vsel %vm749, %v736, %v342
  %v754 = vsel %vm749, %v737, %v344
  %v755 = vsel %vm749, %v738, %v346
  %v756 = vsel %vm749, %v739, %v348
  %v757 = vsel %vm749, %v740, %v350
  %v758 = vsel %vm749, %v741, %v352
  %v759 = vsel %vm749, %v742, %v354
  %v760 = vsel %vm749, %v743, %v356
  %v761 = vsel %vm749, %v744, %v358
  %v762 = vsel %vm749, %v745, %v360
  %v763 = vsel %vm749, %v746, %v362
  %v764 = vsel %vm749, %v747, %v364
  %v765 = vsel %vm749, %v748, %v366
  %vm766 = vcmask 261120
  %v767 = vsel %vm766, %v750, %v400
  %v768 = vsel %vm766, %v751, %v402
  %v769 = vsel %vm766, %v752, %v404
  %v770 = vsel %vm766, %v753, %v406
  %v771 = vsel %vm766, %v754, %v408
  %v772 = vsel %vm766, %v755, %v410
  %v773 = vsel %vm766, %v756, %v412
  %v774 = vsel %vm766, %v757, %v414
  %v775 = vsel %vm766, %v758, %v416
  %v776 = vsel %vm766, %v759, %v418
  %v777 = vsel %vm766, %v760, %v420
  %v778 = vsel %vm766, %v761, %v422
  %v779 = vsel %vm766, %v762, %v424
  %v780 = vsel %vm766, %v763, %v426
  %v781 = vsel %vm766, %v764, %v428
  %v782 = vsel %vm766, %v765, %v430
  %vm783 = vcmask 326656
  %v784 = vsel %vm783, %v767, %v512
  %v785 = vsel %vm783, %v768, %v514
  %v786 = vsel %vm783, %v769, %v516
  %v787 = vsel %vm783, %v770, %v518
  %v788 = vsel %vm783, %v771, %v520
  %v789 = vsel %vm783, %v772, %v522
  %v790 = vsel %vm783, %v773, %v524
  %v791 = vsel %vm783, %v774, %v526
  %v792 = vsel %vm783, %v775, %v528
  %v793 = vsel %vm783, %v776, %v530
  %v794 = vsel %vm783, %v777, %v532
  %v795 = vsel %vm783, %v778, %v534
  %v796 = vsel %vm783, %v779, %v536
  %v797 = vsel %vm783, %v780, %v538
  %v798 = vsel %vm783, %v781, %v540
  %v799 = vsel %vm783, %v782, %v542
  %vm800 = vcmask 392192
  %v801 = vsel %vm800, %v784, %v562
  %v802 = vsel %vm800, %v785, %v564
  %v803 = vsel %vm800, %v786, %v566
  %v804 = vsel %vm800, %v787, %v568
  %v805 = vsel %vm800, %v788, %v570
  %v806 = vsel %vm800, %v789, %v572
  %v807 = vsel %vm800, %v790, %v574
  %v808 = vsel %vm800, %v791, %v576
  %v809 = vsel %vm800, %v792, %v578
  %v810 = vsel %vm800, %v793, %v580
  %v811 = vsel %vm800, %v794, %v582
  %v812 = vsel %vm800, %v795, %v584
  %v813 = vsel %vm800, %v796, %v586
  %v814 = vsel %vm800, %v797, %v588
  %v815 = vsel %vm800, %v798, %v590
  %v816 = vsel %vm800, %v799, %v592
  %vm817 = vcmask 457728
  %v818 = vsel %vm817, %v801, %v612
  %v819 = vsel %vm817, %v802, %v614
  %v820 = vsel %vm817, %v803, %v616
  %v821 = vsel %vm817, %v804, %v618
  %v822 = vsel %vm817, %v805, %v620
  %v823 = vsel %vm817, %v806, %v622
  %v824 = vsel %vm817, %v807, %v624
  %v825 = vsel %vm817, %v808, %v626
  %v826 = vsel %vm817, %v809, %v628
  %v827 = vsel %vm817, %v810, %v630
  %v828 = vsel %vm817, %v811, %v632
  %v829 = vsel %vm817, %v812, %v634
  %v830 = vsel %vm817, %v813, %v636
  %v831 = vsel %vm817, %v814, %v638
  %v832 = vsel %vm817, %v815, %v640
  %v833 = vsel %vm817, %v816, %v642
  %vm834 = vcmask 523264
  %v835 = vsel %vm834, %v818, %v668
  %v836 = vsel %vm834, %v819, %v670
  %v837 = vsel %vm834, %v820, %v672
  %v838 = vsel %vm834, %v821, %v674
  %v839 = vsel %vm834, %v822, %v676
  %v840 = vsel %vm834, %v823, %v678
  %v841 = vsel %vm834, %v824, %v680
  %v842 = vsel %vm834, %v825, %v682
  %v843 = vsel %vm834, %v826, %v684
  %v844 = vsel %vm834, %v827, %v686
  %v845 = vsel %vm834, %v828, %v688
  %v846 = vsel %vm834, %v829, %v690
  %v847 = vsel %vm834, %v830, %v692
  %v848 = vsel %vm834, %v831, %v694
  %v849 = vsel %vm834, %v832, %v696
  %v850 = vsel %vm834, %v833, %v698
  %v851 = vpack.c.bf16 %v836, %v835
  %v852 = vpack.c.bf16 %v838, %v837
  %v853 = vpack.c.bf16 %v840, %v839
  %v854 = vpack.c.bf16 %v842, %v841
  %v855 = vpack.c.bf16 %v844, %v843
  %v856 = vpack.c.bf16 %v846, %v845
  %v857 = vpack.c.bf16 %v848, %v847
  %v858 = vpack.c.bf16 %v850, %v849
  %v859 = vld [vmem:[%s4] sm:$0xf]
  %v860 = vld [vmem:[%s4 + $0x4] sm:$0xf]
  %v861 = vld [vmem:[%s4 + $0x8] sm:$0xf]
  %v862 = vld [vmem:[%s4 + $0xc] sm:$0xf]
  %v863 = vld [vmem:[%s4 + $0x10] sm:$0xf]
  %v864 = vld [vmem:[%s4 + $0x14] sm:$0xf]
  %v865 = vld [vmem:[%s4 + $0x18] sm:$0xf]
  %v866 = vld [vmem:[%s4 + $0x1c] sm:$0xf]
  %v867 = vld [vmem:[%s4 + $0x20] sm:$0xf]
  %v868 = vld [vmem:[%s5] sm:$0x1]
  %v870 = vperm.slane %v868, 0
  %v881 = vunpack.c.l.b16 %v859
  %v882 = vunpack.c.l.b16 %v860
  %v883 = vunpack.c.l.b16 %v861
  %v884 = vunpack.c.l.b16 %v862
  %v885 = vunpack.c.l.b16 %v863
  %v886 = vunpack.c.l.b16 %v864
  %v887 = vunpack.c.l.b16 %v865
  %v888 = vunpack.c.l.b16 %v866
  %v889 = vunpack.c.l.b16 %v867
  %v890 = vpack.c.b16 %v882, %v881
  %v891 = vpack.c.b16 %v884, %v883
  %v892 = vpack.c.b16 %v886, %v885
  %v893 = vpack.c.b16 %v888, %v887
  %v894 = vpack.c.b16 %v889, %v889
  %vm899 = vcmask 588800
  %v901 = vsel %vm899, %v851, 0
  %v904 = vsel %vm899, %v852, 0
  %v907 = vsel %vm899, %v853, 0
  %v910 = vsel %vm899, %v854, 0
  %v913 = vsel %vm899, %v855, 0
  %v916 = vsel %vm899, %v856, 0
  %v919 = vsel %vm899, %v857, 0
  %v922 = vsel %vm899, %v858, 0
  %vm924 = vcmask 1043456
  %v926 = vsel %vm924, %v894, 0
  %928 = vmatpush.bf16.msra.mxu0 0
  %929 = vmatpush.bf16.msra.mxu0 0
  %930 = vmatpush.bf16.msra.mxu0 0
  %931 = vmatpush.bf16.msra.mxu0 %v926
  %932 = vmatpush.bf16.msra.mxu0 %v893
  %933 = vmatpush.bf16.msra.mxu0 %v892
  %934 = vmatpush.bf16.msra.mxu0 %v891
  %935 = vmatpush.bf16.msra.mxu0 %v890
  %936 = vmatmul.bf16.gmra.mxu0 %v901
  %v937 = vpop.f32.mrf.mxu0
  %v938 = vadd.f32 %v870, %v937
  %v939 = vpop.f32.mrf.mxu0
  %v940 = vadd.f32 %v870, %v939
  %941 = vmatmul.bf16.gmra.mxu0 %v904
  %v942 = vpop.f32.mrf.mxu0
  %v943 = vadd.f32 %v870, %v942
  %v944 = vpop.f32.mrf.mxu0
  %v945 = vadd.f32 %v870, %v944
  %946 = vmatmul.bf16.gmra.mxu0 %v907
  %v947 = vpop.f32.mrf.mxu0
  %v948 = vadd.f32 %v870, %v947
  %v949 = vpop.f32.mrf.mxu0
  %v950 = vadd.f32 %v870, %v949
  %951 = vmatmul.bf16.gmra.mxu0 %v910
  %v952 = vpop.f32.mrf.mxu0
  %v953 = vadd.f32 %v870, %v952
  %v954 = vpop.f32.mrf.mxu0
  %v955 = vadd.f32 %v870, %v954
  %956 = vmatmul.bf16.gmra.mxu0 %v913
  %v957 = vpop.f32.mrf.mxu0
  %v958 = vadd.f32 %v870, %v957
  %v959 = vpop.f32.mrf.mxu0
  %v960 = vadd.f32 %v870, %v959
  %961 = vmatmul.bf16.gmra.mxu0 %v916
  %v962 = vpop.f32.mrf.mxu0
  %v963 = vadd.f32 %v870, %v962
  %v964 = vpop.f32.mrf.mxu0
  %v965 = vadd.f32 %v870, %v964
  %966 = vmatmul.bf16.gmra.mxu0 %v919
  %v967 = vpop.f32.mrf.mxu0
  %v968 = vadd.f32 %v870, %v967
  %v969 = vpop.f32.mrf.mxu0
  %v970 = vadd.f32 %v870, %v969
  %971 = vmatmul.bf16.gmra.mxu0 %v922
  %v972 = vpop.f32.mrf.mxu0
  %v973 = vadd.f32 %v870, %v972
  %v974 = vpop.f32.mrf.mxu0
  %v975 = vadd.f32 %v870, %v974
  %976 = vdwg.mxu0
  %vm977 = vcmp.gt.f32.partialorder %v938, 0.0
  %vm978 = vcmp.gt.f32.partialorder %v940, 0.0
  %vm979 = vcmp.gt.f32.partialorder %v943, 0.0
  %vm980 = vcmp.gt.f32.partialorder %v945, 0.0
  %vm981 = vcmp.gt.f32.partialorder %v948, 0.0
  %vm982 = vcmp.gt.f32.partialorder %v950, 0.0
  %vm983 = vcmp.gt.f32.partialorder %v953, 0.0
  %vm984 = vcmp.gt.f32.partialorder %v955, 0.0
  %vm985 = vcmp.gt.f32.partialorder %v958, 0.0
  %vm986 = vcmp.gt.f32.partialorder %v960, 0.0
  %vm987 = vcmp.gt.f32.partialorder %v963, 0.0
  %vm988 = vcmp.gt.f32.partialorder %v965, 0.0
  %vm989 = vcmp.gt.f32.partialorder %v968, 0.0
  %vm990 = vcmp.gt.f32.partialorder %v970, 0.0
  %vm991 = vcmp.gt.f32.partialorder %v973, 0.0
  %vm992 = vcmp.gt.f32.partialorder %v975, 0.0
  %v993 = vmul.f32 %v938, 0.1
  %v994 = vmul.f32 %v940, 0.1
  %v995 = vmul.f32 %v943, 0.1
  %v996 = vmul.f32 %v945, 0.1
  %v997 = vmul.f32 %v948, 0.1
  %v998 = vmul.f32 %v950, 0.1
  %v999 = vmul.f32 %v953, 0.1
  %v1000 = vmul.f32 %v955, 0.1
  %v1001 = vmul.f32 %v958, 0.1
  %v1002 = vmul.f32 %v960, 0.1
  %v1003 = vmul.f32 %v963, 0.1
  %v1004 = vmul.f32 %v965, 0.1
  %v1005 = vmul.f32 %v968, 0.1
  %v1006 = vmul.f32 %v970, 0.1
  %v1007 = vmul.f32 %v973, 0.1
  %v1008 = vmul.f32 %v975, 0.1
  %v1009 = vsel %vm977, %v938, %v993
  %v1010 = vsel %vm978, %v940, %v994
  %v1011 = vsel %vm979, %v943, %v995
  %v1012 = vsel %vm980, %v945, %v996
  %v1013 = vsel %vm981, %v948, %v997
  %v1014 = vsel %vm982, %v950, %v998
  %v1015 = vsel %vm983, %v953, %v999
  %v1016 = vsel %vm984, %v955, %v1000
  %v1017 = vsel %vm985, %v958, %v1001
  %v1018 = vsel %vm986, %v960, %v1002
  %v1019 = vsel %vm987, %v963, %v1003
  %v1020 = vsel %vm988, %v965, %v1004
  %v1021 = vsel %vm989, %v968, %v1005
  %v1022 = vsel %vm990, %v970, %v1006
  %v1023 = vsel %vm991, %v973, %v1007
  %v1024 = vsel %vm992, %v975, %v1008
  %1025 = vst [vmem:[%s6] sm:$0xff] %v1009
  %1026 = vst [vmem:[%s6 + $0x8] sm:$0xff] %v1010
  %1027 = vst [vmem:[%s6 + $0x10] sm:$0xff] %v1011
  %1028 = vst [vmem:[%s6 + $0x18] sm:$0xff] %v1012
  %1029 = vst [vmem:[%s6 + $0x20] sm:$0xff] %v1013
  %1030 = vst [vmem:[%s6 + $0x28] sm:$0xff] %v1014
  %1031 = vst [vmem:[%s6 + $0x30] sm:$0xff] %v1015
  %1032 = vst [vmem:[%s6 + $0x38] sm:$0xff] %v1016
  %1033 = vst [vmem:[%s6 + $0x40] sm:$0xff] %v1017
  %1034 = vst [vmem:[%s6 + $0x48] sm:$0xff] %v1018
  %1035 = vst [vmem:[%s6 + $0x50] sm:$0xff] %v1019
  %1036 = vst [vmem:[%s6 + $0x58] sm:$0xff] %v1020
  %1037 = vst [vmem:[%s6 + $0x60] sm:$0xff] %v1021
  %1038 = vst [vmem:[%s6 + $0x68] sm:$0xff] %v1022
  %1039 = vst [vmem:[%s6 + $0x70] sm:$0xff] %v1023
  %1040 = vst [vmem:[%s6 + $0x78] sm:$0xff] %v1024
  // Predicated region
  $region26: #{darknet_forward.10} parent=0 // pred_check
    _
  $region27: #{darknet_forward.10} parent=0 // pred_check_branch
    %1042 = sbr.rel (0) target = $region29
  $region28: #{darknet_forward.10} parent=0 // pred_region
    _
  $region29: #{darknet_forward.10} parent=0 // pred_fallthru
    _
  // Predicated region
  $region30: #{darknet_forward.10} parent=0 // pred_check
    _
  $region31: #{darknet_forward.10} parent=0 // pred_check_branch
    %1044 = sbr.rel (0) target = $region33
  $region32: #{darknet_forward.10} parent=0 // pred_region
    _
  $region33: #{darknet_forward.10} parent=0 // pred_fallthru
    _

// kernel: darknet_forward.13
$region0: #{darknet_forward.13}
  #allocation0 [shape = 'u32[]', space=smem, size = 0x4, offset = 0x4, fixed_abs, tag = 'smem constant byte address 0x4 - core index']
  #allocation1 [shape = 'u32[72,128]{1,0:T(1,128)}', space=vmem, size = 0x9000, scoped, tag = 'internal scratch']
  %s0 = inlined_call_operand.vmem [shape: f32[16,128], index: 0, kind: input, shape index: {}]
  %s1 = inlined_call_operand.vmem [shape: f32[16,128], index: 1, kind: input, shape index: {}]
  %s2 = inlined_call_operand.vmem [shape: f32[16,128], index: 2, kind: output, shape index: {}]
  %s3 = sld [smem:[#allocation0]]
  $region18: #{darknet_forward.13} parent=0
    _
  %s5 = ssub.s32 1, %s3
  %s6 = scalar_select 0, %s5, %s3
  // Predicated region
  $region2: #{darknet_forward.13} parent=0 // pred_check
    _
  $region3: #{darknet_forward.13} parent=0 // pred_check_branch
    %8 = sbr.rel (0) target = $region5
  $region4: #{darknet_forward.13} parent=0 // pred_region
    _
  $region5: #{darknet_forward.13} parent=0 // pred_fallthru
    _
  // Predicated region
  $region6: #{darknet_forward.13} parent=0 // pred_check
    _
  $region7: #{darknet_forward.13} parent=0 // pred_check_branch
    %10 = sbr.rel (0) target = $region9
  $region8: #{darknet_forward.13} parent=0 // pred_region
    _
  $region9: #{darknet_forward.13} parent=0 // pred_fallthru
    _
  %v11 = vld [vmem:[%s0] sm:$0xff]
  %v12 = vld [vmem:[%s0 + $0x8] sm:$0xff]
  %v13 = vld [vmem:[%s1] sm:$0xff]
  %v14 = vld [vmem:[%s1 + $0x8] sm:$0xff]
  %v15 = vadd.f32 %v11, %v13
  %v16 = vadd.f32 %v12, %v14
  %17 = vst [vmem:[%s2] sm:$0xff] %v15
  %18 = vst [vmem:[%s2 + $0x8] sm:$0xff] %v16
  // Predicated region
  $region10: #{darknet_forward.13} parent=0 // pred_check
    _
  $region11: #{darknet_forward.13} parent=0 // pred_check_branch
    %20 = sbr.rel (0) target = $region13
  $region12: #{darknet_forward.13} parent=0 // pred_region
    _
  $region13: #{darknet_forward.13} parent=0 // pred_fallthru
    _
  // Predicated region
  $region14: #{darknet_forward.13} parent=0 // pred_check
    _
  $region15: #{darknet_forward.13} parent=0 // pred_check_branch
    %22 = sbr.rel (0) target = $region17
  $region16: #{darknet_forward.13} parent=0 // pred_region
    _
  $region17: #{darknet_forward.13} parent=0 // pred_fallthru
    _

// kernel: darknet_forward.12
$region0: #{darknet_forward.12}
  #allocation0 [shape = 'u32[]', space=smem, size = 0x4, offset = 0x4, fixed_abs, tag = 'smem constant byte address 0x4 - core index']
  #allocation1 [shape = 'u32[72,128]{1,0:T(1,128)}', space=vmem, size = 0x9000, scoped, tag = 'internal scratch']
  %s0 = inlined_call_operand.vmem [shape: f32[2,10,10,8], index: 0, kind: input, shape index: {}]
  %s1 = inlined_call_operand.vmem [shape: bf16[72,128], index: 1, kind: input, shape index: {}]
  %s2 = inlined_call_operand.vmem [shape: f32[1,128], index: 2, kind: input, shape index: {}]
  %s3 = inlined_call_operand.vmem [shape: f32[128,128], index: 3, kind: output, shape index: {}]
  %s4 = sld [smem:[#allocation0]]
  $region22: #{darknet_forward.12} parent=0
    _
  %s6 = ssub.s32 1, %s4
  %s7 = scalar_select 0, %s6, %s4
  // Predicated region
  $region2: #{darknet_forward.12} parent=0 // pred_check
    _
  $region3: #{darknet_forward.12} parent=0 // pred_check_branch
    %9 = sbr.rel (0) target = $region5
  $region4: #{darknet_forward.12} parent=0 // pred_region
    _
  $region5: #{darknet_forward.12} parent=0 // pred_fallthru
    _
  // Predicated region
  $region6: #{darknet_forward.12} parent=0 // pred_check
    _
  $region7: #{darknet_forward.12} parent=0 // pred_check_branch
    %11 = sbr.rel (0) target = $region9
  $region8: #{darknet_forward.12} parent=0 // pred_region
    _
  $region9: #{darknet_forward.12} parent=0 // pred_fallthru
    _
  // Predicated region
  $region10: #{darknet_forward.12} parent=0 // pred_check
    _
  $region11: #{darknet_forward.12} parent=0 // pred_check_branch
    %13 = sbr.rel (0) target = $region13
  $region12: #{darknet_forward.12} parent=0 // pred_region
    _
  $region13: #{darknet_forward.12} parent=0 // pred_fallthru
    _
  %v15 = vld [vmem:[%s0] sm:$0xff]
  %v16 = vld [vmem:[%s0 + $0x8] sm:$0x3]
  %v17 = vld [vmem:[%s0 + $0x10] sm:$0xff]
  %v18 = vld [vmem:[%s0 + $0x18] sm:$0x3]
  %v19 = vld [vmem:[%s0 + $0x20] sm:$0xff]
  %v20 = vld [vmem:[%s0 + $0x28] sm:$0x3]
  %v21 = vld [vmem:[%s0 + $0x30] sm:$0xff]
  %v22 = vld [vmem:[%s0 + $0x38] sm:$0x3]
  %v23 = vld [vmem:[%s0 + $0x40] sm:$0xff]
  %v24 = vld [vmem:[%s0 + $0x48] sm:$0x3]
  %v25 = vld [vmem:[%s0 + $0x50] sm:$0xff]
  %v26 = vld [vmem:[%s0 + $0x58] sm:$0x3]
  %v27 = vld [vmem:[%s0 + $0x60] sm:$0xff]
  %v28 = vld [vmem:[%s0 + $0x68] sm:$0x3]
  %v29 = vld [vmem:[%s0 + $0x70] sm:$0xff]
  %v30 = vld [vmem:[%s0 + $0x78] sm:$0x3]
  %v31 = vld [vmem:[%s0 + $0x80] sm:$0xff]
  %v32 = vld [vmem:[%s0 + $0x88] sm:$0x3]
  %v33 = vld [vmem:[%s0 + $0x90] sm:$0xff]
  %v34 = vld [vmem:[%s0 + $0x98] sm:$0x3]
  %v35 = vld [vmem:[%s0 + $0xa0] sm:$0xff]
  %v36 = vld [vmem:[%s0 + $0xa8] sm:$0x3]
  %v37 = vld [vmem:[%s0 + $0xb0] sm:$0xff]
  %v38 = vld [vmem:[%s0 + $0xb8] sm:$0x3]
  %v39 = vld [vmem:[%s0 + $0xc0] sm:$0xff]
  %v40 = vld [vmem:[%s0 + $0xc8] sm:$0x3]
  %v41 = vld [vmem:[%s0 + $0xd0] sm:$0xff]
  %v42 = vld [vmem:[%s0 + $0xd8] sm:$0x3]
  %v43 = vld [vmem:[%s0 + $0xe0] sm:$0xff]
  %v44 = vld [vmem:[%s0 + $0xe8] sm:$0x3]
  %v45 = vld [vmem:[%s0 + $0xf0] sm:$0xff]
  %v46 = vld [vmem:[%s0 + $0xf8] sm:$0x3]
  %v47 = vld [vmem:[%s0 + $0x100] sm:$0xff]
  %v48 = vld [vmem:[%s0 + $0x108] sm:$0x3]
  %v49 = vld [vmem:[%s0 + $0x110] sm:$0xff]
  %v50 = vld [vmem:[%s0 + $0x118] sm:$0x3]
  %v51 = vld [vmem:[%s0 + $0x120] sm:$0xff]
  %v52 = vld [vmem:[%s0 + $0x128] sm:$0x3]
  %v53 = vld [vmem:[%s0 + $0x130] sm:$0xff]
  %v54 = vld [vmem:[%s0 + $0x138] sm:$0x3]
  %vm87 = vcmask 1046528
  %v88 = vrot.slane %v15, 1
  %v89 = vrot.slane %v16, 1
  %v90 = vsel %vm87, %v88, %v89
  %v91 = vrot.slane %v17, 1
  %v92 = vrot.slane %v18, 1
  %v93 = vsel %vm87, %v91, %v92
  %v94 = vrot.slane %v19, 1
  %v95 = vrot.slane %v20, 1
  %v96 = vsel %vm87, %v94, %v95
  %v97 = vrot.slane %v21, 1
  %v98 = vrot.slane %v22, 1
  %v99 = vsel %vm87, %v97, %v98
  %v100 = vrot.slane %v23, 1
  %v101 = vrot.slane %v24, 1
  %v102 = vsel %vm87, %v100, %v101
  %v103 = vrot.slane %v25, 1
  %v104 = vrot.slane %v26, 1
  %v105 = vsel %vm87, %v103, %v104
  %v106 = vrot.slane %v27, 1
  %v107 = vrot.slane %v28, 1
  %v108 = vsel %vm87, %v106, %v107
  %v109 = vrot.slane %v29, 1
  %v110 = vrot.slane %v30, 1
  %v111 = vsel %vm87, %v109, %v110
  %v112 = vrot.slane %v35, 1
  %v113 = vrot.slane %v36, 1
  %v114 = vsel %vm87, %v112, %v113
  %v115 = vrot.slane %v37, 1
  %v116 = vrot.slane %v38, 1
  %v117 = vsel %vm87, %v115, %v116
  %v118 = vrot.slane %v39, 1
  %v119 = vrot.slane %v40, 1
  %v120 = vsel %vm87, %v118, %v119
  %v121 = vrot.slane %v41, 1
  %v122 = vrot.slane %v42, 1
  %v123 = vsel %vm87, %v121, %v122
  %v124 = vrot.slane %v43, 1
  %v125 = vrot.slane %v44, 1
  %v126 = vsel %vm87, %v124, %v125
  %v127 = vrot.slane %v45, 1
  %v128 = vrot.slane %v46, 1
  %v129 = vsel %vm87, %v127, %v128
  %v130 = vrot.slane %v47, 1
  %v131 = vrot.slane %v48, 1
  %v132 = vsel %vm87, %v130, %v131
  %v133 = vrot.slane %v49, 1
  %v134 = vrot.slane %v50, 1
  %v135 = vsel %vm87, %v133, %v134
  %136 = vrot.lane.b32.xlu0 %v90, 8
  %v137 = vpop.permute.xlu0 %136
  %138 = vrot.lane.b32.xlu0 %v93, 8
  %v139 = vpop.permute.xlu0 %138
  %140 = vrot.lane.b32.xlu0 %v96, 8
  %v141 = vpop.permute.xlu0 %140
  %142 = vrot.lane.b32.xlu0 %v99, 8
  %v143 = vpop.permute.xlu0 %142
  %144 = vrot.lane.b32.xlu0 %v102, 8
  %v145 = vpop.permute.xlu0 %144
  %146 = vrot.lane.b32.xlu0 %v105, 8
  %v147 = vpop.permute.xlu0 %146
  %148 = vrot.lane.b32.xlu0 %v108, 8
  %v149 = vpop.permute.xlu0 %148
  %150 = vrot.lane.b32.xlu0 %v111, 8
  %v151 = vpop.permute.xlu0 %150
  %152 = vrot.lane.b32.xlu0 %v114, 8
  %v153 = vpop.permute.xlu0 %152
  %154 = vrot.lane.b32.xlu0 %v117, 8
  %v155 = vpop.permute.xlu0 %154
  %156 = vrot.lane.b32.xlu0 %v120, 8
  %v157 = vpop.permute.xlu0 %156
  %158 = vrot.lane.b32.xlu0 %v123, 8
  %v159 = vpop.permute.xlu0 %158
  %160 = vrot.lane.b32.xlu0 %v126, 8
  %v161 = vpop.permute.xlu0 %160
  %162 = vrot.lane.b32.xlu0 %v129, 8
  %v163 = vpop.permute.xlu0 %162
  %164 = vrot.lane.b32.xlu0 %v132, 8
  %v165 = vpop.permute.xlu0 %164
  %166 = vrot.lane.b32.xlu0 %v135, 8
  %v167 = vpop.permute.xlu0 %166
  %vm184 = vcmask 1045504
  %v185 = vrot.slane %v15, 2
  %v186 = vrot.slane %v16, 2
  %v187 = vsel %vm184, %v185, %v186
  %v188 = vrot.slane %v17, 2
  %v189 = vrot.slane %v18, 2
  %v190 = vsel %vm184, %v188, %v189
  %v191 = vrot.slane %v19, 2
  %v192 = vrot.slane %v20, 2
  %v193 = vsel %vm184, %v191, %v192
  %v194 = vrot.slane %v21, 2
  %v195 = vrot.slane %v22, 2
  %v196 = vsel %vm184, %v194, %v195
  %v197 = vrot.slane %v23, 2
  %v198 = vrot.slane %v24, 2
  %v199 = vsel %vm184, %v197, %v198
  %v200 = vrot.slane %v25, 2
  %v201 = vrot.slane %v26, 2
  %v202 = vsel %vm184, %v200, %v201
  %v203 = vrot.slane %v27, 2
  %v204 = vrot.slane %v28, 2
  %v205 = vsel %vm184, %v203, %v204
  %v206 = vrot.slane %v29, 2
  %v207 = vrot.slane %v30, 2
  %v208 = vsel %vm184, %v206, %v207
  %v209 = vrot.slane %v35, 2
  %v210 = vrot.slane %v36, 2
  %v211 = vsel %vm184, %v209, %v210
  %v212 = vrot.slane %v37, 2
  %v213 = vrot.slane %v38, 2
  %v214 = vsel %vm184, %v212, %v213
  %v215 = vrot.slane %v39, 2
  %v216 = vrot.slane %v40, 2
  %v217 = vsel %vm184, %v215, %v216
  %v218 = vrot.slane %v41, 2
  %v219 = vrot.slane %v42, 2
  %v220 = vsel %vm184, %v218, %v219
  %v221 = vrot.slane %v43, 2
  %v222 = vrot.slane %v44, 2
  %v223 = vsel %vm184, %v221, %v222
  %v224 = vrot.slane %v45, 2
  %v225 = vrot.slane %v46, 2
  %v226 = vsel %vm184, %v224, %v225
  %v227 = vrot.slane %v47, 2
  %v228 = vrot.slane %v48, 2
  %v229 = vsel %vm184, %v227, %v228
  %v230 = vrot.slane %v49, 2
  %v231 = vrot.slane %v50, 2
  %v232 = vsel %vm184, %v230, %v231
  %233 = vrot.lane.b32.xlu0 %v187, 16
  %v234 = vpop.permute.xlu0 %233
  %235 = vrot.lane.b32.xlu0 %v190, 16
  %v236 = vpop.permute.xlu0 %235
  %237 = vrot.lane.b32.xlu0 %v193, 16
  %v238 = vpop.permute.xlu0 %237
  %239 = vrot.lane.b32.xlu0 %v196, 16
  %v240 = vpop.permute.xlu0 %239
  %241 = vrot.lane.b32.xlu0 %v199, 16
  %v242 = vpop.permute.xlu0 %241
  %243 = vrot.lane.b32.xlu0 %v202, 16
  %v244 = vpop.permute.xlu0 %243
  %245 = vrot.lane.b32.xlu0 %v205, 16
  %v246 = vpop.permute.xlu0 %245
  %247 = vrot.lane.b32.xlu0 %v208, 16
  %v248 = vpop.permute.xlu0 %247
  %249 = vrot.lane.b32.xlu0 %v211, 16
  %v250 = vpop.permute.xlu0 %249
  %251 = vrot.lane.b32.xlu0 %v214, 16
  %v252 = vpop.permute.xlu0 %251
  %253 = vrot.lane.b32.xlu0 %v217, 16
  %v254 = vpop.permute.xlu0 %253
  %255 = vrot.lane.b32.xlu0 %v220, 16
  %v256 = vpop.permute.xlu0 %255
  %257 = vrot.lane.b32.xlu0 %v223, 16
  %v258 = vpop.permute.xlu0 %257
  %259 = vrot.lane.b32.xlu0 %v226, 16
  %v260 = vpop.permute.xlu0 %259
  %261 = vrot.lane.b32.xlu0 %v229, 16
  %v262 = vpop.permute.xlu0 %261
  %263 = vrot.lane.b32.xlu0 %v232, 16
  %v264 = vpop.permute.xlu0 %263
  %283 = vrot.lane.b32.xlu0 %v17, 24
  %v284 = vpop.permute.xlu0 %283
  %285 = vrot.lane.b32.xlu0 %v19, 24
  %v286 = vpop.permute.xlu0 %285
  %287 = vrot.lane.b32.xlu0 %v21, 24
  %v288 = vpop.permute.xlu0 %287
  %289 = vrot.lane.b32.xlu0 %v23, 24
  %v290 = vpop.permute.xlu0 %289
  %291 = vrot.lane.b32.xlu0 %v25, 24
  %v292 = vpop.permute.xlu0 %291
  %293 = vrot.lane.b32.xlu0 %v27, 24
  %v294 = vpop.permute.xlu0 %293
  %295 = vrot.lane.b32.xlu0 %v29, 24
  %v296 = vpop.permute.xlu0 %295
  %297 = vrot.lane.b32.xlu0 %v31, 24
  %v298 = vpop.permute.xlu0 %297
  %299 = vrot.lane.b32.xlu0 %v37, 24
  %v300 = vpop.permute.xlu0 %299
  %301 = vrot.lane.b32.xlu0 %v39, 24
  %v302 = vpop.permute.xlu0 %301
  %303 = vrot.lane.b32.xlu0 %v41, 24
  %v304 = vpop.permute.xlu0 %303
  %305 = vrot.lane.b32.xlu0 %v43, 24
  %v306 = vpop.permute.xlu0 %305
  %307 = vrot.lane.b32.xlu0 %v45, 24
  %v308 = vpop.permute.xlu0 %307
  %309 = vrot.lane.b32.xlu0 %v47, 24
  %v310 = vpop.permute.xlu0 %309
  %311 = vrot.lane.b32.xlu0 %v49, 24
  %v312 = vpop.permute.xlu0 %311
  %313 = vrot.lane.b32.xlu0 %v51, 24
  %v314 = vpop.permute.xlu0 %313
  %v333 = vrot.slane %v31, 1
  %v334 = vrot.slane %v32, 1
  %v335 = vsel %vm87, %v333, %v334
  %v336 = vrot.slane %v51, 1
  %v337 = vrot.slane %v52, 1
  %v338 = vsel %vm87, %v336, %v337
  %339 = vrot.lane.b32.xlu0 %v93, 32
  %v340 = vpop.permute.xlu0 %339
  %341 = vrot.lane.b32.xlu0 %v96, 32
  %v342 = vpop.permute.xlu0 %341
  %343 = vrot.lane.b32.xlu0 %v99, 32
  %v344 = vpop.permute.xlu0 %343
  %345 = vrot.lane.b32.xlu0 %v102, 32
  %v346 = vpop.permute.xlu0 %345
  %347 = vrot.lane.b32.xlu0 %v105, 32
  %v348 = vpop.permute.xlu0 %347
  %349 = vrot.lane.b32.xlu0 %v108, 32
  %v350 = vpop.permute.xlu0 %349
  %351 = vrot.lane.b32.xlu0 %v111, 32
  %v352 = vpop.permute.xlu0 %351
  %353 = vrot.lane.b32.xlu0 %v335, 32
  %v354 = vpop.permute.xlu0 %353
  %355 = vrot.lane.b32.xlu0 %v117, 32
  %v356 = vpop.permute.xlu0 %355
  %357 = vrot.lane.b32.xlu0 %v120, 32
  %v358 = vpop.permute.xlu0 %357
  %359 = vrot.lane.b32.xlu0 %v123, 32
  %v360 = vpop.permute.xlu0 %359
  %361 = vrot.lane.b32.xlu0 %v126, 32
  %v362 = vpop.permute.xlu0 %361
  %363 = vrot.lane.b32.xlu0 %v129, 32
  %v364 = vpop.permute.xlu0 %363
  %365 = vrot.lane.b32.xlu0 %v132, 32
  %v366 = vpop.permute.xlu0 %365
  %367 = vrot.lane.b32.xlu0 %v135, 32
  %v368 = vpop.permute.xlu0 %367
  %369 = vrot.lane.b32.xlu0 %v338, 32
  %v370 = vpop.permute.xlu0 %369
  %v387 = vrot.slane %v31, 2
  %v388 = vrot.slane %v32, 2
  %v389 = vsel %vm184, %v387, %v388
  %v390 = vrot.slane %v51, 2
  %v391 = vrot.slane %v52, 2
  %v392 = vsel %vm184, %v390, %v391
  %393 = vrot.lane.b32.xlu0 %v190, 40
  %v394 = vpop.permute.xlu0 %393
  %395 = vrot.lane.b32.xlu0 %v193, 40
  %v396 = vpop.permute.xlu0 %395
  %397 = vrot.lane.b32.xlu0 %v196, 40
  %v398 = vpop.permute.xlu0 %397
  %399 = vrot.lane.b32.xlu0 %v199, 40
  %v400 = vpop.permute.xlu0 %399
  %401 = vrot.lane.b32.xlu0 %v202, 40
  %v402 = vpop.permute.xlu0 %401
  %403 = vrot.lane.b32.xlu0 %v205, 40
  %v404 = vpop.permute.xlu0 %403
  %405 = vrot.lane.b32.xlu0 %v208, 40
  %v406 = vpop.permute.xlu0 %405
  %407 = vrot.lane.b32.xlu0 %v389, 40
  %v408 = vpop.permute.xlu0 %407
  %409 = vrot.lane.b32.xlu0 %v214, 40
  %v410 = vpop.permute.xlu0 %409
  %411 = vrot.lane.b32.xlu0 %v217, 40
  %v412 = vpop.permute.xlu0 %411
  %413 = vrot.lane.b32.xlu0 %v220, 40
  %v414 = vpop.permute.xlu0 %413
  %415 = vrot.lane.b32.xlu0 %v223, 40
  %v416 = vpop.permute.xlu0 %415
  %417 = vrot.lane.b32.xlu0 %v226, 40
  %v418 = vpop.permute.xlu0 %417
  %419 = vrot.lane.b32.xlu0 %v229, 40
  %v420 = vpop.permute.xlu0 %419
  %421 = vrot.lane.b32.xlu0 %v232, 40
  %v422 = vpop.permute.xlu0 %421
  %423 = vrot.lane.b32.xlu0 %v392, 40
  %v424 = vpop.permute.xlu0 %423
  %443 = vrot.lane.b32.xlu0 %v19, 48
  %v444 = vpop.permute.xlu0 %443
  %445 = vrot.lane.b32.xlu0 %v21, 48
  %v446 = vpop.permute.xlu0 %445
  %447 = vrot.lane.b32.xlu0 %v23, 48
  %v448 = vpop.permute.xlu0 %447
  %449 = vrot.lane.b32.xlu0 %v25, 48
  %v450 = vpop.permute.xlu0 %449
  %451 = vrot.lane.b32.xlu0 %v27, 48
  %v452 = vpop.permute.xlu0 %451
  %453 = vrot.lane.b32.xlu0 %v29, 48
  %v454 = vpop.permute.xlu0 %453
  %455 = vrot.lane.b32.xlu0 %v31, 48
  %v456 = vpop.permute.xlu0 %455
  %457 = vrot.lane.b32.xlu0 %v33, 48
  %v458 = vpop.permute.xlu0 %457
  %459 = vrot.lane.b32.xlu0 %v39, 48
  %v460 = vpop.permute.xlu0 %459
  %461 = vrot.lane.b32.xlu0 %v41, 48
  %v462 = vpop.permute.xlu0 %461
  %463 = vrot.lane.b32.xlu0 %v43, 48
  %v464 = vpop.permute.xlu0 %463
  %465 = vrot.lane.b32.xlu0 %v45, 48
  %v466 = vpop.permute.xlu0 %465
  %467 = vrot.lane.b32.xlu0 %v47, 48
  %v468 = vpop.permute.xlu0 %467
  %469 = vrot.lane.b32.xlu0 %v49, 48
  %v470 = vpop.permute.xlu0 %469
  %471 = vrot.lane.b32.xlu0 %v51, 48
  %v472 = vpop.permute.xlu0 %471
  %473 = vrot.lane.b32.xlu0 %v53, 48
  %v474 = vpop.permute.xlu0 %473
  %v493 = vrot.slane %v33, 1
  %v494 = vrot.slane %v34, 1
  %v495 = vsel %vm87, %v493, %v494
  %v496 = vrot.slane %v53, 1
  %v497 = vrot.slane %v54, 1
  %v498 = vsel %vm87, %v496, %v497
  %499 = vrot.lane.b32.xlu0 %v96, 56
  %v500 = vpop.permute.xlu0 %499
  %501 = vrot.lane.b32.xlu0 %v99, 56
  %v502 = vpop.permute.xlu0 %501
  %503 = vrot.lane.b32.xlu0 %v102, 56
  %v504 = vpop.permute.xlu0 %503
  %505 = vrot.lane.b32.xlu0 %v105, 56
  %v506 = vpop.permute.xlu0 %505
  %507 = vrot.lane.b32.xlu0 %v108, 56
  %v508 = vpop.permute.xlu0 %507
  %509 = vrot.lane.b32.xlu0 %v111, 56
  %v510 = vpop.permute.xlu0 %509
  %511 = vrot.lane.b32.xlu0 %v335, 56
  %v512 = vpop.permute.xlu0 %511
  %513 = vrot.lane.b32.xlu0 %v495, 56
  %v514 = vpop.permute.xlu0 %513
  %515 = vrot.lane.b32.xlu0 %v120, 56
  %v516 = vpop.permute.xlu0 %515
  %517 = vrot.lane.b32.xlu0 %v123, 56
  %v518 = vpop.permute.xlu0 %517
  %519 = vrot.lane.b32.xlu0 %v126, 56
  %v520 = vpop.permute.xlu0 %519
  %521 = vrot.lane.b32.xlu0 %v129, 56
  %v522 = vpop.permute.xlu0 %521
  %523 = vrot.lane.b32.xlu0 %v132, 56
  %v524 = vpop.permute.xlu0 %523
  %525 = vrot.lane.b32.xlu0 %v135, 56
  %v526 = vpop.permute.xlu0 %525
  %527 = vrot.lane.b32.xlu0 %v338, 56
  %v528 = vpop.permute.xlu0 %527
  %529 = vrot.lane.b32.xlu0 %v498, 56
  %v530 = vpop.permute.xlu0 %529
  %v547 = vrot.slane %v33, 2
  %v548 = vrot.slane %v34, 2
  %v549 = vsel %vm184, %v547, %v548
  %v550 = vrot.slane %v53, 2
  %v551 = vrot.slane %v54, 2
  %v552 = vsel %vm184, %v550, %v551
  %553 = vrot.lane.b32.xlu0 %v193, 64
  %v554 = vpop.permute.xlu0 %553
  %555 = vrot.lane.b32.xlu0 %v196, 64
  %v556 = vpop.permute.xlu0 %555
  %557 = vrot.lane.b32.xlu0 %v199, 64
  %v558 = vpop.permute.xlu0 %557
  %559 = vrot.lane.b32.xlu0 %v202, 64
  %v560 = vpop.permute.xlu0 %559
  %561 = vrot.lane.b32.xlu0 %v205, 64
  %v562 = vpop.permute.xlu0 %561
  %563 = vrot.lane.b32.xlu0 %v208, 64
  %v564 = vpop.permute.xlu0 %563
  %565 = vrot.lane.b32.xlu0 %v389, 64
  %v566 = vpop.permute.xlu0 %565
  %567 = vrot.lane.b32.xlu0 %v549, 64
  %v568 = vpop.permute.xlu0 %567
  %569 = vrot.lane.b32.xlu0 %v217, 64
  %v570 = vpop.permute.xlu0 %569
  %571 = vrot.lane.b32.xlu0 %v220, 64
  %v572 = vpop.permute.xlu0 %571
  %573 = vrot.lane.b32.xlu0 %v223, 64
  %v574 = vpop.permute.xlu0 %573
  %575 = vrot.lane.b32.xlu0 %v226, 64
  %v576 = vpop.permute.xlu0 %575
  %577 = vrot.lane.b32.xlu0 %v229, 64
  %v578 = vpop.permute.xlu0 %577
  %579 = vrot.lane.b32.xlu0 %v232, 64
  %v580 = vpop.permute.xlu0 %579
  %581 = vrot.lane.b32.xlu0 %v392, 64
  %v582 = vpop.permute.xlu0 %581
  %583 = vrot.lane.b32.xlu0 %v552, 64
  %v584 = vpop.permute.xlu0 %583
  %vm601 = vcmask 64512
  %v602 = vsel %vm601, %v15, %v137
  %v603 = vsel %vm601, %v17, %v139
  %v604 = vsel %vm601, %v19, %v141
  %v605 = vsel %vm601, %v21, %v143
  %v606 = vsel %vm601, %v23, %v145
  %v607 = vsel %vm601, %v25, %v147
  %v608 = vsel %vm601, %v27, %v149
  %v609 = vsel %vm601, %v29, %v151
  %v610 = vsel %vm601, %v35, %v153
  %v611 = vsel %vm601, %v37, %v155
  %v612 = vsel %vm601, %v39, %v157
  %v613 = vsel %vm601, %v41, %v159
  %v614 = vsel %vm601, %v43, %v161
  %v615 = vsel %vm601, %v45, %v163
  %v616 = vsel %vm601, %v47, %v165
  %v617 = vsel %vm601, %v49, %v167
  %vm618 = vcmask 130048
  %v619 = vsel %vm618, %v602, %v234
  %v620 = vsel %vm618, %v603, %v236
  %v621 = vsel %vm618, %v604, %v238
  %v622 = vsel %vm618, %v605, %v240
  %v623 = vsel %vm618, %v606, %v242
  %v624 = vsel %vm618, %v607, %v244
  %v625 = vsel %vm618, %v608, %v246
  %v626 = vsel %vm618, %v609, %v248
  %v627 = vsel %vm618, %v610, %v250
  %v628 = vsel %vm618, %v611, %v252
  %v629 = vsel %vm618, %v612, %v254
  %v630 = vsel %vm618, %v613, %v256
  %v631 = vsel %vm618, %v614, %v258
  %v632 = vsel %vm618, %v615, %v260
  %v633 = vsel %vm618, %v616, %v262
  %v634 = vsel %vm618, %v617, %v264
  %vm635 = vcmask 195584
  %v636 = vsel %vm635, %v619, %v284
  %v637 = vsel %vm635, %v620, %v286
  %v638 = vsel %vm635, %v621, %v288
  %v639 = vsel %vm635, %v622, %v290
  %v640 = vsel %vm635, %v623, %v292
  %v641 = vsel %vm635, %v624, %v294
  %v642 = vsel %vm635, %v625, %v296
  %v643 = vsel %vm635, %v626, %v298
  %v644 = vsel %vm635, %v627, %v300
  %v645 = vsel %vm635, %v628, %v302
  %v646 = vsel %vm635, %v629, %v304
  %v647 = vsel %vm635, %v630, %v306
  %v648 = vsel %vm635, %v631, %v308
  %v649 = vsel %vm635, %v632, %v310
  %v650 = vsel %vm635, %v633, %v312
  %v651 = vsel %vm635, %v634, %v314
  %vm652 = vcmask 261120
  %v653 = vsel %vm652, %v636, %v340
  %v654 = vsel %vm652, %v637, %v342
  %v655 = vsel %vm652, %v638, %v344
  %v656 = vsel %vm652, %v639, %v346
  %v657 = vsel %vm652, %v640, %v348
  %v658 = vsel %vm652, %v641, %v350
  %v659 = vsel %vm652, %v642, %v352
  %v660 = vsel %vm652, %v643, %v354
  %v661 = vsel %vm652, %v644, %v356
  %v662 = vsel %vm652, %v645, %v358
  %v663 = vsel %vm652, %v646, %v360
  %v664 = vsel %vm652, %v647, %v362
  %v665 = vsel %vm652, %v648, %v364
  %v666 = vsel %vm652, %v649, %v366
  %v667 = vsel %vm652, %v650, %v368
  %v668 = vsel %vm652, %v651, %v370
  %vm669 = vcmask 326656
  %v670 = vsel %vm669, %v653, %v394
  %v671 = vsel %vm669, %v654, %v396
  %v672 = vsel %vm669, %v655, %v398
  %v673 = vsel %vm669, %v656, %v400
  %v674 = vsel %vm669, %v657, %v402
  %v675 = vsel %vm669, %v658, %v404
  %v676 = vsel %vm669, %v659, %v406
  %v677 = vsel %vm669, %v660, %v408
  %v678 = vsel %vm669, %v661, %v410
  %v679 = vsel %vm669, %v662, %v412
  %v680 = vsel %vm669, %v663, %v414
  %v681 = vsel %vm669, %v664, %v416
  %v682 = vsel %vm669, %v665, %v418
  %v683 = vsel %vm669, %v666, %v420
  %v684 = vsel %vm669, %v667, %v422
  %v685 = vsel %vm669, %v668, %v424
  %vm686 = vcmask 392192
  %v687 = vsel %vm686, %v670, %v444
  %v688 = vsel %vm686, %v671, %v446
  %v689 = vsel %vm686, %v672, %v448
  %v690 = vsel %vm686, %v673, %v450
  %v691 = vsel %vm686, %v674, %v452
  %v692 = vsel %vm686, %v675, %v454
  %v693 = vsel %vm686, %v676, %v456
  %v694 = vsel %vm686, %v677, %v458
  %v695 = vsel %vm686, %v678, %v460
  %v696 = vsel %vm686, %v679, %v462
  %v697 = vsel %vm686, %v680, %v464
  %v698 = vsel %vm686, %v681, %v466
  %v699 = vsel %vm686, %v682, %v468
  %v700 = vsel %vm686, %v683, %v470
  %v701 = vsel %vm686, %v684, %v472
  %v702 = vsel %vm686, %v685, %v474
  %vm703 = vcmask 457728
  %v704 = vsel %vm703, %v687, %v500
  %v705 = vsel %vm703, %v688, %v502
  %v706 = vsel %vm703, %v689, %v504
  %v707 = vsel %vm703, %v690, %v506
  %v708 = vsel %vm703, %v691, %v508
  %v709 = vsel %vm703, %v692, %v510
  %v710 = vsel %vm703, %v693, %v512
  %v711 = vsel %vm703, %v694, %v514
  %v712 = vsel %vm703, %v695, %v516
  %v713 = vsel %vm703, %v696, %v518
  %v714 = vsel %vm703, %v697, %v520
  %v715 = vsel %vm703, %v698, %v522
  %v716 = vsel %vm703, %v699, %v524
  %v717 = vsel %vm703, %v700, %v526
  %v718 = vsel %vm703, %v701, %v528
  %v719 = vsel %vm703, %v702, %v530
  %vm720 = vcmask 523264
  %v721 = vsel %vm720, %v704, %v554
  %v722 = vsel %vm720, %v705, %v556
  %v723 = vsel %vm720, %v706, %v558
  %v724 = vsel %vm720, %v707, %v560
  %v725 = vsel %vm720, %v708, %v562
  %v726 = vsel %vm720, %v709, %v564
  %v727 = vsel %vm720, %v710, %v566
  %v728 = vsel %vm720, %v711, %v568
  %v729 = vsel %vm720, %v712, %v570
  %v730 = vsel %vm720, %v713, %v572
  %v731 = vsel %vm720, %v714, %v574
  %v732 = vsel %vm720, %v715, %v576
  %v733 = vsel %vm720, %v716, %v578
  %v734 = vsel %vm720, %v717, %v580
  %v735 = vsel %vm720, %v718, %v582
  %v736 = vsel %vm720, %v719, %v584
  %v737 = vpack.c.bf16 %v722, %v721
  %v738 = vpack.c.bf16 %v724, %v723
  %v739 = vpack.c.bf16 %v726, %v725
  %v740 = vpack.c.bf16 %v728, %v727
  %v741 = vpack.c.bf16 %v730, %v729
  %v742 = vpack.c.bf16 %v732, %v731
  %v743 = vpack.c.bf16 %v734, %v733
  %v744 = vpack.c.bf16 %v736, %v735
  %v745 = vld [vmem:[%s1] sm:$0xf]
  %v746 = vld [vmem:[%s1 + $0x4] sm:$0xf]
  %v747 = vld [vmem:[%s1 + $0x8] sm:$0xf]
  %v748 = vld [vmem:[%s1 + $0xc] sm:$0xf]
  %v749 = vld [vmem:[%s1 + $0x10] sm:$0xf]
  %v750 = vld [vmem:[%s1 + $0x14] sm:$0xf]
  %v751 = vld [vmem:[%s1 + $0x18] sm:$0xf]
  %v752 = vld [vmem:[%s1 + $0x1c] sm:$0xf]
  %v753 = vld [vmem:[%s1 + $0x20] sm:$0xf]
  %v754 = vld [vmem:[%s2] sm:$0x1]
  %v756 = vperm.slane %v754, 0
  %v767 = vunpack.c.l.b16 %v745
  %v768 = vunpack.c.l.b16 %v746
  %v769 = vunpack.c.l.b16 %v747
  %v770 = vunpack.c.l.b16 %v748
  %v771 = vunpack.c.l.b16 %v749
  %v772 = vunpack.c.l.b16 %v750
  %v773 = vunpack.c.l.b16 %v751
  %v774 = vunpack.c.l.b16 %v752
  %v775 = vunpack.c.l.b16 %v753
  %v776 = vpack.c.b16 %v768, %v767
  %v777 = vpack.c.b16 %v770, %v769
  %v778 = vpack.c.b16 %v772, %v771
  %v779 = vpack.c.b16 %v774, %v773
  %v780 = vpack.c.b16 %v775, %v775
  %vm785 = vcmask 588800
  %v787 = vsel %vm785, %v737, 0
  %v790 = vsel %vm785, %v738, 0
  %v793 = vsel %vm785, %v739, 0
  %v796 = vsel %vm785, %v740, 0
  %v799 = vsel %vm785, %v741, 0
  %v802 = vsel %vm785, %v742, 0
  %v805 = vsel %vm785, %v743, 0
  %v808 = vsel %vm785, %v744, 0
  %vm810 = vcmask 1043456
  %v812 = vsel %vm810, %v780, 0
  %814 = vmatpush.bf16.msra.mxu0 0
  %815 = vmatpush.bf16.msra.mxu0 0
  %816 = vmatpush.bf16.msra.mxu0 0
  %817 = vmatpush.bf16.msra.mxu0 %v812
  %818 = vmatpush.bf16.msra.mxu0 %v779
  %819 = vmatpush.bf16.msra.mxu0 %v778
  %820 = vmatpush.bf16.msra.mxu0 %v777
  %821 = vmatpush.bf16.msra.mxu0 %v776
  %822 = vmatmul.bf16.gmra.mxu0 %v787
  %v823 = vpop.f32.mrf.mxu0
  %v824 = vadd.f32 %v756, %v823
  %v825 = vpop.f32.mrf.mxu0
  %v826 = vadd.f32 %v756, %v825
  %827 = vmatmul.bf16.gmra.mxu0 %v790
  %v828 = vpop.f32.mrf.mxu0
  %v829 = vadd.f32 %v756, %v828
  %v830 = vpop.f32.mrf.mxu0
  %v831 = vadd.f32 %v756, %v830
  %832 = vmatmul.bf16.gmra.mxu0 %v793
  %v833 = vpop.f32.mrf.mxu0
  %v834 = vadd.f32 %v756, %v833
  %v835 = vpop.f32.mrf.mxu0
  %v836 = vadd.f32 %v756, %v835
  %837 = vmatmul.bf16.gmra.mxu0 %v796
  %v838 = vpop.f32.mrf.mxu0
  %v839 = vadd.f32 %v756, %v838
  %v840 = vpop.f32.mrf.mxu0
  %v841 = vadd.f32 %v756, %v840
  %842 = vmatmul.bf16.gmra.mxu0 %v799
  %v843 = vpop.f32.mrf.mxu0
  %v844 = vadd.f32 %v756, %v843
  %v845 = vpop.f32.mrf.mxu0
  %v846 = vadd.f32 %v756, %v845
  %847 = vmatmul.bf16.gmra.mxu0 %v802
  %v848 = vpop.f32.mrf.mxu0
  %v849 = vadd.f32 %v756, %v848
  %v850 = vpop.f32.mrf.mxu0
  %v851 = vadd.f32 %v756, %v850
  %852 = vmatmul.bf16.gmra.mxu0 %v805
  %v853 = vpop.f32.mrf.mxu0
  %v854 = vadd.f32 %v756, %v853
  %v855 = vpop.f32.mrf.mxu0
  %v856 = vadd.f32 %v756, %v855
  %857 = vmatmul.bf16.gmra.mxu0 %v808
  %v858 = vpop.f32.mrf.mxu0
  %v859 = vadd.f32 %v756, %v858
  %v860 = vpop.f32.mrf.mxu0
  %v861 = vadd.f32 %v756, %v860
  %862 = vdwg.mxu0
  %vm863 = vcmp.gt.f32.partialorder %v824, 0.0
  %vm864 = vcmp.gt.f32.partialorder %v826, 0.0
  %vm865 = vcmp.gt.f32.partialorder %v829, 0.0
  %vm866 = vcmp.gt.f32.partialorder %v831, 0.0
  %vm867 = vcmp.gt.f32.partialorder %v834, 0.0
  %vm868 = vcmp.gt.f32.partialorder %v836, 0.0
  %vm869 = vcmp.gt.f32.partialorder %v839, 0.0
  %vm870 = vcmp.gt.f32.partialorder %v841, 0.0
  %vm871 = vcmp.gt.f32.partialorder %v844, 0.0
  %vm872 = vcmp.gt.f32.partialorder %v846, 0.0
  %vm873 = vcmp.gt.f32.partialorder %v849, 0.0
  %vm874 = vcmp.gt.f32.partialorder %v851, 0.0
  %vm875 = vcmp.gt.f32.partialorder %v854, 0.0
  %vm876 = vcmp.gt.f32.partialorder %v856, 0.0
  %vm877 = vcmp.gt.f32.partialorder %v859, 0.0
  %vm878 = vcmp.gt.f32.partialorder %v861, 0.0
  %v879 = vmul.f32 %v824, 0.1
  %v880 = vmul.f32 %v826, 0.1
  %v881 = vmul.f32 %v829, 0.1
  %v882 = vmul.f32 %v831, 0.1
  %v883 = vmul.f32 %v834, 0.1
  %v884 = vmul.f32 %v836, 0.1
  %v885 = vmul.f32 %v839, 0.1
  %v886 = vmul.f32 %v841, 0.1
  %v887 = vmul.f32 %v844, 0.1
  %v888 = vmul.f32 %v846, 0.1
  %v889 = vmul.f32 %v849, 0.1
  %v890 = vmul.f32 %v851, 0.1
  %v891 = vmul.f32 %v854, 0.1
  %v892 = vmul.f32 %v856, 0.1
  %v893 = vmul.f32 %v859, 0.1
  %v894 = vmul.f32 %v861, 0.1
  %v895 = vsel %vm863, %v824, %v879
  %v896 = vsel %vm864, %v826, %v880
  %v897 = vsel %vm865, %v829, %v881
  %v898 = vsel %vm866, %v831, %v882
  %v899 = vsel %vm867, %v834, %v883
  %v900 = vsel %vm868, %v836, %v884
  %v901 = vsel %vm869, %v839, %v885
  %v902 = vsel %vm870, %v841, %v886
  %v903 = vsel %vm871, %v844, %v887
  %v904 = vsel %vm872, %v846, %v888
  %v905 = vsel %vm873, %v849, %v889
  %v906 = vsel %vm874, %v851, %v890
  %v907 = vsel %vm875, %v854, %v891
  %v908 = vsel %vm876, %v856, %v892
  %v909 = vsel %vm877, %v859, %v893
  %v910 = vsel %vm878, %v861, %v894
  %911 = vst [vmem:[%s3] sm:$0xff] %v895
  %912 = vst [vmem:[%s3 + $0x8] sm:$0xff] %v896
  %913 = vst [vmem:[%s3 + $0x10] sm:$0xff] %v897
  %914 = vst [vmem:[%s3 + $0x18] sm:$0xff] %v898
  %915 = vst [vmem:[%s3 + $0x20] sm:$0xff] %v899
  %916 = vst [vmem:[%s3 + $0x28] sm:$0xff] %v900
  %917 = vst [vmem:[%s3 + $0x30] sm:$0xff] %v901
  %918 = vst [vmem:[%s3 + $0x38] sm:$0xff] %v902
  %919 = vst [vmem:[%s3 + $0x40] sm:$0xff] %v903
  %920 = vst [vmem:[%s3 + $0x48] sm:$0xff] %v904
  %921 = vst [vmem:[%s3 + $0x50] sm:$0xff] %v905
  %922 = vst [vmem:[%s3 + $0x58] sm:$0xff] %v906
  %923 = vst [vmem:[%s3 + $0x60] sm:$0xff] %v907
  %924 = vst [vmem:[%s3 + $0x68] sm:$0xff] %v908
  %925 = vst [vmem:[%s3 + $0x70] sm:$0xff] %v909
  %926 = vst [vmem:[%s3 + $0x78] sm:$0xff] %v910
  // Predicated region
  $region14: #{darknet_forward.12} parent=0 // pred_check
    _
  $region15: #{darknet_forward.12} parent=0 // pred_check_branch
    %928 = sbr.rel (0) target = $region17
  $region16: #{darknet_forward.12} parent=0 // pred_region
    _
  $region17: #{darknet_forward.12} parent=0 // pred_fallthru
    _
  // Predicated region
  $region18: #{darknet_forward.12} parent=0 // pred_check
    _
  $region19: #{darknet_forward.12} parent=0 // pred_check_branch
    %930 = sbr.rel (0) target = $region21
  $region20: #{darknet_forward.12} parent=0 // pred_region
    _
  $region21: #{darknet_forward.12} parent=0 // pred_fallthru
    _

// kernel: darknet_forward.9
$region0: #{darknet_forward.9}
  #allocation0 [shape = 'u32[]', space=smem, size = 0x4, offset = 0x4, fixed_abs, tag = 'smem constant byte address 0x4 - core index']
  #allocation1 [shape = 'u32[72,128]{1,0:T(1,128)}', space=vmem, size = 0x9000, scoped, tag = 'internal scratch']
  %s0 = inlined_call_operand.vmem [shape: f32[2,18,18,4], index: 0, kind: input, shape index: {}]
  %s1 = inlined_call_operand.vmem [shape: bf16[36,128], index: 1, kind: input, shape index: {}]
  %s2 = inlined_call_operand.vmem [shape: f32[1,128], index: 2, kind: input, shape index: {}]
  %s3 = inlined_call_operand.vmem [shape: f32[512,128], index: 3, kind: output, shape index: {}]
  %s4 = sld [smem:[#allocation0]]
  $region22: #{darknet_forward.9} parent=0
    _
  %s6 = ssub.s32 1, %s4
  %s7 = scalar_select 0, %s6, %s4
  // Predicated region
  $region2: #{darknet_forward.9} parent=0 // pred_check
    _
  $region3: #{darknet_forward.9} parent=0 // pred_check_branch
    %9 = sbr.rel (0) target = $region5
  $region4: #{darknet_forward.9} parent=0 // pred_region
    _
  $region5: #{darknet_forward.9} parent=0 // pred_fallthru
    _
  // Predicated region
  $region6: #{darknet_forward.9} parent=0 // pred_check
    _
  $region7: #{darknet_forward.9} parent=0 // pred_check_branch
    %11 = sbr.rel (0) target = $region9
  $region8: #{darknet_forward.9} parent=0 // pred_region
    _
  $region9: #{darknet_forward.9} parent=0 // pred_fallthru
    _
  // Predicated region
  $region10: #{darknet_forward.9} parent=0 // pred_check
    _
  $region11: #{darknet_forward.9} parent=0 // pred_check_branch
    %13 = sbr.rel (0) target = $region13
  $region12: #{darknet_forward.9} parent=0 // pred_region
    _
  $region13: #{darknet_forward.9} parent=0 // pred_fallthru
    _
  %v15 = vld [vmem:[%s0] sm:$0xff]
  %v16 = vld [vmem:[%s0 + $0x8] sm:$0xff]
  %v17 = vld [vmem:[%s0 + $0x10] sm:$0x3]
  %v18 = vld [vmem:[%s0 + $0x18] sm:$0xff]
  %v19 = vld [vmem:[%s0 + $0x20] sm:$0xff]
  %v20 = vld [vmem:[%s0 + $0x28] sm:$0x3]
  %v21 = vld [vmem:[%s0 + $0x30] sm:$0xff]
  %v22 = vld [vmem:[%s0 + $0x38] sm:$0xff]
  %v23 = vld [vmem:[%s0 + $0x40] sm:$0x3]
  %v24 = vld [vmem:[%s0 + $0x48] sm:$0xff]
  %v25 = vld [vmem:[%s0 + $0x50] sm:$0xff]
  %v26 = vld [vmem:[%s0 + $0x58] sm:$0x3]
  %v27 = vld [vmem:[%s0 + $0x60] sm:$0xff]
  %v28 = vld [vmem:[%s0 + $0x68] sm:$0xff]
  %v29 = vld [vmem:[%s0 + $0x70] sm:$0x3]
  %v30 = vld [vmem:[%s0 + $0x78] sm:$0xff]
  %v31 = vld [vmem:[%s0 + $0x80] sm:$0xff]
  %v32 = vld [vmem:[%s0 + $0x88] sm:$0x3]
  %v33 = vld [vmem:[%s0 + $0x90] sm:$0xff]
  %v34 = vld [vmem:[%s0 + $0x98] sm:$0xff]
  %v35 = vld [vmem:[%s0 + $0xa0] sm:$0x3]
  %v36 = vld [vmem:[%s0 + $0xa8] sm:$0xff]
  %v37 = vld [vmem:[%s0 + $0xb0] sm:$0xff]
  %v38 = vld [vmem:[%s0 + $0xb8] sm:$0x3]
  %v39 = vld [vmem:[%s0 + $0xc0] sm:$0xff]
  %v40 = vld [vmem:[%s0 + $0xc8] sm:$0xff]
  %v41 = vld [vmem:[%s0 + $0xd0] sm:$0x3]
  %v42 = vld [vmem:[%s0 + $0xd8] sm:$0xff]
  %v43 = vld [vmem:[%s0 + $0xe0] sm:$0xff]
  %v44 = vld [vmem:[%s0 + $0xe8] sm:$0x3]
  %v45 = vld [vmem:[%s0 + $0xf0] sm:$0xff]
  %v46 = vld [vmem:[%s0 + $0xf8] sm:$0xff]
  %v47 = vld [vmem:[%s0 + $0x100] sm:$0x3]
  %v48 = vld [vmem:[%s0 + $0x108] sm:$0xff]
  %v49 = vld [vmem:[%s0 + $0x110] sm:$0xff]
  %v50 = vld [vmem:[%s0 + $0x118] sm:$0x3]
  %v51 = vld [vmem:[%s0 + $0x120] sm:$0xff]
  %v52 = vld [vmem:[%s0 + $0x128] sm:$0xff]
  %v53 = vld [vmem:[%s0 + $0x130] sm:$0x3]
  %v54 = vld [vmem:[%s0 + $0x138] sm:$0xff]
  %v55 = vld [vmem:[%s0 + $0x140] sm:$0xff]
  %v56 = vld [vmem:[%s0 + $0x148] sm:$0x3]
  %v57 = vld [vmem:[%s0 + $0x150] sm:$0xff]
  %v58 = vld [vmem:[%s0 + $0x158] sm:$0xff]
  %v59 = vld [vmem:[%s0 + $0x160] sm:$0x3]
  %v60 = vld [vmem:[%s0 + $0x168] sm:$0xff]
  %v61 = vld [vmem:[%s0 + $0x170] sm:$0xff]
  %v62 = vld [vmem:[%s0 + $0x178] sm:$0x3]
  %v63 = vld [vmem:[%s0 + $0x180] sm:$0xff]
  %v64 = vld [vmem:[%s0 + $0x188] sm:$0xff]
  %v65 = vld [vmem:[%s0 + $0x190] sm:$0x3]
  %v66 = vld [vmem:[%s0 + $0x198] sm:$0xff]
  %v67 = vld [vmem:[%s0 + $0x1a0] sm:$0xff]
  %v68 = vld [vmem:[%s0 + $0x1a8] sm:$0x3]
  %v69 = vld [vmem:[%s0 + $0x1b0] sm:$0xff]
  %v70 = vld [vmem:[%s0 + $0x1b8] sm:$0xff]
  %v71 = vld [vmem:[%s0 + $0x1c0] sm:$0x3]
  %v72 = vld [vmem:[%s0 + $0x1c8] sm:$0xff]
  %v73 = vld [vmem:[%s0 + $0x1d0] sm:$0xff]
  %v74 = vld [vmem:[%s0 + $0x1d8] sm:$0x3]
  %v75 = vld [vmem:[%s0 + $0x1e0] sm:$0xff]
  %v76 = vld [vmem:[%s0 + $0x1e8] sm:$0xff]
  %v77 = vld [vmem:[%s0 + $0x1f0] sm:$0x3]
  %v78 = vld [vmem:[%s0 + $0x1f8] sm:$0xff]
  %v79 = vld [vmem:[%s0 + $0x200] sm:$0xff]
  %v80 = vld [vmem:[%s0 + $0x208] sm:$0x3]
  %v81 = vld [vmem:[%s0 + $0x210] sm:$0xff]
  %v82 = vld [vmem:[%s0 + $0x218] sm:$0xff]
  %v83 = vld [vmem:[%s0 + $0x220] sm:$0x3]
  %v84 = vld [vmem:[%s0 + $0x228] sm:$0xff]
  %v85 = vld [vmem:[%s0 + $0x230] sm:$0xff]
  %v86 = vld [vmem:[%s0 + $0x238] sm:$0x3]
  %v87 = vld [vmem:[%s0 + $0x240] sm:$0xff]
  %v88 = vld [vmem:[%s0 + $0x248] sm:$0xff]
  %v89 = vld [vmem:[%s0 + $0x250] sm:$0x3]
  %v90 = vld [vmem:[%s0 + $0x258] sm:$0xff]
  %v91 = vld [vmem:[%s0 + $0x260] sm:$0xff]
  %v92 = vld [vmem:[%s0 + $0x268] sm:$0x3]
  %v93 = vld [vmem:[%s0 + $0x270] sm:$0xff]
  %v94 = vld [vmem:[%s0 + $0x278] sm:$0xff]
  %v95 = vld [vmem:[%s0 + $0x280] sm:$0x3]
  %v96 = vld [vmem:[%s0 + $0x288] sm:$0xff]
  %v97 = vld [vmem:[%s0 + $0x290] sm:$0xff]
  %v98 = vld [vmem:[%s0 + $0x298] sm:$0x3]
  %v99 = vld [vmem:[%s0 + $0x2a0] sm:$0xff]
  %v100 = vld [vmem:[%s0 + $0x2a8] sm:$0xff]
  %v101 = vld [vmem:[%s0 + $0x2b0] sm:$0x3]
  %v102 = vld [vmem:[%s0 + $0x2b8] sm:$0xff]
  %v103 = vld [vmem:[%s0 + $0x2c0] sm:$0xff]
  %v104 = vld [vmem:[%s0 + $0x2c8] sm:$0x3]
  %v105 = vld [vmem:[%s0 + $0x2d0] sm:$0xff]
  %v106 = vld [vmem:[%s0 + $0x2d8] sm:$0xff]
  %v107 = vld [vmem:[%s0 + $0x2e0] sm:$0x3]
  %v108 = vld [vmem:[%s0 + $0x2e8] sm:$0xff]
  %v109 = vld [vmem:[%s0 + $0x2f0] sm:$0xff]
  %v110 = vld [vmem:[%s0 + $0x2f8] sm:$0x3]
  %v111 = vld [vmem:[%s0 + $0x300] sm:$0xff]
  %v112 = vld [vmem:[%s0 + $0x308] sm:$0xff]
  %v113 = vld [vmem:[%s0 + $0x310] sm:$0x3]
  %v114 = vld [vmem:[%s0 + $0x318] sm:$0xff]
  %v115 = vld [vmem:[%s0 + $0x320] sm:$0xff]
  %v116 = vld [vmem:[%s0 + $0x328] sm:$0x3]
  %v117 = vld [vmem:[%s0 + $0x330] sm:$0xff]
  %v118 = vld [vmem:[%s0 + $0x338] sm:$0xff]
  %v119 = vld [vmem:[%s0 + $0x340] sm:$0x3]
  %v120 = vld [vmem:[%s0 + $0x348] sm:$0xff]
  %v121 = vld [vmem:[%s0 + $0x350] sm:$0xff]
  %v122 = vld [vmem:[%s0 + $0x358] sm:$0x3]
  %vm219 = vcmask 1046528
  %v220 = vrot.slane %v15, 1
  %v221 = vrot.slane %v16, 1
  %v222 = vsel %vm219, %v220, %v221
  %v223 = vrot.slane %v17, 1
  %v224 = vsel %vm219, %v221, %v223
  %v225 = vrot.slane %v18, 1
  %v226 = vrot.slane %v19, 1
  %v227 = vsel %vm219, %v225, %v226
  %v228 = vrot.slane %v20, 1
  %v229 = vsel %vm219, %v226, %v228
  %v230 = vrot.slane %v21, 1
  %v231 = vrot.slane %v22, 1
  %v232 = vsel %vm219, %v230, %v231
  %v233 = vrot.slane %v23, 1
  %v234 = vsel %vm219, %v231, %v233
  %v235 = vrot.slane %v24, 1
  %v236 = vrot.slane %v25, 1
  %v237 = vsel %vm219, %v235, %v236
  %v238 = vrot.slane %v26, 1
  %v239 = vsel %vm219, %v236, %v238
  %v240 = vrot.slane %v27, 1
  %v241 = vrot.slane %v28, 1
  %v242 = vsel %vm219, %v240, %v241
  %v243 = vrot.slane %v29, 1
  %v244 = vsel %vm219, %v241, %v243
  %v245 = vrot.slane %v30, 1
  %v246 = vrot.slane %v31, 1
  %v247 = vsel %vm219, %v245, %v246
  %v248 = vrot.slane %v32, 1
  %v249 = vsel %vm219, %v246, %v248
  %v250 = vrot.slane %v33, 1
  %v251 = vrot.slane %v34, 1
  %v252 = vsel %vm219, %v250, %v251
  %v253 = vrot.slane %v35, 1
  %v254 = vsel %vm219, %v251, %v253
  %v255 = vrot.slane %v36, 1
  %v256 = vrot.slane %v37, 1
  %v257 = vsel %vm219, %v255, %v256
  %v258 = vrot.slane %v38, 1
  %v259 = vsel %vm219, %v256, %v258
  %v260 = vrot.slane %v39, 1
  %v261 = vrot.slane %v40, 1
  %v262 = vsel %vm219, %v260, %v261
  %v263 = vrot.slane %v41, 1
  %v264 = vsel %vm219, %v261, %v263
  %v265 = vrot.slane %v42, 1
  %v266 = vrot.slane %v43, 1
  %v267 = vsel %vm219, %v265, %v266
  %v268 = vrot.slane %v44, 1
  %v269 = vsel %vm219, %v266, %v268
  %v270 = vrot.slane %v45, 1
  %v271 = vrot.slane %v46, 1
  %v272 = vsel %vm219, %v270, %v271
  %v273 = vrot.slane %v47, 1
  %v274 = vsel %vm219, %v271, %v273
  %v275 = vrot.slane %v48, 1
  %v276 = vrot.slane %v49, 1
  %v277 = vsel %vm219, %v275, %v276
  %v278 = vrot.slane %v50, 1
  %v279 = vsel %vm219, %v276, %v278
  %v280 = vrot.slane %v51, 1
  %v281 = vrot.slane %v52, 1
  %v282 = vsel %vm219, %v280, %v281
  %v283 = vrot.slane %v53, 1
  %v284 = vsel %vm219, %v281, %v283
  %v285 = vrot.slane %v54, 1
  %v286 = vrot.slane %v55, 1
  %v287 = vsel %vm219, %v285, %v286
  %v288 = vrot.slane %v56, 1
  %v289 = vsel %vm219, %v286, %v288
  %v290 = vrot.slane %v57, 1
  %v291 = vrot.slane %v58, 1
  %v292 = vsel %vm219, %v290, %v291
  %v293 = vrot.slane %v59, 1
  %v294 = vsel %vm219, %v291, %v293
  %v295 = vrot.slane %v60, 1
  %v296 = vrot.slane %v61, 1
  %v297 = vsel %vm219, %v295, %v296
  %v298 = vrot.slane %v62, 1
  %v299 = vsel %vm219, %v296, %v298
  %v300 = vrot.slane %v69, 1
  %v301 = vrot.slane %v70, 1
  %v302 = vsel %vm219, %v300, %v301
  %v303 = vrot.slane %v71, 1
  %v304 = vsel %vm219, %v301, %v303
  %v305 = vrot.slane %v72, 1
  %v306 = vrot.slane %v73, 1
  %v307 = vsel %vm219, %v305, %v306
  %v308 = vrot.slane %v74, 1
  %v309 = vsel %vm219, %v306, %v308
  %v310 = vrot.slane %v75, 1
  %v311 = vrot.slane %v76, 1
  %v312 = vsel %vm219, %v310, %v311
  %v313 = vrot.slane %v77, 1
  %v314 = vsel %vm219, %v311, %v313
  %v315 = vrot.slane %v78, 1
  %v316 = vrot.slane %v79, 1
  %v317 = vsel %vm219, %v315, %v316
  %v318 = vrot.slane %v80, 1
  %v319 = vsel %vm219, %v316, %v318
  %v320 = vrot.slane %v81, 1
  %v321 = vrot.slane %v82, 1
  %v322 = vsel %vm219, %v320, %v321
  %v323 = vrot.slane %v83, 1
  %v324 = vsel %vm219, %v321, %v323
  %v325 = vrot.slane %v84, 1
  %v326 = vrot.slane %v85, 1
  %v327 = vsel %vm219, %v325, %v326
  %v328 = vrot.slane %v86, 1
  %v329 = vsel %vm219, %v326, %v328
  %v330 = vrot.slane %v87, 1
  %v331 = vrot.slane %v88, 1
  %v332 = vsel %vm219, %v330, %v331
  %v333 = vrot.slane %v89, 1
  %v334 = vsel %vm219, %v331, %v333
  %v335 = vrot.slane %v90, 1
  %v336 = vrot.slane %v91, 1
  %v337 = vsel %vm219, %v335, %v336
  %v338 = vrot.slane %v92, 1
  %v339 = vsel %vm219, %v336, %v338
  %v340 = vrot.slane %v93, 1
  %v341 = vrot.slane %v94, 1
  %v342 = vsel %vm219, %v340, %v341
  %v343 = vrot.slane %v95, 1
  %v344 = vsel %vm219, %v341, %v343
  %v345 = vrot.slane %v96, 1
  %v346 = vrot.slane %v97, 1
  %v347 = vsel %vm219, %v345, %v346
  %v348 = vrot.slane %v98, 1
  %v349 = vsel %vm219, %v346, %v348
  %v350 = vrot.slane %v99, 1
  %v351 = vrot.slane %v100, 1
  %v352 = vsel %vm219, %v350, %v351
  %v353 = vrot.slane %v101, 1
  %v354 = vsel %vm219, %v351, %v353
  %v355 = vrot.slane %v102, 1
  %v356 = vrot.slane %v103, 1
  %v357 = vsel %vm219, %v355, %v356
  %v358 = vrot.slane %v104, 1
  %v359 = vsel %vm219, %v356, %v358
  %v360 = vrot.slane %v105, 1
  %v361 = vrot.slane %v106, 1
  %v362 = vsel %vm219, %v360, %v361
  %v363 = vrot.slane %v107, 1
  %v364 = vsel %vm219, %v361, %v363
  %v365 = vrot.slane %v108, 1
  %v366 = vrot.slane %v109, 1
  %v367 = vsel %vm219, %v365, %v366
  %v368 = vrot.slane %v110, 1
  %v369 = vsel %vm219, %v366, %v368
  %v370 = vrot.slane %v111, 1
  %v371 = vrot.slane %v112, 1
  %v372 = vsel %vm219, %v370, %v371
  %v373 = vrot.slane %v113, 1
  %v374 = vsel %vm219, %v371, %v373
  %v375 = vrot.slane %v114, 1
  %v376 = vrot.slane %v115, 1
  %v377 = vsel %vm219, %v375, %v376
  %v378 = vrot.slane %v116, 1
  %v379 = vsel %vm219, %v376, %v378
  %380 = vrot.lane.b32.xlu0 %v222, 4
  %v381 = vpop.permute.xlu0 %380
  %382 = vrot.lane.b32.xlu0 %v224, 4
  %v383 = vpop.permute.xlu0 %382
  %384 = vrot.lane.b32.xlu0 %v227, 4
  %v385 = vpop.permute.xlu0 %384
  %386 = vrot.lane.b32.xlu0 %v229, 4
  %v387 = vpop.permute.xlu0 %386
  %388 = vrot.lane.b32.xlu0 %v232, 4
  %v389 = vpop.permute.xlu0 %388
  %390 = vrot.lane.b32.xlu0 %v234, 4
  %v391 = vpop.permute.xlu0 %390
  %392 = vrot.lane.b32.xlu0 %v237, 4
  %v393 = vpop.permute.xlu0 %392
  %394 = vrot.lane.b32.xlu0 %v239, 4
  %v395 = vpop.permute.xlu0 %394
  %396 = vrot.lane.b32.xlu0 %v242, 4
  %v397 = vpop.permute.xlu0 %396
  %398 = vrot.lane.b32.xlu0 %v244, 4
  %v399 = vpop.permute.xlu0 %398
  %400 = vrot.lane.b32.xlu0 %v247, 4
  %v401 = vpop.permute.xlu0 %400
  %402 = vrot.lane.b32.xlu0 %v249, 4
  %v403 = vpop.permute.xlu0 %402
  %404 = vrot.lane.b32.xlu0 %v252, 4
  %v405 = vpop.permute.xlu0 %404
  %406 = vrot.lane.b32.xlu0 %v254, 4
  %v407 = vpop.permute.xlu0 %406
  %408 = vrot.lane.b32.xlu0 %v257, 4
  %v409 = vpop.permute.xlu0 %408
  %410 = vrot.lane.b32.xlu0 %v259, 4
  %v411 = vpop.permute.xlu0 %410
  %412 = vrot.lane.b32.xlu0 %v262, 4
  %v413 = vpop.permute.xlu0 %412
  %414 = vrot.lane.b32.xlu0 %v264, 4
  %v415 = vpop.permute.xlu0 %414
  %416 = vrot.lane.b32.xlu0 %v267, 4
  %v417 = vpop.permute.xlu0 %416
  %418 = vrot.lane.b32.xlu0 %v269, 4
  %v419 = vpop.permute.xlu0 %418
  %420 = vrot.lane.b32.xlu0 %v272, 4
  %v421 = vpop.permute.xlu0 %420
  %422 = vrot.lane.b32.xlu0 %v274, 4
  %v423 = vpop.permute.xlu0 %422
  %424 = vrot.lane.b32.xlu0 %v277, 4
  %v425 = vpop.permute.xlu0 %424
  %426 = vrot.lane.b32.xlu0 %v279, 4
  %v427 = vpop.permute.xlu0 %426
  %428 = vrot.lane.b32.xlu0 %v282, 4
  %v429 = vpop.permute.xlu0 %428
  %430 = vrot.lane.b32.xlu0 %v284, 4
  %v431 = vpop.permute.xlu0 %430
  %432 = vrot.lane.b32.xlu0 %v287, 4
  %v433 = vpop.permute.xlu0 %432
  %434 = vrot.lane.b32.xlu0 %v289, 4
  %v435 = vpop.permute.xlu0 %434
  %436 = vrot.lane.b32.xlu0 %v292, 4
  %v437 = vpop.permute.xlu0 %436
  %438 = vrot.lane.b32.xlu0 %v294, 4
  %v439 = vpop.permute.xlu0 %438
  %440 = vrot.lane.b32.xlu0 %v297, 4
  %v441 = vpop.permute.xlu0 %440
  %442 = vrot.lane.b32.xlu0 %v299, 4
  %v443 = vpop.permute.xlu0 %442
  %444 = vrot.lane.b32.xlu0 %v302, 4
  %v445 = vpop.permute.xlu0 %444
  %446 = vrot.lane.b32.xlu0 %v304, 4
  %v447 = vpop.permute.xlu0 %446
  %448 = vrot.lane.b32.xlu0 %v307, 4
  %v449 = vpop.permute.xlu0 %448
  %450 = vrot.lane.b32.xlu0 %v309, 4
  %v451 = vpop.permute.xlu0 %450
  %452 = vrot.lane.b32.xlu0 %v312, 4
  %v453 = vpop.permute.xlu0 %452
  %454 = vrot.lane.b32.xlu0 %v314, 4
  %v455 = vpop.permute.xlu0 %454
  %456 = vrot.lane.b32.xlu0 %v317, 4
  %v457 = vpop.permute.xlu0 %456
  %458 = vrot.lane.b32.xlu0 %v319, 4
  %v459 = vpop.permute.xlu0 %458
  %460 = vrot.lane.b32.xlu0 %v322, 4
  %v461 = vpop.permute.xlu0 %460
  %462 = vrot.lane.b32.xlu0 %v324, 4
  %v463 = vpop.permute.xlu0 %462
  %464 = vrot.lane.b32.xlu0 %v327, 4
  %v465 = vpop.permute.xlu0 %464
  %466 = vrot.lane.b32.xlu0 %v329, 4
  %v467 = vpop.permute.xlu0 %466
  %468 = vrot.lane.b32.xlu0 %v332, 4
  %v469 = vpop.permute.xlu0 %468
  %470 = vrot.lane.b32.xlu0 %v334, 4
  %v471 = vpop.permute.xlu0 %470
  %472 = vrot.lane.b32.xlu0 %v337, 4
  %v473 = vpop.permute.xlu0 %472
  %474 = vrot.lane.b32.xlu0 %v339, 4
  %v475 = vpop.permute.xlu0 %474
  %476 = vrot.lane.b32.xlu0 %v342, 4
  %v477 = vpop.permute.xlu0 %476
  %478 = vrot.lane.b32.xlu0 %v344, 4
  %v479 = vpop.permute.xlu0 %478
  %480 = vrot.lane.b32.xlu0 %v347, 4
  %v481 = vpop.permute.xlu0 %480
  %482 = vrot.lane.b32.xlu0 %v349, 4
  %v483 = vpop.permute.xlu0 %482
  %484 = vrot.lane.b32.xlu0 %v352, 4
  %v485 = vpop.permute.xlu0 %484
  %486 = vrot.lane.b32.xlu0 %v354, 4
  %v487 = vpop.permute.xlu0 %486
  %488 = vrot.lane.b32.xlu0 %v357, 4
  %v489 = vpop.permute.xlu0 %488
  %490 = vrot.lane.b32.xlu0 %v359, 4
  %v491 = vpop.permute.xlu0 %490
  %492 = vrot.lane.b32.xlu0 %v362, 4
  %v493 = vpop.permute.xlu0 %492
  %494 = vrot.lane.b32.xlu0 %v364, 4
  %v495 = vpop.permute.xlu0 %494
  %496 = vrot.lane.b32.xlu0 %v367, 4
  %v497 = vpop.permute.xlu0 %496
  %498 = vrot.lane.b32.xlu0 %v369, 4
  %v499 = vpop.permute.xlu0 %498
  %500 = vrot.lane.b32.xlu0 %v372, 4
  %v501 = vpop.permute.xlu0 %500
  %502 = vrot.lane.b32.xlu0 %v374, 4
  %v503 = vpop.permute.xlu0 %502
  %504 = vrot.lane.b32.xlu0 %v377, 4
  %v505 = vpop.permute.xlu0 %504
  %506 = vrot.lane.b32.xlu0 %v379, 4
  %v507 = vpop.permute.xlu0 %506
  %vm572 = vcmask 1045504
  %v573 = vrot.slane %v15, 2
  %v574 = vrot.slane %v16, 2
  %v575 = vsel %vm572, %v573, %v574
  %v576 = vrot.slane %v17, 2
  %v577 = vsel %vm572, %v574, %v576
  %v578 = vrot.slane %v18, 2
  %v579 = vrot.slane %v19, 2
  %v580 = vsel %vm572, %v578, %v579
  %v581 = vrot.slane %v20, 2
  %v582 = vsel %vm572, %v579, %v581
  %v583 = vrot.slane %v21, 2
  %v584 = vrot.slane %v22, 2
  %v585 = vsel %vm572, %v583, %v584
  %v586 = vrot.slane %v23, 2
  %v587 = vsel %vm572, %v584, %v586
  %v588 = vrot.slane %v24, 2
  %v589 = vrot.slane %v25, 2
  %v590 = vsel %vm572, %v588, %v589
  %v591 = vrot.slane %v26, 2
  %v592 = vsel %vm572, %v589, %v591
  %v593 = vrot.slane %v27, 2
  %v594 = vrot.slane %v28, 2
  %v595 = vsel %vm572, %v593, %v594
  %v596 = vrot.slane %v29, 2
  %v597 = vsel %vm572, %v594, %v596
  %v598 = vrot.slane %v30, 2
  %v599 = vrot.slane %v31, 2
  %v600 = vsel %vm572, %v598, %v599
  %v601 = vrot.slane %v32, 2
  %v602 = vsel %vm572, %v599, %v601
  %v603 = vrot.slane %v33, 2
  %v604 = vrot.slane %v34, 2
  %v605 = vsel %vm572, %v603, %v604
  %v606 = vrot.slane %v35, 2
  %v607 = vsel %vm572, %v604, %v606
  %v608 = vrot.slane %v36, 2
  %v609 = vrot.slane %v37, 2
  %v610 = vsel %vm572, %v608, %v609
  %v611 = vrot.slane %v38, 2
  %v612 = vsel %vm572, %v609, %v611
  %v613 = vrot.slane %v39, 2
  %v614 = vrot.slane %v40, 2
  %v615 = vsel %vm572, %v613, %v614
  %v616 = vrot.slane %v41, 2
  %v617 = vsel %vm572, %v614, %v616
  %v618 = vrot.slane %v42, 2
  %v619 = vrot.slane %v43, 2
  %v620 = vsel %vm572, %v618, %v619
  %v621 = vrot.slane %v44, 2
  %v622 = vsel %vm572, %v619, %v621
  %v623 = vrot.slane %v45, 2
  %v624 = vrot.slane %v46, 2
  %v625 = vsel %vm572, %v623, %v624
  %v626 = vrot.slane %v47, 2
  %v627 = vsel %vm572, %v624, %v626
  %v628 = vrot.slane %v48, 2
  %v629 = vrot.slane %v49, 2
  %v630 = vsel %vm572, %v628, %v629
  %v631 = vrot.slane %v50, 2
  %v632 = vsel %vm572, %v629, %v631
  %v633 = vrot.slane %v51, 2
  %v634 = vrot.slane %v52, 2
  %v635 = vsel %vm572, %v633, %v634
  %v636 = vrot.slane %v53, 2
  %v637 = vsel %vm572, %v634, %v636
  %v638 = vrot.slane %v54, 2
  %v639 = vrot.slane %v55, 2
  %v640 = vsel %vm572, %v638, %v639
  %v641 = vrot.slane %v56, 2
  %v642 = vsel %vm572, %v639, %v641
  %v643 = vrot.slane %v57, 2
  %v644 = vrot.slane %v58, 2
  %v645 = vsel %vm572, %v643, %v644
  %v646 = vrot.slane %v59, 2
  %v647 = vsel %vm572, %v644, %v646
  %v648 = vrot.slane %v60, 2
  %v649 = vrot.slane %v61, 2
  %v650 = vsel %vm572, %v648, %v649
  %v651 = vrot.slane %v62, 2
  %v652 = vsel %vm572, %v649, %v651
  %v653 = vrot.slane %v69, 2
  %v654 = vrot.slane %v70, 2
  %v655 = vsel %vm572, %v653, %v654
  %v656 = vrot.slane %v71, 2
  %v657 = vsel %vm572, %v654, %v656
  %v658 = vrot.slane %v72, 2
  %v659 = vrot.slane %v73, 2
  %v660 = vsel %vm572, %v658, %v659
  %v661 = vrot.slane %v74, 2
  %v662 = vsel %vm572, %v659, %v661
  %v663 = vrot.slane %v75, 2
  %v664 = vrot.slane %v76, 2
  %v665 = vsel %vm572, %v663, %v664
  %v666 = vrot.slane %v77, 2
  %v667 = vsel %vm572, %v664, %v666
  %v668 = vrot.slane %v78, 2
  %v669 = vrot.slane %v79, 2
  %v670 = vsel %vm572, %v668, %v669
  %v671 = vrot.slane %v80, 2
  %v672 = vsel %vm572, %v669, %v671
  %v673 = vrot.slane %v81, 2
  %v674 = vrot.slane %v82, 2
  %v675 = vsel %vm572, %v673, %v674
  %v676 = vrot.slane %v83, 2
  %v677 = vsel %vm572, %v674, %v676
  %v678 = vrot.slane %v84, 2
  %v679 = vrot.slane %v85, 2
  %v680 = vsel %vm572, %v678, %v679
  %v681 = vrot.slane %v86, 2
  %v682 = vsel %vm572, %v679, %v681
  %v683 = vrot.slane %v87, 2
  %v684 = vrot.slane %v88, 2
  %v685 = vsel %vm572, %v683, %v684
  %v686 = vrot.slane %v89, 2
  %v687 = vsel %vm572, %v684, %v686
  %v688 = vrot.slane %v90, 2
  %v689 = vrot.slane %v91, 2
  %v690 = vsel %vm572, %v688, %v689
  %v691 = vrot.slane %v92, 2
  %v692 = vsel %vm572, %v689, %v691
  %v693 = vrot.slane %v93, 2
  %v694 = vrot.slane %v94, 2
  %v695 = vsel %vm572, %v693, %v694
  %v696 = vrot.slane %v95, 2
  %v697 = vsel %vm572, %v694, %v696
  %v698 = vrot.slane %v96, 2
  %v699 = vrot.slane %v97, 2
  %v700 = vsel %vm572, %v698, %v699
  %v701 = vrot.slane %v98, 2
  %v702 = vsel %vm572, %v699, %v701
  %v703 = vrot.slane %v99, 2
  %v704 = vrot.slane %v100, 2
  %v705 = vsel %vm572, %v703, %v704
  %v706 = vrot.slane %v101, 2
  %v707 = vsel %vm572, %v704, %v706
  %v708 = vrot.slane %v102, 2
  %v709 = vrot.slane %v103, 2
  %v710 = vsel %vm572, %v708, %v709
  %v711 = vrot.slane %v104, 2
  %v712 = vsel %vm572, %v709, %v711
  %v713 = vrot.slane %v105, 2
  %v714 = vrot.slane %v106, 2
  %v715 = vsel %vm572, %v713, %v714
  %v716 = vrot.slane %v107, 2
  %v717 = vsel %vm572, %v714, %v716
  %v718 = vrot.slane %v108, 2
  %v719 = vrot.slane %v109, 2
  %v720 = vsel %vm572, %v718, %v719
  %v721 = vrot.slane %v110, 2
  %v722 = vsel %vm572, %v719, %v721
  %v723 = vrot.slane %v111, 2
  %v724 = vrot.slane %v112, 2
  %v725 = vsel %vm572, %v723, %v724
  %v726 = vrot.slane %v113, 2
  %v727 = vsel %vm572, %v724, %v726
  %v728 = vrot.slane %v114, 2
  %v729 = vrot.slane %v115, 2
  %v730 = vsel %vm572, %v728, %v729
  %v731 = vrot.slane %v116, 2
  %v732 = vsel %vm572, %v729, %v731
  %733 = vrot.lane.b32.xlu0 %v575, 8
  %v734 = vpop.permute.xlu0 %733
  %735 = vrot.lane.b32.xlu0 %v577, 8
  %v736 = vpop.permute.xlu0 %735
  %737 = vrot.lane.b32.xlu0 %v580, 8
  %v738 = vpop.permute.xlu0 %737
  %739 = vrot.lane.b32.xlu0 %v582, 8
  %v740 = vpop.permute.xlu0 %739
  %741 = vrot.lane.b32.xlu0 %v585, 8
  %v742 = vpop.permute.xlu0 %741
  %743 = vrot.lane.b32.xlu0 %v587, 8
  %v744 = vpop.permute.xlu0 %743
  %745 = vrot.lane.b32.xlu0 %v590, 8
  %v746 = vpop.permute.xlu0 %745
  %747 = vrot.lane.b32.xlu0 %v592, 8
  %v748 = vpop.permute.xlu0 %747
  %749 = vrot.lane.b32.xlu0 %v595, 8
  %v750 = vpop.permute.xlu0 %749
  %751 = vrot.lane.b32.xlu0 %v597, 8
  %v752 = vpop.permute.xlu0 %751
  %753 = vrot.lane.b32.xlu0 %v600, 8
  %v754 = vpop.permute.xlu0 %753
  %755 = vrot.lane.b32.xlu0 %v602, 8
  %v756 = vpop.permute.xlu0 %755
  %757 = vrot.lane.b32.xlu0 %v605, 8
  %v758 = vpop.permute.xlu0 %757
  %759 = vrot.lane.b32.xlu0 %v607, 8
  %v760 = vpop.permute.xlu0 %759
  %761 = vrot.lane.b32.xlu0 %v610, 8
  %v762 = vpop.permute.xlu0 %761
  %763 = vrot.lane.b32.xlu0 %v612, 8
  %v764 = vpop.permute.xlu0 %763
  %765 = vrot.lane.b32.xlu0 %v615, 8
  %v766 = vpop.permute.xlu0 %765
  %767 = vrot.lane.b32.xlu0 %v617, 8
  %v768 = vpop.permute.xlu0 %767
  %769 = vrot.lane.b32.xlu0 %v620, 8
  %v770 = vpop.permute.xlu0 %769
  %771 = vrot.lane.b32.xlu0 %v622, 8
  %v772 = vpop.permute.xlu0 %771
  %773 = vrot.lane.b32.xlu0 %v625, 8
  %v774 = vpop.permute.xlu0 %773
  %775 = vrot.lane.b32.xlu0 %v627, 8
  %v776 = vpop.permute.xlu0 %775
  %777 = vrot.lane.b32.xlu0 %v630, 8
  %v778 = vpop.permute.xlu0 %777
  %779 = vrot.lane.b32.xlu0 %v632, 8
  %v780 = vpop.permute.xlu0 %779
  %781 = vrot.lane.b32.xlu0 %v635, 8
  %v782 = vpop.permute.xlu0 %781
  %783 = vrot.lane.b32.xlu0 %v637, 8
  %v784 = vpop.permute.xlu0 %783
  %785 = vrot.lane.b32.xlu0 %v640, 8
  %v786 = vpop.permute.xlu0 %785
  %787 = vrot.lane.b32.xlu0 %v642, 8
  %v788 = vpop.permute.xlu0 %787
  %789 = vrot.lane.b32.xlu0 %v645, 8
  %v790 = vpop.permute.xlu0 %789
  %791 = vrot.lane.b32.xlu0 %v647, 8
  %v792 = vpop.permute.xlu0 %791
  %793 = vrot.lane.b32.xlu0 %v650, 8
  %v794 = vpop.permute.xlu0 %793
  %795 = vrot.lane.b32.xlu0 %v652, 8
  %v796 = vpop.permute.xlu0 %795
  %797 = vrot.lane.b32.xlu0 %v655, 8
  %v798 = vpop.permute.xlu0 %797
  %799 = vrot.lane.b32.xlu0 %v657, 8
  %v800 = vpop.permute.xlu0 %799
  %801 = vrot.lane.b32.xlu0 %v660, 8
  %v802 = vpop.permute.xlu0 %801
  %803 = vrot.lane.b32.xlu0 %v662, 8
  %v804 = vpop.permute.xlu0 %803
  %805 = vrot.lane.b32.xlu0 %v665, 8
  %v806 = vpop.permute.xlu0 %805
  %807 = vrot.lane.b32.xlu0 %v667, 8
  %v808 = vpop.permute.xlu0 %807
  %809 = vrot.lane.b32.xlu0 %v670, 8
  %v810 = vpop.permute.xlu0 %809
  %811 = vrot.lane.b32.xlu0 %v672, 8
  %v812 = vpop.permute.xlu0 %811
  %813 = vrot.lane.b32.xlu0 %v675, 8
  %v814 = vpop.permute.xlu0 %813
  %815 = vrot.lane.b32.xlu0 %v677, 8
  %v816 = vpop.permute.xlu0 %815
  %817 = vrot.lane.b32.xlu0 %v680, 8
  %v818 = vpop.permute.xlu0 %817
  %819 = vrot.lane.b32.xlu0 %v682, 8
  %v820 = vpop.permute.xlu0 %819
  %821 = vrot.lane.b32.xlu0 %v685, 8
  %v822 = vpop.permute.xlu0 %821
  %823 = vrot.lane.b32.xlu0 %v687, 8
  %v824 = vpop.permute.xlu0 %823
  %825 = vrot.lane.b32.xlu0 %v690, 8
  %v826 = vpop.permute.xlu0 %825
  %827 = vrot.lane.b32.xlu0 %v692, 8
  %v828 = vpop.permute.xlu0 %827
  %829 = vrot.lane.b32.xlu0 %v695, 8
  %v830 = vpop.permute.xlu0 %829
  %831 = vrot.lane.b32.xlu0 %v697, 8
  %v832 = vpop.permute.xlu0 %831
  %833 = vrot.lane.b32.xlu0 %v700, 8
  %v834 = vpop.permute.xlu0 %833
  %835 = vrot.lane.b32.xlu0 %v702, 8
  %v836 = vpop.permute.xlu0 %835
  %837 = vrot.lane.b32.xlu0 %v705, 8
  %v838 = vpop.permute.xlu0 %837
  %839 = vrot.lane.b32.xlu0 %v707, 8
  %v840 = vpop.permute.xlu0 %839
  %841 = vrot.lane.b32.xlu0 %v710, 8
  %v842 = vpop.permute.xlu0 %841
  %843 = vrot.lane.b32.xlu0 %v712, 8
  %v844 = vpop.permute.xlu0 %843
  %845 = vrot.lane.b32.xlu0 %v715, 8
  %v846 = vpop.permute.xlu0 %845
  %847 = vrot.lane.b32.xlu0 %v717, 8
  %v848 = vpop.permute.xlu0 %847
  %849 = vrot.lane.b32.xlu0 %v720, 8
  %v850 = vpop.permute.xlu0 %849
  %851 = vrot.lane.b32.xlu0 %v722, 8
  %v852 = vpop.permute.xlu0 %851
  %853 = vrot.lane.b32.xlu0 %v725, 8
  %v854 = vpop.permute.xlu0 %853
  %855 = vrot.lane.b32.xlu0 %v727, 8
  %v856 = vpop.permute.xlu0 %855
  %857 = vrot.lane.b32.xlu0 %v730, 8
  %v858 = vpop.permute.xlu0 %857
  %859 = vrot.lane.b32.xlu0 %v732, 8
  %v860 = vpop.permute.xlu0 %859
  %929 = vrot.lane.b32.xlu0 %v18, 12
  %v930 = vpop.permute.xlu0 %929
  %931 = vrot.lane.b32.xlu0 %v19, 12
  %v932 = vpop.permute.xlu0 %931
  %933 = vrot.lane.b32.xlu0 %v21, 12
  %v934 = vpop.permute.xlu0 %933
  %935 = vrot.lane.b32.xlu0 %v22, 12
  %v936 = vpop.permute.xlu0 %935
  %937 = vrot.lane.b32.xlu0 %v24, 12
  %v938 = vpop.permute.xlu0 %937
  %939 = vrot.lane.b32.xlu0 %v25, 12
  %v940 = vpop.permute.xlu0 %939
  %941 = vrot.lane.b32.xlu0 %v27, 12
  %v942 = vpop.permute.xlu0 %941
  %943 = vrot.lane.b32.xlu0 %v28, 12
  %v944 = vpop.permute.xlu0 %943
  %945 = vrot.lane.b32.xlu0 %v30, 12
  %v946 = vpop.permute.xlu0 %945
  %947 = vrot.lane.b32.xlu0 %v31, 12
  %v948 = vpop.permute.xlu0 %947
  %949 = vrot.lane.b32.xlu0 %v33, 12
  %v950 = vpop.permute.xlu0 %949
  %951 = vrot.lane.b32.xlu0 %v34, 12
  %v952 = vpop.permute.xlu0 %951
  %953 = vrot.lane.b32.xlu0 %v36, 12
  %v954 = vpop.permute.xlu0 %953
  %955 = vrot.lane.b32.xlu0 %v37, 12
  %v956 = vpop.permute.xlu0 %955
  %957 = vrot.lane.b32.xlu0 %v39, 12
  %v958 = vpop.permute.xlu0 %957
  %959 = vrot.lane.b32.xlu0 %v40, 12
  %v960 = vpop.permute.xlu0 %959
  %961 = vrot.lane.b32.xlu0 %v42, 12
  %v962 = vpop.permute.xlu0 %961
  %963 = vrot.lane.b32.xlu0 %v43, 12
  %v964 = vpop.permute.xlu0 %963
  %965 = vrot.lane.b32.xlu0 %v45, 12
  %v966 = vpop.permute.xlu0 %965
  %967 = vrot.lane.b32.xlu0 %v46, 12
  %v968 = vpop.permute.xlu0 %967
  %969 = vrot.lane.b32.xlu0 %v48, 12
  %v970 = vpop.permute.xlu0 %969
  %971 = vrot.lane.b32.xlu0 %v49, 12
  %v972 = vpop.permute.xlu0 %971
  %973 = vrot.lane.b32.xlu0 %v51, 12
  %v974 = vpop.permute.xlu0 %973
  %975 = vrot.lane.b32.xlu0 %v52, 12
  %v976 = vpop.permute.xlu0 %975
  %977 = vrot.lane.b32.xlu0 %v54, 12
  %v978 = vpop.permute.xlu0 %977
  %979 = vrot.lane.b32.xlu0 %v55, 12
  %v980 = vpop.permute.xlu0 %979
  %981 = vrot.lane.b32.xlu0 %v57, 12
  %v982 = vpop.permute.xlu0 %981
  %983 = vrot.lane.b32.xlu0 %v58, 12
  %v984 = vpop.permute.xlu0 %983
  %985 = vrot.lane.b32.xlu0 %v60, 12
  %v986 = vpop.permute.xlu0 %985
  %987 = vrot.lane.b32.xlu0 %v61, 12
  %v988 = vpop.permute.xlu0 %987
  %989 = vrot.lane.b32.xlu0 %v63, 12
  %v990 = vpop.permute.xlu0 %989
  %991 = vrot.lane.b32.xlu0 %v64, 12
  %v992 = vpop.permute.xlu0 %991
  %993 = vrot.lane.b32.xlu0 %v72, 12
  %v994 = vpop.permute.xlu0 %993
  %995 = vrot.lane.b32.xlu0 %v73, 12
  %v996 = vpop.permute.xlu0 %995
  %997 = vrot.lane.b32.xlu0 %v75, 12
  %v998 = vpop.permute.xlu0 %997
  %999 = vrot.lane.b32.xlu0 %v76, 12
  %v1000 = vpop.permute.xlu0 %999
  %1001 = vrot.lane.b32.xlu0 %v78, 12
  %v1002 = vpop.permute.xlu0 %1001
  %1003 = vrot.lane.b32.xlu0 %v79, 12
  %v1004 = vpop.permute.xlu0 %1003
  %1005 = vrot.lane.b32.xlu0 %v81, 12
  %v1006 = vpop.permute.xlu0 %1005
  %1007 = vrot.lane.b32.xlu0 %v82, 12
  %v1008 = vpop.permute.xlu0 %1007
  %1009 = vrot.lane.b32.xlu0 %v84, 12
  %v1010 = vpop.permute.xlu0 %1009
  %1011 = vrot.lane.b32.xlu0 %v85, 12
  %v1012 = vpop.permute.xlu0 %1011
  %1013 = vrot.lane.b32.xlu0 %v87, 12
  %v1014 = vpop.permute.xlu0 %1013
  %1015 = vrot.lane.b32.xlu0 %v88, 12
  %v1016 = vpop.permute.xlu0 %1015
  %1017 = vrot.lane.b32.xlu0 %v90, 12
  %v1018 = vpop.permute.xlu0 %1017
  %1019 = vrot.lane.b32.xlu0 %v91, 12
  %v1020 = vpop.permute.xlu0 %1019
  %1021 = vrot.lane.b32.xlu0 %v93, 12
  %v1022 = vpop.permute.xlu0 %1021
  %1023 = vrot.lane.b32.xlu0 %v94, 12
  %v1024 = vpop.permute.xlu0 %1023
  %1025 = vrot.lane.b32.xlu0 %v96, 12
  %v1026 = vpop.permute.xlu0 %1025
  %1027 = vrot.lane.b32.xlu0 %v97, 12
  %v1028 = vpop.permute.xlu0 %1027
  %1029 = vrot.lane.b32.xlu0 %v99, 12
  %v1030 = vpop.permute.xlu0 %1029
  %1031 = vrot.lane.b32.xlu0 %v100, 12
  %v1032 = vpop.permute.xlu0 %1031
  %1033 = vrot.lane.b32.xlu0 %v102, 12
  %v1034 = vpop.permute.xlu0 %1033
  %1035 = vrot.lane.b32.xlu0 %v103, 12
  %v1036 = vpop.permute.xlu0 %1035
  %1037 = vrot.lane.b32.xlu0 %v105, 12
  %v1038 = vpop.permute.xlu0 %1037
  %1039 = vrot.lane.b32.xlu0 %v106, 12
  %v1040 = vpop.permute.xlu0 %1039
  %1041 = vrot.lane.b32.xlu0 %v108, 12
  %v1042 = vpop.permute.xlu0 %1041
  %1043 = vrot.lane.b32.xlu0 %v109, 12
  %v1044 = vpop.permute.xlu0 %1043
  %1045 = vrot.lane.b32.xlu0 %v111, 12
  %v1046 = vpop.permute.xlu0 %1045
  %1047 = vrot.lane.b32.xlu0 %v112, 12
  %v1048 = vpop.permute.xlu0 %1047
  %1049 = vrot.lane.b32.xlu0 %v114, 12
  %v1050 = vpop.permute.xlu0 %1049
  %1051 = vrot.lane.b32.xlu0 %v115, 12
  %v1052 = vpop.permute.xlu0 %1051
  %1053 = vrot.lane.b32.xlu0 %v117, 12
  %v1054 = vpop.permute.xlu0 %1053
  %1055 = vrot.lane.b32.xlu0 %v118, 12
  %v1056 = vpop.permute.xlu0 %1055
  %v1123 = vrot.slane %v63, 1
  %v1124 = vrot.slane %v64, 1
  %v1125 = vsel %vm219, %v1123, %v1124
  %v1126 = vrot.slane %v65, 1
  %v1127 = vsel %vm219, %v1124, %v1126
  %v1128 = vrot.slane %v117, 1
  %v1129 = vrot.slane %v118, 1
  %v1130 = vsel %vm219, %v1128, %v1129
  %v1131 = vrot.slane %v119, 1
  %v1132 = vsel %vm219, %v1129, %v1131
  %1133 = vrot.lane.b32.xlu0 %v227, 16
  %v1134 = vpop.permute.xlu0 %1133
  %1135 = vrot.lane.b32.xlu0 %v229, 16
  %v1136 = vpop.permute.xlu0 %1135
  %1137 = vrot.lane.b32.xlu0 %v232, 16
  %v1138 = vpop.permute.xlu0 %1137
  %1139 = vrot.lane.b32.xlu0 %v234, 16
  %v1140 = vpop.permute.xlu0 %1139
  %1141 = vrot.lane.b32.xlu0 %v237, 16
  %v1142 = vpop.permute.xlu0 %1141
  %1143 = vrot.lane.b32.xlu0 %v239, 16
  %v1144 = vpop.permute.xlu0 %1143
  %1145 = vrot.lane.b32.xlu0 %v242, 16
  %v1146 = vpop.permute.xlu0 %1145
  %1147 = vrot.lane.b32.xlu0 %v244, 16
  %v1148 = vpop.permute.xlu0 %1147
  %1149 = vrot.lane.b32.xlu0 %v247, 16
  %v1150 = vpop.permute.xlu0 %1149
  %1151 = vrot.lane.b32.xlu0 %v249, 16
  %v1152 = vpop.permute.xlu0 %1151
  %1153 = vrot.lane.b32.xlu0 %v252, 16
  %v1154 = vpop.permute.xlu0 %1153
  %1155 = vrot.lane.b32.xlu0 %v254, 16
  %v1156 = vpop.permute.xlu0 %1155
  %1157 = vrot.lane.b32.xlu0 %v257, 16
  %v1158 = vpop.permute.xlu0 %1157
  %1159 = vrot.lane.b32.xlu0 %v259, 16
  %v1160 = vpop.permute.xlu0 %1159
  %1161 = vrot.lane.b32.xlu0 %v262, 16
  %v1162 = vpop.permute.xlu0 %1161
  %1163 = vrot.lane.b32.xlu0 %v264, 16
  %v1164 = vpop.permute.xlu0 %1163
  %1165 = vrot.lane.b32.xlu0 %v267, 16
  %v1166 = vpop.permute.xlu0 %1165
  %1167 = vrot.lane.b32.xlu0 %v269, 16
  %v1168 = vpop.permute.xlu0 %1167
  %1169 = vrot.lane.b32.xlu0 %v272, 16
  %v1170 = vpop.permute.xlu0 %1169
  %1171 = vrot.lane.b32.xlu0 %v274, 16
  %v1172 = vpop.permute.xlu0 %1171
  %1173 = vrot.lane.b32.xlu0 %v277, 16
  %v1174 = vpop.permute.xlu0 %1173
  %1175 = vrot.lane.b32.xlu0 %v279, 16
  %v1176 = vpop.permute.xlu0 %1175
  %1177 = vrot.lane.b32.xlu0 %v282, 16
  %v1178 = vpop.permute.xlu0 %1177
  %1179 = vrot.lane.b32.xlu0 %v284, 16
  %v1180 = vpop.permute.xlu0 %1179
  %1181 = vrot.lane.b32.xlu0 %v287, 16
  %v1182 = vpop.permute.xlu0 %1181
  %1183 = vrot.lane.b32.xlu0 %v289, 16
  %v1184 = vpop.permute.xlu0 %1183
  %1185 = vrot.lane.b32.xlu0 %v292, 16
  %v1186 = vpop.permute.xlu0 %1185
  %1187 = vrot.lane.b32.xlu0 %v294, 16
  %v1188 = vpop.permute.xlu0 %1187
  %1189 = vrot.lane.b32.xlu0 %v297, 16
  %v1190 = vpop.permute.xlu0 %1189
  %1191 = vrot.lane.b32.xlu0 %v299, 16
  %v1192 = vpop.permute.xlu0 %1191
  %1193 = vrot.lane.b32.xlu0 %v1125, 16
  %v1194 = vpop.permute.xlu0 %1193
  %1195 = vrot.lane.b32.xlu0 %v1127, 16
  %v1196 = vpop.permute.xlu0 %1195
  %1197 = vrot.lane.b32.xlu0 %v307, 16
  %v1198 = vpop.permute.xlu0 %1197
  %1199 = vrot.lane.b32.xlu0 %v309, 16
  %v1200 = vpop.permute.xlu0 %1199
  %1201 = vrot.lane.b32.xlu0 %v312, 16
  %v1202 = vpop.permute.xlu0 %1201
  %1203 = vrot.lane.b32.xlu0 %v314, 16
  %v1204 = vpop.permute.xlu0 %1203
  %1205 = vrot.lane.b32.xlu0 %v317, 16
  %v1206 = vpop.permute.xlu0 %1205
  %1207 = vrot.lane.b32.xlu0 %v319, 16
  %v1208 = vpop.permute.xlu0 %1207
  %1209 = vrot.lane.b32.xlu0 %v322, 16
  %v1210 = vpop.permute.xlu0 %1209
  %1211 = vrot.lane.b32.xlu0 %v324, 16
  %v1212 = vpop.permute.xlu0 %1211
  %1213 = vrot.lane.b32.xlu0 %v327, 16
  %v1214 = vpop.permute.xlu0 %1213
  %1215 = vrot.lane.b32.xlu0 %v329, 16
  %v1216 = vpop.permute.xlu0 %1215
  %1217 = vrot.lane.b32.xlu0 %v332, 16
  %v1218 = vpop.permute.xlu0 %1217
  %1219 = vrot.lane.b32.xlu0 %v334, 16
  %v1220 = vpop.permute.xlu0 %1219
  %1221 = vrot.lane.b32.xlu0 %v337, 16
  %v1222 = vpop.permute.xlu0 %1221
  %1223 = vrot.lane.b32.xlu0 %v339, 16
  %v1224 = vpop.permute.xlu0 %1223
  %1225 = vrot.lane.b32.xlu0 %v342, 16
  %v1226 = vpop.permute.xlu0 %1225
  %1227 = vrot.lane.b32.xlu0 %v344, 16
  %v1228 = vpop.permute.xlu0 %1227
  %1229 = vrot.lane.b32.xlu0 %v347, 16
  %v1230 = vpop.permute.xlu0 %1229
  %1231 = vrot.lane.b32.xlu0 %v349, 16
  %v1232 = vpop.permute.xlu0 %1231
  %1233 = vrot.lane.b32.xlu0 %v352, 16
  %v1234 = vpop.permute.xlu0 %1233
  %1235 = vrot.lane.b32.xlu0 %v354, 16
  %v1236 = vpop.permute.xlu0 %1235
  %1237 = vrot.lane.b32.xlu0 %v357, 16
  %v1238 = vpop.permute.xlu0 %1237
  %1239 = vrot.lane.b32.xlu0 %v359, 16
  %v1240 = vpop.permute.xlu0 %1239
  %1241 = vrot.lane.b32.xlu0 %v362, 16
  %v1242 = vpop.permute.xlu0 %1241
  %1243 = vrot.lane.b32.xlu0 %v364, 16
  %v1244 = vpop.permute.xlu0 %1243
  %1245 = vrot.lane.b32.xlu0 %v367, 16
  %v1246 = vpop.permute.xlu0 %1245
  %1247 = vrot.lane.b32.xlu0 %v369, 16
  %v1248 = vpop.permute.xlu0 %1247
  %1249 = vrot.lane.b32.xlu0 %v372, 16
  %v1250 = vpop.permute.xlu0 %1249
  %1251 = vrot.lane.b32.xlu0 %v374, 16
  %v1252 = vpop.permute.xlu0 %1251
  %1253 = vrot.lane.b32.xlu0 %v377, 16
  %v1254 = vpop.permute.xlu0 %1253
  %1255 = vrot.lane.b32.xlu0 %v379, 16
  %v1256 = vpop.permute.xlu0 %1255
  %1257 = vrot.lane.b32.xlu0 %v1130, 16
  %v1258 = vpop.permute.xlu0 %1257
  %1259 = vrot.lane.b32.xlu0 %v1132, 16
  %v1260 = vpop.permute.xlu0 %1259
  %v1325 = vrot.slane %v63, 2
  %v1326 = vrot.slane %v64, 2
  %v1327 = vsel %vm572, %v1325, %v1326
  %v1328 = vrot.slane %v65, 2
  %v1329 = vsel %vm572, %v1326, %v1328
  %v1330 = vrot.slane %v117, 2
  %v1331 = vrot.slane %v118, 2
  %v1332 = vsel %vm572, %v1330, %v1331
  %v1333 = vrot.slane %v119, 2
  %v1334 = vsel %vm572, %v1331, %v1333
  %1335 = vrot.lane.b32.xlu0 %v580, 20
  %v1336 = vpop.permute.xlu0 %1335
  %1337 = vrot.lane.b32.xlu0 %v582, 20
  %v1338 = vpop.permute.xlu0 %1337
  %1339 = vrot.lane.b32.xlu0 %v585, 20
  %v1340 = vpop.permute.xlu0 %1339
  %1341 = vrot.lane.b32.xlu0 %v587, 20
  %v1342 = vpop.permute.xlu0 %1341
  %1343 = vrot.lane.b32.xlu0 %v590, 20
  %v1344 = vpop.permute.xlu0 %1343
  %1345 = vrot.lane.b32.xlu0 %v592, 20
  %v1346 = vpop.permute.xlu0 %1345
  %1347 = vrot.lane.b32.xlu0 %v595, 20
  %v1348 = vpop.permute.xlu0 %1347
  %1349 = vrot.lane.b32.xlu0 %v597, 20
  %v1350 = vpop.permute.xlu0 %1349
  %1351 = vrot.lane.b32.xlu0 %v600, 20
  %v1352 = vpop.permute.xlu0 %1351
  %1353 = vrot.lane.b32.xlu0 %v602, 20
  %v1354 = vpop.permute.xlu0 %1353
  %1355 = vrot.lane.b32.xlu0 %v605, 20
  %v1356 = vpop.permute.xlu0 %1355
  %1357 = vrot.lane.b32.xlu0 %v607, 20
  %v1358 = vpop.permute.xlu0 %1357
  %1359 = vrot.lane.b32.xlu0 %v610, 20
  %v1360 = vpop.permute.xlu0 %1359
  %1361 = vrot.lane.b32.xlu0 %v612, 20
  %v1362 = vpop.permute.xlu0 %1361
  %1363 = vrot.lane.b32.xlu0 %v615, 20
  %v1364 = vpop.permute.xlu0 %1363
  %1365 = vrot.lane.b32.xlu0 %v617, 20
  %v1366 = vpop.permute.xlu0 %1365
  %1367 = vrot.lane.b32.xlu0 %v620, 20
  %v1368 = vpop.permute.xlu0 %1367
  %1369 = vrot.lane.b32.xlu0 %v622, 20
  %v1370 = vpop.permute.xlu0 %1369
  %1371 = vrot.lane.b32.xlu0 %v625, 20
  %v1372 = vpop.permute.xlu0 %1371
  %1373 = vrot.lane.b32.xlu0 %v627, 20
  %v1374 = vpop.permute.xlu0 %1373
  %1375 = vrot.lane.b32.xlu0 %v630, 20
  %v1376 = vpop.permute.xlu0 %1375
  %1377 = vrot.lane.b32.xlu0 %v632, 20
  %v1378 = vpop.permute.xlu0 %1377
  %1379 = vrot.lane.b32.xlu0 %v635, 20
  %v1380 = vpop.permute.xlu0 %1379
  %1381 = vrot.lane.b32.xlu0 %v637, 20
  %v1382 = vpop.permute.xlu0 %1381
  %1383 = vrot.lane.b32.xlu0 %v640, 20
  %v1384 = vpop.permute.xlu0 %1383
  %1385 = vrot.lane.b32.xlu0 %v642, 20
  %v1386 = vpop.permute.xlu0 %1385
  %1387 = vrot.lane.b32.xlu0 %v645, 20
  %v1388 = vpop.permute.xlu0 %1387
  %1389 = vrot.lane.b32.xlu0 %v647, 20
  %v1390 = vpop.permute.xlu0 %1389
  %1391 = vrot.lane.b32.xlu0 %v650, 20
  %v1392 = vpop.permute.xlu0 %1391
  %1393 = vrot.lane.b32.xlu0 %v652, 20
  %v1394 = vpop.permute.xlu0 %1393
  %1395 = vrot.lane.b32.xlu0 %v1327, 20
  %v1396 = vpop.permute.xlu0 %1395
  %1397 = vrot.lane.b32.xlu0 %v1329, 20
  %v1398 = vpop.permute.xlu0 %1397
  %1399 = vrot.lane.b32.xlu0 %v660, 20
  %v1400 = vpop.permute.xlu0 %1399
  %1401 = vrot.lane.b32.xlu0 %v662, 20
  %v1402 = vpop.permute.xlu0 %1401
  %1403 = vrot.lane.b32.xlu0 %v665, 20
  %v1404 = vpop.permute.xlu0 %1403
  %1405 = vrot.lane.b32.xlu0 %v667, 20
  %v1406 = vpop.permute.xlu0 %1405
  %1407 = vrot.lane.b32.xlu0 %v670, 20
  %v1408 = vpop.permute.xlu0 %1407
  %1409 = vrot.lane.b32.xlu0 %v672, 20
  %v1410 = vpop.permute.xlu0 %1409
  %1411 = vrot.lane.b32.xlu0 %v675, 20
  %v1412 = vpop.permute.xlu0 %1411
  %1413 = vrot.lane.b32.xlu0 %v677, 20
  %v1414 = vpop.permute.xlu0 %1413
  %1415 = vrot.lane.b32.xlu0 %v680, 20
  %v1416 = vpop.permute.xlu0 %1415
  %1417 = vrot.lane.b32.xlu0 %v682, 20
  %v1418 = vpop.permute.xlu0 %1417
  %1419 = vrot.lane.b32.xlu0 %v685, 20
  %v1420 = vpop.permute.xlu0 %1419
  %1421 = vrot.lane.b32.xlu0 %v687, 20
  %v1422 = vpop.permute.xlu0 %1421
  %1423 = vrot.lane.b32.xlu0 %v690, 20
  %v1424 = vpop.permute.xlu0 %1423
  %1425 = vrot.lane.b32.xlu0 %v692, 20
  %v1426 = vpop.permute.xlu0 %1425
  %1427 = vrot.lane.b32.xlu0 %v695, 20
  %v1428 = vpop.permute.xlu0 %1427
  %1429 = vrot.lane.b32.xlu0 %v697, 20
  %v1430 = vpop.permute.xlu0 %1429
  %1431 = vrot.lane.b32.xlu0 %v700, 20
  %v1432 = vpop.permute.xlu0 %1431
  %1433 = vrot.lane.b32.xlu0 %v702, 20
  %v1434 = vpop.permute.xlu0 %1433
  %1435 = vrot.lane.b32.xlu0 %v705, 20
  %v1436 = vpop.permute.xlu0 %1435
  %1437 = vrot.lane.b32.xlu0 %v707, 20
  %v1438 = vpop.permute.xlu0 %1437
  %1439 = vrot.lane.b32.xlu0 %v710, 20
  %v1440 = vpop.permute.xlu0 %1439
  %1441 = vrot.lane.b32.xlu0 %v712, 20
  %v1442 = vpop.permute.xlu0 %1441
  %1443 = vrot.lane.b32.xlu0 %v715, 20
  %v1444 = vpop.permute.xlu0 %1443
  %1445 = vrot.lane.b32.xlu0 %v717, 20
  %v1446 = vpop.permute.xlu0 %1445
  %1447 = vrot.lane.b32.xlu0 %v720, 20
  %v1448 = vpop.permute.xlu0 %1447
  %1449 = vrot.lane.b32.xlu0 %v722, 20
  %v1450 = vpop.permute.xlu0 %1449
  %1451 = vrot.lane.b32.xlu0 %v725, 20
  %v1452 = vpop.permute.xlu0 %1451
  %1453 = vrot.lane.b32.xlu0 %v727, 20
  %v1454 = vpop.permute.xlu0 %1453
  %1455 = vrot.lane.b32.xlu0 %v730, 20
  %v1456 = vpop.permute.xlu0 %1455
  %1457 = vrot.lane.b32.xlu0 %v732, 20
  %v1458 = vpop.permute.xlu0 %1457
  %1459 = vrot.lane.b32.xlu0 %v1332, 20
  %v1460 = vpop.permute.xlu0 %1459
  %1461 = vrot.lane.b32.xlu0 %v1334, 20
  %v1462 = vpop.permute.xlu0 %1461
  %1531 = vrot.lane.b32.xlu0 %v21, 24
  %v1532 = vpop.permute.xlu0 %1531
  %1533 = vrot.lane.b32.xlu0 %v22, 24
  %v1534 = vpop.permute.xlu0 %1533
  %1535 = vrot.lane.b32.xlu0 %v24, 24
  %v1536 = vpop.permute.xlu0 %1535
  %1537 = vrot.lane.b32.xlu0 %v25, 24
  %v1538 = vpop.permute.xlu0 %1537
  %1539 = vrot.lane.b32.xlu0 %v27, 24
  %v1540 = vpop.permute.xlu0 %1539
  %1541 = vrot.lane.b32.xlu0 %v28, 24
  %v1542 = vpop.permute.xlu0 %1541
  %1543 = vrot.lane.b32.xlu0 %v30, 24
  %v1544 = vpop.permute.xlu0 %1543
  %1545 = vrot.lane.b32.xlu0 %v31, 24
  %v1546 = vpop.permute.xlu0 %1545
  %1547 = vrot.lane.b32.xlu0 %v33, 24
  %v1548 = vpop.permute.xlu0 %1547
  %1549 = vrot.lane.b32.xlu0 %v34, 24
  %v1550 = vpop.permute.xlu0 %1549
  %1551 = vrot.lane.b32.xlu0 %v36, 24
  %v1552 = vpop.permute.xlu0 %1551
  %1553 = vrot.lane.b32.xlu0 %v37, 24
  %v1554 = vpop.permute.xlu0 %1553
  %1555 = vrot.lane.b32.xlu0 %v39, 24
  %v1556 = vpop.permute.xlu0 %1555
  %1557 = vrot.lane.b32.xlu0 %v40, 24
  %v1558 = vpop.permute.xlu0 %1557
  %1559 = vrot.lane.b32.xlu0 %v42, 24
  %v1560 = vpop.permute.xlu0 %1559
  %1561 = vrot.lane.b32.xlu0 %v43, 24
  %v1562 = vpop.permute.xlu0 %1561
  %1563 = vrot.lane.b32.xlu0 %v45, 24
  %v1564 = vpop.permute.xlu0 %1563
  %1565 = vrot.lane.b32.xlu0 %v46, 24
  %v1566 = vpop.permute.xlu0 %1565
  %1567 = vrot.lane.b32.xlu0 %v48, 24
  %v1568 = vpop.permute.xlu0 %1567
  %1569 = vrot.lane.b32.xlu0 %v49, 24
  %v1570 = vpop.permute.xlu0 %1569
  %1571 = vrot.lane.b32.xlu0 %v51, 24
  %v1572 = vpop.permute.xlu0 %1571
  %1573 = vrot.lane.b32.xlu0 %v52, 24
  %v1574 = vpop.permute.xlu0 %1573
  %1575 = vrot.lane.b32.xlu0 %v54, 24
  %v1576 = vpop.permute.xlu0 %1575
  %1577 = vrot.lane.b32.xlu0 %v55, 24
  %v1578 = vpop.permute.xlu0 %1577
  %1579 = vrot.lane.b32.xlu0 %v57, 24
  %v1580 = vpop.permute.xlu0 %1579
  %1581 = vrot.lane.b32.xlu0 %v58, 24
  %v1582 = vpop.permute.xlu0 %1581
  %1583 = vrot.lane.b32.xlu0 %v60, 24
  %v1584 = vpop.permute.xlu0 %1583
  %1585 = vrot.lane.b32.xlu0 %v61, 24
  %v1586 = vpop.permute.xlu0 %1585
  %1587 = vrot.lane.b32.xlu0 %v63, 24
  %v1588 = vpop.permute.xlu0 %1587
  %1589 = vrot.lane.b32.xlu0 %v64, 24
  %v1590 = vpop.permute.xlu0 %1589
  %1591 = vrot.lane.b32.xlu0 %v66, 24
  %v1592 = vpop.permute.xlu0 %1591
  %1593 = vrot.lane.b32.xlu0 %v67, 24
  %v1594 = vpop.permute.xlu0 %1593
  %1595 = vrot.lane.b32.xlu0 %v75, 24
  %v1596 = vpop.permute.xlu0 %1595
  %1597 = vrot.lane.b32.xlu0 %v76, 24
  %v1598 = vpop.permute.xlu0 %1597
  %1599 = vrot.lane.b32.xlu0 %v78, 24
  %v1600 = vpop.permute.xlu0 %1599
  %1601 = vrot.lane.b32.xlu0 %v79, 24
  %v1602 = vpop.permute.xlu0 %1601
  %1603 = vrot.lane.b32.xlu0 %v81, 24
  %v1604 = vpop.permute.xlu0 %1603
  %1605 = vrot.lane.b32.xlu0 %v82, 24
  %v1606 = vpop.permute.xlu0 %1605
  %1607 = vrot.lane.b32.xlu0 %v84, 24
  %v1608 = vpop.permute.xlu0 %1607
  %1609 = vrot.lane.b32.xlu0 %v85, 24
  %v1610 = vpop.permute.xlu0 %1609
  %1611 = vrot.lane.b32.xlu0 %v87, 24
  %v1612 = vpop.permute.xlu0 %1611
  %1613 = vrot.lane.b32.xlu0 %v88, 24
  %v1614 = vpop.permute.xlu0 %1613
  %1615 = vrot.lane.b32.xlu0 %v90, 24
  %v1616 = vpop.permute.xlu0 %1615
  %1617 = vrot.lane.b32.xlu0 %v91, 24
  %v1618 = vpop.permute.xlu0 %1617
  %1619 = vrot.lane.b32.xlu0 %v93, 24
  %v1620 = vpop.permute.xlu0 %1619
  %1621 = vrot.lane.b32.xlu0 %v94, 24
  %v1622 = vpop.permute.xlu0 %1621
  %1623 = vrot.lane.b32.xlu0 %v96, 24
  %v1624 = vpop.permute.xlu0 %1623
  %1625 = vrot.lane.b32.xlu0 %v97, 24
  %v1626 = vpop.permute.xlu0 %1625
  %1627 = vrot.lane.b32.xlu0 %v99, 24
  %v1628 = vpop.permute.xlu0 %1627
  %1629 = vrot.lane.b32.xlu0 %v100, 24
  %v1630 = vpop.permute.xlu0 %1629
  %1631 = vrot.lane.b32.xlu0 %v102, 24
  %v1632 = vpop.permute.xlu0 %1631
  %1633 = vrot.lane.b32.xlu0 %v103, 24
  %v1634 = vpop.permute.xlu0 %1633
  %1635 = vrot.lane.b32.xlu0 %v105, 24
  %v1636 = vpop.permute.xlu0 %1635
  %1637 = vrot.lane.b32.xlu0 %v106, 24
  %v1638 = vpop.permute.xlu0 %1637
  %1639 = vrot.lane.b32.xlu0 %v108, 24
  %v1640 = vpop.permute.xlu0 %1639
  %1641 = vrot.lane.b32.xlu0 %v109, 24
  %v1642 = vpop.permute.xlu0 %1641
  %1643 = vrot.lane.b32.xlu0 %v111, 24
  %v1644 = vpop.permute.xlu0 %1643
  %1645 = vrot.lane.b32.xlu0 %v112, 24
  %v1646 = vpop.permute.xlu0 %1645
  %1647 = vrot.lane.b32.xlu0 %v114, 24
  %v1648 = vpop.permute.xlu0 %1647
  %1649 = vrot.lane.b32.xlu0 %v115, 24
  %v1650 = vpop.permute.xlu0 %1649
  %1651 = vrot.lane.b32.xlu0 %v117, 24
  %v1652 = vpop.permute.xlu0 %1651
  %1653 = vrot.lane.b32.xlu0 %v118, 24
  %v1654 = vpop.permute.xlu0 %1653
  %1655 = vrot.lane.b32.xlu0 %v120, 24
  %v1656 = vpop.permute.xlu0 %1655
  %1657 = vrot.lane.b32.xlu0 %v121, 24
  %v1658 = vpop.permute.xlu0 %1657
  %v1725 = vrot.slane %v66, 1
  %v1726 = vrot.slane %v67, 1
  %v1727 = vsel %vm219, %v1725, %v1726
  %v1728 = vrot.slane %v68, 1
  %v1729 = vsel %vm219, %v1726, %v1728
  %v1730 = vrot.slane %v120, 1
  %v1731 = vrot.slane %v121, 1
  %v1732 = vsel %vm219, %v1730, %v1731
  %v1733 = vrot.slane %v122, 1
  %v1734 = vsel %vm219, %v1731, %v1733
  %1735 = vrot.lane.b32.xlu0 %v232, 28
  %v1736 = vpop.permute.xlu0 %1735
  %1737 = vrot.lane.b32.xlu0 %v234, 28
  %v1738 = vpop.permute.xlu0 %1737
  %1739 = vrot.lane.b32.xlu0 %v237, 28
  %v1740 = vpop.permute.xlu0 %1739
  %1741 = vrot.lane.b32.xlu0 %v239, 28
  %v1742 = vpop.permute.xlu0 %1741
  %1743 = vrot.lane.b32.xlu0 %v242, 28
  %v1744 = vpop.permute.xlu0 %1743
  %1745 = vrot.lane.b32.xlu0 %v244, 28
  %v1746 = vpop.permute.xlu0 %1745
  %1747 = vrot.lane.b32.xlu0 %v247, 28
  %v1748 = vpop.permute.xlu0 %1747
  %1749 = vrot.lane.b32.xlu0 %v249, 28
  %v1750 = vpop.permute.xlu0 %1749
  %1751 = vrot.lane.b32.xlu0 %v252, 28
  %v1752 = vpop.permute.xlu0 %1751
  %1753 = vrot.lane.b32.xlu0 %v254, 28
  %v1754 = vpop.permute.xlu0 %1753
  %1755 = vrot.lane.b32.xlu0 %v257, 28
  %v1756 = vpop.permute.xlu0 %1755
  %1757 = vrot.lane.b32.xlu0 %v259, 28
  %v1758 = vpop.permute.xlu0 %1757
  %1759 = vrot.lane.b32.xlu0 %v262, 28
  %v1760 = vpop.permute.xlu0 %1759
  %1761 = vrot.lane.b32.xlu0 %v264, 28
  %v1762 = vpop.permute.xlu0 %1761
  %1763 = vrot.lane.b32.xlu0 %v267, 28
  %v1764 = vpop.permute.xlu0 %1763
  %1765 = vrot.lane.b32.xlu0 %v269, 28
  %v1766 = vpop.permute.xlu0 %1765
  %1767 = vrot.lane.b32.xlu0 %v272, 28
  %v1768 = vpop.permute.xlu0 %1767
  %1769 = vrot.lane.b32.xlu0 %v274, 28
  %v1770 = vpop.permute.xlu0 %1769
  %1771 = vrot.lane.b32.xlu0 %v277, 28
  %v1772 = vpop.permute.xlu0 %1771
  %1773 = vrot.lane.b32.xlu0 %v279, 28
  %v1774 = vpop.permute.xlu0 %1773
  %1775 = vrot.lane.b32.xlu0 %v282, 28
  %v1776 = vpop.permute.xlu0 %1775
  %1777 = vrot.lane.b32.xlu0 %v284, 28
  %v1778 = vpop.permute.xlu0 %1777
  %1779 = vrot.lane.b32.xlu0 %v287, 28
  %v1780 = vpop.permute.xlu0 %1779
  %1781 = vrot.lane.b32.xlu0 %v289, 28
  %v1782 = vpop.permute.xlu0 %1781
  %1783 = vrot.lane.b32.xlu0 %v292, 28
  %v1784 = vpop.permute.xlu0 %1783
  %1785 = vrot.lane.b32.xlu0 %v294, 28
  %v1786 = vpop.permute.xlu0 %1785
  %1787 = vrot.lane.b32.xlu0 %v297, 28
  %v1788 = vpop.permute.xlu0 %1787
  %1789 = vrot.lane.b32.xlu0 %v299, 28
  %v1790 = vpop.permute.xlu0 %1789
  %1791 = vrot.lane.b32.xlu0 %v1125, 28
  %v1792 = vpop.permute.xlu0 %1791
  %1793 = vrot.lane.b32.xlu0 %v1127, 28
  %v1794 = vpop.permute.xlu0 %1793
  %1795 = vrot.lane.b32.xlu0 %v1727, 28
  %v1796 = vpop.permute.xlu0 %1795
  %1797 = vrot.lane.b32.xlu0 %v1729, 28
  %v1798 = vpop.permute.xlu0 %1797
  %1799 = vrot.lane.b32.xlu0 %v312, 28
  %v1800 = vpop.permute.xlu0 %1799
  %1801 = vrot.lane.b32.xlu0 %v314, 28
  %v1802 = vpop.permute.xlu0 %1801
  %1803 = vrot.lane.b32.xlu0 %v317, 28
  %v1804 = vpop.permute.xlu0 %1803
  %1805 = vrot.lane.b32.xlu0 %v319, 28
  %v1806 = vpop.permute.xlu0 %1805
  %1807 = vrot.lane.b32.xlu0 %v322, 28
  %v1808 = vpop.permute.xlu0 %1807
  %1809 = vrot.lane.b32.xlu0 %v324, 28
  %v1810 = vpop.permute.xlu0 %1809
  %1811 = vrot.lane.b32.xlu0 %v327, 28
  %v1812 = vpop.permute.xlu0 %1811
  %1813 = vrot.lane.b32.xlu0 %v329, 28
  %v1814 = vpop.permute.xlu0 %1813
  %1815 = vrot.lane.b32.xlu0 %v332, 28
  %v1816 = vpop.permute.xlu0 %1815
  %1817 = vrot.lane.b32.xlu0 %v334, 28
  %v1818 = vpop.permute.xlu0 %1817
  %1819 = vrot.lane.b32.xlu0 %v337, 28
  %v1820 = vpop.permute.xlu0 %1819
  %1821 = vrot.lane.b32.xlu0 %v339, 28
  %v1822 = vpop.permute.xlu0 %1821
  %1823 = vrot.lane.b32.xlu0 %v342, 28
  %v1824 = vpop.permute.xlu0 %1823
  %1825 = vrot.lane.b32.xlu0 %v344, 28
  %v1826 = vpop.permute.xlu0 %1825
  %1827 = vrot.lane.b32.xlu0 %v347, 28
  %v1828 = vpop.permute.xlu0 %1827
  %1829 = vrot.lane.b32.xlu0 %v349, 28
  %v1830 = vpop.permute.xlu0 %1829
  %1831 = vrot.lane.b32.xlu0 %v352, 28
  %v1832 = vpop.permute.xlu0 %1831
  %1833 = vrot.lane.b32.xlu0 %v354, 28
  %v1834 = vpop.permute.xlu0 %1833
  %1835 = vrot.lane.b32.xlu0 %v357, 28
  %v1836 = vpop.permute.xlu0 %1835
  %1837 = vrot.lane.b32.xlu0 %v359, 28
  %v1838 = vpop.permute.xlu0 %1837
  %1839 = vrot.lane.b32.xlu0 %v362, 28
  %v1840 = vpop.permute.xlu0 %1839
  %1841 = vrot.lane.b32.xlu0 %v364, 28
  %v1842 = vpop.permute.xlu0 %1841
  %1843 = vrot.lane.b32.xlu0 %v367, 28
  %v1844 = vpop.permute.xlu0 %1843
  %1845 = vrot.lane.b32.xlu0 %v369, 28
  %v1846 = vpop.permute.xlu0 %1845
  %1847 = vrot.lane.b32.xlu0 %v372, 28
  %v1848 = vpop.permute.xlu0 %1847
  %1849 = vrot.lane.b32.xlu0 %v374, 28
  %v1850 = vpop.permute.xlu0 %1849
  %1851 = vrot.lane.b32.xlu0 %v377, 28
  %v1852 = vpop.permute.xlu0 %1851
  %1853 = vrot.lane.b32.xlu0 %v379, 28
  %v1854 = vpop.permute.xlu0 %1853
  %1855 = vrot.lane.b32.xlu0 %v1130, 28
  %v1856 = vpop.permute.xlu0 %1855
  %1857 = vrot.lane.b32.xlu0 %v1132, 28
  %v1858 = vpop.permute.xlu0 %1857
  %1859 = vrot.lane.b32.xlu0 %v1732, 28
  %v1860 = vpop.permute.xlu0 %1859
  %1861 = vrot.lane.b32.xlu0 %v1734, 28
  %v1862 = vpop.permute.xlu0 %1861
  %v1927 = vrot.slane %v66, 2
  %v1928 = vrot.slane %v67, 2
  %v1929 = vsel %vm572, %v1927, %v1928
  %v1930 = vrot.slane %v68, 2
  %v1931 = vsel %vm572, %v1928, %v1930
  %v1932 = vrot.slane %v120, 2
  %v1933 = vrot.slane %v121, 2
  %v1934 = vsel %vm572, %v1932, %v1933
  %v1935 = vrot.slane %v122, 2
  %v1936 = vsel %vm572, %v1933, %v1935
  %1937 = vrot.lane.b32.xlu0 %v585, 32
  %v1938 = vpop.permute.xlu0 %1937
  %1939 = vrot.lane.b32.xlu0 %v587, 32
  %v1940 = vpop.permute.xlu0 %1939
  %1941 = vrot.lane.b32.xlu0 %v590, 32
  %v1942 = vpop.permute.xlu0 %1941
  %1943 = vrot.lane.b32.xlu0 %v592, 32
  %v1944 = vpop.permute.xlu0 %1943
  %1945 = vrot.lane.b32.xlu0 %v595, 32
  %v1946 = vpop.permute.xlu0 %1945
  %1947 = vrot.lane.b32.xlu0 %v597, 32
  %v1948 = vpop.permute.xlu0 %1947
  %1949 = vrot.lane.b32.xlu0 %v600, 32
  %v1950 = vpop.permute.xlu0 %1949
  %1951 = vrot.lane.b32.xlu0 %v602, 32
  %v1952 = vpop.permute.xlu0 %1951
  %1953 = vrot.lane.b32.xlu0 %v605, 32
  %v1954 = vpop.permute.xlu0 %1953
  %1955 = vrot.lane.b32.xlu0 %v607, 32
  %v1956 = vpop.permute.xlu0 %1955
  %1957 = vrot.lane.b32.xlu0 %v610, 32
  %v1958 = vpop.permute.xlu0 %1957
  %1959 = vrot.lane.b32.xlu0 %v612, 32
  %v1960 = vpop.permute.xlu0 %1959
  %1961 = vrot.lane.b32.xlu0 %v615, 32
  %v1962 = vpop.permute.xlu0 %1961
  %1963 = vrot.lane.b32.xlu0 %v617, 32
  %v1964 = vpop.permute.xlu0 %1963
  %1965 = vrot.lane.b32.xlu0 %v620, 32
  %v1966 = vpop.permute.xlu0 %1965
  %1967 = vrot.lane.b32.xlu0 %v622, 32
  %v1968 = vpop.permute.xlu0 %1967
  %1969 = vrot.lane.b32.xlu0 %v625, 32
  %v1970 = vpop.permute.xlu0 %1969
  %1971 = vrot.lane.b32.xlu0 %v627, 32
  %v1972 = vpop.permute.xlu0 %1971
  %1973 = vrot.lane.b32.xlu0 %v630, 32
  %v1974 = vpop.permute.xlu0 %1973
  %1975 = vrot.lane.b32.xlu0 %v632, 32
  %v1976 = vpop.permute.xlu0 %1975
  %1977 = vrot.lane.b32.xlu0 %v635, 32
  %v1978 = vpop.permute.xlu0 %1977
  %1979 = vrot.lane.b32.xlu0 %v637, 32
  %v1980 = vpop.permute.xlu0 %1979
  %1981 = vrot.lane.b32.xlu0 %v640, 32
  %v1982 = vpop.permute.xlu0 %1981
  %1983 = vrot.lane.b32.xlu0 %v642, 32
  %v1984 = vpop.permute.xlu0 %1983
  %1985 = vrot.lane.b32.xlu0 %v645, 32
  %v1986 = vpop.permute.xlu0 %1985
  %1987 = vrot.lane.b32.xlu0 %v647, 32
  %v1988 = vpop.permute.xlu0 %1987
  %1989 = vrot.lane.b32.xlu0 %v650, 32
  %v1990 = vpop.permute.xlu0 %1989
  %1991 = vrot.lane.b32.xlu0 %v652, 32
  %v1992 = vpop.permute.xlu0 %1991
  %1993 = vrot.lane.b32.xlu0 %v1327, 32
  %v1994 = vpop.permute.xlu0 %1993
  %1995 = vrot.lane.b32.xlu0 %v1329, 32
  %v1996 = vpop.permute.xlu0 %1995
  %1997 = vrot.lane.b32.xlu0 %v1929, 32
  %v1998 = vpop.permute.xlu0 %1997
  %1999 = vrot.lane.b32.xlu0 %v1931, 32
  %v2000 = vpop.permute.xlu0 %1999
  %2001 = vrot.lane.b32.xlu0 %v665, 32
  %v2002 = vpop.permute.xlu0 %2001
  %2003 = vrot.lane.b32.xlu0 %v667, 32
  %v2004 = vpop.permute.xlu0 %2003
  %2005 = vrot.lane.b32.xlu0 %v670, 32
  %v2006 = vpop.permute.xlu0 %2005
  %2007 = vrot.lane.b32.xlu0 %v672, 32
  %v2008 = vpop.permute.xlu0 %2007
  %2009 = vrot.lane.b32.xlu0 %v675, 32
  %v2010 = vpop.permute.xlu0 %2009
  %2011 = vrot.lane.b32.xlu0 %v677, 32
  %v2012 = vpop.permute.xlu0 %2011
  %2013 = vrot.lane.b32.xlu0 %v680, 32
  %v2014 = vpop.permute.xlu0 %2013
  %2015 = vrot.lane.b32.xlu0 %v682, 32
  %v2016 = vpop.permute.xlu0 %2015
  %2017 = vrot.lane.b32.xlu0 %v685, 32
  %v2018 = vpop.permute.xlu0 %2017
  %2019 = vrot.lane.b32.xlu0 %v687, 32
  %v2020 = vpop.permute.xlu0 %2019
  %2021 = vrot.lane.b32.xlu0 %v690, 32
  %v2022 = vpop.permute.xlu0 %2021
  %2023 = vrot.lane.b32.xlu0 %v692, 32
  %v2024 = vpop.permute.xlu0 %2023
  %2025 = vrot.lane.b32.xlu0 %v695, 32
  %v2026 = vpop.permute.xlu0 %2025
  %2027 = vrot.lane.b32.xlu0 %v697, 32
  %v2028 = vpop.permute.xlu0 %2027
  %2029 = vrot.lane.b32.xlu0 %v700, 32
  %v2030 = vpop.permute.xlu0 %2029
  %2031 = vrot.lane.b32.xlu0 %v702, 32
  %v2032 = vpop.permute.xlu0 %2031
  %2033 = vrot.lane.b32.xlu0 %v705, 32
  %v2034 = vpop.permute.xlu0 %2033
  %2035 = vrot.lane.b32.xlu0 %v707, 32
  %v2036 = vpop.permute.xlu0 %2035
  %2037 = vrot.lane.b32.xlu0 %v710, 32
  %v2038 = vpop.permute.xlu0 %2037
  %2039 = vrot.lane.b32.xlu0 %v712, 32
  %v2040 = vpop.permute.xlu0 %2039
  %2041 = vrot.lane.b32.xlu0 %v715, 32
  %v2042 = vpop.permute.xlu0 %2041
  %2043 = vrot.lane.b32.xlu0 %v717, 32
  %v2044 = vpop.permute.xlu0 %2043
  %2045 = vrot.lane.b32.xlu0 %v720, 32
  %v2046 = vpop.permute.xlu0 %2045
  %2047 = vrot.lane.b32.xlu0 %v722, 32
  %v2048 = vpop.permute.xlu0 %2047
  %2049 = vrot.lane.b32.xlu0 %v725, 32
  %v2050 = vpop.permute.xlu0 %2049
  %2051 = vrot.lane.b32.xlu0 %v727, 32
  %v2052 = vpop.permute.xlu0 %2051
  %2053 = vrot.lane.b32.xlu0 %v730, 32
  %v2054 = vpop.permute.xlu0 %2053
  %2055 = vrot.lane.b32.xlu0 %v732, 32
  %v2056 = vpop.permute.xlu0 %2055
  %2057 = vrot.lane.b32.xlu0 %v1332, 32
  %v2058 = vpop.permute.xlu0 %2057
  %2059 = vrot.lane.b32.xlu0 %v1334, 32
  %v2060 = vpop.permute.xlu0 %2059
  %2061 = vrot.lane.b32.xlu0 %v1934, 32
  %v2062 = vpop.permute.xlu0 %2061
  %2063 = vrot.lane.b32.xlu0 %v1936, 32
  %v2064 = vpop.permute.xlu0 %2063
  %vm2129 = vcmask 31744
  %v2130 = vsel %vm2129, %v15, %v381
  %v2131 = vsel %vm2129, %v16, %v383
  %v2132 = vsel %vm2129, %v18, %v385
  %v2133 = vsel %vm2129, %v19, %v387
  %v2134 = vsel %vm2129, %v21, %v389
  %v2135 = vsel %vm2129, %v22, %v391
  %v2136 = vsel %vm2129, %v24, %v393
  %v2137 = vsel %vm2129, %v25, %v395
  %v2138 = vsel %vm2129, %v27, %v397
  %v2139 = vsel %vm2129, %v28, %v399
  %v2140 = vsel %vm2129, %v30, %v401
  %v2141 = vsel %vm2129, %v31, %v403
  %v2142 = vsel %vm2129, %v33, %v405
  %v2143 = vsel %vm2129, %v34, %v407
  %v2144 = vsel %vm2129, %v36, %v409
  %v2145 = vsel %vm2129, %v37, %v411
  %v2146 = vsel %vm2129, %v39, %v413
  %v2147 = vsel %vm2129, %v40, %v415
  %v2148 = vsel %vm2129, %v42, %v417
  %v2149 = vsel %vm2129, %v43, %v419
  %v2150 = vsel %vm2129, %v45, %v421
  %v2151 = vsel %vm2129, %v46, %v423
  %v2152 = vsel %vm2129, %v48, %v425
  %v2153 = vsel %vm2129, %v49, %v427
  %v2154 = vsel %vm2129, %v51, %v429
  %v2155 = vsel %vm2129, %v52, %v431
  %v2156 = vsel %vm2129, %v54, %v433
  %v2157 = vsel %vm2129, %v55, %v435
  %v2158 = vsel %vm2129, %v57, %v437
  %v2159 = vsel %vm2129, %v58, %v439
  %v2160 = vsel %vm2129, %v60, %v441
  %v2161 = vsel %vm2129, %v61, %v443
  %v2162 = vsel %vm2129, %v69, %v445
  %v2163 = vsel %vm2129, %v70, %v447
  %v2164 = vsel %vm2129, %v72, %v449
  %v2165 = vsel %vm2129, %v73, %v451
  %v2166 = vsel %vm2129, %v75, %v453
  %v2167 = vsel %vm2129, %v76, %v455
  %v2168 = vsel %vm2129, %v78, %v457
  %v2169 = vsel %vm2129, %v79, %v459
  %v2170 = vsel %vm2129, %v81, %v461
  %v2171 = vsel %vm2129, %v82, %v463
  %v2172 = vsel %vm2129, %v84, %v465
  %v2173 = vsel %vm2129, %v85, %v467
  %v2174 = vsel %vm2129, %v87, %v469
  %v2175 = vsel %vm2129, %v88, %v471
  %v2176 = vsel %vm2129, %v90, %v473
  %v2177 = vsel %vm2129, %v91, %v475
  %v2178 = vsel %vm2129, %v93, %v477
  %v2179 = vsel %vm2129, %v94, %v479
  %v2180 = vsel %vm2129, %v96, %v481
  %v2181 = vsel %vm2129, %v97, %v483
  %v2182 = vsel %vm2129, %v99, %v485
  %v2183 = vsel %vm2129, %v100, %v487
  %v2184 = vsel %vm2129, %v102, %v489
  %v2185 = vsel %vm2129, %v103, %v491
  %v2186 = vsel %vm2129, %v105, %v493
  %v2187 = vsel %vm2129, %v106, %v495
  %v2188 = vsel %vm2129, %v108, %v497
  %v2189 = vsel %vm2129, %v109, %v499
  %v2190 = vsel %vm2129, %v111, %v501
  %v2191 = vsel %vm2129, %v112, %v503
  %v2192 = vsel %vm2129, %v114, %v505
  %v2193 = vsel %vm2129, %v115, %v507
  %vm2194 = vcmask 64512
  %v2195 = vsel %vm2194, %v2130, %v734
  %v2196 = vsel %vm2194, %v2131, %v736
  %v2197 = vsel %vm2194, %v2132, %v738
  %v2198 = vsel %vm2194, %v2133, %v740
  %v2199 = vsel %vm2194, %v2134, %v742
  %v2200 = vsel %vm2194, %v2135, %v744
  %v2201 = vsel %vm2194, %v2136, %v746
  %v2202 = vsel %vm2194, %v2137, %v748
  %v2203 = vsel %vm2194, %v2138, %v750
  %v2204 = vsel %vm2194, %v2139, %v752
  %v2205 = vsel %vm2194, %v2140, %v754
  %v2206 = vsel %vm2194, %v2141, %v756
  %v2207 = vsel %vm2194, %v2142, %v758
  %v2208 = vsel %vm2194, %v2143, %v760
  %v2209 = vsel %vm2194, %v2144, %v762
  %v2210 = vsel %vm2194, %v2145, %v764
  %v2211 = vsel %vm2194, %v2146, %v766
  %v2212 = vsel %vm2194, %v2147, %v768
  %v2213 = vsel %vm2194, %v2148, %v770
  %v2214 = vsel %vm2194, %v2149, %v772
  %v2215 = vsel %vm2194, %v2150, %v774
  %v2216 = vsel %vm2194, %v2151, %v776
  %v2217 = vsel %vm2194, %v2152, %v778
  %v2218 = vsel %vm2194, %v2153, %v780
  %v2219 = vsel %vm2194, %v2154, %v782
  %v2220 = vsel %vm2194, %v2155, %v784
  %v2221 = vsel %vm2194, %v2156, %v786
  %v2222 = vsel %vm2194, %v2157, %v788
  %v2223 = vsel %vm2194, %v2158, %v790
  %v2224 = vsel %vm2194, %v2159, %v792
  %v2225 = vsel %vm2194, %v2160, %v794
  %v2226 = vsel %vm2194, %v2161, %v796
  %v2227 = vsel %vm2194, %v2162, %v798
  %v2228 = vsel %vm2194, %v2163, %v800
  %v2229 = vsel %vm2194, %v2164, %v802
  %v2230 = vsel %vm2194, %v2165, %v804
  %v2231 = vsel %vm2194, %v2166, %v806
  %v2232 = vsel %vm2194, %v2167, %v808
  %v2233 = vsel %vm2194, %v2168, %v810
  %v2234 = vsel %vm2194, %v2169, %v812
  %v2235 = vsel %vm2194, %v2170, %v814
  %v2236 = vsel %vm2194, %v2171, %v816
  %v2237 = vsel %vm2194, %v2172, %v818
  %v2238 = vsel %vm2194, %v2173, %v820
  %v2239 = vsel %vm2194, %v2174, %v822
  %v2240 = vsel %vm2194, %v2175, %v824
  %v2241 = vsel %vm2194, %v2176, %v826
  %v2242 = vsel %vm2194, %v2177, %v828
  %v2243 = vsel %vm2194, %v2178, %v830
  %v2244 = vsel %vm2194, %v2179, %v832
  %v2245 = vsel %vm2194, %v2180, %v834
  %v2246 = vsel %vm2194, %v2181, %v836
  %v2247 = vsel %vm2194, %v2182, %v838
  %v2248 = vsel %vm2194, %v2183, %v840
  %v2249 = vsel %vm2194, %v2184, %v842
  %v2250 = vsel %vm2194, %v2185, %v844
  %v2251 = vsel %vm2194, %v2186, %v846
  %v2252 = vsel %vm2194, %v2187, %v848
  %v2253 = vsel %vm2194, %v2188, %v850
  %v2254 = vsel %vm2194, %v2189, %v852
  %v2255 = vsel %vm2194, %v2190, %v854
  %v2256 = vsel %vm2194, %v2191, %v856
  %v2257 = vsel %vm2194, %v2192, %v858
  %v2258 = vsel %vm2194, %v2193, %v860
  %vm2259 = vcmask 97280
  %v2260 = vsel %vm2259, %v2195, %v930
  %v2261 = vsel %vm2259, %v2196, %v932
  %v2262 = vsel %vm2259, %v2197, %v934
  %v2263 = vsel %vm2259, %v2198, %v936
  %v2264 = vsel %vm2259, %v2199, %v938
  %v2265 = vsel %vm2259, %v2200, %v940
  %v2266 = vsel %vm2259, %v2201, %v942
  %v2267 = vsel %vm2259, %v2202, %v944
  %v2268 = vsel %vm2259, %v2203, %v946
  %v2269 = vsel %vm2259, %v2204, %v948
  %v2270 = vsel %vm2259, %v2205, %v950
  %v2271 = vsel %vm2259, %v2206, %v952
  %v2272 = vsel %vm2259, %v2207, %v954
  %v2273 = vsel %vm2259, %v2208, %v956
  %v2274 = vsel %vm2259, %v2209, %v958
  %v2275 = vsel %vm2259, %v2210, %v960
  %v2276 = vsel %vm2259, %v2211, %v962
  %v2277 = vsel %vm2259, %v2212, %v964
  %v2278 = vsel %vm2259, %v2213, %v966
  %v2279 = vsel %vm2259, %v2214, %v968
  %v2280 = vsel %vm2259, %v2215, %v970
  %v2281 = vsel %vm2259, %v2216, %v972
  %v2282 = vsel %vm2259, %v2217, %v974
  %v2283 = vsel %vm2259, %v2218, %v976
  %v2284 = vsel %vm2259, %v2219, %v978
  %v2285 = vsel %vm2259, %v2220, %v980
  %v2286 = vsel %vm2259, %v2221, %v982
  %v2287 = vsel %vm2259, %v2222, %v984
  %v2288 = vsel %vm2259, %v2223, %v986
  %v2289 = vsel %vm2259, %v2224, %v988
  %v2290 = vsel %vm2259, %v2225, %v990
  %v2291 = vsel %vm2259, %v2226, %v992
  %v2292 = vsel %vm2259, %v2227, %v994
  %v2293 = vsel %vm2259, %v2228, %v996
  %v2294 = vsel %vm2259, %v2229, %v998
  %v2295 = vsel %vm2259, %v2230, %v1000
  %v2296 = vsel %vm2259, %v2231, %v1002
  %v2297 = vsel %vm2259, %v2232, %v1004
  %v2298 = vsel %vm2259, %v2233, %v1006
  %v2299 = vsel %vm2259, %v2234, %v1008
  %v2300 = vsel %vm2259, %v2235, %v1010
  %v2301 = vsel %vm2259, %v2236, %v1012
  %v2302 = vsel %vm2259, %v2237, %v1014
  %v2303 = vsel %vm2259, %v2238, %v1016
  %v2304 = vsel %vm2259, %v2239, %v1018
  %v2305 = vsel %vm2259, %v2240, %v1020
  %v2306 = vsel %vm2259, %v2241, %v1022
  %v2307 = vsel %vm2259, %v2242, %v1024
  %v2308 = vsel %vm2259, %v2243, %v1026
  %v2309 = vsel %vm2259, %v2244, %v1028
  %v2310 = vsel %vm2259, %v2245, %v1030
  %v2311 = vsel %vm2259, %v2246, %v1032
  %v2312 = vsel %vm2259, %v2247, %v1034
  %v2313 = vsel %vm2259, %v2248, %v1036
  %v2314 = vsel %vm2259, %v2249, %v1038
  %v2315 = vsel %vm2259, %v2250, %v1040
  %v2316 = vsel %vm2259, %v2251, %v1042
  %v2317 = vsel %vm2259, %v2252, %v1044
  %v2318 = vsel %vm2259, %v2253, %v1046
  %v2319 = vsel %vm2259, %v2254, %v1048
  %v2320 = vsel %vm2259, %v2255, %v1050
  %v2321 = vsel %vm2259, %v2256, %v1052
  %v2322 = vsel %vm2259, %v2257, %v1054
  %v2323 = vsel %vm2259, %v2258, %v1056
  %vm2324 = vcmask 130048
  %v2325 = vsel %vm2324, %v2260, %v1134
  %v2326 = vsel %vm2324, %v2261, %v1136
  %v2327 = vsel %vm2324, %v2262, %v1138
  %v2328 = vsel %vm2324, %v2263, %v1140
  %v2329 = vsel %vm2324, %v2264, %v1142
  %v2330 = vsel %vm2324, %v2265, %v1144
  %v2331 = vsel %vm2324, %v2266, %v1146
  %v2332 = vsel %vm2324, %v2267, %v1148
  %v2333 = vsel %vm2324, %v2268, %v1150
  %v2334 = vsel %vm2324, %v2269, %v1152
  %v2335 = vsel %vm2324, %v2270, %v1154
  %v2336 = vsel %vm2324, %v2271, %v1156
  %v2337 = vsel %vm2324, %v2272, %v1158
  %v2338 = vsel %vm2324, %v2273, %v1160
  %v2339 = vsel %vm2324, %v2274, %v1162
  %v2340 = vsel %vm2324, %v2275, %v1164
  %v2341 = vsel %vm2324, %v2276, %v1166
  %v2342 = vsel %vm2324, %v2277, %v1168
  %v2343 = vsel %vm2324, %v2278, %v1170
  %v2344 = vsel %vm2324, %v2279, %v1172
  %v2345 = vsel %vm2324, %v2280, %v1174
  %v2346 = vsel %vm2324, %v2281, %v1176
  %v2347 = vsel %vm2324, %v2282, %v1178
  %v2348 = vsel %vm2324, %v2283, %v1180
  %v2349 = vsel %vm2324, %v2284, %v1182
  %v2350 = vsel %vm2324, %v2285, %v1184
  %v2351 = vsel %vm2324, %v2286, %v1186
  %v2352 = vsel %vm2324, %v2287, %v1188
  %v2353 = vsel %vm2324, %v2288, %v1190
  %v2354 = vsel %vm2324, %v2289, %v1192
  %v2355 = vsel %vm2324, %v2290, %v1194
  %v2356 = vsel %vm2324, %v2291, %v1196
  %v2357 = vsel %vm2324, %v2292, %v1198
  %v2358 = vsel %vm2324, %v2293, %v1200
  %v2359 = vsel %vm2324, %v2294, %v1202
  %v2360 = vsel %vm2324, %v2295, %v1204
  %v2361 = vsel %vm2324, %v2296, %v1206
  %v2362 = vsel %vm2324, %v2297, %v1208
  %v2363 = vsel %vm2324, %v2298, %v1210
  %v2364 = vsel %vm2324, %v2299, %v1212
  %v2365 = vsel %vm2324, %v2300, %v1214
  %v2366 = vsel %vm2324, %v2301, %v1216
  %v2367 = vsel %vm2324, %v2302, %v1218
  %v2368 = vsel %vm2324, %v2303, %v1220
  %v2369 = vsel %vm2324, %v2304, %v1222
  %v2370 = vsel %vm2324, %v2305, %v1224
  %v2371 = vsel %vm2324, %v2306, %v1226
  %v2372 = vsel %vm2324, %v2307, %v1228
  %v2373 = vsel %vm2324, %v2308, %v1230
  %v2374 = vsel %vm2324, %v2309, %v1232
  %v2375 = vsel %vm2324, %v2310, %v1234
  %v2376 = vsel %vm2324, %v2311, %v1236
  %v2377 = vsel %vm2324, %v2312, %v1238
  %v2378 = vsel %vm2324, %v2313, %v1240
  %v2379 = vsel %vm2324, %v2314, %v1242
  %v2380 = vsel %vm2324, %v2315, %v1244
  %v2381 = vsel %vm2324, %v2316, %v1246
  %v2382 = vsel %vm2324, %v2317, %v1248
  %v2383 = vsel %vm2324, %v2318, %v1250
  %v2384 = vsel %vm2324, %v2319, %v1252
  %v2385 = vsel %vm2324, %v2320, %v1254
  %v2386 = vsel %vm2324, %v2321, %v1256
  %v2387 = vsel %vm2324, %v2322, %v1258
  %v2388 = vsel %vm2324, %v2323, %v1260
  %vm2389 = vcmask 162816
  %v2390 = vsel %vm2389, %v2325, %v1336
  %v2391 = vsel %vm2389, %v2326, %v1338
  %v2392 = vsel %vm2389, %v2327, %v1340
  %v2393 = vsel %vm2389, %v2328, %v1342
  %v2394 = vsel %vm2389, %v2329, %v1344
  %v2395 = vsel %vm2389, %v2330, %v1346
  %v2396 = vsel %vm2389, %v2331, %v1348
  %v2397 = vsel %vm2389, %v2332, %v1350
  %v2398 = vsel %vm2389, %v2333, %v1352
  %v2399 = vsel %vm2389, %v2334, %v1354
  %v2400 = vsel %vm2389, %v2335, %v1356
  %v2401 = vsel %vm2389, %v2336, %v1358
  %v2402 = vsel %vm2389, %v2337, %v1360
  %v2403 = vsel %vm2389, %v2338, %v1362
  %v2404 = vsel %vm2389, %v2339, %v1364
  %v2405 = vsel %vm2389, %v2340, %v1366
  %v2406 = vsel %vm2389, %v2341, %v1368
  %v2407 = vsel %vm2389, %v2342, %v1370
  %v2408 = vsel %vm2389, %v2343, %v1372
  %v2409 = vsel %vm2389, %v2344, %v1374
  %v2410 = vsel %vm2389, %v2345, %v1376
  %v2411 = vsel %vm2389, %v2346, %v1378
  %v2412 = vsel %vm2389, %v2347, %v1380
  %v2413 = vsel %vm2389, %v2348, %v1382
  %v2414 = vsel %vm2389, %v2349, %v1384
  %v2415 = vsel %vm2389, %v2350, %v1386
  %v2416 = vsel %vm2389, %v2351, %v1388
  %v2417 = vsel %vm2389, %v2352, %v1390
  %v2418 = vsel %vm2389, %v2353, %v1392
  %v2419 = vsel %vm2389, %v2354, %v1394
  %v2420 = vsel %vm2389, %v2355, %v1396
  %v2421 = vsel %vm2389, %v2356, %v1398
  %v2422 = vsel %vm2389, %v2357, %v1400
  %v2423 = vsel %vm2389, %v2358, %v1402
  %v2424 = vsel %vm2389, %v2359, %v1404
  %v2425 = vsel %vm2389, %v2360, %v1406
  %v2426 = vsel %vm2389, %v2361, %v1408
  %v2427 = vsel %vm2389, %v2362, %v1410
  %v2428 = vsel %vm2389, %v2363, %v1412
  %v2429 = vsel %vm2389, %v2364, %v1414
  %v2430 = vsel %vm2389, %v2365, %v1416
  %v2431 = vsel %vm2389, %v2366, %v1418
  %v2432 = vsel %vm2389, %v2367, %v1420
  %v2433 = vsel %vm2389, %v2368, %v1422
  %v2434 = vsel %vm2389, %v2369, %v1424
  %v2435 = vsel %vm2389, %v2370, %v1426
  %v2436 = vsel %vm2389, %v2371, %v1428
  %v2437 = vsel %vm2389, %v2372, %v1430
  %v2438 = vsel %vm2389, %v2373, %v1432
  %v2439 = vsel %vm2389, %v2374, %v1434
  %v2440 = vsel %vm2389, %v2375, %v1436
  %v2441 = vsel %vm2389, %v2376, %v1438
  %v2442 = vsel %vm2389, %v2377, %v1440
  %v2443 = vsel %vm2389, %v2378, %v1442
  %v2444 = vsel %vm2389, %v2379, %v1444
  %v2445 = vsel %vm2389, %v2380, %v1446
  %v2446 = vsel %vm2389, %v2381, %v1448
  %v2447 = vsel %vm2389, %v2382, %v1450
  %v2448 = vsel %vm2389, %v2383, %v1452
  %v2449 = vsel %vm2389, %v2384, %v1454
  %v2450 = vsel %vm2389, %v2385, %v1456
  %v2451 = vsel %vm2389, %v2386, %v1458
  %v2452 = vsel %vm2389, %v2387, %v1460
  %v2453 = vsel %vm2389, %v2388, %v1462
  %vm2454 = vcmask 195584
  %v2455 = vsel %vm2454, %v2390, %v1532
  %v2456 = vsel %vm2454, %v2391, %v1534
  %v2457 = vsel %vm2454, %v2392, %v1536
  %v2458 = vsel %vm2454, %v2393, %v1538
  %v2459 = vsel %vm2454, %v2394, %v1540
  %v2460 = vsel %vm2454, %v2395, %v1542
  %v2461 = vsel %vm2454, %v2396, %v1544
  %v2462 = vsel %vm2454, %v2397, %v1546
  %v2463 = vsel %vm2454, %v2398, %v1548
  %v2464 = vsel %vm2454, %v2399, %v1550
  %v2465 = vsel %vm2454, %v2400, %v1552
  %v2466 = vsel %vm2454, %v2401, %v1554
  %v2467 = vsel %vm2454, %v2402, %v1556
  %v2468 = vsel %vm2454, %v2403, %v1558
  %v2469 = vsel %vm2454, %v2404, %v1560
  %v2470 = vsel %vm2454, %v2405, %v1562
  %v2471 = vsel %vm2454, %v2406, %v1564
  %v2472 = vsel %vm2454, %v2407, %v1566
  %v2473 = vsel %vm2454, %v2408, %v1568
  %v2474 = vsel %vm2454, %v2409, %v1570
  %v2475 = vsel %vm2454, %v2410, %v1572
  %v2476 = vsel %vm2454, %v2411, %v1574
  %v2477 = vsel %vm2454, %v2412, %v1576
  %v2478 = vsel %vm2454, %v2413, %v1578
  %v2479 = vsel %vm2454, %v2414, %v1580
  %v2480 = vsel %vm2454, %v2415, %v1582
  %v2481 = vsel %vm2454, %v2416, %v1584
  %v2482 = vsel %vm2454, %v2417, %v1586
  %v2483 = vsel %vm2454, %v2418, %v1588
  %v2484 = vsel %vm2454, %v2419, %v1590
  %v2485 = vsel %vm2454, %v2420, %v1592
  %v2486 = vsel %vm2454, %v2421, %v1594
  %v2487 = vsel %vm2454, %v2422, %v1596
  %v2488 = vsel %vm2454, %v2423, %v1598
  %v2489 = vsel %vm2454, %v2424, %v1600
  %v2490 = vsel %vm2454, %v2425, %v1602
  %v2491 = vsel %vm2454, %v2426, %v1604
  %v2492 = vsel %vm2454, %v2427, %v1606
  %v2493 = vsel %vm2454, %v2428, %v1608
  %v2494 = vsel %vm2454, %v2429, %v1610
  %v2495 = vsel %vm2454, %v2430, %v1612
  %v2496 = vsel %vm2454, %v2431, %v1614
  %v2497 = vsel %vm2454, %v2432, %v1616
  %v2498 = vsel %vm2454, %v2433, %v1618
  %v2499 = vsel %vm2454, %v2434, %v1620
  %v2500 = vsel %vm2454, %v2435, %v1622
  %v2501 = vsel %vm2454, %v2436, %v1624
  %v2502 = vsel %vm2454, %v2437, %v1626
  %v2503 = vsel %vm2454, %v2438, %v1628
  %v2504 = vsel %vm2454, %v2439, %v1630
  %v2505 = vsel %vm2454, %v2440, %v1632
  %v2506 = vsel %vm2454, %v2441, %v1634
  %v2507 = vsel %vm2454, %v2442, %v1636
  %v2508 = vsel %vm2454, %v2443, %v1638
  %v2509 = vsel %vm2454, %v2444, %v1640
  %v2510 = vsel %vm2454, %v2445, %v1642
  %v2511 = vsel %vm2454, %v2446, %v1644
  %v2512 = vsel %vm2454, %v2447, %v1646
  %v2513 = vsel %vm2454, %v2448, %v1648
  %v2514 = vsel %vm2454, %v2449, %v1650
  %v2515 = vsel %vm2454, %v2450, %v1652
  %v2516 = vsel %vm2454, %v2451, %v1654
  %v2517 = vsel %vm2454, %v2452, %v1656
  %v2518 = vsel %vm2454, %v2453, %v1658
  %vm2519 = vcmask 228352
  %v2520 = vsel %vm2519, %v2455, %v1736
  %v2521 = vsel %vm2519, %v2456, %v1738
  %v2522 = vsel %vm2519, %v2457, %v1740
  %v2523 = vsel %vm2519, %v2458, %v1742
  %v2524 = vsel %vm2519, %v2459, %v1744
  %v2525 = vsel %vm2519, %v2460, %v1746
  %v2526 = vsel %vm2519, %v2461, %v1748
  %v2527 = vsel %vm2519, %v2462, %v1750
  %v2528 = vsel %vm2519, %v2463, %v1752
  %v2529 = vsel %vm2519, %v2464, %v1754
  %v2530 = vsel %vm2519, %v2465, %v1756
  %v2531 = vsel %vm2519, %v2466, %v1758
  %v2532 = vsel %vm2519, %v2467, %v1760
  %v2533 = vsel %vm2519, %v2468, %v1762
  %v2534 = vsel %vm2519, %v2469, %v1764
  %v2535 = vsel %vm2519, %v2470, %v1766
  %v2536 = vsel %vm2519, %v2471, %v1768
  %v2537 = vsel %vm2519, %v2472, %v1770
  %v2538 = vsel %vm2519, %v2473, %v1772
  %v2539 = vsel %vm2519, %v2474, %v1774
  %v2540 = vsel %vm2519, %v2475, %v1776
  %v2541 = vsel %vm2519, %v2476, %v1778
  %v2542 = vsel %vm2519, %v2477, %v1780
  %v2543 = vsel %vm2519, %v2478, %v1782
  %v2544 = vsel %vm2519, %v2479, %v1784
  %v2545 = vsel %vm2519, %v2480, %v1786
  %v2546 = vsel %vm2519, %v2481, %v1788
  %v2547 = vsel %vm2519, %v2482, %v1790
  %v2548 = vsel %vm2519, %v2483, %v1792
  %v2549 = vsel %vm2519, %v2484, %v1794
  %v2550 = vsel %vm2519, %v2485, %v1796
  %v2551 = vsel %vm2519, %v2486, %v1798
  %v2552 = vsel %vm2519, %v2487, %v1800
  %v2553 = vsel %vm2519, %v2488, %v1802
  %v2554 = vsel %vm2519, %v2489, %v1804
  %v2555 = vsel %vm2519, %v2490, %v1806
  %v2556 = vsel %vm2519, %v2491, %v1808
  %v2557 = vsel %vm2519, %v2492, %v1810
  %v2558 = vsel %vm2519, %v2493, %v1812
  %v2559 = vsel %vm2519, %v2494, %v1814
  %v2560 = vsel %vm2519, %v2495, %v1816
  %v2561 = vsel %vm2519, %v2496, %v1818
  %v2562 = vsel %vm2519, %v2497, %v1820
  %v2563 = vsel %vm2519, %v2498, %v1822
  %v2564 = vsel %vm2519, %v2499, %v1824
  %v2565 = vsel %vm2519, %v2500, %v1826
  %v2566 = vsel %vm2519, %v2501, %v1828
  %v2567 = vsel %vm2519, %v2502, %v1830
  %v2568 = vsel %vm2519, %v2503, %v1832
  %v2569 = vsel %vm2519, %v2504, %v1834
  %v2570 = vsel %vm2519, %v2505, %v1836
  %v2571 = vsel %vm2519, %v2506, %v1838
  %v2572 = vsel %vm2519, %v2507, %v1840
  %v2573 = vsel %vm2519, %v2508, %v1842
  %v2574 = vsel %vm2519, %v2509, %v1844
  %v2575 = vsel %vm2519, %v2510, %v1846
  %v2576 = vsel %vm2519, %v2511, %v1848
  %v2577 = vsel %vm2519, %v2512, %v1850
  %v2578 = vsel %vm2519, %v2513, %v1852
  %v2579 = vsel %vm2519, %v2514, %v1854
  %v2580 = vsel %vm2519, %v2515, %v1856
  %v2581 = vsel %vm2519, %v2516, %v1858
  %v2582 = vsel %vm2519, %v2517, %v1860
  %v2583 = vsel %vm2519, %v2518, %v1862
  %vm2584 = vcmask 261120
  %v2585 = vsel %vm2584, %v2520, %v1938
  %v2586 = vsel %vm2584, %v2521, %v1940
  %v2587 = vsel %vm2584, %v2522, %v1942
  %v2588 = vsel %vm2584, %v2523, %v1944
  %v2589 = vsel %vm2584, %v2524, %v1946
  %v2590 = vsel %vm2584, %v2525, %v1948
  %v2591 = vsel %vm2584, %v2526, %v1950
  %v2592 = vsel %vm2584, %v2527, %v1952
  %v2593 = vsel %vm2584, %v2528, %v1954
  %v2594 = vsel %vm2584, %v2529, %v1956
  %v2595 = vsel %vm2584, %v2530, %v1958
  %v2596 = vsel %vm2584, %v2531, %v1960
  %v2597 = vsel %vm2584, %v2532, %v1962
  %v2598 = vsel %vm2584, %v2533, %v1964
  %v2599 = vsel %vm2584, %v2534, %v1966
  %v2600 = vsel %vm2584, %v2535, %v1968
  %v2601 = vsel %vm2584, %v2536, %v1970
  %v2602 = vsel %vm2584, %v2537, %v1972
  %v2603 = vsel %vm2584, %v2538, %v1974
  %v2604 = vsel %vm2584, %v2539, %v1976
  %v2605 = vsel %vm2584, %v2540, %v1978
  %v2606 = vsel %vm2584, %v2541, %v1980
  %v2607 = vsel %vm2584, %v2542, %v1982
  %v2608 = vsel %vm2584, %v2543, %v1984
  %v2609 = vsel %vm2584, %v2544, %v1986
  %v2610 = vsel %vm2584, %v2545, %v1988
  %v2611 = vsel %vm2584, %v2546, %v1990
  %v2612 = vsel %vm2584, %v2547, %v1992
  %v2613 = vsel %vm2584, %v2548, %v1994
  %v2614 = vsel %vm2584, %v2549, %v1996
  %v2615 = vsel %vm2584, %v2550, %v1998
  %v2616 = vsel %vm2584, %v2551, %v2000
  %v2617 = vsel %vm2584, %v2552, %v2002
  %v2618 = vsel %vm2584, %v2553, %v2004
  %v2619 = vsel %vm2584, %v2554, %v2006
  %v2620 = vsel %vm2584, %v2555, %v2008
  %v2621 = vsel %vm2584, %v2556, %v2010
  %v2622 = vsel %vm2584, %v2557, %v2012
  %v2623 = vsel %vm2584, %v2558, %v2014
  %v2624 = vsel %vm2584, %v2559, %v2016
  %v2625 = vsel %vm2584, %v2560, %v2018
  %v2626 = vsel %vm2584, %v2561, %v2020
  %v2627 = vsel %vm2584, %v2562, %v2022
  %v2628 = vsel %vm2584, %v2563, %v2024
  %v2629 = vsel %vm2584, %v2564, %v2026
  %v2630 = vsel %vm2584, %v2565, %v2028
  %v2631 = vsel %vm2584, %v2566, %v2030
  %v2632 = vsel %vm2584, %v2567, %v2032
  %v2633 = vsel %vm2584, %v2568, %v2034
  %v2634 = vsel %vm2584, %v2569, %v2036
  %v2635 = vsel %vm2584, %v2570, %v2038
  %v2636 = vsel %vm2584, %v2571, %v2040
  %v2637 = vsel %vm2584, %v2572, %v2042
  %v2638 = vsel %vm2584, %v2573, %v2044
  %v2639 = vsel %vm2584, %v2574, %v2046
  %v2640 = vsel %vm2584, %v2575, %v2048
  %v2641 = vsel %vm2584, %v2576, %v2050
  %v2642 = vsel %vm2584, %v2577, %v2052
  %v2643 = vsel %vm2584, %v2578, %v2054
  %v2644 = vsel %vm2584, %v2579, %v2056
  %v2645 = vsel %vm2584, %v2580, %v2058
  %v2646 = vsel %vm2584, %v2581, %v2060
  %v2647 = vsel %vm2584, %v2582, %v2062
  %v2648 = vsel %vm2584, %v2583, %v2064
  %v2649 = vpack.c.bf16 %v2586, %v2585
  %v2650 = vpack.c.bf16 %v2588, %v2587
  %v2651 = vpack.c.bf16 %v2590, %v2589
  %v2652 = vpack.c.bf16 %v2592, %v2591
  %v2653 = vpack.c.bf16 %v2594, %v2593
  %v2654 = vpack.c.bf16 %v2596, %v2595
  %v2655 = vpack.c.bf16 %v2598, %v2597
  %v2656 = vpack.c.bf16 %v2600, %v2599
  %v2657 = vpack.c.bf16 %v2602, %v2601
  %v2658 = vpack.c.bf16 %v2604, %v2603
  %v2659 = vpack.c.bf16 %v2606, %v2605
  %v2660 = vpack.c.bf16 %v2608, %v2607
  %v2661 = vpack.c.bf16 %v2610, %v2609
  %v2662 = vpack.c.bf16 %v2612, %v2611
  %v2663 = vpack.c.bf16 %v2614, %v2613
  %v2664 = vpack.c.bf16 %v2616, %v2615
  %v2665 = vpack.c.bf16 %v2618, %v2617
  %v2666 = vpack.c.bf16 %v2620, %v2619
  %v2667 = vpack.c.bf16 %v2622, %v2621
  %v2668 = vpack.c.bf16 %v2624, %v2623
  %v2669 = vpack.c.bf16 %v2626, %v2625
  %v2670 = vpack.c.bf16 %v2628, %v2627
  %v2671 = vpack.c.bf16 %v2630, %v2629
  %v2672 = vpack.c.bf16 %v2632, %v2631
  %v2673 = vpack.c.bf16 %v2634, %v2633
  %v2674 = vpack.c.bf16 %v2636, %v2635
  %v2675 = vpack.c.bf16 %v2638, %v2637
  %v2676 = vpack.c.bf16 %v2640, %v2639
  %v2677 = vpack.c.bf16 %v2642, %v2641
  %v2678 = vpack.c.bf16 %v2644, %v2643
  %v2679 = vpack.c.bf16 %v2646, %v2645
  %v2680 = vpack.c.bf16 %v2648, %v2647
  %v2681 = vld [vmem:[%s1] sm:$0xf]
  %v2682 = vld [vmem:[%s1 + $0x4] sm:$0xf]
  %v2683 = vld [vmem:[%s1 + $0x8] sm:$0xf]
  %v2684 = vld [vmem:[%s1 + $0xc] sm:$0xf]
  %v2685 = vld [vmem:[%s1 + $0x10] sm:$0x3]
  %v2686 = vld [vmem:[%s2] sm:$0x1]
  %v2688 = vperm.slane %v2686, 0
  %v2695 = vunpack.c.l.b16 %v2681
  %v2696 = vunpack.c.l.b16 %v2682
  %v2697 = vunpack.c.l.b16 %v2683
  %v2698 = vunpack.c.l.b16 %v2684
  %v2699 = vunpack.c.l.b16 %v2685
  %v2700 = vpack.c.b16 %v2696, %v2695
  %v2701 = vpack.c.b16 %v2698, %v2697
  %v2702 = vpack.c.b16 %v2699, %v2699
  %vm2705 = vcmask 293888
  %v2707 = vsel %vm2705, %v2649, 0
  %v2710 = vsel %vm2705, %v2650, 0
  %v2713 = vsel %vm2705, %v2651, 0
  %v2716 = vsel %vm2705, %v2652, 0
  %v2719 = vsel %vm2705, %v2653, 0
  %v2722 = vsel %vm2705, %v2654, 0
  %v2725 = vsel %vm2705, %v2655, 0
  %v2728 = vsel %vm2705, %v2656, 0
  %v2731 = vsel %vm2705, %v2657, 0
  %v2734 = vsel %vm2705, %v2658, 0
  %v2737 = vsel %vm2705, %v2659, 0
  %v2740 = vsel %vm2705, %v2660, 0
  %v2743 = vsel %vm2705, %v2661, 0
  %v2746 = vsel %vm2705, %v2662, 0
  %v2749 = vsel %vm2705, %v2663, 0
  %v2752 = vsel %vm2705, %v2664, 0
  %v2755 = vsel %vm2705, %v2665, 0
  %v2758 = vsel %vm2705, %v2666, 0
  %v2761 = vsel %vm2705, %v2667, 0
  %v2764 = vsel %vm2705, %v2668, 0
  %v2767 = vsel %vm2705, %v2669, 0
  %v2770 = vsel %vm2705, %v2670, 0
  %v2773 = vsel %vm2705, %v2671, 0
  %v2776 = vsel %vm2705, %v2672, 0
  %v2779 = vsel %vm2705, %v2673, 0
  %v2782 = vsel %vm2705, %v2674, 0
  %v2785 = vsel %vm2705, %v2675, 0
  %v2788 = vsel %vm2705, %v2676, 0
  %v2791 = vsel %vm2705, %v2677, 0
  %v2794 = vsel %vm2705, %v2678, 0
  %v2797 = vsel %vm2705, %v2679, 0
  %v2800 = vsel %vm2705, %v2680, 0
  %vm2802 = vcmask 1041408
  %v2804 = vsel %vm2802, %v2702, 0
  %2806 = vmatpush.bf16.msra.mxu0 0
  %2807 = vmatpush.bf16.msra.mxu0 0
  %2808 = vmatpush.bf16.msra.mxu0 0
  %2809 = vmatpush.bf16.msra.mxu0 0
  %2810 = vmatpush.bf16.msra.mxu0 0
  %2811 = vmatpush.bf16.msra.mxu0 %v2804
  %2812 = vmatpush.bf16.msra.mxu0 %v2701
  %2813 = vmatpush.bf16.msra.mxu0 %v2700
  %2814 = vmatmul.bf16.gmra.mxu0 %v2707
  %v2815 = vpop.f32.mrf.mxu0
  %v2816 = vadd.f32 %v2688, %v2815
  %v2817 = vpop.f32.mrf.mxu0
  %v2818 = vadd.f32 %v2688, %v2817
  %2819 = vmatmul.bf16.gmra.mxu0 %v2710
  %v2820 = vpop.f32.mrf.mxu0
  %v2821 = vadd.f32 %v2688, %v2820
  %v2822 = vpop.f32.mrf.mxu0
  %v2823 = vadd.f32 %v2688, %v2822
  %2824 = vmatmul.bf16.gmra.mxu0 %v2713
  %v2825 = vpop.f32.mrf.mxu0
  %v2826 = vadd.f32 %v2688, %v2825
  %v2827 = vpop.f32.mrf.mxu0
  %v2828 = vadd.f32 %v2688, %v2827
  %2829 = vmatmul.bf16.gmra.mxu0 %v2716
  %v2830 = vpop.f32.mrf.mxu0
  %v2831 = vadd.f32 %v2688, %v2830
  %v2832 = vpop.f32.mrf.mxu0
  %v2833 = vadd.f32 %v2688, %v2832
  %2834 = vmatmul.bf16.gmra.mxu0 %v2719
  %v2835 = vpop.f32.mrf.mxu0
  %v2836 = vadd.f32 %v2688, %v2835
  %v2837 = vpop.f32.mrf.mxu0
  %v2838 = vadd.f32 %v2688, %v2837
  %2839 = vmatmul.bf16.gmra.mxu0 %v2722
  %v2840 = vpop.f32.mrf.mxu0
  %v2841 = vadd.f32 %v2688, %v2840
  %v2842 = vpop.f32.mrf.mxu0
  %v2843 = vadd.f32 %v2688, %v2842
  %2844 = vmatmul.bf16.gmra.mxu0 %v2725
  %v2845 = vpop.f32.mrf.mxu0
  %v2846 = vadd.f32 %v2688, %v2845
  %v2847 = vpop.f32.mrf.mxu0
  %v2848 = vadd.f32 %v2688, %v2847
  %2849 = vmatmul.bf16.gmra.mxu0 %v2728
  %v2850 = vpop.f32.mrf.mxu0
  %v2851 = vadd.f32 %v2688, %v2850
  %v2852 = vpop.f32.mrf.mxu0
  %v2853 = vadd.f32 %v2688, %v2852
  %2854 = vmatmul.bf16.gmra.mxu0 %v2731
  %v2855 = vpop.f32.mrf.mxu0
  %v2856 = vadd.f32 %v2688, %v2855
  %v2857 = vpop.f32.mrf.mxu0
  %v2858 = vadd.f32 %v2688, %v2857
  %2859 = vmatmul.bf16.gmra.mxu0 %v2734
  %v2860 = vpop.f32.mrf.mxu0
  %v2861 = vadd.f32 %v2688, %v2860
  %v2862 = vpop.f32.mrf.mxu0
  %v2863 = vadd.f32 %v2688, %v2862
  %2864 = vmatmul.bf16.gmra.mxu0 %v2737
  %v2865 = vpop.f32.mrf.mxu0
  %v2866 = vadd.f32 %v2688, %v2865
  %v2867 = vpop.f32.mrf.mxu0
  %v2868 = vadd.f32 %v2688, %v2867
  %2869 = vmatmul.bf16.gmra.mxu0 %v2740
  %v2870 = vpop.f32.mrf.mxu0
  %v2871 = vadd.f32 %v2688, %v2870
  %v2872 = vpop.f32.mrf.mxu0
  %v2873 = vadd.f32 %v2688, %v2872
  %2874 = vmatmul.bf16.gmra.mxu0 %v2743
  %v2875 = vpop.f32.mrf.mxu0
  %v2876 = vadd.f32 %v2688, %v2875
  %v2877 = vpop.f32.mrf.mxu0
  %v2878 = vadd.f32 %v2688, %v2877
  %2879 = vmatmul.bf16.gmra.mxu0 %v2746
  %v2880 = vpop.f32.mrf.mxu0
  %v2881 = vadd.f32 %v2688, %v2880
  %v2882 = vpop.f32.mrf.mxu0
  %v2883 = vadd.f32 %v2688, %v2882
  %2884 = vmatmul.bf16.gmra.mxu0 %v2749
  %v2885 = vpop.f32.mrf.mxu0
  %v2886 = vadd.f32 %v2688, %v2885
  %v2887 = vpop.f32.mrf.mxu0
  %v2888 = vadd.f32 %v2688, %v2887
  %2889 = vmatmul.bf16.gmra.mxu0 %v2752
  %v2890 = vpop.f32.mrf.mxu0
  %v2891 = vadd.f32 %v2688, %v2890
  %v2892 = vpop.f32.mrf.mxu0
  %v2893 = vadd.f32 %v2688, %v2892
  %2894 = vmatmul.bf16.gmra.mxu0 %v2755
  %v2895 = vpop.f32.mrf.mxu0
  %v2896 = vadd.f32 %v2688, %v2895
  %v2897 = vpop.f32.mrf.mxu0
  %v2898 = vadd.f32 %v2688, %v2897
  %2899 = vmatmul.bf16.gmra.mxu0 %v2758
  %v2900 = vpop.f32.mrf.mxu0
  %v2901 = vadd.f32 %v2688, %v2900
  %v2902 = vpop.f32.mrf.mxu0
  %v2903 = vadd.f32 %v2688, %v2902
  %2904 = vmatmul.bf16.gmra.mxu0 %v2761
  %v2905 = vpop.f32.mrf.mxu0
  %v2906 = vadd.f32 %v2688, %v2905
  %v2907 = vpop.f32.mrf.mxu0
  %v2908 = vadd.f32 %v2688, %v2907
  %2909 = vmatmul.bf16.gmra.mxu0 %v2764
  %v2910 = vpop.f32.mrf.mxu0
  %v2911 = vadd.f32 %v2688, %v2910
  %v2912 = vpop.f32.mrf.mxu0
  %v2913 = vadd.f32 %v2688, %v2912
  %2914 = vmatmul.bf16.gmra.mxu0 %v2767
  %v2915 = vpop.f32.mrf.mxu0
  %v2916 = vadd.f32 %v2688, %v2915
  %v2917 = vpop.f32.mrf.mxu0
  %v2918 = vadd.f32 %v2688, %v2917
  %2919 = vmatmul.bf16.gmra.mxu0 %v2770
  %v2920 = vpop.f32.mrf.mxu0
  %v2921 = vadd.f32 %v2688, %v2920
  %v2922 = vpop.f32.mrf.mxu0
  %v2923 = vadd.f32 %v2688, %v2922
  %2924 = vmatmul.bf16.gmra.mxu0 %v2773
  %v2925 = vpop.f32.mrf.mxu0
  %v2926 = vadd.f32 %v2688, %v2925
  %v2927 = vpop.f32.mrf.mxu0
  %v2928 = vadd.f32 %v2688, %v2927
  %2929 = vmatmul.bf16.gmra.mxu0 %v2776
  %v2930 = vpop.f32.mrf.mxu0
  %v2931 = vadd.f32 %v2688, %v2930
  %v2932 = vpop.f32.mrf.mxu0
  %v2933 = vadd.f32 %v2688, %v2932
  %2934 = vmatmul.bf16.gmra.mxu0 %v2779
  %v2935 = vpop.f32.mrf.mxu0
  %v2936 = vadd.f32 %v2688, %v2935
  %v2937 = vpop.f32.mrf.mxu0
  %v2938 = vadd.f32 %v2688, %v2937
  %2939 = vmatmul.bf16.gmra.mxu0 %v2782
  %v2940 = vpop.f32.mrf.mxu0
  %v2941 = vadd.f32 %v2688, %v2940
  %v2942 = vpop.f32.mrf.mxu0
  %v2943 = vadd.f32 %v2688, %v2942
  %2944 = vmatmul.bf16.gmra.mxu0 %v2785
  %v2945 = vpop.f32.mrf.mxu0
  %v2946 = vadd.f32 %v2688, %v2945
  %v2947 = vpop.f32.mrf.mxu0
  %v2948 = vadd.f32 %v2688, %v2947
  %2949 = vmatmul.bf16.gmra.mxu0 %v2788
  %v2950 = vpop.f32.mrf.mxu0
  %v2951 = vadd.f32 %v2688, %v2950
  %v2952 = vpop.f32.mrf.mxu0
  %v2953 = vadd.f32 %v2688, %v2952
  %2954 = vmatmul.bf16.gmra.mxu0 %v2791
  %v2955 = vpop.f32.mrf.mxu0
  %v2956 = vadd.f32 %v2688, %v2955
  %v2957 = vpop.f32.mrf.mxu0
  %v2958 = vadd.f32 %v2688, %v2957
  %2959 = vmatmul.bf16.gmra.mxu0 %v2794
  %v2960 = vpop.f32.mrf.mxu0
  %v2961 = vadd.f32 %v2688, %v2960
  %v2962 = vpop.f32.mrf.mxu0
  %v2963 = vadd.f32 %v2688, %v2962
  %2964 = vmatmul.bf16.gmra.mxu0 %v2797
  %v2965 = vpop.f32.mrf.mxu0
  %v2966 = vadd.f32 %v2688, %v2965
  %v2967 = vpop.f32.mrf.mxu0
  %v2968 = vadd.f32 %v2688, %v2967
  %2969 = vmatmul.bf16.gmra.mxu0 %v2800
  %v2970 = vpop.f32.mrf.mxu0
  %v2971 = vadd.f32 %v2688, %v2970
  %v2972 = vpop.f32.mrf.mxu0
  %v2973 = vadd.f32 %v2688, %v2972
  %2974 = vdwg.mxu0
  %vm2975 = vcmp.gt.f32.partialorder %v2816, 0.0
  %vm2976 = vcmp.gt.f32.partialorder %v2818, 0.0
  %vm2977 = vcmp.gt.f32.partialorder %v2821, 0.0
  %vm2978 = vcmp.gt.f32.partialorder %v2823, 0.0
  %vm2979 = vcmp.gt.f32.partialorder %v2826, 0.0
  %vm2980 = vcmp.gt.f32.partialorder %v2828, 0.0
  %vm2981 = vcmp.gt.f32.partialorder %v2831, 0.0
  %vm2982 = vcmp.gt.f32.partialorder %v2833, 0.0
  %vm2983 = vcmp.gt.f32.partialorder %v2836, 0.0
  %vm2984 = vcmp.gt.f32.partialorder %v2838, 0.0
  %vm2985 = vcmp.gt.f32.partialorder %v2841, 0.0
  %vm2986 = vcmp.gt.f32.partialorder %v2843, 0.0
  %vm2987 = vcmp.gt.f32.partialorder %v2846, 0.0
  %vm2988 = vcmp.gt.f32.partialorder %v2848, 0.0
  %vm2989 = vcmp.gt.f32.partialorder %v2851, 0.0
  %vm2990 = vcmp.gt.f32.partialorder %v2853, 0.0
  %vm2991 = vcmp.gt.f32.partialorder %v2856, 0.0
  %vm2992 = vcmp.gt.f32.partialorder %v2858, 0.0
  %vm2993 = vcmp.gt.f32.partialorder %v2861, 0.0
  %vm2994 = vcmp.gt.f32.partialorder %v2863, 0.0
  %vm2995 = vcmp.gt.f32.partialorder %v2866, 0.0
  %vm2996 = vcmp.gt.f32.partialorder %v2868, 0.0
  %vm2997 = vcmp.gt.f32.partialorder %v2871, 0.0
  %vm2998 = vcmp.gt.f32.partialorder %v2873, 0.0
  %vm2999 = vcmp.gt.f32.partialorder %v2876, 0.0
  %vm3000 = vcmp.gt.f32.partialorder %v2878, 0.0
  %vm3001 = vcmp.gt.f32.partialorder %v2881, 0.0
  %vm3002 = vcmp.gt.f32.partialorder %v2883, 0.0
  %vm3003 = vcmp.gt.f32.partialorder %v2886, 0.0
  %vm3004 = vcmp.gt.f32.partialorder %v2888, 0.0
  %vm3005 = vcmp.gt.f32.partialorder %v2891, 0.0
  %vm3006 = vcmp.gt.f32.partialorder %v2893, 0.0
  %vm3007 = vcmp.gt.f32.partialorder %v2896, 0.0
  %vm3008 = vcmp.gt.f32.partialorder %v2898, 0.0
  %vm3009 = vcmp.gt.f32.partialorder %v2901, 0.0
  %vm3010 = vcmp.gt.f32.partialorder %v2903, 0.0
  %vm3011 = vcmp.gt.f32.partialorder %v2906, 0.0
  %vm3012 = vcmp.gt.f32.partialorder %v2908, 0.0
  %vm3013 = vcmp.gt.f32.partialorder %v2911, 0.0
  %vm3014 = vcmp.gt.f32.partialorder %v2913, 0.0
  %vm3015 = vcmp.gt.f32.partialorder %v2916, 0.0
  %vm3016 = vcmp.gt.f32.partialorder %v2918, 0.0
  %vm3017 = vcmp.gt.f32.partialorder %v2921, 0.0
  %vm3018 = vcmp.gt.f32.partialorder %v2923, 0.0
  %vm3019 = vcmp.gt.f32.partialorder %v2926, 0.0
  %vm3020 = vcmp.gt.f32.partialorder %v2928, 0.0
  %vm3021 = vcmp.gt.f32.partialorder %v2931, 0.0
  %vm3022 = vcmp.gt.f32.partialorder %v2933, 0.0
  %vm3023 = vcmp.gt.f32.partialorder %v2936, 0.0
  %vm3024 = vcmp.gt.f32.partialorder %v2938, 0.0
  %vm3025 = vcmp.gt.f32.partialorder %v2941, 0.0
  %vm3026 = vcmp.gt.f32.partialorder %v2943, 0.0
  %vm3027 = vcmp.gt.f32.partialorder %v2946, 0.0
  %vm3028 = vcmp.gt.f32.partialorder %v2948, 0.0
  %vm3029 = vcmp.gt.f32.partialorder %v2951, 0.0
  %vm3030 = vcmp.gt.f32.partialorder %v2953, 0.0
  %vm3031 = vcmp.gt.f32.partialorder %v2956, 0.0
  %vm3032 = vcmp.gt.f32.partialorder %v2958, 0.0
  %vm3033 = vcmp.gt.f32.partialorder %v2961, 0.0
  %vm3034 = vcmp.gt.f32.partialorder %v2963, 0.0
  %vm3035 = vcmp.gt.f32.partialorder %v2966, 0.0
  %vm3036 = vcmp.gt.f32.partialorder %v2968, 0.0
  %vm3037 = vcmp.gt.f32.partialorder %v2971, 0.0
  %vm3038 = vcmp.gt.f32.partialorder %v2973, 0.0
  %v3039 = vmul.f32 %v2816, 0.1
  %v3040 = vmul.f32 %v2818, 0.1
  %v3041 = vmul.f32 %v2821, 0.1
  %v3042 = vmul.f32 %v2823, 0.1
  %v3043 = vmul.f32 %v2826, 0.1
  %v3044 = vmul.f32 %v2828, 0.1
  %v3045 = vmul.f32 %v2831, 0.1
  %v3046 = vmul.f32 %v2833, 0.1
  %v3047 = vmul.f32 %v2836, 0.1
  %v3048 = vmul.f32 %v2838, 0.1
  %v3049 = vmul.f32 %v2841, 0.1
  %v3050 = vmul.f32 %v2843, 0.1
  %v3051 = vmul.f32 %v2846, 0.1
  %v3052 = vmul.f32 %v2848, 0.1
  %v3053 = vmul.f32 %v2851, 0.1
  %v3054 = vmul.f32 %v2853, 0.1
  %v3055 = vmul.f32 %v2856, 0.1
  %v3056 = vmul.f32 %v2858, 0.1
  %v3057 = vmul.f32 %v2861, 0.1
  %v3058 = vmul.f32 %v2863, 0.1
  %v3059 = vmul.f32 %v2866, 0.1
  %v3060 = vmul.f32 %v2868, 0.1
  %v3061 = vmul.f32 %v2871, 0.1
  %v3062 = vmul.f32 %v2873, 0.1
  %v3063 = vmul.f32 %v2876, 0.1
  %v3064 = vmul.f32 %v2878, 0.1
  %v3065 = vmul.f32 %v2881, 0.1
  %v3066 = vmul.f32 %v2883, 0.1
  %v3067 = vmul.f32 %v2886, 0.1
  %v3068 = vmul.f32 %v2888, 0.1
  %v3069 = vmul.f32 %v2891, 0.1
  %v3070 = vmul.f32 %v2893, 0.1
  %v3071 = vmul.f32 %v2896, 0.1
  %v3072 = vmul.f32 %v2898, 0.1
  %v3073 = vmul.f32 %v2901, 0.1
  %v3074 = vmul.f32 %v2903, 0.1
  %v3075 = vmul.f32 %v2906, 0.1
  %v3076 = vmul.f32 %v2908, 0.1
  %v3077 = vmul.f32 %v2911, 0.1
  %v3078 = vmul.f32 %v2913, 0.1
  %v3079 = vmul.f32 %v2916, 0.1
  %v3080 = vmul.f32 %v2918, 0.1
  %v3081 = vmul.f32 %v2921, 0.1
  %v3082 = vmul.f32 %v2923, 0.1
  %v3083 = vmul.f32 %v2926, 0.1
  %v3084 = vmul.f32 %v2928, 0.1
  %v3085 = vmul.f32 %v2931, 0.1
  %v3086 = vmul.f32 %v2933, 0.1
  %v3087 = vmul.f32 %v2936, 0.1
  %v3088 = vmul.f32 %v2938, 0.1
  %v3089 = vmul.f32 %v2941, 0.1
  %v3090 = vmul.f32 %v2943, 0.1
  %v3091 = vmul.f32 %v2946, 0.1
  %v3092 = vmul.f32 %v2948, 0.1
  %v3093 = vmul.f32 %v2951, 0.1
  %v3094 = vmul.f32 %v2953, 0.1
  %v3095 = vmul.f32 %v2956, 0.1
  %v3096 = vmul.f32 %v2958, 0.1
  %v3097 = vmul.f32 %v2961, 0.1
  %v3098 = vmul.f32 %v2963, 0.1
  %v3099 = vmul.f32 %v2966, 0.1
  %v3100 = vmul.f32 %v2968, 0.1
  %v3101 = vmul.f32 %v2971, 0.1
  %v3102 = vmul.f32 %v2973, 0.1
  %v3103 = vsel %vm2975, %v2816, %v3039
  %v3104 = vsel %vm2976, %v2818, %v3040
  %v3105 = vsel %vm2977, %v2821, %v3041
  %v3106 = vsel %vm2978, %v2823, %v3042
  %v3107 = vsel %vm2979, %v2826, %v3043
  %v3108 = vsel %vm2980, %v2828, %v3044
  %v3109 = vsel %vm2981, %v2831, %v3045
  %v3110 = vsel %vm2982, %v2833, %v3046
  %v3111 = vsel %vm2983, %v2836, %v3047
  %v3112 = vsel %vm2984, %v2838, %v3048
  %v3113 = vsel %vm2985, %v2841, %v3049
  %v3114 = vsel %vm2986, %v2843, %v3050
  %v3115 = vsel %vm2987, %v2846, %v3051
  %v3116 = vsel %vm2988, %v2848, %v3052
  %v3117 = vsel %vm2989, %v2851, %v3053
  %v3118 = vsel %vm2990, %v2853, %v3054
  %v3119 = vsel %vm2991, %v2856, %v3055
  %v3120 = vsel %vm2992, %v2858, %v3056
  %v3121 = vsel %vm2993, %v2861, %v3057
  %v3122 = vsel %vm2994, %v2863, %v3058
  %v3123 = vsel %vm2995, %v2866, %v3059
  %v3124 = vsel %vm2996, %v2868, %v3060
  %v3125 = vsel %vm2997, %v2871, %v3061
  %v3126 = vsel %vm2998, %v2873, %v3062
  %v3127 = vsel %vm2999, %v2876, %v3063
  %v3128 = vsel %vm3000, %v2878, %v3064
  %v3129 = vsel %vm3001, %v2881, %v3065
  %v3130 = vsel %vm3002, %v2883, %v3066
  %v3131 = vsel %vm3003, %v2886, %v3067
  %v3132 = vsel %vm3004, %v2888, %v3068
  %v3133 = vsel %vm3005, %v2891, %v3069
  %v3134 = vsel %vm3006, %v2893, %v3070
  %v3135 = vsel %vm3007, %v2896, %v3071
  %v3136 = vsel %vm3008, %v2898, %v3072
  %v3137 = vsel %vm3009, %v2901, %v3073
  %v3138 = vsel %vm3010, %v2903, %v3074
  %v3139 = vsel %vm3011, %v2906, %v3075
  %v3140 = vsel %vm3012, %v2908, %v3076
  %v3141 = vsel %vm3013, %v2911, %v3077
  %v3142 = vsel %vm3014, %v2913, %v3078
  %v3143 = vsel %vm3015, %v2916, %v3079
  %v3144 = vsel %vm3016, %v2918, %v3080
  %v3145 = vsel %vm3017, %v2921, %v3081
  %v3146 = vsel %vm3018, %v2923, %v3082
  %v3147 = vsel %vm3019, %v2926, %v3083
  %v3148 = vsel %vm3020, %v2928, %v3084
  %v3149 = vsel %vm3021, %v2931, %v3085
  %v3150 = vsel %vm3022, %v2933, %v3086
  %v3151 = vsel %vm3023, %v2936, %v3087
  %v3152 = vsel %vm3024, %v2938, %v3088
  %v3153 = vsel %vm3025, %v2941, %v3089
  %v3154 = vsel %vm3026, %v2943, %v3090
  %v3155 = vsel %vm3027, %v2946, %v3091
  %v3156 = vsel %vm3028, %v2948, %v3092
  %v3157 = vsel %vm3029, %v2951, %v3093
  %v3158 = vsel %vm3030, %v2953, %v3094
  %v3159 = vsel %vm3031, %v2956, %v3095
  %v3160 = vsel %vm3032, %v2958, %v3096
  %v3161 = vsel %vm3033, %v2961, %v3097
  %v3162 = vsel %vm3034, %v2963, %v3098
  %v3163 = vsel %vm3035, %v2966, %v3099
  %v3164 = vsel %vm3036, %v2968, %v3100
  %v3165 = vsel %vm3037, %v2971, %v3101
  %v3166 = vsel %vm3038, %v2973, %v3102
  %3167 = vst [vmem:[%s3] sm:$0xff] %v3103
  %3168 = vst [vmem:[%s3 + $0x8] sm:$0xff] %v3104
  %3169 = vst [vmem:[%s3 + $0x10] sm:$0xff] %v3105
  %3170 = vst [vmem:[%s3 + $0x18] sm:$0xff] %v3106
  %3171 = vst [vmem:[%s3 + $0x20] sm:$0xff] %v3107
  %3172 = vst [vmem:[%s3 + $0x28] sm:$0xff] %v3108
  %3173 = vst [vmem:[%s3 + $0x30] sm:$0xff] %v3109
  %3174 = vst [vmem:[%s3 + $0x38] sm:$0xff] %v3110
  %3175 = vst [vmem:[%s3 + $0x40] sm:$0xff] %v3111
  %3176 = vst [vmem:[%s3 + $0x48] sm:$0xff] %v3112
  %3177 = vst [vmem:[%s3 + $0x50] sm:$0xff] %v3113
  %3178 = vst [vmem:[%s3 + $0x58] sm:$0xff] %v3114
  %3179 = vst [vmem:[%s3 + $0x60] sm:$0xff] %v3115
  %3180 = vst [vmem:[%s3 + $0x68] sm:$0xff] %v3116
  %3181 = vst [vmem:[%s3 + $0x70] sm:$0xff] %v3117
  %3182 = vst [vmem:[%s3 + $0x78] sm:$0xff] %v3118
  %3183 = vst [vmem:[%s3 + $0x80] sm:$0xff] %v3119
  %3184 = vst [vmem:[%s3 + $0x88] sm:$0xff] %v3120
  %3185 = vst [vmem:[%s3 + $0x90] sm:$0xff] %v3121
  %3186 = vst [vmem:[%s3 + $0x98] sm:$0xff] %v3122
  %3187 = vst [vmem:[%s3 + $0xa0] sm:$0xff] %v3123
  %3188 = vst [vmem:[%s3 + $0xa8] sm:$0xff] %v3124
  %3189 = vst [vmem:[%s3 + $0xb0] sm:$0xff] %v3125
  %3190 = vst [vmem:[%s3 + $0xb8] sm:$0xff] %v3126
  %3191 = vst [vmem:[%s3 + $0xc0] sm:$0xff] %v3127
  %3192 = vst [vmem:[%s3 + $0xc8] sm:$0xff] %v3128
  %3193 = vst [vmem:[%s3 + $0xd0] sm:$0xff] %v3129
  %3194 = vst [vmem:[%s3 + $0xd8] sm:$0xff] %v3130
  %3195 = vst [vmem:[%s3 + $0xe0] sm:$0xff] %v3131
  %3196 = vst [vmem:[%s3 + $0xe8] sm:$0xff] %v3132
  %3197 = vst [vmem:[%s3 + $0xf0] sm:$0xff] %v3133
  %3198 = vst [vmem:[%s3 + $0xf8] sm:$0xff] %v3134
  %3199 = vst [vmem:[%s3 + $0x100] sm:$0xff] %v3135
  %3200 = vst [vmem:[%s3 + $0x108] sm:$0xff] %v3136
  %3201 = vst [vmem:[%s3 + $0x110] sm:$0xff] %v3137
  %3202 = vst [vmem:[%s3 + $0x118] sm:$0xff] %v3138
  %3203 = vst [vmem:[%s3 + $0x120] sm:$0xff] %v3139
  %3204 = vst [vmem:[%s3 + $0x128] sm:$0xff] %v3140
  %3205 = vst [vmem:[%s3 + $0x130] sm:$0xff] %v3141
  %3206 = vst [vmem:[%s3 + $0x138] sm:$0xff] %v3142
  %3207 = vst [vmem:[%s3 + $0x140] sm:$0xff] %v3143
  %3208 = vst [vmem:[%s3 + $0x148] sm:$0xff] %v3144
  %3209 = vst [vmem:[%s3 + $0x150] sm:$0xff] %v3145
  %3210 = vst [vmem:[%s3 + $0x158] sm:$0xff] %v3146
  %3211 = vst [vmem:[%s3 + $0x160] sm:$0xff] %v3147
  %3212 = vst [vmem:[%s3 + $0x168] sm:$0xff] %v3148
  %3213 = vst [vmem:[%s3 + $0x170] sm:$0xff] %v3149
  %3214 = vst [vmem:[%s3 + $0x178] sm:$0xff] %v3150
  %3215 = vst [vmem:[%s3 + $0x180] sm:$0xff] %v3151
  %3216 = vst [vmem:[%s3 + $0x188] sm:$0xff] %v3152
  %3217 = vst [vmem:[%s3 + $0x190] sm:$0xff] %v3153
  %3218 = vst [vmem:[%s3 + $0x198] sm:$0xff] %v3154
  %3219 = vst [vmem:[%s3 + $0x1a0] sm:$0xff] %v3155
  %3220 = vst [vmem:[%s3 + $0x1a8] sm:$0xff] %v3156
  %3221 = vst [vmem:[%s3 + $0x1b0] sm:$0xff] %v3157
  %3222 = vst [vmem:[%s3 + $0x1b8] sm:$0xff] %v3158
  %3223 = vst [vmem:[%s3 + $0x1c0] sm:$0xff] %v3159
  %3224 = vst [vmem:[%s3 + $0x1c8] sm:$0xff] %v3160
  %3225 = vst [vmem:[%s3 + $0x1d0] sm:$0xff] %v3161
  %3226 = vst [vmem:[%s3 + $0x1d8] sm:$0xff] %v3162
  %3227 = vst [vmem:[%s3 + $0x1e0] sm:$0xff] %v3163
  %3228 = vst [vmem:[%s3 + $0x1e8] sm:$0xff] %v3164
  %3229 = vst [vmem:[%s3 + $0x1f0] sm:$0xff] %v3165
  %3230 = vst [vmem:[%s3 + $0x1f8] sm:$0xff] %v3166
  // Predicated region
  $region14: #{darknet_forward.9} parent=0 // pred_check
    _
  $region15: #{darknet_forward.9} parent=0 // pred_check_branch
    %3232 = sbr.rel (0) target = $region17
  $region16: #{darknet_forward.9} parent=0 // pred_region
    _
  $region17: #{darknet_forward.9} parent=0 // pred_fallthru
    _
  // Predicated region
  $region18: #{darknet_forward.9} parent=0 // pred_check
    _
  $region19: #{darknet_forward.9} parent=0 // pred_check_branch
    %3234 = sbr.rel (0) target = $region21
  $region20: #{darknet_forward.9} parent=0 // pred_region
    _
  $region21: #{darknet_forward.9} parent=0 // pred_fallthru
    _

// kernel: darknet_forward.14
$region0: #{darknet_forward.14}
  #allocation0 [shape = 'u32[]', space=smem, size = 0x4, offset = 0x4, fixed_abs, tag = 'smem constant byte address 0x4 - core index']
  #allocation1 [shape = 'u32[72,128]{1,0:T(1,128)}', space=vmem, size = 0x9000, scoped, tag = 'internal scratch']
  %s0 = inlined_call_operand.vmem [shape: f32[2,5,9,16], index: 0, kind: input, shape index: {}]
  %s1 = inlined_call_operand.vmem [shape: f32[2,5,9,16], index: 1, kind: input, shape index: {}]
  %s2 = inlined_call_operand.vmem [shape: f32[2,5,9,16], index: 2, kind: input, shape index: {}]
  %s3 = inlined_call_operand.vmem [shape: f32[2,5,9,16], index: 3, kind: input, shape index: {}]
  %s4 = inlined_call_operand.vmem [shape: bf16[144,128], index: 4, kind: input, shape index: {}]
  %s5 = inlined_call_operand.vmem [shape: f32[1,128], index: 5, kind: input, shape index: {}]
  %s6 = inlined_call_operand.vmem [shape: f32[64,128], index: 6, kind: output, shape index: {}]
  %s7 = sld [smem:[#allocation0]]
  $region34: #{darknet_forward.14} parent=0
    _
  %s9 = ssub.s32 1, %s7
  %s10 = scalar_select 0, %s9, %s7
  // Predicated region
  $region2: #{darknet_forward.14} parent=0 // pred_check
    _
  $region3: #{darknet_forward.14} parent=0 // pred_check_branch
    %12 = sbr.rel (0) target = $region5
  $region4: #{darknet_forward.14} parent=0 // pred_region
    _
  $region5: #{darknet_forward.14} parent=0 // pred_fallthru
    _
  // Predicated region
  $region6: #{darknet_forward.14} parent=0 // pred_check
    _
  $region7: #{darknet_forward.14} parent=0 // pred_check_branch
    %14 = sbr.rel (0) target = $region9
  $region8: #{darknet_forward.14} parent=0 // pred_region
    _
  $region9: #{darknet_forward.14} parent=0 // pred_fallthru
    _
  // Predicated region
  $region10: #{darknet_forward.14} parent=0 // pred_check
    _
  $region11: #{darknet_forward.14} parent=0 // pred_check_branch
    %16 = sbr.rel (0) target = $region13
  $region12: #{darknet_forward.14} parent=0 // pred_region
    _
  $region13: #{darknet_forward.14} parent=0 // pred_fallthru
    _
  // Predicated region
  $region14: #{darknet_forward.14} parent=0 // pred_check
    _
  $region15: #{darknet_forward.14} parent=0 // pred_check_branch
    %18 = sbr.rel (0) target = $region17
  $region16: #{darknet_forward.14} parent=0 // pred_region
    _
  $region17: #{darknet_forward.14} parent=0 // pred_fallthru
    _
  // Predicated region
  $region18: #{darknet_forward.14} parent=0 // pred_check
    _
  $region19: #{darknet_forward.14} parent=0 // pred_check_branch
    %20 = sbr.rel (0) target = $region21
  $region20: #{darknet_forward.14} parent=0 // pred_region
    _
  $region21: #{darknet_forward.14} parent=0 // pred_fallthru
    _
  // Predicated region
  $region22: #{darknet_forward.14} parent=0 // pred_check
    _
  $region23: #{darknet_forward.14} parent=0 // pred_check_branch
    %22 = sbr.rel (0) target = $region25
  $region24: #{darknet_forward.14} parent=0 // pred_region
    _
  $region25: #{darknet_forward.14} parent=0 // pred_fallthru
    _
  %v24 = vld [vmem:[%s0] sm:$0xff]
  %v25 = vld [vmem:[%s0 + $0x8] sm:$0x1]
  %v26 = vld [vmem:[%s0 + $0x10] sm:$0xff]
  %v27 = vld [vmem:[%s0 + $0x18] sm:$0x1]
  %v28 = vld [vmem:[%s0 + $0x20] sm:$0xff]
  %v29 = vld [vmem:[%s0 + $0x28] sm:$0x1]
  %v30 = vld [vmem:[%s0 + $0x30] sm:$0xff]
  %v31 = vld [vmem:[%s0 + $0x38] sm:$0x1]
  %v32 = vld [vmem:[%s0 + $0x40] sm:$0xff]
  %v33 = vld [vmem:[%s0 + $0x48] sm:$0x1]
  %v34 = vld [vmem:[%s0 + $0x50] sm:$0xff]
  %v35 = vld [vmem:[%s0 + $0x58] sm:$0x1]
  %v36 = vld [vmem:[%s0 + $0x60] sm:$0xff]
  %v37 = vld [vmem:[%s0 + $0x68] sm:$0x1]
  %v38 = vld [vmem:[%s0 + $0x70] sm:$0xff]
  %v39 = vld [vmem:[%s0 + $0x78] sm:$0x1]
  %v40 = vld [vmem:[%s0 + $0x80] sm:$0xff]
  %v41 = vld [vmem:[%s0 + $0x88] sm:$0x1]
  %v42 = vld [vmem:[%s0 + $0x90] sm:$0xff]
  %v43 = vld [vmem:[%s0 + $0x98] sm:$0x1]
  %v44 = vld [vmem:[%s1] sm:$0xff]
  %v45 = vld [vmem:[%s1 + $0x10] sm:$0xff]
  %v46 = vld [vmem:[%s1 + $0x20] sm:$0xff]
  %v47 = vld [vmem:[%s1 + $0x30] sm:$0xff]
  %v48 = vld [vmem:[%s1 + $0x40] sm:$0xff]
  %v49 = vld [vmem:[%s1 + $0x50] sm:$0xff]
  %v50 = vld [vmem:[%s1 + $0x60] sm:$0xff]
  %v51 = vld [vmem:[%s1 + $0x70] sm:$0xff]
  %v52 = vld [vmem:[%s1 + $0x80] sm:$0xff]
  %v53 = vld [vmem:[%s1 + $0x90] sm:$0xff]
  %v54 = vld [vmem:[%s2] sm:$0xff]
  %v55 = vld [vmem:[%s2 + $0x8] sm:$0x1]
  %v56 = vld [vmem:[%s2 + $0x10] sm:$0xff]
  %v57 = vld [vmem:[%s2 + $0x18] sm:$0x1]
  %v58 = vld [vmem:[%s2 + $0x20] sm:$0xff]
  %v59 = vld [vmem:[%s2 + $0x28] sm:$0x1]
  %v60 = vld [vmem:[%s2 + $0x30] sm:$0xff]
  %v61 = vld [vmem:[%s2 + $0x38] sm:$0x1]
  %v62 = vld [vmem:[%s2 + $0x50] sm:$0xff]
  %v63 = vld [vmem:[%s2 + $0x58] sm:$0x1]
  %v64 = vld [vmem:[%s2 + $0x60] sm:$0xff]
  %v65 = vld [vmem:[%s2 + $0x68] sm:$0x1]
  %v66 = vld [vmem:[%s2 + $0x70] sm:$0xff]
  %v67 = vld [vmem:[%s2 + $0x78] sm:$0x1]
  %v68 = vld [vmem:[%s2 + $0x80] sm:$0xff]
  %v69 = vld [vmem:[%s2 + $0x88] sm:$0x1]
  %v70 = vld [vmem:[%s3] sm:$0xff]
  %v71 = vld [vmem:[%s3 + $0x10] sm:$0xff]
  %v72 = vld [vmem:[%s3 + $0x20] sm:$0xff]
  %v73 = vld [vmem:[%s3 + $0x30] sm:$0xff]
  %v74 = vld [vmem:[%s3 + $0x50] sm:$0xff]
  %v75 = vld [vmem:[%s3 + $0x60] sm:$0xff]
  %v76 = vld [vmem:[%s3 + $0x70] sm:$0xff]
  %v77 = vld [vmem:[%s3 + $0x80] sm:$0xff]
  %86 = vrot.lane.b32.xlu0 %v44, 16
  %v87 = vpop.permute.xlu0 %86
  %88 = vrot.lane.b32.xlu0 %v45, 16
  %v89 = vpop.permute.xlu0 %88
  %90 = vrot.lane.b32.xlu0 %v46, 16
  %v91 = vpop.permute.xlu0 %90
  %92 = vrot.lane.b32.xlu0 %v47, 16
  %v93 = vpop.permute.xlu0 %92
  %94 = vrot.lane.b32.xlu0 %v49, 16
  %v95 = vpop.permute.xlu0 %94
  %96 = vrot.lane.b32.xlu0 %v50, 16
  %v97 = vpop.permute.xlu0 %96
  %98 = vrot.lane.b32.xlu0 %v51, 16
  %v99 = vpop.permute.xlu0 %98
  %100 = vrot.lane.b32.xlu0 %v52, 16
  %v101 = vpop.permute.xlu0 %100
  %vm126 = vcmask 1046528
  %v127 = vrot.slane %v24, 1
  %v128 = vrot.slane %v25, 1
  %v129 = vsel %vm126, %v127, %v128
  %v130 = vrot.slane %v26, 1
  %v131 = vrot.slane %v27, 1
  %v132 = vsel %vm126, %v130, %v131
  %v133 = vrot.slane %v28, 1
  %v134 = vrot.slane %v29, 1
  %v135 = vsel %vm126, %v133, %v134
  %v136 = vrot.slane %v30, 1
  %v137 = vrot.slane %v31, 1
  %v138 = vsel %vm126, %v136, %v137
  %v139 = vrot.slane %v34, 1
  %v140 = vrot.slane %v35, 1
  %v141 = vsel %vm126, %v139, %v140
  %v142 = vrot.slane %v36, 1
  %v143 = vrot.slane %v37, 1
  %v144 = vsel %vm126, %v142, %v143
  %v145 = vrot.slane %v38, 1
  %v146 = vrot.slane %v39, 1
  %v147 = vsel %vm126, %v145, %v146
  %v148 = vrot.slane %v40, 1
  %v149 = vrot.slane %v41, 1
  %v150 = vsel %vm126, %v148, %v149
  %151 = vrot.lane.b32.xlu0 %v129, 32
  %v152 = vpop.permute.xlu0 %151
  %153 = vrot.lane.b32.xlu0 %v132, 32
  %v154 = vpop.permute.xlu0 %153
  %155 = vrot.lane.b32.xlu0 %v135, 32
  %v156 = vpop.permute.xlu0 %155
  %157 = vrot.lane.b32.xlu0 %v138, 32
  %v158 = vpop.permute.xlu0 %157
  %159 = vrot.lane.b32.xlu0 %v141, 32
  %v160 = vpop.permute.xlu0 %159
  %161 = vrot.lane.b32.xlu0 %v144, 32
  %v162 = vpop.permute.xlu0 %161
  %163 = vrot.lane.b32.xlu0 %v147, 32
  %v164 = vpop.permute.xlu0 %163
  %165 = vrot.lane.b32.xlu0 %v150, 32
  %v166 = vpop.permute.xlu0 %165
  %183 = vrot.lane.b32.xlu0 %v54, 48
  %v184 = vpop.permute.xlu0 %183
  %185 = vrot.lane.b32.xlu0 %v56, 48
  %v186 = vpop.permute.xlu0 %185
  %187 = vrot.lane.b32.xlu0 %v58, 48
  %v188 = vpop.permute.xlu0 %187
  %189 = vrot.lane.b32.xlu0 %v60, 48
  %v190 = vpop.permute.xlu0 %189
  %191 = vrot.lane.b32.xlu0 %v62, 48
  %v192 = vpop.permute.xlu0 %191
  %193 = vrot.lane.b32.xlu0 %v64, 48
  %v194 = vpop.permute.xlu0 %193
  %195 = vrot.lane.b32.xlu0 %v66, 48
  %v196 = vpop.permute.xlu0 %195
  %197 = vrot.lane.b32.xlu0 %v68, 48
  %v198 = vpop.permute.xlu0 %197
  %215 = vrot.lane.b32.xlu0 %v70, 64
  %v216 = vpop.permute.xlu0 %215
  %217 = vrot.lane.b32.xlu0 %v71, 64
  %v218 = vpop.permute.xlu0 %217
  %219 = vrot.lane.b32.xlu0 %v72, 64
  %v220 = vpop.permute.xlu0 %219
  %221 = vrot.lane.b32.xlu0 %v73, 64
  %v222 = vpop.permute.xlu0 %221
  %223 = vrot.lane.b32.xlu0 %v74, 64
  %v224 = vpop.permute.xlu0 %223
  %225 = vrot.lane.b32.xlu0 %v75, 64
  %v226 = vpop.permute.xlu0 %225
  %227 = vrot.lane.b32.xlu0 %v76, 64
  %v228 = vpop.permute.xlu0 %227
  %229 = vrot.lane.b32.xlu0 %v77, 64
  %v230 = vpop.permute.xlu0 %229
  %v247 = vrot.slane %v54, 1
  %v248 = vrot.slane %v55, 1
  %v249 = vsel %vm126, %v247, %v248
  %v250 = vrot.slane %v56, 1
  %v251 = vrot.slane %v57, 1
  %v252 = vsel %vm126, %v250, %v251
  %v253 = vrot.slane %v58, 1
  %v254 = vrot.slane %v59, 1
  %v255 = vsel %vm126, %v253, %v254
  %v256 = vrot.slane %v60, 1
  %v257 = vrot.slane %v61, 1
  %v258 = vsel %vm126, %v256, %v257
  %v259 = vrot.slane %v62, 1
  %v260 = vrot.slane %v63, 1
  %v261 = vsel %vm126, %v259, %v260
  %v262 = vrot.slane %v64, 1
  %v263 = vrot.slane %v65, 1
  %v264 = vsel %vm126, %v262, %v263
  %v265 = vrot.slane %v66, 1
  %v266 = vrot.slane %v67, 1
  %v267 = vsel %vm126, %v265, %v266
  %v268 = vrot.slane %v68, 1
  %v269 = vrot.slane %v69, 1
  %v270 = vsel %vm126, %v268, %v269
  %271 = vrot.lane.b32.xlu0 %v249, 80
  %v272 = vpop.permute.xlu0 %271
  %273 = vrot.lane.b32.xlu0 %v252, 80
  %v274 = vpop.permute.xlu0 %273
  %275 = vrot.lane.b32.xlu0 %v255, 80
  %v276 = vpop.permute.xlu0 %275
  %277 = vrot.lane.b32.xlu0 %v258, 80
  %v278 = vpop.permute.xlu0 %277
  %279 = vrot.lane.b32.xlu0 %v261, 80
  %v280 = vpop.permute.xlu0 %279
  %281 = vrot.lane.b32.xlu0 %v264, 80
  %v282 = vpop.permute.xlu0 %281
  %283 = vrot.lane.b32.xlu0 %v267, 80
  %v284 = vpop.permute.xlu0 %283
  %285 = vrot.lane.b32.xlu0 %v270, 80
  %v286 = vpop.permute.xlu0 %285
  %297 = vrot.lane.b32.xlu0 %v26, 96
  %v298 = vpop.permute.xlu0 %297
  %299 = vrot.lane.b32.xlu0 %v28, 96
  %v300 = vpop.permute.xlu0 %299
  %301 = vrot.lane.b32.xlu0 %v30, 96
  %v302 = vpop.permute.xlu0 %301
  %303 = vrot.lane.b32.xlu0 %v32, 96
  %v304 = vpop.permute.xlu0 %303
  %305 = vrot.lane.b32.xlu0 %v36, 96
  %v306 = vpop.permute.xlu0 %305
  %307 = vrot.lane.b32.xlu0 %v38, 96
  %v308 = vpop.permute.xlu0 %307
  %309 = vrot.lane.b32.xlu0 %v40, 96
  %v310 = vpop.permute.xlu0 %309
  %311 = vrot.lane.b32.xlu0 %v42, 96
  %v312 = vpop.permute.xlu0 %311
  %323 = vrot.lane.b32.xlu0 %v45, 112
  %v324 = vpop.permute.xlu0 %323
  %325 = vrot.lane.b32.xlu0 %v46, 112
  %v326 = vpop.permute.xlu0 %325
  %327 = vrot.lane.b32.xlu0 %v47, 112
  %v328 = vpop.permute.xlu0 %327
  %329 = vrot.lane.b32.xlu0 %v48, 112
  %v330 = vpop.permute.xlu0 %329
  %331 = vrot.lane.b32.xlu0 %v50, 112
  %v332 = vpop.permute.xlu0 %331
  %333 = vrot.lane.b32.xlu0 %v51, 112
  %v334 = vpop.permute.xlu0 %333
  %335 = vrot.lane.b32.xlu0 %v52, 112
  %v336 = vpop.permute.xlu0 %335
  %337 = vrot.lane.b32.xlu0 %v53, 112
  %v338 = vpop.permute.xlu0 %337
  %v349 = vrot.slane %v32, 1
  %v350 = vrot.slane %v33, 1
  %v351 = vsel %vm126, %v349, %v350
  %v352 = vrot.slane %v42, 1
  %v353 = vrot.slane %v43, 1
  %v354 = vsel %vm126, %v352, %v353
  %vm363 = vcmask 130048
  %v364 = vsel %vm363, %v24, %v87
  %v365 = vsel %vm363, %v26, %v89
  %v366 = vsel %vm363, %v28, %v91
  %v367 = vsel %vm363, %v30, %v93
  %v368 = vsel %vm363, %v34, %v95
  %v369 = vsel %vm363, %v36, %v97
  %v370 = vsel %vm363, %v38, %v99
  %v371 = vsel %vm363, %v40, %v101
  %vm372 = vcmask 261120
  %v373 = vsel %vm372, %v364, %v152
  %v374 = vsel %vm372, %v365, %v154
  %v375 = vsel %vm372, %v366, %v156
  %v376 = vsel %vm372, %v367, %v158
  %v377 = vsel %vm372, %v368, %v160
  %v378 = vsel %vm372, %v369, %v162
  %v379 = vsel %vm372, %v370, %v164
  %v380 = vsel %vm372, %v371, %v166
  %vm381 = vcmask 392192
  %v382 = vsel %vm381, %v373, %v184
  %v383 = vsel %vm381, %v374, %v186
  %v384 = vsel %vm381, %v375, %v188
  %v385 = vsel %vm381, %v376, %v190
  %v386 = vsel %vm381, %v377, %v192
  %v387 = vsel %vm381, %v378, %v194
  %v388 = vsel %vm381, %v379, %v196
  %v389 = vsel %vm381, %v380, %v198
  %vm390 = vcmask 523264
  %v391 = vsel %vm390, %v382, %v216
  %v392 = vsel %vm390, %v383, %v218
  %v393 = vsel %vm390, %v384, %v220
  %v394 = vsel %vm390, %v385, %v222
  %v395 = vsel %vm390, %v386, %v224
  %v396 = vsel %vm390, %v387, %v226
  %v397 = vsel %vm390, %v388, %v228
  %v398 = vsel %vm390, %v389, %v230
  %vm399 = vcmask 654336
  %v400 = vsel %vm399, %v391, %v272
  %v401 = vsel %vm399, %v392, %v274
  %v402 = vsel %vm399, %v393, %v276
  %v403 = vsel %vm399, %v394, %v278
  %v404 = vsel %vm399, %v395, %v280
  %v405 = vsel %vm399, %v396, %v282
  %v406 = vsel %vm399, %v397, %v284
  %v407 = vsel %vm399, %v398, %v286
  %vm408 = vcmask 785408
  %v409 = vsel %vm408, %v400, %v298
  %v410 = vsel %vm408, %v401, %v300
  %v411 = vsel %vm408, %v402, %v302
  %v412 = vsel %vm408, %v403, %v304
  %v413 = vsel %vm408, %v404, %v306
  %v414 = vsel %vm408, %v405, %v308
  %v415 = vsel %vm408, %v406, %v310
  %v416 = vsel %vm408, %v407, %v312
  %vm417 = vcmask 916480
  %v418 = vsel %vm417, %v409, %v324
  %v419 = vsel %vm417, %v410, %v326
  %v420 = vsel %vm417, %v411, %v328
  %v421 = vsel %vm417, %v412, %v330
  %v422 = vsel %vm417, %v413, %v332
  %v423 = vsel %vm417, %v414, %v334
  %v424 = vsel %vm417, %v415, %v336
  %v425 = vsel %vm417, %v416, %v338
  %v426 = vpack.c.bf16 %v419, %v418
  %v427 = vpack.c.bf16 %v135, %v132
  %v428 = vpack.c.bf16 %v421, %v420
  %v429 = vpack.c.bf16 %v351, %v138
  %v430 = vpack.c.bf16 %v423, %v422
  %v431 = vpack.c.bf16 %v147, %v144
  %v432 = vpack.c.bf16 %v425, %v424
  %v433 = vpack.c.bf16 %v354, %v150
  %v434 = vld [vmem:[%s4] sm:$0xf]
  %v435 = vld [vmem:[%s4 + $0x4] sm:$0xf]
  %v436 = vld [vmem:[%s4 + $0x8] sm:$0xf]
  %v437 = vld [vmem:[%s4 + $0xc] sm:$0xf]
  %v438 = vld [vmem:[%s4 + $0x10] sm:$0xf]
  %v439 = vld [vmem:[%s4 + $0x14] sm:$0xf]
  %v440 = vld [vmem:[%s4 + $0x18] sm:$0xf]
  %v441 = vld [vmem:[%s4 + $0x1c] sm:$0xf]
  %v442 = vld [vmem:[%s4 + $0x20] sm:$0xf]
  %v443 = vld [vmem:[%s4 + $0x24] sm:$0xf]
  %v444 = vld [vmem:[%s4 + $0x28] sm:$0xf]
  %v445 = vld [vmem:[%s4 + $0x2c] sm:$0xf]
  %v446 = vld [vmem:[%s4 + $0x30] sm:$0xf]
  %v447 = vld [vmem:[%s4 + $0x34] sm:$0xf]
  %v448 = vld [vmem:[%s4 + $0x38] sm:$0xf]
  %v449 = vld [vmem:[%s4 + $0x3c] sm:$0xf]
  %v450 = vld [vmem:[%s4 + $0x40] sm:$0xf]
  %v451 = vld [vmem:[%s4 + $0x44] sm:$0xf]
  %v452 = vld [vmem:[%s5] sm:$0x1]
  %v454 = vperm.slane %v452, 0
  %v474 = vunpack.c.l.b16 %v434
  %v475 = vunpack.c.l.b16 %v435
  %v476 = vunpack.c.l.b16 %v436
  %v477 = vunpack.c.l.b16 %v437
  %v478 = vunpack.c.l.b16 %v438
  %v479 = vunpack.c.l.b16 %v439
  %v480 = vunpack.c.l.b16 %v440
  %v481 = vunpack.c.l.b16 %v441
  %v482 = vunpack.c.l.b16 %v442
  %v483 = vunpack.c.l.b16 %v443
  %v484 = vunpack.c.l.b16 %v444
  %v485 = vunpack.c.l.b16 %v445
  %v486 = vunpack.c.l.b16 %v446
  %v487 = vunpack.c.l.b16 %v447
  %v488 = vunpack.c.l.b16 %v448
  %v489 = vunpack.c.l.b16 %v449
  %v490 = vunpack.c.l.b16 %v450
  %v491 = vunpack.c.l.b16 %v451
  %v492 = vpack.c.b16 %v475, %v474
  %v493 = vpack.c.b16 %v477, %v476
  %v494 = vpack.c.b16 %v479, %v478
  %v495 = vpack.c.b16 %v481, %v480
  %v496 = vpack.c.b16 %v483, %v482
  %v497 = vpack.c.b16 %v485, %v484
  %v498 = vpack.c.b16 %v487, %v486
  %v499 = vpack.c.b16 %v489, %v488
  %v500 = vpack.c.b16 %v491, %v490
  %v511 = vsel %vm363, %v427, 0
  %v514 = vsel %vm363, %v429, 0
  %v517 = vsel %vm363, %v431, 0
  %v520 = vsel %vm363, %v433, 0
  %522 = vmatpush.bf16.msra.mxu0 %v499
  %523 = vmatpush.bf16.msra.mxu0 %v498
  %524 = vmatpush.bf16.msra.mxu0 %v497
  %525 = vmatpush.bf16.msra.mxu0 %v496
  %526 = vmatpush.bf16.msra.mxu0 %v495
  %527 = vmatpush.bf16.msra.mxu0 %v494
  %528 = vmatpush.bf16.msra.mxu0 %v493
  %529 = vmatpush.bf16.msra.mxu0 %v492
  %530 = vmatmul.bf16.gmra.mxu0 %v426
  %v531 = vpop.f32.mrf.mxu0
  %v532 = vadd.f32 %v454, %v531
  %v533 = vpop.f32.mrf.mxu0
  %v534 = vadd.f32 %v454, %v533
  %535 = vmatmul.bf16.gmra.mxu0 %v428
  %v536 = vpop.f32.mrf.mxu0
  %v537 = vadd.f32 %v454, %v536
  %v538 = vpop.f32.mrf.mxu0
  %v539 = vadd.f32 %v454, %v538
  %540 = vmatmul.bf16.gmra.mxu0 %v430
  %v541 = vpop.f32.mrf.mxu0
  %v542 = vadd.f32 %v454, %v541
  %v543 = vpop.f32.mrf.mxu0
  %v544 = vadd.f32 %v454, %v543
  %545 = vmatmul.bf16.gmra.mxu0 %v432
  %v546 = vpop.f32.mrf.mxu0
  %v547 = vadd.f32 %v454, %v546
  %v548 = vpop.f32.mrf.mxu0
  %v549 = vadd.f32 %v454, %v548
  %550 = vdwg.mxu0
  %551 = vmatpush.bf16.msra.mxu0 0
  %552 = vmatpush.bf16.msra.mxu0 0
  %553 = vmatpush.bf16.msra.mxu0 0
  %554 = vmatpush.bf16.msra.mxu0 0
  %555 = vmatpush.bf16.msra.mxu0 0
  %556 = vmatpush.bf16.msra.mxu0 0
  %557 = vmatpush.bf16.msra.mxu0 0
  %558 = vmatpush.bf16.msra.mxu0 %v500
  %559 = vmatmul.bf16.gmra.mxu0 %v511
  %v560 = vpop.f32.mrf.mxu0
  %v561 = vadd.f32 %v532, %v560
  %v562 = vpop.f32.mrf.mxu0
  %v563 = vadd.f32 %v534, %v562
  %564 = vmatmul.bf16.gmra.mxu0 %v514
  %v565 = vpop.f32.mrf.mxu0
  %v566 = vadd.f32 %v537, %v565
  %v567 = vpop.f32.mrf.mxu0
  %v568 = vadd.f32 %v539, %v567
  %569 = vmatmul.bf16.gmra.mxu0 %v517
  %v570 = vpop.f32.mrf.mxu0
  %v571 = vadd.f32 %v542, %v570
  %v572 = vpop.f32.mrf.mxu0
  %v573 = vadd.f32 %v544, %v572
  %574 = vmatmul.bf16.gmra.mxu0 %v520
  %v575 = vpop.f32.mrf.mxu0
  %v576 = vadd.f32 %v547, %v575
  %v577 = vpop.f32.mrf.mxu0
  %v578 = vadd.f32 %v549, %v577
  %579 = vdwg.mxu0
  %vm580 = vcmp.gt.f32.partialorder %v561, 0.0
  %vm581 = vcmp.gt.f32.partialorder %v563, 0.0
  %vm582 = vcmp.gt.f32.partialorder %v566, 0.0
  %vm583 = vcmp.gt.f32.partialorder %v568, 0.0
  %vm584 = vcmp.gt.f32.partialorder %v571, 0.0
  %vm585 = vcmp.gt.f32.partialorder %v573, 0.0
  %vm586 = vcmp.gt.f32.partialorder %v576, 0.0
  %vm587 = vcmp.gt.f32.partialorder %v578, 0.0
  %v588 = vmul.f32 %v561, 0.1
  %v589 = vmul.f32 %v563, 0.1
  %v590 = vmul.f32 %v566, 0.1
  %v591 = vmul.f32 %v568, 0.1
  %v592 = vmul.f32 %v571, 0.1
  %v593 = vmul.f32 %v573, 0.1
  %v594 = vmul.f32 %v576, 0.1
  %v595 = vmul.f32 %v578, 0.1
  %v596 = vsel %vm580, %v561, %v588
  %v597 = vsel %vm581, %v563, %v589
  %v598 = vsel %vm582, %v566, %v590
  %v599 = vsel %vm583, %v568, %v591
  %v600 = vsel %vm584, %v571, %v592
  %v601 = vsel %vm585, %v573, %v593
  %v602 = vsel %vm586, %v576, %v594
  %v603 = vsel %vm587, %v578, %v595
  %604 = vst [vmem:[%s6] sm:$0xff] %v596
  %605 = vst [vmem:[%s6 + $0x8] sm:$0xff] %v597
  %606 = vst [vmem:[%s6 + $0x10] sm:$0xff] %v598
  %607 = vst [vmem:[%s6 + $0x18] sm:$0xff] %v599
  %608 = vst [vmem:[%s6 + $0x20] sm:$0xff] %v600
  %609 = vst [vmem:[%s6 + $0x28] sm:$0xff] %v601
  %610 = vst [vmem:[%s6 + $0x30] sm:$0xff] %v602
  %611 = vst [vmem:[%s6 + $0x38] sm:$0xff] %v603
  // Predicated region
  $region26: #{darknet_forward.14} parent=0 // pred_check
    _
  $region27: #{darknet_forward.14} parent=0 // pred_check_branch
    %613 = sbr.rel (0) target = $region29
  $region28: #{darknet_forward.14} parent=0 // pred_region
    _
  $region29: #{darknet_forward.14} parent=0 // pred_fallthru
    _
  // Predicated region
  $region30: #{darknet_forward.14} parent=0 // pred_check
    _
  $region31: #{darknet_forward.14} parent=0 // pred_check_branch
    %615 = sbr.rel (0) target = $region33
  $region32: #{darknet_forward.14} parent=0 // pred_region
    _
  $region33: #{darknet_forward.14} parent=0 // pred_fallthru
    _

// kernel: darknet_forward.17
$region0: #{darknet_forward.17}
  #allocation0 [shape = 'u32[]', space=smem, size = 0x4, offset = 0x4, fixed_abs, tag = 'smem constant byte address 0x4 - core index']
  #allocation1 [shape = 'u32[72,128]{1,0:T(1,128)}', space=vmem, size = 0x9000, scoped, tag = 'internal scratch']
  %s0 = inlined_call_operand.vmem [shape: f32[2,8,8,16], index: 0, kind: input, shape index: {}]
  %s1 = inlined_call_operand.vmem [shape: bf16[16,128], index: 1, kind: input, shape index: {}]
  %s2 = inlined_call_operand.vmem [shape: f32[1,128], index: 2, kind: input, shape index: {}]
  %s3 = inlined_call_operand.vmem [shape: f32[128,128], index: 3, kind: input, shape index: {}]
  %s4 = inlined_call_operand.vmem [shape: f32[128,128], index: 4, kind: input, shape index: {}]
  %s5 = inlined_call_operand.vmem [shape: s32[128,128], index: 5, kind: input, shape index: {}]
  %s6 = inlined_call_operand.vmem [shape: f32[128,128], index: 6, kind: output, shape index: {}]
  %s7 = sld [smem:[#allocation0]]
  $region34: #{darknet_forward.17} parent=0
    _
  %s9 = ssub.s32 1, %s7
  %s10 = scalar_select 0, %s9, %s7
  // Predicated region
  $region2: #{darknet_forward.17} parent=0 // pred_check
    _
  $region3: #{darknet_forward.17} parent=0 // pred_check_branch
    %12 = sbr.rel (0) target = $region5
  $region4: #{darknet_forward.17} parent=0 // pred_region
    _
  $region5: #{darknet_forward.17} parent=0 // pred_fallthru
    _
  // Predicated region
  $region6: #{darknet_forward.17} parent=0 // pred_check
    _
  $region7: #{darknet_forward.17} parent=0 // pred_check_branch
    %14 = sbr.rel (0) target = $region9
  $region8: #{darknet_forward.17} parent=0 // pred_region
    _
  $region9: #{darknet_forward.17} parent=0 // pred_fallthru
    _
  // Predicated region
  $region10: #{darknet_forward.17} parent=0 // pred_check
    _
  $region11: #{darknet_forward.17} parent=0 // pred_check_branch
    %16 = sbr.rel (0) target = $region13
  $region12: #{darknet_forward.17} parent=0 // pred_region
    _
  $region13: #{darknet_forward.17} parent=0 // pred_fallthru
    _
  // Predicated region
  $region14: #{darknet_forward.17} parent=0 // pred_check
    _
  $region15: #{darknet_forward.17} parent=0 // pred_check_branch
    %18 = sbr.rel (0) target = $region17
  $region16: #{darknet_forward.17} parent=0 // pred_region
    _
  $region17: #{darknet_forward.17} parent=0 // pred_fallthru
    _
  // Predicated region
  $region18: #{darknet_forward.17} parent=0 // pred_check
    _
  $region19: #{darknet_forward.17} parent=0 // pred_check_branch
    %20 = sbr.rel (0) target = $region21
  $region20: #{darknet_forward.17} parent=0 // pred_region
    _
  $region21: #{darknet_forward.17} parent=0 // pred_fallthru
    _
  // Predicated region
  $region22: #{darknet_forward.17} parent=0 // pred_check
    _
  $region23: #{darknet_forward.17} parent=0 // pred_check_branch
    %22 = sbr.rel (0) target = $region25
  $region24: #{darknet_forward.17} parent=0 // pred_region
    _
  $region25: #{darknet_forward.17} parent=0 // pred_fallthru
    _
  %v24 = vld [vmem:[%s0] sm:$0xff]
  %v25 = vld [vmem:[%s0 + $0x8] sm:$0xff]
  %v26 = vld [vmem:[%s0 + $0x10] sm:$0xff]
  %v27 = vld [vmem:[%s0 + $0x18] sm:$0xff]
  %v28 = vld [vmem:[%s0 + $0x20] sm:$0xff]
  %v29 = vld [vmem:[%s0 + $0x28] sm:$0xff]
  %v30 = vld [vmem:[%s0 + $0x30] sm:$0xff]
  %v31 = vld [vmem:[%s0 + $0x38] sm:$0xff]
  %v32 = vld [vmem:[%s0 + $0x40] sm:$0xff]
  %v33 = vld [vmem:[%s0 + $0x48] sm:$0xff]
  %v34 = vld [vmem:[%s0 + $0x50] sm:$0xff]
  %v35 = vld [vmem:[%s0 + $0x58] sm:$0xff]
  %v36 = vld [vmem:[%s0 + $0x60] sm:$0xff]
  %v37 = vld [vmem:[%s0 + $0x68] sm:$0xff]
  %v38 = vld [vmem:[%s0 + $0x70] sm:$0xff]
  %v39 = vld [vmem:[%s0 + $0x78] sm:$0xff]
  %v40 = vpack.c.bf16 %v25, %v24
  %v41 = vpack.c.bf16 %v27, %v26
  %v42 = vpack.c.bf16 %v29, %v28
  %v43 = vpack.c.bf16 %v31, %v30
  %v44 = vpack.c.bf16 %v33, %v32
  %v45 = vpack.c.bf16 %v35, %v34
  %v46 = vpack.c.bf16 %v37, %v36
  %v47 = vpack.c.bf16 %v39, %v38
  %v48 = vld [vmem:[%s1] sm:$0xf]
  %v49 = vld [vmem:[%s1 + $0x4] sm:$0xf]
  %v50 = vld [vmem:[%s2] sm:$0x1]
  %v52 = vperm.slane %v50, 0
  %v56 = vunpack.c.l.b16 %v48
  %v57 = vunpack.c.l.b16 %v49
  %v58 = vpack.c.b16 %v57, %v56
  %vm60 = vcmask 130048
  %v62 = vsel %vm60, %v40, 0
  %v65 = vsel %vm60, %v41, 0
  %v68 = vsel %vm60, %v42, 0
  %v71 = vsel %vm60, %v43, 0
  %v74 = vsel %vm60, %v44, 0
  %v77 = vsel %vm60, %v45, 0
  %v80 = vsel %vm60, %v46, 0
  %v83 = vsel %vm60, %v47, 0
  %85 = vmatpush.bf16.msra.mxu0 0
  %86 = vmatpush.bf16.msra.mxu0 0
  %87 = vmatpush.bf16.msra.mxu0 0
  %88 = vmatpush.bf16.msra.mxu0 0
  %89 = vmatpush.bf16.msra.mxu0 0
  %90 = vmatpush.bf16.msra.mxu0 0
  %91 = vmatpush.bf16.msra.mxu0 0
  %92 = vmatpush.bf16.msra.mxu0 %v58
  %93 = vmatmul.bf16.gmra.mxu0 %v62
  %v94 = vpop.f32.mrf.mxu0
  %v95 = vadd.f32 %v52, %v94
  %v96 = vpop.f32.mrf.mxu0
  %v97 = vadd.f32 %v52, %v96
  %98 = vmatmul.bf16.gmra.mxu0 %v65
  %v99 = vpop.f32.mrf.mxu0
  %v100 = vadd.f32 %v52, %v99
  %v101 = vpop.f32.mrf.mxu0
  %v102 = vadd.f32 %v52, %v101
  %103 = vmatmul.bf16.gmra.mxu0 %v68
  %v104 = vpop.f32.mrf.mxu0
  %v105 = vadd.f32 %v52, %v104
  %v106 = vpop.f32.mrf.mxu0
  %v107 = vadd.f32 %v52, %v106
  %108 = vmatmul.bf16.gmra.mxu0 %v71
  %v109 = vpop.f32.mrf.mxu0
  %v110 = vadd.f32 %v52, %v109
  %v111 = vpop.f32.mrf.mxu0
  %v112 = vadd.f32 %v52, %v111
  %113 = vmatmul.bf16.gmra.mxu0 %v74
  %v114 = vpop.f32.mrf.mxu0
  %v115 = vadd.f32 %v52, %v114
  %v116 = vpop.f32.mrf.mxu0
  %v117 = vadd.f32 %v52, %v116
  %118 = vmatmul.bf16.gmra.mxu0 %v77
  %v119 = vpop.f32.mrf.mxu0
  %v120 = vadd.f32 %v52, %v119
  %v121 = vpop.f32.mrf.mxu0
  %v122 = vadd.f32 %v52, %v121
  %123 = vmatmul.bf16.gmra.mxu0 %v80
  %v124 = vpop.f32.mrf.mxu0
  %v125 = vadd.f32 %v52, %v124
  %v126 = vpop.f32.mrf.mxu0
  %v127 = vadd.f32 %v52, %v126
  %128 = vmatmul.bf16.gmra.mxu0 %v83
  %v129 = vpop.f32.mrf.mxu0
  %v130 = vadd.f32 %v52, %v129
  %v131 = vpop.f32.mrf.mxu0
  %v132 = vadd.f32 %v52, %v131
  %133 = vdwg.mxu0
  %v134 = vld [vmem:[%s5] sm:$0xff]
  %v135 = vld [vmem:[%s5 + $0x8] sm:$0xff]
  %v136 = vld [vmem:[%s5 + $0x10] sm:$0xff]
  %v137 = vld [vmem:[%s5 + $0x18] sm:$0xff]
  %v138 = vld [vmem:[%s5 + $0x20] sm:$0xff]
  %v139 = vld [vmem:[%s5 + $0x28] sm:$0xff]
  %v140 = vld [vmem:[%s5 + $0x30] sm:$0xff]
  %v141 = vld [vmem:[%s5 + $0x38] sm:$0xff]
  %v142 = vld [vmem:[%s5 + $0x40] sm:$0xff]
  %v143 = vld [vmem:[%s5 + $0x48] sm:$0xff]
  %v144 = vld [vmem:[%s5 + $0x50] sm:$0xff]
  %v145 = vld [vmem:[%s5 + $0x58] sm:$0xff]
  %v146 = vld [vmem:[%s5 + $0x60] sm:$0xff]
  %v147 = vld [vmem:[%s5 + $0x68] sm:$0xff]
  %v148 = vld [vmem:[%s5 + $0x70] sm:$0xff]
  %v149 = vld [vmem:[%s5 + $0x78] sm:$0xff]
  %v150 = vxor.u32 %v95, 2147483648
  %v151 = vxor.u32 %v97, 2147483648
  %v152 = vxor.u32 %v100, 2147483648
  %v153 = vxor.u32 %v102, 2147483648
  %v154 = vxor.u32 %v105, 2147483648
  %v155 = vxor.u32 %v107, 2147483648
  %v156 = vxor.u32 %v110, 2147483648
  %v157 = vxor.u32 %v112, 2147483648
  %v158 = vxor.u32 %v115, 2147483648
  %v159 = vxor.u32 %v117, 2147483648
  %v160 = vxor.u32 %v120, 2147483648
  %v161 = vxor.u32 %v122, 2147483648
  %v162 = vxor.u32 %v125, 2147483648
  %v163 = vxor.u32 %v127, 2147483648
  %v164 = vxor.u32 %v130, 2147483648
  %v165 = vxor.u32 %v132, 2147483648
  %v166 = vmul.f32 %v150, 1.442695
  %v167 = vpow.pop %v166
  %v168 = vmul.f32 %v151, 1.442695
  %v169 = vpow.pop %v168
  %v170 = vmul.f32 %v152, 1.442695
  %v171 = vpow.pop %v170
  %v172 = vmul.f32 %v153, 1.442695
  %v173 = vpow.pop %v172
  %v174 = vmul.f32 %v154, 1.442695
  %v175 = vpow.pop %v174
  %v176 = vmul.f32 %v155, 1.442695
  %v177 = vpow.pop %v176
  %v178 = vmul.f32 %v156, 1.442695
  %v179 = vpow.pop %v178
  %v180 = vmul.f32 %v157, 1.442695
  %v181 = vpow.pop %v180
  %v182 = vmul.f32 %v158, 1.442695
  %v183 = vpow.pop %v182
  %v184 = vmul.f32 %v159, 1.442695
  %v185 = vpow.pop %v184
  %v186 = vmul.f32 %v160, 1.442695
  %v187 = vpow.pop %v186
  %v188 = vmul.f32 %v161, 1.442695
  %v189 = vpow.pop %v188
  %v190 = vmul.f32 %v162, 1.442695
  %v191 = vpow.pop %v190
  %v192 = vmul.f32 %v163, 1.442695
  %v193 = vpow.pop %v192
  %v194 = vmul.f32 %v164, 1.442695
  %v195 = vpow.pop %v194
  %v196 = vmul.f32 %v165, 1.442695
  %v197 = vpow.pop %v196
  %v198 = vadd.f32 %v167, 1.0
  %v199 = vadd.f32 %v169, 1.0
  %v200 = vadd.f32 %v171, 1.0
  %v201 = vadd.f32 %v173, 1.0
  %v202 = vadd.f32 %v175, 1.0
  %v203 = vadd.f32 %v177, 1.0
  %v204 = vadd.f32 %v179, 1.0
  %v205 = vadd.f32 %v181, 1.0
  %v206 = vadd.f32 %v183, 1.0
  %v207 = vadd.f32 %v185, 1.0
  %v208 = vadd.f32 %v187, 1.0
  %v209 = vadd.f32 %v189, 1.0
  %v210 = vadd.f32 %v191, 1.0
  %v211 = vadd.f32 %v193, 1.0
  %v212 = vadd.f32 %v195, 1.0
  %v213 = vadd.f32 %v197, 1.0
  %v214 = vrcp.pop %v198
  %v215 = vmul.f32 %v198, %v214
  %v216 = vsub.f32 1.0, %v215
  %v217 = vmul.f32 %v214, %v216
  %v218 = vadd.f32 %v214, %v217
  %vm219 = vweird.f32 %v198
  %vm220 = vweird.f32 %v214
  %vm221 = vmor %vm219, %vm220
  %v222 = vsel %vm221, %v214, %v218
  %v223 = vand.u32 2147483647, %v198
  %vm224 = vcmp.eq.f32.partialorder %v223, 8.507059e+37
  %v225 = vand.u32 %v198, 2147483648
  %v226 = vor.u32 1.1754944e-38, %v225
  %v227 = vsel %vm224, %v226, %v222
  %v228 = vmul.f32 1.0, %v227
  %v229 = vrcp.pop %v199
  %v230 = vmul.f32 %v199, %v229
  %v231 = vsub.f32 1.0, %v230
  %v232 = vmul.f32 %v229, %v231
  %v233 = vadd.f32 %v229, %v232
  %vm234 = vweird.f32 %v199
  %vm235 = vweird.f32 %v229
  %vm236 = vmor %vm234, %vm235
  %v237 = vsel %vm236, %v229, %v233
  %v238 = vand.u32 2147483647, %v199
  %vm239 = vcmp.eq.f32.partialorder %v238, 8.507059e+37
  %v240 = vand.u32 %v199, 2147483648
  %v241 = vor.u32 1.1754944e-38, %v240
  %v242 = vsel %vm239, %v241, %v237
  %v243 = vmul.f32 1.0, %v242
  %v244 = vrcp.pop %v200
  %v245 = vmul.f32 %v200, %v244
  %v246 = vsub.f32 1.0, %v245
  %v247 = vmul.f32 %v244, %v246
  %v248 = vadd.f32 %v244, %v247
  %vm249 = vweird.f32 %v200
  %vm250 = vweird.f32 %v244
  %vm251 = vmor %vm249, %vm250
  %v252 = vsel %vm251, %v244, %v248
  %v253 = vand.u32 2147483647, %v200
  %vm254 = vcmp.eq.f32.partialorder %v253, 8.507059e+37
  %v255 = vand.u32 %v200, 2147483648
  %v256 = vor.u32 1.1754944e-38, %v255
  %v257 = vsel %vm254, %v256, %v252
  %v258 = vmul.f32 1.0, %v257
  %v259 = vrcp.pop %v201
  %v260 = vmul.f32 %v201, %v259
  %v261 = vsub.f32 1.0, %v260
  %v262 = vmul.f32 %v259, %v261
  %v263 = vadd.f32 %v259, %v262
  %vm264 = vweird.f32 %v201
  %vm265 = vweird.f32 %v259
  %vm266 = vmor %vm264, %vm265
  %v267 = vsel %vm266, %v259, %v263
  %v268 = vand.u32 2147483647, %v201
  %vm269 = vcmp.eq.f32.partialorder %v268, 8.507059e+37
  %v270 = vand.u32 %v201, 2147483648
  %v271 = vor.u32 1.1754944e-38, %v270
  %v272 = vsel %vm269, %v271, %v267
  %v273 = vmul.f32 1.0, %v272
  %v274 = vrcp.pop %v202
  %v275 = vmul.f32 %v202, %v274
  %v276 = vsub.f32 1.0, %v275
  %v277 = vmul.f32 %v274, %v276
  %v278 = vadd.f32 %v274, %v277
  %vm279 = vweird.f32 %v202
  %vm280 = vweird.f32 %v274
  %vm281 = vmor %vm279, %vm280
  %v282 = vsel %vm281, %v274, %v278
  %v283 = vand.u32 2147483647, %v202
  %vm284 = vcmp.eq.f32.partialorder %v283, 8.507059e+37
  %v285 = vand.u32 %v202, 2147483648
  %v286 = vor.u32 1.1754944e-38, %v285
  %v287 = vsel %vm284, %v286, %v282
  %v288 = vmul.f32 1.0, %v287
  %v289 = vrcp.pop %v203
  %v290 = vmul.f32 %v203, %v289
  %v291 = vsub.f32 1.0, %v290
  %v292 = vmul.f32 %v289, %v291
  %v293 = vadd.f32 %v289, %v292
  %vm294 = vweird.f32 %v203
  %vm295 = vweird.f32 %v289
  %vm296 = vmor %vm294, %vm295
  %v297 = vsel %vm296, %v289, %v293
  %v298 = vand.u32 2147483647, %v203
  %vm299 = vcmp.eq.f32.partialorder %v298, 8.507059e+37
  %v300 = vand.u32 %v203, 2147483648
  %v301 = vor.u32 1.1754944e-38, %v300
  %v302 = vsel %vm299, %v301, %v297
  %v303 = vmul.f32 1.0, %v302
  %v304 = vrcp.pop %v204
  %v305 = vmul.f32 %v204, %v304
  %v306 = vsub.f32 1.0, %v305
  %v307 = vmul.f32 %v304, %v306
  %v308 = vadd.f32 %v304, %v307
  %vm309 = vweird.f32 %v204
  %vm310 = vweird.f32 %v304
  %vm311 = vmor %vm309, %vm310
  %v312 = vsel %vm311, %v304, %v308
  %v313 = vand.u32 2147483647, %v204
  %vm314 = vcmp.eq.f32.partialorder %v313, 8.507059e+37
  %v315 = vand.u32 %v204, 2147483648
  %v316 = vor.u32 1.1754944e-38, %v315
  %v317 = vsel %vm314, %v316, %v312
  %v318 = vmul.f32 1.0, %v317
  %v319 = vrcp.pop %v205
  %v320 = vmul.f32 %v205, %v319
  %v321 = vsub.f32 1.0, %v320
  %v322 = vmul.f32 %v319, %v321
  %v323 = vadd.f32 %v319, %v322
  %vm324 = vweird.f32 %v205
  %vm325 = vweird.f32 %v319
  %vm326 = vmor %vm324, %vm325
  %v327 = vsel %vm326, %v319, %v323
  %v328 = vand.u32 2147483647, %v205
  %vm329 = vcmp.eq.f32.partialorder %v328, 8.507059e+37
  %v330 = vand.u32 %v205, 2147483648
  %v331 = vor.u32 1.1754944e-38, %v330
  %v332 = vsel %vm329, %v331, %v327
  %v333 = vmul.f32 1.0, %v332
  %v334 = vrcp.pop %v206
  %v335 = vmul.f32 %v206, %v334
  %v336 = vsub.f32 1.0, %v335
  %v337 = vmul.f32 %v334, %v336
  %v338 = vadd.f32 %v334, %v337
  %vm339 = vweird.f32 %v206
  %vm340 = vweird.f32 %v334
  %vm341 = vmor %vm339, %vm340
  %v342 = vsel %vm341, %v334, %v338
  %v343 = vand.u32 2147483647, %v206
  %vm344 = vcmp.eq.f32.partialorder %v343, 8.507059e+37
  %v345 = vand.u32 %v206, 2147483648
  %v346 = vor.u32 1.1754944e-38, %v345
  %v347 = vsel %vm344, %v346, %v342
  %v348 = vmul.f32 1.0, %v347
  %v349 = vrcp.pop %v207
  %v350 = vmul.f32 %v207, %v349
  %v351 = vsub.f32 1.0, %v350
  %v352 = vmul.f32 %v349, %v351
  %v353 = vadd.f32 %v349, %v352
  %vm354 = vweird.f32 %v207
  %vm355 = vweird.f32 %v349
  %vm356 = vmor %vm354, %vm355
  %v357 = vsel %vm356, %v349, %v353
  %v358 = vand.u32 2147483647, %v207
  %vm359 = vcmp.eq.f32.partialorder %v358, 8.507059e+37
  %v360 = vand.u32 %v207, 2147483648
  %v361 = vor.u32 1.1754944e-38, %v360
  %v362 = vsel %vm359, %v361, %v357
  %v363 = vmul.f32 1.0, %v362
  %v364 = vrcp.pop %v208
  %v365 = vmul.f32 %v208, %v364
  %v366 = vsub.f32 1.0, %v365
  %v367 = vmul.f32 %v364, %v366
  %v368 = vadd.f32 %v364, %v367
  %vm369 = vweird.f32 %v208
  %vm370 = vweird.f32 %v364
  %vm371 = vmor %vm369, %vm370
  %v372 = vsel %vm371, %v364, %v368
  %v373 = vand.u32 2147483647, %v208
  %vm374 = vcmp.eq.f32.partialorder %v373, 8.507059e+37
  %v375 = vand.u32 %v208, 2147483648
  %v376 = vor.u32 1.1754944e-38, %v375
  %v377 = vsel %vm374, %v376, %v372
  %v378 = vmul.f32 1.0, %v377
  %v379 = vrcp.pop %v209
  %v380 = vmul.f32 %v209, %v379
  %v381 = vsub.f32 1.0, %v380
  %v382 = vmul.f32 %v379, %v381
  %v383 = vadd.f32 %v379, %v382
  %vm384 = vweird.f32 %v209
  %vm385 = vweird.f32 %v379
  %vm386 = vmor %vm384, %vm385
  %v387 = vsel %vm386, %v379, %v383
  %v388 = vand.u32 2147483647, %v209
  %vm389 = vcmp.eq.f32.partialorder %v388, 8.507059e+37
  %v390 = vand.u32 %v209, 2147483648
  %v391 = vor.u32 1.1754944e-38, %v390
  %v392 = vsel %vm389, %v391, %v387
  %v393 = vmul.f32 1.0, %v392
  %v394 = vrcp.pop %v210
  %v395 = vmul.f32 %v210, %v394
  %v396 = vsub.f32 1.0, %v395
  %v397 = vmul.f32 %v394, %v396
  %v398 = vadd.f32 %v394, %v397
  %vm399 = vweird.f32 %v210
  %vm400 = vweird.f32 %v394
  %vm401 = vmor %vm399, %vm400
  %v402 = vsel %vm401, %v394, %v398
  %v403 = vand.u32 2147483647, %v210
  %vm404 = vcmp.eq.f32.partialorder %v403, 8.507059e+37
  %v405 = vand.u32 %v210, 2147483648
  %v406 = vor.u32 1.1754944e-38, %v405
  %v407 = vsel %vm404, %v406, %v402
  %v408 = vmul.f32 1.0, %v407
  %v409 = vrcp.pop %v211
  %v410 = vmul.f32 %v211, %v409
  %v411 = vsub.f32 1.0, %v410
  %v412 = vmul.f32 %v409, %v411
  %v413 = vadd.f32 %v409, %v412
  %vm414 = vweird.f32 %v211
  %vm415 = vweird.f32 %v409
  %vm416 = vmor %vm414, %vm415
  %v417 = vsel %vm416, %v409, %v413
  %v418 = vand.u32 2147483647, %v211
  %vm419 = vcmp.eq.f32.partialorder %v418, 8.507059e+37
  %v420 = vand.u32 %v211, 2147483648
  %v421 = vor.u32 1.1754944e-38, %v420
  %v422 = vsel %vm419, %v421, %v417
  %v423 = vmul.f32 1.0, %v422
  %v424 = vrcp.pop %v212
  %v425 = vmul.f32 %v212, %v424
  %v426 = vsub.f32 1.0, %v425
  %v427 = vmul.f32 %v424, %v426
  %v428 = vadd.f32 %v424, %v427
  %vm429 = vweird.f32 %v212
  %vm430 = vweird.f32 %v424
  %vm431 = vmor %vm429, %vm430
  %v432 = vsel %vm431, %v424, %v428
  %v433 = vand.u32 2147483647, %v212
  %vm434 = vcmp.eq.f32.partialorder %v433, 8.507059e+37
  %v435 = vand.u32 %v212, 2147483648
  %v436 = vor.u32 1.1754944e-38, %v435
  %v437 = vsel %vm434, %v436, %v432
  %v438 = vmul.f32 1.0, %v437
  %v439 = vrcp.pop %v213
  %v440 = vmul.f32 %v213, %v439
  %v441 = vsub.f32 1.0, %v440
  %v442 = vmul.f32 %v439, %v441
  %v443 = vadd.f32 %v439, %v442
  %vm444 = vweird.f32 %v213
  %vm445 = vweird.f32 %v439
  %vm446 = vmor %vm444, %vm445
  %v447 = vsel %vm446, %v439, %v443
  %v448 = vand.u32 2147483647, %v213
  %vm449 = vcmp.eq.f32.partialorder %v448, 8.507059e+37
  %v450 = vand.u32 %v213, 2147483648
  %v451 = vor.u32 1.1754944e-38, %v450
  %v452 = vsel %vm449, %v451, %v447
  %v453 = vmul.f32 1.0, %v452
  %v454 = vld [vmem:[%s3] sm:$0xff]
  %v455 = vld [vmem:[%s3 + $0x8] sm:$0xff]
  %v456 = vld [vmem:[%s3 + $0x10] sm:$0xff]
  %v457 = vld [vmem:[%s3 + $0x18] sm:$0xff]
  %v458 = vld [vmem:[%s3 + $0x20] sm:$0xff]
  %v459 = vld [vmem:[%s3 + $0x28] sm:$0xff]
  %v460 = vld [vmem:[%s3 + $0x30] sm:$0xff]
  %v461 = vld [vmem:[%s3 + $0x38] sm:$0xff]
  %v462 = vld [vmem:[%s3 + $0x40] sm:$0xff]
  %v463 = vld [vmem:[%s3 + $0x48] sm:$0xff]
  %v464 = vld [vmem:[%s3 + $0x50] sm:$0xff]
  %v465 = vld [vmem:[%s3 + $0x58] sm:$0xff]
  %v466 = vld [vmem:[%s3 + $0x60] sm:$0xff]
  %v467 = vld [vmem:[%s3 + $0x68] sm:$0xff]
  %v468 = vld [vmem:[%s3 + $0x70] sm:$0xff]
  %v469 = vld [vmem:[%s3 + $0x78] sm:$0xff]
  %v470 = vadd.f32 %v228, %v454
  %v471 = vadd.f32 %v243, %v455
  %v472 = vadd.f32 %v258, %v456
  %v473 = vadd.f32 %v273, %v457
  %v474 = vadd.f32 %v288, %v458
  %v475 = vadd.f32 %v303, %v459
  %v476 = vadd.f32 %v318, %v460
  %v477 = vadd.f32 %v333, %v461
  %v478 = vadd.f32 %v348, %v462
  %v479 = vadd.f32 %v363, %v463
  %v480 = vadd.f32 %v378, %v464
  %v481 = vadd.f32 %v393, %v465
  %v482 = vadd.f32 %v408, %v466
  %v483 = vadd.f32 %v423, %v467
  %v484 = vadd.f32 %v438, %v468
  %v485 = vadd.f32 %v453, %v469
  %v486 = vmul.f32 %v470, 2.0
  %v487 = vmul.f32 %v471, 2.0
  %v488 = vmul.f32 %v472, 2.0
  %v489 = vmul.f32 %v473, 2.0
  %v490 = vmul.f32 %v474, 2.0
  %v491 = vmul.f32 %v475, 2.0
  %v492 = vmul.f32 %v476, 2.0
  %v493 = vmul.f32 %v477, 2.0
  %v494 = vmul.f32 %v478, 2.0
  %v495 = vmul.f32 %v479, 2.0
  %v496 = vmul.f32 %v480, 2.0
  %v497 = vmul.f32 %v481, 2.0
  %v498 = vmul.f32 %v482, 2.0
  %v499 = vmul.f32 %v483, 2.0
  %v500 = vmul.f32 %v484, 2.0
  %v501 = vmul.f32 %v485, 2.0
  %v502 = vmul.f32 %v95, 1.442695
  %v503 = vpow.pop %v502
  %v504 = vmul.f32 %v97, 1.442695
  %v505 = vpow.pop %v504
  %v506 = vmul.f32 %v100, 1.442695
  %v507 = vpow.pop %v506
  %v508 = vmul.f32 %v102, 1.442695
  %v509 = vpow.pop %v508
  %v510 = vmul.f32 %v105, 1.442695
  %v511 = vpow.pop %v510
  %v512 = vmul.f32 %v107, 1.442695
  %v513 = vpow.pop %v512
  %v514 = vmul.f32 %v110, 1.442695
  %v515 = vpow.pop %v514
  %v516 = vmul.f32 %v112, 1.442695
  %v517 = vpow.pop %v516
  %v518 = vmul.f32 %v115, 1.442695
  %v519 = vpow.pop %v518
  %v520 = vmul.f32 %v117, 1.442695
  %v521 = vpow.pop %v520
  %v522 = vmul.f32 %v120, 1.442695
  %v523 = vpow.pop %v522
  %v524 = vmul.f32 %v122, 1.442695
  %v525 = vpow.pop %v524
  %v526 = vmul.f32 %v125, 1.442695
  %v527 = vpow.pop %v526
  %v528 = vmul.f32 %v127, 1.442695
  %v529 = vpow.pop %v528
  %v530 = vmul.f32 %v130, 1.442695
  %v531 = vpow.pop %v530
  %v532 = vmul.f32 %v132, 1.442695
  %v533 = vpow.pop %v532
  %v534 = vld [vmem:[%s4] sm:$0xff]
  %v535 = vld [vmem:[%s4 + $0x8] sm:$0xff]
  %v536 = vld [vmem:[%s4 + $0x10] sm:$0xff]
  %v537 = vld [vmem:[%s4 + $0x18] sm:$0xff]
  %v538 = vld [vmem:[%s4 + $0x20] sm:$0xff]
  %v539 = vld [vmem:[%s4 + $0x28] sm:$0xff]
  %v540 = vld [vmem:[%s4 + $0x30] sm:$0xff]
  %v541 = vld [vmem:[%s4 + $0x38] sm:$0xff]
  %v542 = vld [vmem:[%s4 + $0x40] sm:$0xff]
  %v543 = vld [vmem:[%s4 + $0x48] sm:$0xff]
  %v544 = vld [vmem:[%s4 + $0x50] sm:$0xff]
  %v545 = vld [vmem:[%s4 + $0x58] sm:$0xff]
  %v546 = vld [vmem:[%s4 + $0x60] sm:$0xff]
  %v547 = vld [vmem:[%s4 + $0x68] sm:$0xff]
  %v548 = vld [vmem:[%s4 + $0x70] sm:$0xff]
  %v549 = vld [vmem:[%s4 + $0x78] sm:$0xff]
  %v550 = vmul.f32 %v503, %v534
  %v551 = vmul.f32 %v505, %v535
  %v552 = vmul.f32 %v507, %v536
  %v553 = vmul.f32 %v509, %v537
  %v554 = vmul.f32 %v511, %v538
  %v555 = vmul.f32 %v513, %v539
  %v556 = vmul.f32 %v515, %v540
  %v557 = vmul.f32 %v517, %v541
  %v558 = vmul.f32 %v519, %v542
  %v559 = vmul.f32 %v521, %v543
  %v560 = vmul.f32 %v523, %v544
  %v561 = vmul.f32 %v525, %v545
  %v562 = vmul.f32 %v527, %v546
  %v563 = vmul.f32 %v529, %v547
  %v564 = vmul.f32 %v531, %v548
  %v565 = vmul.f32 %v533, %v549
  %vm566 = vcmp.eq.s32.totalorder %v134, 0
  %vm567 = vcmp.eq.s32.totalorder %v135, 0
  %vm568 = vcmp.eq.s32.totalorder %v136, 0
  %vm569 = vcmp.eq.s32.totalorder %v137, 0
  %vm570 = vcmp.eq.s32.totalorder %v138, 0
  %vm571 = vcmp.eq.s32.totalorder %v139, 0
  %vm572 = vcmp.eq.s32.totalorder %v140, 0
  %vm573 = vcmp.eq.s32.totalorder %v141, 0
  %vm574 = vcmp.eq.s32.totalorder %v142, 0
  %vm575 = vcmp.eq.s32.totalorder %v143, 0
  %vm576 = vcmp.eq.s32.totalorder %v144, 0
  %vm577 = vcmp.eq.s32.totalorder %v145, 0
  %vm578 = vcmp.eq.s32.totalorder %v146, 0
  %vm579 = vcmp.eq.s32.totalorder %v147, 0
  %vm580 = vcmp.eq.s32.totalorder %v148, 0
  %vm581 = vcmp.eq.s32.totalorder %v149, 0
  %vm582 = vcmp.eq.s32.totalorder %v134, 1
  %vm583 = vcmp.eq.s32.totalorder %v135, 1
  %vm584 = vcmp.eq.s32.totalorder %v136, 1
  %vm585 = vcmp.eq.s32.totalorder %v137, 1
  %vm586 = vcmp.eq.s32.totalorder %v138, 1
  %vm587 = vcmp.eq.s32.totalorder %v139, 1
  %vm588 = vcmp.eq.s32.totalorder %v140, 1
  %vm589 = vcmp.eq.s32.totalorder %v141, 1
  %vm590 = vcmp.eq.s32.totalorder %v142, 1
  %vm591 = vcmp.eq.s32.totalorder %v143, 1
  %vm592 = vcmp.eq.s32.totalorder %v144, 1
  %vm593 = vcmp.eq.s32.totalorder %v145, 1
  %vm594 = vcmp.eq.s32.totalorder %v146, 1
  %vm595 = vcmp.eq.s32.totalorder %v147, 1
  %vm596 = vcmp.eq.s32.totalorder %v148, 1
  %vm597 = vcmp.eq.s32.totalorder %v149, 1
  %v598 = vsel %vm582, %v550, %v228
  %v599 = vsel %vm583, %v551, %v243
  %v600 = vsel %vm584, %v552, %v258
  %v601 = vsel %vm585, %v553, %v273
  %v602 = vsel %vm586, %v554, %v288
  %v603 = vsel %vm587, %v555, %v303
  %v604 = vsel %vm588, %v556, %v318
  %v605 = vsel %vm589, %v557, %v333
  %v606 = vsel %vm590, %v558, %v348
  %v607 = vsel %vm591, %v559, %v363
  %v608 = vsel %vm592, %v560, %v378
  %v609 = vsel %vm593, %v561, %v393
  %v610 = vsel %vm594, %v562, %v408
  %v611 = vsel %vm595, %v563, %v423
  %v612 = vsel %vm596, %v564, %v438
  %v613 = vsel %vm597, %v565, %v453
  %v614 = vsel %vm566, %v486, %v598
  %v615 = vsel %vm567, %v487, %v599
  %v616 = vsel %vm568, %v488, %v600
  %v617 = vsel %vm569, %v489, %v601
  %v618 = vsel %vm570, %v490, %v602
  %v619 = vsel %vm571, %v491, %v603
  %v620 = vsel %vm572, %v492, %v604
  %v621 = vsel %vm573, %v493, %v605
  %v622 = vsel %vm574, %v494, %v606
  %v623 = vsel %vm575, %v495, %v607
  %v624 = vsel %vm576, %v496, %v608
  %v625 = vsel %vm577, %v497, %v609
  %v626 = vsel %vm578, %v498, %v610
  %v627 = vsel %vm579, %v499, %v611
  %v628 = vsel %vm580, %v500, %v612
  %v629 = vsel %vm581, %v501, %v613
  %630 = vst [vmem:[%s6] sm:$0xff] %v614
  %631 = vst [vmem:[%s6 + $0x8] sm:$0xff] %v615
  %632 = vst [vmem:[%s6 + $0x10] sm:$0xff] %v616
  %633 = vst [vmem:[%s6 + $0x18] sm:$0xff] %v617
  %634 = vst [vmem:[%s6 + $0x20] sm:$0xff] %v618
  %635 = vst [vmem:[%s6 + $0x28] sm:$0xff] %v619
  %636 = vst [vmem:[%s6 + $0x30] sm:$0xff] %v620
  %637 = vst [vmem:[%s6 + $0x38] sm:$0xff] %v621
  %638 = vst [vmem:[%s6 + $0x40] sm:$0xff] %v622
  %639 = vst [vmem:[%s6 + $0x48] sm:$0xff] %v623
  %640 = vst [vmem:[%s6 + $0x50] sm:$0xff] %v624
  %641 = vst [vmem:[%s6 + $0x58] sm:$0xff] %v625
  %642 = vst [vmem:[%s6 + $0x60] sm:$0xff] %v626
  %643 = vst [vmem:[%s6 + $0x68] sm:$0xff] %v627
  %644 = vst [vmem:[%s6 + $0x70] sm:$0xff] %v628
  %645 = vst [vmem:[%s6 + $0x78] sm:$0xff] %v629
  // Predicated region
  $region26: #{darknet_forward.17} parent=0 // pred_check
    _
  $region27: #{darknet_forward.17} parent=0 // pred_check_branch
    %647 = sbr.rel (0) target = $region29
  $region28: #{darknet_forward.17} parent=0 // pred_region
    _
  $region29: #{darknet_forward.17} parent=0 // pred_fallthru
    _
  // Predicated region
  $region30: #{darknet_forward.17} parent=0 // pred_check
    _
  $region31: #{darknet_forward.17} parent=0 // pred_check_branch
    %649 = sbr.rel (0) target = $region33
  $region32: #{darknet_forward.17} parent=0 // pred_region
    _
  $region33: #{darknet_forward.17} parent=0 // pred_fallthru
    _

// kernel: darknet_forward.16
$region0: #{darknet_forward.16}
  #allocation0 [shape = 'u32[]', space=smem, size = 0x4, offset = 0x4, fixed_abs, tag = 'smem constant byte address 0x4 - core index']
  #allocation1 [shape = 'u32[72,128]{1,0:T(1,128)}', space=vmem, size = 0x9000, scoped, tag = 'internal scratch']
  %s0 = inlined_call_operand.vmem [shape: f32[2,10,10,32], index: 0, kind: input, shape index: {}]
  %s1 = inlined_call_operand.vmem [shape: bf16[288,128], index: 1, kind: input, shape index: {}]
  %s2 = inlined_call_operand.vmem [shape: f32[1,128], index: 2, kind: input, shape index: {}]
  %s3 = inlined_call_operand.vmem [shape: f32[128,128], index: 3, kind: output, shape index: {}]
  %s4 = sld [smem:[#allocation0]]
  $region22: #{darknet_forward.16} parent=0
    _
  %s6 = ssub.s32 1, %s4
  %s7 = scalar_select 0, %s6, %s4
  // Predicated region
  $region2: #{darknet_forward.16} parent=0 // pred_check
    _
  $region3: #{darknet_forward.16} parent=0 // pred_check_branch
    %9 = sbr.rel (0) target = $region5
  $region4: #{darknet_forward.16} parent=0 // pred_region
    _
  $region5: #{darknet_forward.16} parent=0 // pred_fallthru
    _
  // Predicated region
  $region6: #{darknet_forward.16} parent=0 // pred_check
    _
  $region7: #{darknet_forward.16} parent=0 // pred_check_branch
    %11 = sbr.rel (0) target = $region9
  $region8: #{darknet_forward.16} parent=0 // pred_region
    _
  $region9: #{darknet_forward.16} parent=0 // pred_fallthru
    _
  // Predicated region
  $region10: #{darknet_forward.16} parent=0 // pred_check
    _
  $region11: #{darknet_forward.16} parent=0 // pred_check_branch
    %13 = sbr.rel (0) target = $region13
  $region12: #{darknet_forward.16} parent=0 // pred_region
    _
  $region13: #{darknet_forward.16} parent=0 // pred_fallthru
    _
  %v15 = vld [vmem:[%s0] sm:$0xff]
  %v16 = vld [vmem:[%s0 + $0x8] sm:$0x3]
  %v17 = vld [vmem:[%s0 + $0x10] sm:$0xff]
  %v18 = vld [vmem:[%s0 + $0x18] sm:$0x3]
  %v19 = vld [vmem:[%s0 + $0x20] sm:$0xff]
  %v20 = vld [vmem:[%s0 + $0x28] sm:$0x3]
  %v21 = vld [vmem:[%s0 + $0x30] sm:$0xff]
  %v22 = vld [vmem:[%s0 + $0x38] sm:$0x3]
  %v23 = vld [vmem:[%s0 + $0x40] sm:$0xff]
  %v24 = vld [vmem:[%s0 + $0x48] sm:$0x3]
  %v25 = vld [vmem:[%s0 + $0x50] sm:$0xff]
  %v26 = vld [vmem:[%s0 + $0x58] sm:$0x3]
  %v27 = vld [vmem:[%s0 + $0x60] sm:$0xff]
  %v28 = vld [vmem:[%s0 + $0x68] sm:$0x3]
  %v29 = vld [vmem:[%s0 + $0x70] sm:$0xff]
  %v30 = vld [vmem:[%s0 + $0x78] sm:$0x3]
  %v31 = vld [vmem:[%s0 + $0x80] sm:$0xff]
  %v32 = vld [vmem:[%s0 + $0x88] sm:$0x3]
  %v33 = vld [vmem:[%s0 + $0x90] sm:$0xff]
  %v34 = vld [vmem:[%s0 + $0x98] sm:$0x3]
  %v35 = vld [vmem:[%s0 + $0xa0] sm:$0xff]
  %v36 = vld [vmem:[%s0 + $0xa8] sm:$0x3]
  %v37 = vld [vmem:[%s0 + $0xb0] sm:$0xff]
  %v38 = vld [vmem:[%s0 + $0xb8] sm:$0x3]
  %v39 = vld [vmem:[%s0 + $0xc0] sm:$0xff]
  %v40 = vld [vmem:[%s0 + $0xc8] sm:$0x3]
  %v41 = vld [vmem:[%s0 + $0xd0] sm:$0xff]
  %v42 = vld [vmem:[%s0 + $0xd8] sm:$0x3]
  %v43 = vld [vmem:[%s0 + $0xe0] sm:$0xff]
  %v44 = vld [vmem:[%s0 + $0xe8] sm:$0x3]
  %v45 = vld [vmem:[%s0 + $0xf0] sm:$0xff]
  %v46 = vld [vmem:[%s0 + $0xf8] sm:$0x3]
  %v47 = vld [vmem:[%s0 + $0x100] sm:$0xff]
  %v48 = vld [vmem:[%s0 + $0x108] sm:$0x3]
  %v49 = vld [vmem:[%s0 + $0x110] sm:$0xff]
  %v50 = vld [vmem:[%s0 + $0x118] sm:$0x3]
  %v51 = vld [vmem:[%s0 + $0x120] sm:$0xff]
  %v52 = vld [vmem:[%s0 + $0x128] sm:$0x3]
  %v53 = vld [vmem:[%s0 + $0x130] sm:$0xff]
  %v54 = vld [vmem:[%s0 + $0x138] sm:$0x3]
  %vm87 = vcmask 1046528
  %v88 = vrot.slane %v15, 1
  %v89 = vrot.slane %v16, 1
  %v90 = vsel %vm87, %v88, %v89
  %v91 = vrot.slane %v17, 1
  %v92 = vrot.slane %v18, 1
  %v93 = vsel %vm87, %v91, %v92
  %v94 = vrot.slane %v19, 1
  %v95 = vrot.slane %v20, 1
  %v96 = vsel %vm87, %v94, %v95
  %v97 = vrot.slane %v21, 1
  %v98 = vrot.slane %v22, 1
  %v99 = vsel %vm87, %v97, %v98
  %v100 = vrot.slane %v23, 1
  %v101 = vrot.slane %v24, 1
  %v102 = vsel %vm87, %v100, %v101
  %v103 = vrot.slane %v25, 1
  %v104 = vrot.slane %v26, 1
  %v105 = vsel %vm87, %v103, %v104
  %v106 = vrot.slane %v27, 1
  %v107 = vrot.slane %v28, 1
  %v108 = vsel %vm87, %v106, %v107
  %v109 = vrot.slane %v29, 1
  %v110 = vrot.slane %v30, 1
  %v111 = vsel %vm87, %v109, %v110
  %v112 = vrot.slane %v35, 1
  %v113 = vrot.slane %v36, 1
  %v114 = vsel %vm87, %v112, %v113
  %v115 = vrot.slane %v37, 1
  %v116 = vrot.slane %v38, 1
  %v117 = vsel %vm87, %v115, %v116
  %v118 = vrot.slane %v39, 1
  %v119 = vrot.slane %v40, 1
  %v120 = vsel %vm87, %v118, %v119
  %v121 = vrot.slane %v41, 1
  %v122 = vrot.slane %v42, 1
  %v123 = vsel %vm87, %v121, %v122
  %v124 = vrot.slane %v43, 1
  %v125 = vrot.slane %v44, 1
  %v126 = vsel %vm87, %v124, %v125
  %v127 = vrot.slane %v45, 1
  %v128 = vrot.slane %v46, 1
  %v129 = vsel %vm87, %v127, %v128
  %v130 = vrot.slane %v47, 1
  %v131 = vrot.slane %v48, 1
  %v132 = vsel %vm87, %v130, %v131
  %v133 = vrot.slane %v49, 1
  %v134 = vrot.slane %v50, 1
  %v135 = vsel %vm87, %v133, %v134
  %136 = vrot.lane.b32.xlu0 %v90, 32
  %v137 = vpop.permute.xlu0 %136
  %138 = vrot.lane.b32.xlu0 %v93, 32
  %v139 = vpop.permute.xlu0 %138
  %140 = vrot.lane.b32.xlu0 %v96, 32
  %v141 = vpop.permute.xlu0 %140
  %142 = vrot.lane.b32.xlu0 %v99, 32
  %v143 = vpop.permute.xlu0 %142
  %144 = vrot.lane.b32.xlu0 %v102, 32
  %v145 = vpop.permute.xlu0 %144
  %146 = vrot.lane.b32.xlu0 %v105, 32
  %v147 = vpop.permute.xlu0 %146
  %148 = vrot.lane.b32.xlu0 %v108, 32
  %v149 = vpop.permute.xlu0 %148
  %150 = vrot.lane.b32.xlu0 %v111, 32
  %v151 = vpop.permute.xlu0 %150
  %152 = vrot.lane.b32.xlu0 %v114, 32
  %v153 = vpop.permute.xlu0 %152
  %154 = vrot.lane.b32.xlu0 %v117, 32
  %v155 = vpop.permute.xlu0 %154
  %156 = vrot.lane.b32.xlu0 %v120, 32
  %v157 = vpop.permute.xlu0 %156
  %158 = vrot.lane.b32.xlu0 %v123, 32
  %v159 = vpop.permute.xlu0 %158
  %160 = vrot.lane.b32.xlu0 %v126, 32
  %v161 = vpop.permute.xlu0 %160
  %162 = vrot.lane.b32.xlu0 %v129, 32
  %v163 = vpop.permute.xlu0 %162
  %164 = vrot.lane.b32.xlu0 %v132, 32
  %v165 = vpop.permute.xlu0 %164
  %166 = vrot.lane.b32.xlu0 %v135, 32
  %v167 = vpop.permute.xlu0 %166
  %vm184 = vcmask 1045504
  %v185 = vrot.slane %v15, 2
  %v186 = vrot.slane %v16, 2
  %v187 = vsel %vm184, %v185, %v186
  %v188 = vrot.slane %v17, 2
  %v189 = vrot.slane %v18, 2
  %v190 = vsel %vm184, %v188, %v189
  %v191 = vrot.slane %v19, 2
  %v192 = vrot.slane %v20, 2
  %v193 = vsel %vm184, %v191, %v192
  %v194 = vrot.slane %v21, 2
  %v195 = vrot.slane %v22, 2
  %v196 = vsel %vm184, %v194, %v195
  %v197 = vrot.slane %v23, 2
  %v198 = vrot.slane %v24, 2
  %v199 = vsel %vm184, %v197, %v198
  %v200 = vrot.slane %v25, 2
  %v201 = vrot.slane %v26, 2
  %v202 = vsel %vm184, %v200, %v201
  %v203 = vrot.slane %v27, 2
  %v204 = vrot.slane %v28, 2
  %v205 = vsel %vm184, %v203, %v204
  %v206 = vrot.slane %v29, 2
  %v207 = vrot.slane %v30, 2
  %v208 = vsel %vm184, %v206, %v207
  %v209 = vrot.slane %v35, 2
  %v210 = vrot.slane %v36, 2
  %v211 = vsel %vm184, %v209, %v210
  %v212 = vrot.slane %v37, 2
  %v213 = vrot.slane %v38, 2
  %v214 = vsel %vm184, %v212, %v213
  %v215 = vrot.slane %v39, 2
  %v216 = vrot.slane %v40, 2
  %v217 = vsel %vm184, %v215, %v216
  %v218 = vrot.slane %v41, 2
  %v219 = vrot.slane %v42, 2
  %v220 = vsel %vm184, %v218, %v219
  %v221 = vrot.slane %v43, 2
  %v222 = vrot.slane %v44, 2
  %v223 = vsel %vm184, %v221, %v222
  %v224 = vrot.slane %v45, 2
  %v225 = vrot.slane %v46, 2
  %v226 = vsel %vm184, %v224, %v225
  %v227 = vrot.slane %v47, 2
  %v228 = vrot.slane %v48, 2
  %v229 = vsel %vm184, %v227, %v228
  %v230 = vrot.slane %v49, 2
  %v231 = vrot.slane %v50, 2
  %v232 = vsel %vm184, %v230, %v231
  %233 = vrot.lane.b32.xlu0 %v187, 64
  %v234 = vpop.permute.xlu0 %233
  %235 = vrot.lane.b32.xlu0 %v190, 64
  %v236 = vpop.permute.xlu0 %235
  %237 = vrot.lane.b32.xlu0 %v193, 64
  %v238 = vpop.permute.xlu0 %237
  %239 = vrot.lane.b32.xlu0 %v196, 64
  %v240 = vpop.permute.xlu0 %239
  %241 = vrot.lane.b32.xlu0 %v199, 64
  %v242 = vpop.permute.xlu0 %241
  %243 = vrot.lane.b32.xlu0 %v202, 64
  %v244 = vpop.permute.xlu0 %243
  %245 = vrot.lane.b32.xlu0 %v205, 64
  %v246 = vpop.permute.xlu0 %245
  %247 = vrot.lane.b32.xlu0 %v208, 64
  %v248 = vpop.permute.xlu0 %247
  %249 = vrot.lane.b32.xlu0 %v211, 64
  %v250 = vpop.permute.xlu0 %249
  %251 = vrot.lane.b32.xlu0 %v214, 64
  %v252 = vpop.permute.xlu0 %251
  %253 = vrot.lane.b32.xlu0 %v217, 64
  %v254 = vpop.permute.xlu0 %253
  %255 = vrot.lane.b32.xlu0 %v220, 64
  %v256 = vpop.permute.xlu0 %255
  %257 = vrot.lane.b32.xlu0 %v223, 64
  %v258 = vpop.permute.xlu0 %257
  %259 = vrot.lane.b32.xlu0 %v226, 64
  %v260 = vpop.permute.xlu0 %259
  %261 = vrot.lane.b32.xlu0 %v229, 64
  %v262 = vpop.permute.xlu0 %261
  %263 = vrot.lane.b32.xlu0 %v232, 64
  %v264 = vpop.permute.xlu0 %263
  %283 = vrot.lane.b32.xlu0 %v17, 96
  %v284 = vpop.permute.xlu0 %283
  %285 = vrot.lane.b32.xlu0 %v19, 96
  %v286 = vpop.permute.xlu0 %285
  %287 = vrot.lane.b32.xlu0 %v21, 96
  %v288 = vpop.permute.xlu0 %287
  %289 = vrot.lane.b32.xlu0 %v23, 96
  %v290 = vpop.permute.xlu0 %289
  %291 = vrot.lane.b32.xlu0 %v25, 96
  %v292 = vpop.permute.xlu0 %291
  %293 = vrot.lane.b32.xlu0 %v27, 96
  %v294 = vpop.permute.xlu0 %293
  %295 = vrot.lane.b32.xlu0 %v29, 96
  %v296 = vpop.permute.xlu0 %295
  %297 = vrot.lane.b32.xlu0 %v31, 96
  %v298 = vpop.permute.xlu0 %297
  %299 = vrot.lane.b32.xlu0 %v37, 96
  %v300 = vpop.permute.xlu0 %299
  %301 = vrot.lane.b32.xlu0 %v39, 96
  %v302 = vpop.permute.xlu0 %301
  %303 = vrot.lane.b32.xlu0 %v41, 96
  %v304 = vpop.permute.xlu0 %303
  %305 = vrot.lane.b32.xlu0 %v43, 96
  %v306 = vpop.permute.xlu0 %305
  %307 = vrot.lane.b32.xlu0 %v45, 96
  %v308 = vpop.permute.xlu0 %307
  %309 = vrot.lane.b32.xlu0 %v47, 96
  %v310 = vpop.permute.xlu0 %309
  %311 = vrot.lane.b32.xlu0 %v49, 96
  %v312 = vpop.permute.xlu0 %311
  %313 = vrot.lane.b32.xlu0 %v51, 96
  %v314 = vpop.permute.xlu0 %313
  %v333 = vrot.slane %v31, 1
  %v334 = vrot.slane %v32, 1
  %v335 = vsel %vm87, %v333, %v334
  %v336 = vrot.slane %v51, 1
  %v337 = vrot.slane %v52, 1
  %v338 = vsel %vm87, %v336, %v337
  %v355 = vrot.slane %v31, 2
  %v356 = vrot.slane %v32, 2
  %v357 = vsel %vm184, %v355, %v356
  %v358 = vrot.slane %v51, 2
  %v359 = vrot.slane %v52, 2
  %v360 = vsel %vm184, %v358, %v359
  %361 = vrot.lane.b32.xlu0 %v190, 32
  %v362 = vpop.permute.xlu0 %361
  %363 = vrot.lane.b32.xlu0 %v193, 32
  %v364 = vpop.permute.xlu0 %363
  %365 = vrot.lane.b32.xlu0 %v196, 32
  %v366 = vpop.permute.xlu0 %365
  %367 = vrot.lane.b32.xlu0 %v199, 32
  %v368 = vpop.permute.xlu0 %367
  %369 = vrot.lane.b32.xlu0 %v202, 32
  %v370 = vpop.permute.xlu0 %369
  %371 = vrot.lane.b32.xlu0 %v205, 32
  %v372 = vpop.permute.xlu0 %371
  %373 = vrot.lane.b32.xlu0 %v208, 32
  %v374 = vpop.permute.xlu0 %373
  %375 = vrot.lane.b32.xlu0 %v357, 32
  %v376 = vpop.permute.xlu0 %375
  %377 = vrot.lane.b32.xlu0 %v214, 32
  %v378 = vpop.permute.xlu0 %377
  %379 = vrot.lane.b32.xlu0 %v217, 32
  %v380 = vpop.permute.xlu0 %379
  %381 = vrot.lane.b32.xlu0 %v220, 32
  %v382 = vpop.permute.xlu0 %381
  %383 = vrot.lane.b32.xlu0 %v223, 32
  %v384 = vpop.permute.xlu0 %383
  %385 = vrot.lane.b32.xlu0 %v226, 32
  %v386 = vpop.permute.xlu0 %385
  %387 = vrot.lane.b32.xlu0 %v229, 32
  %v388 = vpop.permute.xlu0 %387
  %389 = vrot.lane.b32.xlu0 %v232, 32
  %v390 = vpop.permute.xlu0 %389
  %391 = vrot.lane.b32.xlu0 %v360, 32
  %v392 = vpop.permute.xlu0 %391
  %411 = vrot.lane.b32.xlu0 %v19, 64
  %v412 = vpop.permute.xlu0 %411
  %413 = vrot.lane.b32.xlu0 %v21, 64
  %v414 = vpop.permute.xlu0 %413
  %415 = vrot.lane.b32.xlu0 %v23, 64
  %v416 = vpop.permute.xlu0 %415
  %417 = vrot.lane.b32.xlu0 %v25, 64
  %v418 = vpop.permute.xlu0 %417
  %419 = vrot.lane.b32.xlu0 %v27, 64
  %v420 = vpop.permute.xlu0 %419
  %421 = vrot.lane.b32.xlu0 %v29, 64
  %v422 = vpop.permute.xlu0 %421
  %423 = vrot.lane.b32.xlu0 %v31, 64
  %v424 = vpop.permute.xlu0 %423
  %425 = vrot.lane.b32.xlu0 %v33, 64
  %v426 = vpop.permute.xlu0 %425
  %427 = vrot.lane.b32.xlu0 %v39, 64
  %v428 = vpop.permute.xlu0 %427
  %429 = vrot.lane.b32.xlu0 %v41, 64
  %v430 = vpop.permute.xlu0 %429
  %431 = vrot.lane.b32.xlu0 %v43, 64
  %v432 = vpop.permute.xlu0 %431
  %433 = vrot.lane.b32.xlu0 %v45, 64
  %v434 = vpop.permute.xlu0 %433
  %435 = vrot.lane.b32.xlu0 %v47, 64
  %v436 = vpop.permute.xlu0 %435
  %437 = vrot.lane.b32.xlu0 %v49, 64
  %v438 = vpop.permute.xlu0 %437
  %439 = vrot.lane.b32.xlu0 %v51, 64
  %v440 = vpop.permute.xlu0 %439
  %441 = vrot.lane.b32.xlu0 %v53, 64
  %v442 = vpop.permute.xlu0 %441
  %v461 = vrot.slane %v33, 1
  %v462 = vrot.slane %v34, 1
  %v463 = vsel %vm87, %v461, %v462
  %v464 = vrot.slane %v53, 1
  %v465 = vrot.slane %v54, 1
  %v466 = vsel %vm87, %v464, %v465
  %467 = vrot.lane.b32.xlu0 %v96, 96
  %v468 = vpop.permute.xlu0 %467
  %469 = vrot.lane.b32.xlu0 %v99, 96
  %v470 = vpop.permute.xlu0 %469
  %471 = vrot.lane.b32.xlu0 %v102, 96
  %v472 = vpop.permute.xlu0 %471
  %473 = vrot.lane.b32.xlu0 %v105, 96
  %v474 = vpop.permute.xlu0 %473
  %475 = vrot.lane.b32.xlu0 %v108, 96
  %v476 = vpop.permute.xlu0 %475
  %477 = vrot.lane.b32.xlu0 %v111, 96
  %v478 = vpop.permute.xlu0 %477
  %479 = vrot.lane.b32.xlu0 %v335, 96
  %v480 = vpop.permute.xlu0 %479
  %481 = vrot.lane.b32.xlu0 %v463, 96
  %v482 = vpop.permute.xlu0 %481
  %483 = vrot.lane.b32.xlu0 %v120, 96
  %v484 = vpop.permute.xlu0 %483
  %485 = vrot.lane.b32.xlu0 %v123, 96
  %v486 = vpop.permute.xlu0 %485
  %487 = vrot.lane.b32.xlu0 %v126, 96
  %v488 = vpop.permute.xlu0 %487
  %489 = vrot.lane.b32.xlu0 %v129, 96
  %v490 = vpop.permute.xlu0 %489
  %491 = vrot.lane.b32.xlu0 %v132, 96
  %v492 = vpop.permute.xlu0 %491
  %493 = vrot.lane.b32.xlu0 %v135, 96
  %v494 = vpop.permute.xlu0 %493
  %495 = vrot.lane.b32.xlu0 %v338, 96
  %v496 = vpop.permute.xlu0 %495
  %497 = vrot.lane.b32.xlu0 %v466, 96
  %v498 = vpop.permute.xlu0 %497
  %v515 = vrot.slane %v33, 2
  %v516 = vrot.slane %v34, 2
  %v517 = vsel %vm184, %v515, %v516
  %v518 = vrot.slane %v53, 2
  %v519 = vrot.slane %v54, 2
  %v520 = vsel %vm184, %v518, %v519
  %vm537 = vcmask 261120
  %v538 = vsel %vm537, %v15, %v137
  %v539 = vsel %vm537, %v17, %v139
  %v540 = vsel %vm537, %v19, %v141
  %v541 = vsel %vm537, %v21, %v143
  %v542 = vsel %vm537, %v23, %v145
  %v543 = vsel %vm537, %v25, %v147
  %v544 = vsel %vm537, %v27, %v149
  %v545 = vsel %vm537, %v29, %v151
  %v546 = vsel %vm537, %v35, %v153
  %v547 = vsel %vm537, %v37, %v155
  %v548 = vsel %vm537, %v39, %v157
  %v549 = vsel %vm537, %v41, %v159
  %v550 = vsel %vm537, %v43, %v161
  %v551 = vsel %vm537, %v45, %v163
  %v552 = vsel %vm537, %v47, %v165
  %v553 = vsel %vm537, %v49, %v167
  %vm554 = vcmask 523264
  %v555 = vsel %vm554, %v538, %v234
  %v556 = vsel %vm554, %v539, %v236
  %v557 = vsel %vm554, %v540, %v238
  %v558 = vsel %vm554, %v541, %v240
  %v559 = vsel %vm554, %v542, %v242
  %v560 = vsel %vm554, %v543, %v244
  %v561 = vsel %vm554, %v544, %v246
  %v562 = vsel %vm554, %v545, %v248
  %v563 = vsel %vm554, %v546, %v250
  %v564 = vsel %vm554, %v547, %v252
  %v565 = vsel %vm554, %v548, %v254
  %v566 = vsel %vm554, %v549, %v256
  %v567 = vsel %vm554, %v550, %v258
  %v568 = vsel %vm554, %v551, %v260
  %v569 = vsel %vm554, %v552, %v262
  %v570 = vsel %vm554, %v553, %v264
  %vm571 = vcmask 785408
  %v572 = vsel %vm571, %v555, %v284
  %v573 = vsel %vm571, %v556, %v286
  %v574 = vsel %vm571, %v557, %v288
  %v575 = vsel %vm571, %v558, %v290
  %v576 = vsel %vm571, %v559, %v292
  %v577 = vsel %vm571, %v560, %v294
  %v578 = vsel %vm571, %v561, %v296
  %v579 = vsel %vm571, %v562, %v298
  %v580 = vsel %vm571, %v563, %v300
  %v581 = vsel %vm571, %v564, %v302
  %v582 = vsel %vm571, %v565, %v304
  %v583 = vsel %vm571, %v566, %v306
  %v584 = vsel %vm571, %v567, %v308
  %v585 = vsel %vm571, %v568, %v310
  %v586 = vsel %vm571, %v569, %v312
  %v587 = vsel %vm571, %v570, %v314
  %v588 = vsel %vm537, %v93, %v362
  %v589 = vsel %vm537, %v96, %v364
  %v590 = vsel %vm537, %v99, %v366
  %v591 = vsel %vm537, %v102, %v368
  %v592 = vsel %vm537, %v105, %v370
  %v593 = vsel %vm537, %v108, %v372
  %v594 = vsel %vm537, %v111, %v374
  %v595 = vsel %vm537, %v335, %v376
  %v596 = vsel %vm537, %v117, %v378
  %v597 = vsel %vm537, %v120, %v380
  %v598 = vsel %vm537, %v123, %v382
  %v599 = vsel %vm537, %v126, %v384
  %v600 = vsel %vm537, %v129, %v386
  %v601 = vsel %vm537, %v132, %v388
  %v602 = vsel %vm537, %v135, %v390
  %v603 = vsel %vm537, %v338, %v392
  %v604 = vsel %vm554, %v588, %v412
  %v605 = vsel %vm554, %v589, %v414
  %v606 = vsel %vm554, %v590, %v416
  %v607 = vsel %vm554, %v591, %v418
  %v608 = vsel %vm554, %v592, %v420
  %v609 = vsel %vm554, %v593, %v422
  %v610 = vsel %vm554, %v594, %v424
  %v611 = vsel %vm554, %v595, %v426
  %v612 = vsel %vm554, %v596, %v428
  %v613 = vsel %vm554, %v597, %v430
  %v614 = vsel %vm554, %v598, %v432
  %v615 = vsel %vm554, %v599, %v434
  %v616 = vsel %vm554, %v600, %v436
  %v617 = vsel %vm554, %v601, %v438
  %v618 = vsel %vm554, %v602, %v440
  %v619 = vsel %vm554, %v603, %v442
  %v620 = vsel %vm571, %v604, %v468
  %v621 = vsel %vm571, %v605, %v470
  %v622 = vsel %vm571, %v606, %v472
  %v623 = vsel %vm571, %v607, %v474
  %v624 = vsel %vm571, %v608, %v476
  %v625 = vsel %vm571, %v609, %v478
  %v626 = vsel %vm571, %v610, %v480
  %v627 = vsel %vm571, %v611, %v482
  %v628 = vsel %vm571, %v612, %v484
  %v629 = vsel %vm571, %v613, %v486
  %v630 = vsel %vm571, %v614, %v488
  %v631 = vsel %vm571, %v615, %v490
  %v632 = vsel %vm571, %v616, %v492
  %v633 = vsel %vm571, %v617, %v494
  %v634 = vsel %vm571, %v618, %v496
  %v635 = vsel %vm571, %v619, %v498
  %v636 = vpack.c.bf16 %v573, %v572
  %v637 = vpack.c.bf16 %v621, %v620
  %v638 = vpack.c.bf16 %v196, %v193
  %v639 = vpack.c.bf16 %v575, %v574
  %v640 = vpack.c.bf16 %v623, %v622
  %v641 = vpack.c.bf16 %v202, %v199
  %v642 = vpack.c.bf16 %v577, %v576
  %v643 = vpack.c.bf16 %v625, %v624
  %v644 = vpack.c.bf16 %v208, %v205
  %v645 = vpack.c.bf16 %v579, %v578
  %v646 = vpack.c.bf16 %v627, %v626
  %v647 = vpack.c.bf16 %v517, %v357
  %v648 = vpack.c.bf16 %v581, %v580
  %v649 = vpack.c.bf16 %v629, %v628
  %v650 = vpack.c.bf16 %v220, %v217
  %v651 = vpack.c.bf16 %v583, %v582
  %v652 = vpack.c.bf16 %v631, %v630
  %v653 = vpack.c.bf16 %v226, %v223
  %v654 = vpack.c.bf16 %v585, %v584
  %v655 = vpack.c.bf16 %v633, %v632
  %v656 = vpack.c.bf16 %v232, %v229
  %v657 = vpack.c.bf16 %v587, %v586
  %v658 = vpack.c.bf16 %v635, %v634
  %v659 = vpack.c.bf16 %v520, %v360
  %v660 = vld [vmem:[%s1] sm:$0xf]
  %v661 = vld [vmem:[%s1 + $0x4] sm:$0xf]
  %v662 = vld [vmem:[%s1 + $0x8] sm:$0xf]
  %v663 = vld [vmem:[%s1 + $0xc] sm:$0xf]
  %v664 = vld [vmem:[%s1 + $0x10] sm:$0xf]
  %v665 = vld [vmem:[%s1 + $0x14] sm:$0xf]
  %v666 = vld [vmem:[%s1 + $0x18] sm:$0xf]
  %v667 = vld [vmem:[%s1 + $0x1c] sm:$0xf]
  %v668 = vld [vmem:[%s1 + $0x20] sm:$0xf]
  %v669 = vld [vmem:[%s1 + $0x24] sm:$0xf]
  %v670 = vld [vmem:[%s1 + $0x28] sm:$0xf]
  %v671 = vld [vmem:[%s1 + $0x2c] sm:$0xf]
  %v672 = vld [vmem:[%s1 + $0x30] sm:$0xf]
  %v673 = vld [vmem:[%s1 + $0x34] sm:$0xf]
  %v674 = vld [vmem:[%s1 + $0x38] sm:$0xf]
  %v675 = vld [vmem:[%s1 + $0x3c] sm:$0xf]
  %v676 = vld [vmem:[%s1 + $0x40] sm:$0xf]
  %v677 = vld [vmem:[%s1 + $0x44] sm:$0xf]
  %v678 = vld [vmem:[%s1 + $0x48] sm:$0xf]
  %v679 = vld [vmem:[%s1 + $0x4c] sm:$0xf]
  %v680 = vld [vmem:[%s1 + $0x50] sm:$0xf]
  %v681 = vld [vmem:[%s1 + $0x54] sm:$0xf]
  %v682 = vld [vmem:[%s1 + $0x58] sm:$0xf]
  %v683 = vld [vmem:[%s1 + $0x5c] sm:$0xf]
  %v684 = vld [vmem:[%s1 + $0x60] sm:$0xf]
  %v685 = vld [vmem:[%s1 + $0x64] sm:$0xf]
  %v686 = vld [vmem:[%s1 + $0x68] sm:$0xf]
  %v687 = vld [vmem:[%s1 + $0x6c] sm:$0xf]
  %v688 = vld [vmem:[%s1 + $0x70] sm:$0xf]
  %v689 = vld [vmem:[%s1 + $0x74] sm:$0xf]
  %v690 = vld [vmem:[%s1 + $0x78] sm:$0xf]
  %v691 = vld [vmem:[%s1 + $0x7c] sm:$0xf]
  %v692 = vld [vmem:[%s1 + $0x80] sm:$0xf]
  %v693 = vld [vmem:[%s1 + $0x84] sm:$0xf]
  %v694 = vld [vmem:[%s1 + $0x88] sm:$0xf]
  %v695 = vld [vmem:[%s1 + $0x8c] sm:$0xf]
  %v696 = vld [vmem:[%s2] sm:$0x1]
  %v698 = vperm.slane %v696, 0
  %v736 = vunpack.c.l.b16 %v660
  %v737 = vunpack.c.l.b16 %v661
  %v738 = vunpack.c.l.b16 %v662
  %v739 = vunpack.c.l.b16 %v663
  %v740 = vunpack.c.l.b16 %v664
  %v741 = vunpack.c.l.b16 %v665
  %v742 = vunpack.c.l.b16 %v666
  %v743 = vunpack.c.l.b16 %v667
  %v744 = vunpack.c.l.b16 %v668
  %v745 = vunpack.c.l.b16 %v669
  %v746 = vunpack.c.l.b16 %v670
  %v747 = vunpack.c.l.b16 %v671
  %v748 = vunpack.c.l.b16 %v672
  %v749 = vunpack.c.l.b16 %v673
  %v750 = vunpack.c.l.b16 %v674
  %v751 = vunpack.c.l.b16 %v675
  %v752 = vunpack.c.l.b16 %v676
  %v753 = vunpack.c.l.b16 %v677
  %v754 = vunpack.c.l.b16 %v678
  %v755 = vunpack.c.l.b16 %v679
  %v756 = vunpack.c.l.b16 %v680
  %v757 = vunpack.c.l.b16 %v681
  %v758 = vunpack.c.l.b16 %v682
  %v759 = vunpack.c.l.b16 %v683
  %v760 = vunpack.c.l.b16 %v684
  %v761 = vunpack.c.l.b16 %v685
  %v762 = vunpack.c.l.b16 %v686
  %v763 = vunpack.c.l.b16 %v687
  %v764 = vunpack.c.l.b16 %v688
  %v765 = vunpack.c.l.b16 %v689
  %v766 = vunpack.c.l.b16 %v690
  %v767 = vunpack.c.l.b16 %v691
  %v768 = vunpack.c.l.b16 %v692
  %v769 = vunpack.c.l.b16 %v693
  %v770 = vunpack.c.l.b16 %v694
  %v771 = vunpack.c.l.b16 %v695
  %v772 = vpack.c.b16 %v737, %v736
  %v773 = vpack.c.b16 %v739, %v738
  %v774 = vpack.c.b16 %v741, %v740
  %v775 = vpack.c.b16 %v743, %v742
  %v776 = vpack.c.b16 %v745, %v744
  %v777 = vpack.c.b16 %v747, %v746
  %v778 = vpack.c.b16 %v749, %v748
  %v779 = vpack.c.b16 %v751, %v750
  %v780 = vpack.c.b16 %v753, %v752
  %v781 = vpack.c.b16 %v755, %v754
  %v782 = vpack.c.b16 %v757, %v756
  %v783 = vpack.c.b16 %v759, %v758
  %v784 = vpack.c.b16 %v761, %v760
  %v785 = vpack.c.b16 %v763, %v762
  %v786 = vpack.c.b16 %v765, %v764
  %v787 = vpack.c.b16 %v767, %v766
  %v788 = vpack.c.b16 %v769, %v768
  %v789 = vpack.c.b16 %v771, %v770
  %v809 = vsel %vm537, %v638, 0
  %v812 = vsel %vm537, %v641, 0
  %v815 = vsel %vm537, %v644, 0
  %v818 = vsel %vm537, %v647, 0
  %v821 = vsel %vm537, %v650, 0
  %v824 = vsel %vm537, %v653, 0
  %v827 = vsel %vm537, %v656, 0
  %v830 = vsel %vm537, %v659, 0
  %832 = vmatpush.bf16.msra.mxu0 %v779
  %833 = vmatpush.bf16.msra.mxu0 %v778
  %834 = vmatpush.bf16.msra.mxu0 %v777
  %835 = vmatpush.bf16.msra.mxu0 %v776
  %836 = vmatpush.bf16.msra.mxu0 %v775
  %837 = vmatpush.bf16.msra.mxu0 %v774
  %838 = vmatpush.bf16.msra.mxu0 %v773
  %839 = vmatpush.bf16.msra.mxu0 %v772
  %840 = vmatmul.bf16.gmra.mxu0 %v636
  %v841 = vpop.f32.mrf.mxu0
  %v842 = vadd.f32 %v698, %v841
  %v843 = vpop.f32.mrf.mxu0
  %v844 = vadd.f32 %v698, %v843
  %845 = vmatmul.bf16.gmra.mxu0 %v639
  %v846 = vpop.f32.mrf.mxu0
  %v847 = vadd.f32 %v698, %v846
  %v848 = vpop.f32.mrf.mxu0
  %v849 = vadd.f32 %v698, %v848
  %850 = vmatmul.bf16.gmra.mxu0 %v642
  %v851 = vpop.f32.mrf.mxu0
  %v852 = vadd.f32 %v698, %v851
  %v853 = vpop.f32.mrf.mxu0
  %v854 = vadd.f32 %v698, %v853
  %855 = vmatmul.bf16.gmra.mxu0 %v645
  %v856 = vpop.f32.mrf.mxu0
  %v857 = vadd.f32 %v698, %v856
  %v858 = vpop.f32.mrf.mxu0
  %v859 = vadd.f32 %v698, %v858
  %860 = vmatmul.bf16.gmra.mxu0 %v648
  %v861 = vpop.f32.mrf.mxu0
  %v862 = vadd.f32 %v698, %v861
  %v863 = vpop.f32.mrf.mxu0
  %v864 = vadd.f32 %v698, %v863
  %865 = vmatmul.bf16.gmra.mxu0 %v651
  %v866 = vpop.f32.mrf.mxu0
  %v867 = vadd.f32 %v698, %v866
  %v868 = vpop.f32.mrf.mxu0
  %v869 = vadd.f32 %v698, %v868
  %870 = vmatmul.bf16.gmra.mxu0 %v654
  %v871 = vpop.f32.mrf.mxu0
  %v872 = vadd.f32 %v698, %v871
  %v873 = vpop.f32.mrf.mxu0
  %v874 = vadd.f32 %v698, %v873
  %875 = vmatmul.bf16.gmra.mxu0 %v657
  %v876 = vpop.f32.mrf.mxu0
  %v877 = vadd.f32 %v698, %v876
  %v878 = vpop.f32.mrf.mxu0
  %v879 = vadd.f32 %v698, %v878
  %880 = vdwg.mxu0
  %881 = vmatpush.bf16.msra.mxu0 %v787
  %882 = vmatpush.bf16.msra.mxu0 %v786
  %883 = vmatpush.bf16.msra.mxu0 %v785
  %884 = vmatpush.bf16.msra.mxu0 %v784
  %885 = vmatpush.bf16.msra.mxu0 %v783
  %886 = vmatpush.bf16.msra.mxu0 %v782
  %887 = vmatpush.bf16.msra.mxu0 %v781
  %888 = vmatpush.bf16.msra.mxu0 %v780
  %889 = vmatmul.bf16.gmra.mxu0 %v637
  %v890 = vpop.f32.mrf.mxu0
  %v891 = vadd.f32 %v842, %v890
  %v892 = vpop.f32.mrf.mxu0
  %v893 = vadd.f32 %v844, %v892
  %894 = vmatmul.bf16.gmra.mxu0 %v640
  %v895 = vpop.f32.mrf.mxu0
  %v896 = vadd.f32 %v847, %v895
  %v897 = vpop.f32.mrf.mxu0
  %v898 = vadd.f32 %v849, %v897
  %899 = vmatmul.bf16.gmra.mxu0 %v643
  %v900 = vpop.f32.mrf.mxu0
  %v901 = vadd.f32 %v852, %v900
  %v902 = vpop.f32.mrf.mxu0
  %v903 = vadd.f32 %v854, %v902
  %904 = vmatmul.bf16.gmra.mxu0 %v646
  %v905 = vpop.f32.mrf.mxu0
  %v906 = vadd.f32 %v857, %v905
  %v907 = vpop.f32.mrf.mxu0
  %v908 = vadd.f32 %v859, %v907
  %909 = vmatmul.bf16.gmra.mxu0 %v649
  %v910 = vpop.f32.mrf.mxu0
  %v911 = vadd.f32 %v862, %v910
  %v912 = vpop.f32.mrf.mxu0
  %v913 = vadd.f32 %v864, %v912
  %914 = vmatmul.bf16.gmra.mxu0 %v652
  %v915 = vpop.f32.mrf.mxu0
  %v916 = vadd.f32 %v867, %v915
  %v917 = vpop.f32.mrf.mxu0
  %v918 = vadd.f32 %v869, %v917
  %919 = vmatmul.bf16.gmra.mxu0 %v655
  %v920 = vpop.f32.mrf.mxu0
  %v921 = vadd.f32 %v872, %v920
  %v922 = vpop.f32.mrf.mxu0
  %v923 = vadd.f32 %v874, %v922
  %924 = vmatmul.bf16.gmra.mxu0 %v658
  %v925 = vpop.f32.mrf.mxu0
  %v926 = vadd.f32 %v877, %v925
  %v927 = vpop.f32.mrf.mxu0
  %v928 = vadd.f32 %v879, %v927
  %929 = vdwg.mxu0
  %930 = vmatpush.bf16.msra.mxu0 0
  %931 = vmatpush.bf16.msra.mxu0 0
  %932 = vmatpush.bf16.msra.mxu0 0
  %933 = vmatpush.bf16.msra.mxu0 0
  %934 = vmatpush.bf16.msra.mxu0 0
  %935 = vmatpush.bf16.msra.mxu0 0
  %936 = vmatpush.bf16.msra.mxu0 %v789
  %937 = vmatpush.bf16.msra.mxu0 %v788
  %938 = vmatmul.bf16.gmra.mxu0 %v809
  %v939 = vpop.f32.mrf.mxu0
  %v940 = vadd.f32 %v891, %v939
  %v941 = vpop.f32.mrf.mxu0
  %v942 = vadd.f32 %v893, %v941
  %943 = vmatmul.bf16.gmra.mxu0 %v812
  %v944 = vpop.f32.mrf.mxu0
  %v945 = vadd.f32 %v896, %v944
  %v946 = vpop.f32.mrf.mxu0
  %v947 = vadd.f32 %v898, %v946
  %948 = vmatmul.bf16.gmra.mxu0 %v815
  %v949 = vpop.f32.mrf.mxu0
  %v950 = vadd.f32 %v901, %v949
  %v951 = vpop.f32.mrf.mxu0
  %v952 = vadd.f32 %v903, %v951
  %953 = vmatmul.bf16.gmra.mxu0 %v818
  %v954 = vpop.f32.mrf.mxu0
  %v955 = vadd.f32 %v906, %v954
  %v956 = vpop.f32.mrf.mxu0
  %v957 = vadd.f32 %v908, %v956
  %958 = vmatmul.bf16.gmra.mxu0 %v821
  %v959 = vpop.f32.mrf.mxu0
  %v960 = vadd.f32 %v911, %v959
  %v961 = vpop.f32.mrf.mxu0
  %v962 = vadd.f32 %v913, %v961
  %963 = vmatmul.bf16.gmra.mxu0 %v824
  %v964 = vpop.f32.mrf.mxu0
  %v965 = vadd.f32 %v916, %v964
  %v966 = vpop.f32.mrf.mxu0
  %v967 = vadd.f32 %v918, %v966
  %968 = vmatmul.bf16.gmra.mxu0 %v827
  %v969 = vpop.f32.mrf.mxu0
  %v970 = vadd.f32 %v921, %v969
  %v971 = vpop.f32.mrf.mxu0
  %v972 = vadd.f32 %v923, %v971
  %973 = vmatmul.bf16.gmra.mxu0 %v830
  %v974 = vpop.f32.mrf.mxu0
  %v975 = vadd.f32 %v926, %v974
  %v976 = vpop.f32.mrf.mxu0
  %v977 = vadd.f32 %v928, %v976
  %978 = vdwg.mxu0
  %vm979 = vcmp.gt.f32.partialorder %v940, 0.0
  %vm980 = vcmp.gt.f32.partialorder %v942, 0.0
  %vm981 = vcmp.gt.f32.partialorder %v945, 0.0
  %vm982 = vcmp.gt.f32.partialorder %v947, 0.0
  %vm983 = vcmp.gt.f32.partialorder %v950, 0.0
  %vm984 = vcmp.gt.f32.partialorder %v952, 0.0
  %vm985 = vcmp.gt.f32.partialorder %v955, 0.0
  %vm986 = vcmp.gt.f32.partialorder %v957, 0.0
  %vm987 = vcmp.gt.f32.partialorder %v960, 0.0
  %vm988 = vcmp.gt.f32.partialorder %v962, 0.0
  %vm989 = vcmp.gt.f32.partialorder %v965, 0.0
  %vm990 = vcmp.gt.f32.partialorder %v967, 0.0
  %vm991 = vcmp.gt.f32.partialorder %v970, 0.0
  %vm992 = vcmp.gt.f32.partialorder %v972, 0.0
  %vm993 = vcmp.gt.f32.partialorder %v975, 0.0
  %vm994 = vcmp.gt.f32.partialorder %v977, 0.0
  %v995 = vmul.f32 %v940, 0.1
  %v996 = vmul.f32 %v942, 0.1
  %v997 = vmul.f32 %v945, 0.1
  %v998 = vmul.f32 %v947, 0.1
  %v999 = vmul.f32 %v950, 0.1
  %v1000 = vmul.f32 %v952, 0.1
  %v1001 = vmul.f32 %v955, 0.1
  %v1002 = vmul.f32 %v957, 0.1
  %v1003 = vmul.f32 %v960, 0.1
  %v1004 = vmul.f32 %v962, 0.1
  %v1005 = vmul.f32 %v965, 0.1
  %v1006 = vmul.f32 %v967, 0.1
  %v1007 = vmul.f32 %v970, 0.1
  %v1008 = vmul.f32 %v972, 0.1
  %v1009 = vmul.f32 %v975, 0.1
  %v1010 = vmul.f32 %v977, 0.1
  %v1011 = vsel %vm979, %v940, %v995
  %v1012 = vsel %vm980, %v942, %v996
  %v1013 = vsel %vm981, %v945, %v997
  %v1014 = vsel %vm982, %v947, %v998
  %v1015 = vsel %vm983, %v950, %v999
  %v1016 = vsel %vm984, %v952, %v1000
  %v1017 = vsel %vm985, %v955, %v1001
  %v1018 = vsel %vm986, %v957, %v1002
  %v1019 = vsel %vm987, %v960, %v1003
  %v1020 = vsel %vm988, %v962, %v1004
  %v1021 = vsel %vm989, %v965, %v1005
  %v1022 = vsel %vm990, %v967, %v1006
  %v1023 = vsel %vm991, %v970, %v1007
  %v1024 = vsel %vm992, %v972, %v1008
  %v1025 = vsel %vm993, %v975, %v1009
  %v1026 = vsel %vm994, %v977, %v1010
  %1027 = vst [vmem:[%s3] sm:$0xff] %v1011
  %1028 = vst [vmem:[%s3 + $0x8] sm:$0xff] %v1012
  %1029 = vst [vmem:[%s3 + $0x10] sm:$0xff] %v1013
  %1030 = vst [vmem:[%s3 + $0x18] sm:$0xff] %v1014
  %1031 = vst [vmem:[%s3 + $0x20] sm:$0xff] %v1015
  %1032 = vst [vmem:[%s3 + $0x28] sm:$0xff] %v1016
  %1033 = vst [vmem:[%s3 + $0x30] sm:$0xff] %v1017
  %1034 = vst [vmem:[%s3 + $0x38] sm:$0xff] %v1018
  %1035 = vst [vmem:[%s3 + $0x40] sm:$0xff] %v1019
  %1036 = vst [vmem:[%s3 + $0x48] sm:$0xff] %v1020
  %1037 = vst [vmem:[%s3 + $0x50] sm:$0xff] %v1021
  %1038 = vst [vmem:[%s3 + $0x58] sm:$0xff] %v1022
  %1039 = vst [vmem:[%s3 + $0x60] sm:$0xff] %v1023
  %1040 = vst [vmem:[%s3 + $0x68] sm:$0xff] %v1024
  %1041 = vst [vmem:[%s3 + $0x70] sm:$0xff] %v1025
  %1042 = vst [vmem:[%s3 + $0x78] sm:$0xff] %v1026
  // Predicated region
  $region14: #{darknet_forward.16} parent=0 // pred_check
    _
  $region15: #{darknet_forward.16} parent=0 // pred_check_branch
    %1044 = sbr.rel (0) target = $region17
  $region16: #{darknet_forward.16} parent=0 // pred_region
    _
  $region17: #{darknet_forward.16} parent=0 // pred_fallthru
    _
  // Predicated region
  $region18: #{darknet_forward.16} parent=0 // pred_check
    _
  $region19: #{darknet_forward.16} parent=0 // pred_check_branch
    %1046 = sbr.rel (0) target = $region21
  $region20: #{darknet_forward.16} parent=0 // pred_region
    _
  $region21: #{darknet_forward.16} parent=0 // pred_fallthru
    _

// kernel: darknet_forward.15
$region0: #{darknet_forward.15}
  #allocation0 [shape = 'u32[]', space=smem, size = 0x4, offset = 0x4, fixed_abs, tag = 'smem constant byte address 0x4 - core index']
  #allocation1 [shape = 'u32[72,128]{1,0:T(1,128)}', space=vmem, size = 0x9000, scoped, tag = 'internal scratch']
  %s0 = inlined_call_operand.vmem [shape: f32[2,4,8,16], index: 0, kind: input, shape index: {}]
  %s1 = inlined_call_operand.vmem [shape: bf16[16,128], index: 1, kind: input, shape index: {}]
  %s2 = inlined_call_operand.vmem [shape: f32[1,128], index: 2, kind: input, shape index: {}]
  %s3 = inlined_call_operand.vmem [shape: f32[64,128], index: 3, kind: input, shape index: {}]
  %s4 = inlined_call_operand.vmem [shape: f32[64,128], index: 4, kind: input, shape index: {}]
  %s5 = inlined_call_operand.vmem [shape: s32[64,128], index: 5, kind: input, shape index: {}]
  %s6 = inlined_call_operand.vmem [shape: f32[64,128], index: 6, kind: output, shape index: {}]
  %s7 = sld [smem:[#allocation0]]
  $region34: #{darknet_forward.15} parent=0
    _
  %s9 = ssub.s32 1, %s7
  %s10 = scalar_select 0, %s9, %s7
  // Predicated region
  $region2: #{darknet_forward.15} parent=0 // pred_check
    _
  $region3: #{darknet_forward.15} parent=0 // pred_check_branch
    %12 = sbr.rel (0) target = $region5
  $region4: #{darknet_forward.15} parent=0 // pred_region
    _
  $region5: #{darknet_forward.15} parent=0 // pred_fallthru
    _
  // Predicated region
  $region6: #{darknet_forward.15} parent=0 // pred_check
    _
  $region7: #{darknet_forward.15} parent=0 // pred_check_branch
    %14 = sbr.rel (0) target = $region9
  $region8: #{darknet_forward.15} parent=0 // pred_region
    _
  $region9: #{darknet_forward.15} parent=0 // pred_fallthru
    _
  // Predicated region
  $region10: #{darknet_forward.15} parent=0 // pred_check
    _
  $region11: #{darknet_forward.15} parent=0 // pred_check_branch
    %16 = sbr.rel (0) target = $region13
  $region12: #{darknet_forward.15} parent=0 // pred_region
    _
  $region13: #{darknet_forward.15} parent=0 // pred_fallthru
    _
  // Predicated region
  $region14: #{darknet_forward.15} parent=0 // pred_check
    _
  $region15: #{darknet_forward.15} parent=0 // pred_check_branch
    %18 = sbr.rel (0) target = $region17
  $region16: #{darknet_forward.15} parent=0 // pred_region
    _
  $region17: #{darknet_forward.15} parent=0 // pred_fallthru
    _
  // Predicated region
  $region18: #{darknet_forward.15} parent=0 // pred_check
    _
  $region19: #{darknet_forward.15} parent=0 // pred_check_branch
    %20 = sbr.rel (0) target = $region21
  $region20: #{darknet_forward.15} parent=0 // pred_region
    _
  $region21: #{darknet_forward.15} parent=0 // pred_fallthru
    _
  // Predicated region
  $region22: #{darknet_forward.15} parent=0 // pred_check
    _
  $region23: #{darknet_forward.15} parent=0 // pred_check_branch
    %22 = sbr.rel (0) target = $region25
  $region24: #{darknet_forward.15} parent=0 // pred_region
    _
  $region25: #{darknet_forward.15} parent=0 // pred_fallthru
    _
  %v24 = vld [vmem:[%s0] sm:$0xff]
  %v25 = vld [vmem:[%s0 + $0x8] sm:$0xff]
  %v26 = vld [vmem:[%s0 + $0x10] sm:$0xff]
  %v27 = vld [vmem:[%s0 + $0x18] sm:$0xff]
  %v28 = vld [vmem:[%s0 + $0x20] sm:$0xff]
  %v29 = vld [vmem:[%s0 + $0x28] sm:$0xff]
  %v30 = vld [vmem:[%s0 + $0x30] sm:$0xff]
  %v31 = vld [vmem:[%s0 + $0x38] sm:$0xff]
  %v32 = vpack.c.bf16 %v25, %v24
  %v33 = vpack.c.bf16 %v27, %v26
  %v34 = vpack.c.bf16 %v29, %v28
  %v35 = vpack.c.bf16 %v31, %v30
  %v36 = vld [vmem:[%s1] sm:$0xf]
  %v37 = vld [vmem:[%s1 + $0x4] sm:$0xf]
  %v38 = vld [vmem:[%s2] sm:$0x1]
  %v40 = vperm.slane %v38, 0
  %v44 = vunpack.c.l.b16 %v36
  %v45 = vunpack.c.l.b16 %v37
  %v46 = vpack.c.b16 %v45, %v44
  %vm48 = vcmask 130048
  %v50 = vsel %vm48, %v32, 0
  %v53 = vsel %vm48, %v33, 0
  %v56 = vsel %vm48, %v34, 0
  %v59 = vsel %vm48, %v35, 0
  %61 = vmatpush.bf16.msra.mxu0 0
  %62 = vmatpush.bf16.msra.mxu0 0
  %63 = vmatpush.bf16.msra.mxu0 0
  %64 = vmatpush.bf16.msra.mxu0 0
  %65 = vmatpush.bf16.msra.mxu0 0
  %66 = vmatpush.bf16.msra.mxu0 0
  %67 = vmatpush.bf16.msra.mxu0 0
  %68 = vmatpush.bf16.msra.mxu0 %v46
  %69 = vmatmul.bf16.gmra.mxu0 %v50
  %v70 = vpop.f32.mrf.mxu0
  %v71 = vadd.f32 %v40, %v70
  %v72 = vpop.f32.mrf.mxu0
  %v73 = vadd.f32 %v40, %v72
  %74 = vmatmul.bf16.gmra.mxu0 %v53
  %v75 = vpop.f32.mrf.mxu0
  %v76 = vadd.f32 %v40, %v75
  %v77 = vpop.f32.mrf.mxu0
  %v78 = vadd.f32 %v40, %v77
  %79 = vmatmul.bf16.gmra.mxu0 %v56
  %v80 = vpop.f32.mrf.mxu0
  %v81 = vadd.f32 %v40, %v80
  %v82 = vpop.f32.mrf.mxu0
  %v83 = vadd.f32 %v40, %v82
  %84 = vmatmul.bf16.gmra.mxu0 %v59
  %v85 = vpop.f32.mrf.mxu0
  %v86 = vadd.f32 %v40, %v85
  %v87 = vpop.f32.mrf.mxu0
  %v88 = vadd.f32 %v40, %v87
  %89 = vdwg.mxu0
  %v90 = vld [vmem:[%s5] sm:$0xff]
  %v91 = vld [vmem:[%s5 + $0x8] sm:$0xff]
  %v92 = vld [vmem:[%s5 + $0x10] sm:$0xff]
  %v93 = vld [vmem:[%s5 + $0x18] sm:$0xff]
  %v94 = vld [vmem:[%s5 + $0x20] sm:$0xff]
  %v95 = vld [vmem:[%s5 + $0x28] sm:$0xff]
  %v96 = vld [vmem:[%s5 + $0x30] sm:$0xff]
  %v97 = vld [vmem:[%s5 + $0x38] sm:$0xff]
  %v98 = vxor.u32 %v71, 2147483648
  %v99 = vxor.u32 %v73, 2147483648
  %v100 = vxor.u32 %v76, 2147483648
  %v101 = vxor.u32 %v78, 2147483648
  %v102 = vxor.u32 %v81, 2147483648
  %v103 = vxor.u32 %v83, 2147483648
  %v104 = vxor.u32 %v86, 2147483648
  %v105 = vxor.u32 %v88, 2147483648
  %v106 = vmul.f32 %v98, 1.442695
  %v107 = vpow.pop %v106
  %v108 = vmul.f32 %v99, 1.442695
  %v109 = vpow.pop %v108
  %v110 = vmul.f32 %v100, 1.442695
  %v111 = vpow.pop %v110
  %v112 = vmul.f32 %v101, 1.442695
  %v113 = vpow.pop %v112
  %v114 = vmul.f32 %v102, 1.442695
  %v115 = vpow.pop %v114
  %v116 = vmul.f32 %v103, 1.442695
  %v117 = vpow.pop %v116
  %v118 = vmul.f32 %v104, 1.442695
  %v119 = vpow.pop %v118
  %v120 = vmul.f32 %v105, 1.442695
  %v121 = vpow.pop %v120
  %v122 = vadd.f32 %v107, 1.0
  %v123 = vadd.f32 %v109, 1.0
  %v124 = vadd.f32 %v111, 1.0
  %v125 = vadd.f32 %v113, 1.0
  %v126 = vadd.f32 %v115, 1.0
  %v127 = vadd.f32 %v117, 1.0
  %v128 = vadd.f32 %v119, 1.0
  %v129 = vadd.f32 %v121, 1.0
  %v130 = vrcp.pop %v122
  %v131 = vmul.f32 %v122, %v130
  %v132 = vsub.f32 1.0, %v131
  %v133 = vmul.f32 %v130, %v132
  %v134 = vadd.f32 %v130, %v133
  %vm135 = vweird.f32 %v122
  %vm136 = vweird.f32 %v130
  %vm137 = vmor %vm135, %vm136
  %v138 = vsel %vm137, %v130, %v134
  %v139 = vand.u32 2147483647, %v122
  %vm140 = vcmp.eq.f32.partialorder %v139, 8.507059e+37
  %v141 = vand.u32 %v122, 2147483648
  %v142 = vor.u32 1.1754944e-38, %v141
  %v143 = vsel %vm140, %v142, %v138
  %v144 = vmul.f32 1.0, %v143
  %v145 = vrcp.pop %v123
  %v146 = vmul.f32 %v123, %v145
  %v147 = vsub.f32 1.0, %v146
  %v148 = vmul.f32 %v145, %v147
  %v149 = vadd.f32 %v145, %v148
  %vm150 = vweird.f32 %v123
  %vm151 = vweird.f32 %v145
  %vm152 = vmor %vm150, %vm151
  %v153 = vsel %vm152, %v145, %v149
  %v154 = vand.u32 2147483647, %v123
  %vm155 = vcmp.eq.f32.partialorder %v154, 8.507059e+37
  %v156 = vand.u32 %v123, 2147483648
  %v157 = vor.u32 1.1754944e-38, %v156
  %v158 = vsel %vm155, %v157, %v153
  %v159 = vmul.f32 1.0, %v158
  %v160 = vrcp.pop %v124
  %v161 = vmul.f32 %v124, %v160
  %v162 = vsub.f32 1.0, %v161
  %v163 = vmul.f32 %v160, %v162
  %v164 = vadd.f32 %v160, %v163
  %vm165 = vweird.f32 %v124
  %vm166 = vweird.f32 %v160
  %vm167 = vmor %vm165, %vm166
  %v168 = vsel %vm167, %v160, %v164
  %v169 = vand.u32 2147483647, %v124
  %vm170 = vcmp.eq.f32.partialorder %v169, 8.507059e+37
  %v171 = vand.u32 %v124, 2147483648
  %v172 = vor.u32 1.1754944e-38, %v171
  %v173 = vsel %vm170, %v172, %v168
  %v174 = vmul.f32 1.0, %v173
  %v175 = vrcp.pop %v125
  %v176 = vmul.f32 %v125, %v175
  %v177 = vsub.f32 1.0, %v176
  %v178 = vmul.f32 %v175, %v177
  %v179 = vadd.f32 %v175, %v178
  %vm180 = vweird.f32 %v125
  %vm181 = vweird.f32 %v175
  %vm182 = vmor %vm180, %vm181
  %v183 = vsel %vm182, %v175, %v179
  %v184 = vand.u32 2147483647, %v125
  %vm185 = vcmp.eq.f32.partialorder %v184, 8.507059e+37
  %v186 = vand.u32 %v125, 2147483648
  %v187 = vor.u32 1.1754944e-38, %v186
  %v188 = vsel %vm185, %v187, %v183
  %v189 = vmul.f32 1.0, %v188
  %v190 = vrcp.pop %v126
  %v191 = vmul.f32 %v126, %v190
  %v192 = vsub.f32 1.0, %v191
  %v193 = vmul.f32 %v190, %v192
  %v194 = vadd.f32 %v190, %v193
  %vm195 = vweird.f32 %v126
  %vm196 = vweird.f32 %v190
  %vm197 = vmor %vm195, %vm196
  %v198 = vsel %vm197, %v190, %v194
  %v199 = vand.u32 2147483647, %v126
  %vm200 = vcmp.eq.f32.partialorder %v199, 8.507059e+37
  %v201 = vand.u32 %v126, 2147483648
  %v202 = vor.u32 1.1754944e-38, %v201
  %v203 = vsel %vm200, %v202, %v198
  %v204 = vmul.f32 1.0, %v203
  %v205 = vrcp.pop %v127
  %v206 = vmul.f32 %v127, %v205
  %v207 = vsub.f32 1.0, %v206
  %v208 = vmul.f32 %v205, %v207
  %v209 = vadd.f32 %v205, %v208
  %vm210 = vweird.f32 %v127
  %vm211 = vweird.f32 %v205
  %vm212 = vmor %vm210, %vm211
  %v213 = vsel %vm212, %v205, %v209
  %v214 = vand.u32 2147483647, %v127
  %vm215 = vcmp.eq.f32.partialorder %v214, 8.507059e+37
  %v216 = vand.u32 %v127, 2147483648
  %v217 = vor.u32 1.1754944e-38, %v216
  %v218 = vsel %vm215, %v217, %v213
  %v219 = vmul.f32 1.0, %v218
  %v220 = vrcp.pop %v128
  %v221 = vmul.f32 %v128, %v220
  %v222 = vsub.f32 1.0, %v221
  %v223 = vmul.f32 %v220, %v222
  %v224 = vadd.f32 %v220, %v223
  %vm225 = vweird.f32 %v128
  %vm226 = vweird.f32 %v220
  %vm227 = vmor %vm225, %vm226
  %v228 = vsel %vm227, %v220, %v224
  %v229 = vand.u32 2147483647, %v128
  %vm230 = vcmp.eq.f32.partialorder %v229, 8.507059e+37
  %v231 = vand.u32 %v128, 2147483648
  %v232 = vor.u32 1.1754944e-38, %v231
  %v233 = vsel %vm230, %v232, %v228
  %v234 = vmul.f32 1.0, %v233
  %v235 = vrcp.pop %v129
  %v236 = vmul.f32 %v129, %v235
  %v237 = vsub.f32 1.0, %v236
  %v238 = vmul.f32 %v235, %v237
  %v239 = vadd.f32 %v235, %v238
  %vm240 = vweird.f32 %v129
  %vm241 = vweird.f32 %v235
  %vm242 = vmor %vm240, %vm241
  %v243 = vsel %vm242, %v235, %v239
  %v244 = vand.u32 2147483647, %v129
  %vm245 = vcmp.eq.f32.partialorder %v244, 8.507059e+37
  %v246 = vand.u32 %v129, 2147483648
  %v247 = vor.u32 1.1754944e-38, %v246
  %v248 = vsel %vm245, %v247, %v243
  %v249 = vmul.f32 1.0, %v248
  %v250 = vld [vmem:[%s3] sm:$0xff]
  %v251 = vld [vmem:[%s3 + $0x8] sm:$0xff]
  %v252 = vld [vmem:[%s3 + $0x10] sm:$0xff]
  %v253 = vld [vmem:[%s3 + $0x18] sm:$0xff]
  %v254 = vld [vmem:[%s3 + $0x20] sm:$0xff]
  %v255 = vld [vmem:[%s3 + $0x28] sm:$0xff]
  %v256 = vld [vmem:[%s3 + $0x30] sm:$0xff]
  %v257 = vld [vmem:[%s3 + $0x38] sm:$0xff]
  %v258 = vadd.f32 %v144, %v250
  %v259 = vadd.f32 %v159, %v251
  %v260 = vadd.f32 %v174, %v252
  %v261 = vadd.f32 %v189, %v253
  %v262 = vadd.f32 %v204, %v254
  %v263 = vadd.f32 %v219, %v255
  %v264 = vadd.f32 %v234, %v256
  %v265 = vadd.f32 %v249, %v257
  %v266 = vmul.f32 %v258, 4.0
  %v267 = vmul.f32 %v259, 4.0
  %v268 = vmul.f32 %v260, 4.0
  %v269 = vmul.f32 %v261, 4.0
  %v270 = vmul.f32 %v262, 4.0
  %v271 = vmul.f32 %v263, 4.0
  %v272 = vmul.f32 %v264, 4.0
  %v273 = vmul.f32 %v265, 4.0
  %v274 = vmul.f32 %v71, 1.442695
  %v275 = vpow.pop %v274
  %v276 = vmul.f32 %v73, 1.442695
  %v277 = vpow.pop %v276
  %v278 = vmul.f32 %v76, 1.442695
  %v279 = vpow.pop %v278
  %v280 = vmul.f32 %v78, 1.442695
  %v281 = vpow.pop %v280
  %v282 = vmul.f32 %v81, 1.442695
  %v283 = vpow.pop %v282
  %v284 = vmul.f32 %v83, 1.442695
  %v285 = vpow.pop %v284
  %v286 = vmul.f32 %v86, 1.442695
  %v287 = vpow.pop %v286
  %v288 = vmul.f32 %v88, 1.442695
  %v289 = vpow.pop %v288
  %v290 = vld [vmem:[%s4] sm:$0xff]
  %v291 = vld [vmem:[%s4 + $0x8] sm:$0xff]
  %v292 = vld [vmem:[%s4 + $0x10] sm:$0xff]
  %v293 = vld [vmem:[%s4 + $0x18] sm:$0xff]
  %v294 = vld [vmem:[%s4 + $0x20] sm:$0xff]
  %v295 = vld [vmem:[%s4 + $0x28] sm:$0xff]
  %v296 = vld [vmem:[%s4 + $0x30] sm:$0xff]
  %v297 = vld [vmem:[%s4 + $0x38] sm:$0xff]
  %v298 = vmul.f32 %v275, %v290
  %v299 = vmul.f32 %v277, %v291
  %v300 = vmul.f32 %v279, %v292
  %v301 = vmul.f32 %v281, %v293
  %v302 = vmul.f32 %v283, %v294
  %v303 = vmul.f32 %v285, %v295
  %v304 = vmul.f32 %v287, %v296
  %v305 = vmul.f32 %v289, %v297
  %vm306 = vcmp.eq.s32.totalorder %v90, 0
  %vm307 = vcmp.eq.s32.totalorder %v91, 0
  %vm308 = vcmp.eq.s32.totalorder %v92, 0
  %vm309 = vcmp.eq.s32.totalorder %v93, 0
  %vm310 = vcmp.eq.s32.totalorder %v94, 0
  %vm311 = vcmp.eq.s32.totalorder %v95, 0
  %vm312 = vcmp.eq.s32.totalorder %v96, 0
  %vm313 = vcmp.eq.s32.totalorder %v97, 0
  %vm314 = vcmp.eq.s32.totalorder %v90, 1
  %vm315 = vcmp.eq.s32.totalorder %v91, 1
  %vm316 = vcmp.eq.s32.totalorder %v92, 1
  %vm317 = vcmp.eq.s32.totalorder %v93, 1
  %vm318 = vcmp.eq.s32.totalorder %v94, 1
  %vm319 = vcmp.eq.s32.totalorder %v95, 1
  %vm320 = vcmp.eq.s32.totalorder %v96, 1
  %vm321 = vcmp.eq.s32.totalorder %v97, 1
  %v322 = vsel %vm314, %v298, %v144
  %v323 = vsel %vm315, %v299, %v159
  %v324 = vsel %vm316, %v300, %v174
  %v325 = vsel %vm317, %v301, %v189
  %v326 = vsel %vm318, %v302, %v204
  %v327 = vsel %vm319, %v303, %v219
  %v328 = vsel %vm320, %v304, %v234
  %v329 = vsel %vm321, %v305, %v249
  %v330 = vsel %vm306, %v266, %v322
  %v331 = vsel %vm307, %v267, %v323
  %v332 = vsel %vm308, %v268, %v324
  %v333 = vsel %vm309, %v269, %v325
  %v334 = vsel %vm310, %v270, %v326
  %v335 = vsel %vm311, %v271, %v327
  %v336 = vsel %vm312, %v272, %v328
  %v337 = vsel %vm313, %v273, %v329
  %338 = vst [vmem:[%s6] sm:$0xff] %v330
  %339 = vst [vmem:[%s6 + $0x8] sm:$0xff] %v331
  %340 = vst [vmem:[%s6 + $0x10] sm:$0xff] %v332
  %341 = vst [vmem:[%s6 + $0x18] sm:$0xff] %v333
  %342 = vst [vmem:[%s6 + $0x20] sm:$0xff] %v334
  %343 = vst [vmem:[%s6 + $0x28] sm:$0xff] %v335
  %344 = vst [vmem:[%s6 + $0x30] sm:$0xff] %v336
  %345 = vst [vmem:[%s6 + $0x38] sm:$0xff] %v337
  // Predicated region
  $region26: #{darknet_forward.15} parent=0 // pred_check
    _
  $region27: #{darknet_forward.15} parent=0 // pred_check_branch
    %347 = sbr.rel (0) target = $region29
  $region28: #{darknet_forward.15} parent=0 // pred_region
    _
  $region29: #{darknet_forward.15} parent=0 // pred_fallthru
    _
  // Predicated region
  $region30: #{darknet_forward.15} parent=0 // pred_check
    _
  $region31: #{darknet_forward.15} parent=0 // pred_check_branch
    %349 = sbr.rel (0) target = $region33
  $region32: #{darknet_forward.15} parent=0 // pred_region
    _
  $region33: #{darknet_forward.15} parent=0 // pred_fallthru
    _

</llo_original>
